<compile_context>
chip_gen: v6e
topology: v6e:2x2x1
jax: 0.10.0
libtpu: 0.0.40
codegen_flags: <defaults>
</compile_context>

<pallas_src>
import functools

import jax
import jax.numpy as jnp
from jax.experimental import pallas as pl
from jax.experimental.pallas import tpu as pltpu

LN_EPS = 1e-5  # PyTorch nn.LayerNorm default eps


# ----------------------------------------------------------------------------
# Shared math helpers (used by kernel and pure-JAX reference)
# ----------------------------------------------------------------------------
def _layernorm(x, w, b):
    mu = jnp.mean(x, axis=-1, keepdims=True)
    var = jnp.mean(jnp.square(x - mu), axis=-1, keepdims=True)
    return (x - mu) * jax.lax.rsqrt(var + LN_EPS) * w + b


def _gelu_exact(x):
    # PyTorch nn.GELU() default = exact erf-based GELU.
    return 0.5 * x * (1.0 + jax.lax.erf(x * 0.7071067811865476))


# ----------------------------------------------------------------------------
# Fused kernel: patch embed + cls/pos + all transformer layers + both heads
# ----------------------------------------------------------------------------
def fused_blinkformer_kernel(
    # --- inputs ---
    img_ref, patch_w_ref, posb_ref, negmask_ref,
    ln1w_ref, ln1b_ref, wqkv_ref, wo_ref, bo_ref,
    ln2w_ref, ln2b_ref, w1_ref, b1_ref, w2_ref, b2_ref,
    clnw_ref, clnb_ref, clsw_ref, clsb_ref,
    blnw_ref, blnb_ref, bw1_ref, bb1_ref, bw2_ref, bb2_ref, bw3_ref, bb3_ref,
    # --- outputs ---
    out1_ref, out2_ref,
    # --- scratch ---
    x_scr,
    *, heads, dim_head,
):
    layer = pl.program_id(1)
    n_layers = pl.num_programs(1)
    inner = heads * dim_head

    # ---- token construction: patch embedding + (cls + pos + patch bias) ----
    # img slab is pre-padded (zero rows for cls slot / pad rows / pad
    # examples); posb folds cls_token + pos_embedding + patch bias into one
    # additive (M, dim) term (tiled over the Bt examples of the block).
    @pl.when(layer == 0)
    def _():
        patches = jnp.dot(img_ref[...], patch_w_ref[...],
                          preferred_element_type=jnp.float32)
        x_scr[...] = patches + posb_ref[...]

    x = x_scr[...]                                           # (M, dim) f32

    # ---- PreNorm multi-head self-attention ----
    xn = _layernorm(x, ln1w_ref[0], ln1b_ref[0]).astype(jnp.bfloat16)
    # Single fused QKV matmul: (M, dim) @ (dim, 3*inner).  dim_head**-0.5 is
    # pre-folded into the Q columns.
    qkv = jnp.dot(xn, wqkv_ref[0],
                  preferred_element_type=jnp.float32).astype(jnp.bfloat16)
    neg = negmask_ref[...]                                   # (M, M) additive mask

    ctx_parts = []
    for h in range(heads):                                   # static unroll
        q_h = qkv[:, h * dim_head:(h + 1) * dim_head]
        k_h = qkv[:, inner + h * dim_head:inner + (h + 1) * dim_head]
        v_h = qkv[:, 2 * inner + h * dim_head:2 * inner + (h + 1) * dim_head]
        # scores over the whole block; cross-example / pad keys masked out
        dots = jax.lax.dot_general(
            q_h, k_h, (((1,), (1,)), ((), ())),
            preferred_element_type=jnp.float32) + neg        # (M, M)
        m = jnp.max(dots, axis=-1, keepdims=True)
        e = jnp.exp(dots - m)                                # masked -> exactly 0
        attn = (e * pl.reciprocal(jnp.sum(e, axis=-1, keepdims=True),
                                  approx=True)).astype(jnp.bfloat16)
        ctx_parts.append(jnp.dot(attn, v_h,
                                 preferred_element_type=jnp.float32))
    ctx = jnp.concatenate(ctx_parts, axis=-1).astype(jnp.bfloat16)  # (M, inner)

    # Single K=inner output projection + residual
    x = x + jnp.dot(ctx, wo_ref[0],
                    preferred_element_type=jnp.float32) + bo_ref[0]

    # ---- PreNorm feed-forward (exact erf GELU) ----
    xn2 = _layernorm(x, ln2w_ref[0], ln2b_ref[0]).astype(jnp.bfloat16)
    h1 = jnp.dot(xn2, w1_ref[0], preferred_element_type=jnp.float32) + b1_ref[0]
    h1 = _gelu_exact(h1).astype(jnp.bfloat16)
    x = x + jnp.dot(h1, w2_ref[0], preferred_element_type=jnp.float32) + b2_ref[0]
    x_scr[...] = x

    # ---- classification + BSE heads, once, after the last layer ----
    @pl.when(layer == n_layers - 1)
    def _():
        # cls head computed on all rows (trivially cheap); wrapper keeps row 0
        # of each example.
        xc = _layernorm(x, clnw_ref[...], clnb_ref[...]).astype(jnp.bfloat16)
        out1_ref[...] = (
            jnp.dot(xc, clsw_ref[...], preferred_element_type=jnp.float32)
            + clsb_ref[...])

        # BSE head: LN + Linear(D,256) + Linear(256,128) + Linear(128,1)
        # (no nonlinearity between Linears, matching the PyTorch module).
        hb = _layernorm(x, blnw_ref[...], blnb_ref[...]).astype(jnp.bfloat16)
        hb = (jnp.dot(hb, bw1_ref[...], preferred_element_type=jnp.float32)
              + bb1_ref[...]).astype(jnp.bfloat16)
        hb = (jnp.dot(hb, bw2_ref[...], preferred_element_type=jnp.float32)
              + bb2_ref[...]).astype(jnp.bfloat16)
        # lane-dense (1, M) score row instead of an (M, 1) column
        scores = jax.lax.dot_general(
            bw3_ref[...], hb, (((1,), (1,)), ((), ())),
            preferred_element_type=jnp.float32)              # (1, M)
        out2_ref[0] = jax.nn.sigmoid(scores + bb3_ref[...])


# ----------------------------------------------------------------------------
# Wrapper: one pallas_call for the whole forward
# ----------------------------------------------------------------------------
def blinkformer_forward(img, kp, cfg, block_b=8):
    """block_b: examples per grid step (Bt).  8 -> M=128 rows (v5e MXU fill);
    use 16 on v6e/v7x if the batch is large enough (M=256)."""
    B, S, C, H, W = img.shape
    dim, heads, dh = cfg["dim"], cfg["heads"], cfg["dim_head"]
    depth, mlp, ncls = cfg["depth"], cfg["mlp_dim"], cfg["num_classes"]
    inner = heads * dh
    patch_dim = C * H * W
    n_real = S + 1
    n_pad = kp["posb"].shape[0]
    h1b = kp["bse_w1"].shape[1]
    h2b = kp["bse_w2"].shape[1]

    bt = block_b
    n_blocks = -(-B // bt)
    b_pad = n_blocks * bt
    m_rows = bt * n_pad                                      # tokens per block

    # ---- padded token-row image slab (bf16 -> half the HBM traffic) ----
    # row layout per block: example b occupies rows [b*n_pad, (b+1)*n_pad);
    # row 0 (cls slot), rows >= n_real, and pad examples are zero so the patch
    # matmul directly yields the padded token slab.
    img_flat = img.reshape(B, S, patch_dim).astype(jnp.bfloat16)
    img_tok = jnp.zeros((b_pad, n_pad, patch_dim), jnp.bfloat16)
    img_tok = img_tok.at[:B, 1:n_real].set(img_flat)
    img_tok = img_tok.reshape(b_pad * n_pad, patch_dim)

    # additive cls/pos/patch-bias term, tiled over the Bt examples of a block
    posb_tiled = jnp.tile(kp["posb"], (bt, 1))               # (m_rows, dim)

    # additive attention mask: key valid iff same example AND real position
    row_ex = jnp.arange(m_rows) // n_pad
    key_pos = jnp.arange(m_rows) % n_pad
    valid = (row_ex[:, None] == row_ex[None, :]) & (key_pos[None, :] < n_real)
    negmask = jnp.where(valid, 0.0, -1e30).astype(jnp.float32)

    kernel = functools.partial(fused_blinkformer_kernel,
                               heads=heads, dim_head=dh)

    def cspec(shape):          # constant (grid-invariant) operand
        return pl.BlockSpec(shape, lambda b, l: (0,) * len(shape))

    def lspec(shape):          # per-layer stacked operand
        return pl.BlockSpec((1,) + shape, lambda b, l: (l,) + (0,) * len(shape))

    in_specs = [
        pl.BlockSpec((m_rows, patch_dim), lambda b, l: (b, 0)),   # img slab
        cspec((patch_dim, dim)),                                  # patch_w
        cspec((m_rows, dim)),                                     # posb (tiled)
        cspec((m_rows, m_rows)),                                  # neg mask
        lspec((1, dim)), lspec((1, dim)),                         # ln1 w,b
        lspec((dim, 3 * inner)),                                  # w_qkv fused
        lspec((inner, dim)), lspec((1, dim)),                     # w_out, b_out
        lspec((1, dim)), lspec((1, dim)),                         # ln2 w,b
        lspec((dim, mlp)), lspec((1, mlp)),                       # ff w1,b1
        lspec((mlp, dim)), lspec((1, dim)),                       # ff w2,b2
        cspec((1, dim)), cspec((1, dim)),                         # cls ln
        cspec((dim, ncls)), cspec((1, ncls)),                     # cls lin
        cspec((1, dim)), cspec((1, dim)),                         # bse ln
        cspec((dim, h1b)), cspec((1, h1b)),                       # bse l1
        cspec((h1b, h2b)), cspec((1, h2b)),                       # bse l2
        cspec((1, h2b)), cspec((1, 1)),                           # bse l3
    ]
    out_specs = [
        pl.BlockSpec((m_rows, ncls), lambda b, l: (b, 0)),
        pl.BlockSpec((1, 1, m_rows), lambda b, l: (b, 0, 0)),
    ]

    out1, out2 = pl.pallas_call(
        kernel,
        out_shape=(jax.ShapeDtypeStruct((b_pad * n_pad, ncls), jnp.float32),
                   jax.ShapeDtypeStruct((n_blocks, 1, m_rows), jnp.float32)),
        grid=(n_blocks, depth),
        in_specs=in_specs,
        out_specs=out_specs,
        scratch_shapes=[pltpu.VMEM((m_rows, dim), jnp.float32)],
        compiler_params=pltpu.CompilerParams(
            dimension_semantics=("parallel", "arbitrary"),
            vmem_limit_bytes=32 * 1024 * 1024),
    )(
        img_tok, kp["patch_w"], posb_tiled, negmask,
        kp["ln1_w"], kp["ln1_b"], kp["w_qkv"], kp["w_out"], kp["b_out"],
        kp["ln2_w"], kp["ln2_b"], kp["w1"], kp["b1"], kp["w2"], kp["b2"],
        kp["cls_ln_w"], kp["cls_ln_b"], kp["cls_w"], kp["cls_b"],
        kp["bse_ln_w"], kp["bse_ln_b"], kp["bse_w1"], kp["bse_b1"],
        kp["bse_w2"], kp["bse_b2"], kp["bse_w3_row"], kp["bse_b3"],
    )
    out1 = out1.reshape(b_pad, n_pad, ncls)[:B, 0, :]            # (B, ncls)
    out2 = out2.reshape(b_pad, n_pad)[:B, 1:n_real]              # (B, S)
    return out1, out2


# ----------------------------------------------------------------------------
# One-time parameter preparation (stack layers, fuse QKV, fold scale, bf16)
# ----------------------------------------------------------------------------
def prepare_params(p, cfg):
    depth, heads, dh = cfg["depth"], cfg["heads"], cfg["dim_head"]
    dim, S = cfg["dim"], cfg["seq_length"]
    inner = heads * dh
    n_real = S + 1
    n_pad = max(8, ((n_real + 7) // 8) * 8)

    def stack(name):
        return jnp.stack([lp[name] for lp in p["layers"]], axis=0)

    # fused QKV weights, attention scale folded into the Q columns (f32, then bf16)
    w_qkv = stack("w_qkv")                                    # (depth, dim, 3*inner)
    w_qkv = w_qkv.at[:, :, :inner].multiply(dh ** -0.5)

    # additive term: row0 = cls + pos0, rows 1..S = pos + patch_b, pad rows = 0
    posb = jnp.zeros((n_pad, dim), jnp.float32)
    posb = posb.at[0].set(p["pos_embedding"][0, 0] + p["cls_token"][0, 0])
    posb = posb.at[1:n_real].set(
        p["pos_embedding"][0, 1:n_real] + p["patch_b"][None, :])

    bf = lambda a: a.astype(jnp.bfloat16)
    return dict(
        patch_w=bf(p["patch_w"]), posb=posb,
        ln1_w=stack("ln1_w"), ln1_b=stack("ln1_b"),
        w_qkv=bf(w_qkv), w_out=bf(stack("w_out")), b_out=stack("b_out"),
        ln2_w=stack("ln2_w"), ln2_b=stack("ln2_b"),
        w1=bf(stack("w1")), b1=stack("b1"),
        w2=bf(stack("w2")), b2=stack("b2"),
        cls_ln_w=p["cls_ln_w"], cls_ln_b=p["cls_ln_b"],
        cls_w=bf(p["cls_w"]), cls_b=p["cls_b"],
        bse_ln_w=p["bse_ln_w"], bse_ln_b=p["bse_ln_b"],
        bse_w1=bf(p["bse_w1"]), bse_b1=p["bse_b1"],
        bse_w2=bf(p["bse_w2"]), bse_b2=p["bse_b2"],
        bse_w3_row=bf(p["bse_w3"].T), bse_b3=p["bse_b3"],
    )


# ----------------------------------------------------------------------------
# Pure-JAX reference (f32) for correctness checking
# ----------------------------------------------------------------------------
def blinkformer_reference(img, p, cfg):
    B, S, C, H, W = img.shape
    dim, heads, dh = cfg["dim"], cfg["heads"], cfg["dim_head"]
    inner = heads * dh
    x = img.reshape(B, S, -1) @ p["patch_w"] + p["patch_b"]
    cls = jnp.broadcast_to(p["cls_token"], (B, 1, dim))
    x = jnp.concatenate([cls, x], axis=1) + p["pos_embedding"][:, :S + 1]
    for lp in p["layers"]:
        xn = _layernorm(x, lp["ln1_w"], lp["ln1_b"])
        qkv = xn @ lp["w_qkv"]
        q, k, v = jnp.split(qkv, 3, axis=-1)
        sh = lambda t: t.reshape(B, S + 1, heads, dh).transpose(0, 2, 1, 3)
        q, k, v = sh(q), sh(k), sh(v)
        dots = jnp.einsum("bhid,bhjd->bhij", q, k) * dh ** -0.5
        attn = jax.nn.softmax(dots, axis=-1)
        ctx = jnp.einsum("bhij,bhjd->bhid", attn, v)
        ctx = ctx.transpose(0, 2, 1, 3).reshape(B, S + 1, inner)
        x = x + ctx @ lp["w_out"] + lp["b_out"]
        xn2 = _layernorm(x, lp["ln2_w"], lp["ln2_b"])
        h = _gelu_exact(xn2 @ lp["w1"] + lp["b1"])
        x = x + h @ lp["w2"] + lp["b2"]
    out1 = _layernorm(x[:, 0], p["cls_ln_w"], p["cls_ln_b"]) @ p["cls_w"] + p["cls_b"]
    h = _layernorm(x[:, 1:], p["bse_ln_w"], p["bse_ln_b"]) @ p["bse_w1"] + p["bse_b1"]
    h = h @ p["bse_w2"] + p["bse_b2"]
    h = h @ p["bse_w3"] + p["bse_b3"]
    return out1, jax.nn.sigmoid(h[..., 0])


# ----------------------------------------------------------------------------
# Deterministic synthetic parameters (module-like layout, f32)
# ----------------------------------------------------------------------------
def init_params(key, cfg):
    dim, depth = cfg["dim"], cfg["depth"]
    heads, dh, mlp = cfg["heads"], cfg["dim_head"], cfg["mlp_dim"]
    patch_dim = cfg["channels"] * cfg["image_size"] ** 2
    inner = heads * dh
    keys = iter(jax.random.split(key, 8 * depth + 16))

    def w(shape, scale=0.02):
        return (scale * jax.random.normal(next(keys), shape)).astype(jnp.float32)

    params = {
        "patch_w": w((patch_dim, dim)),
        "patch_b": jnp.zeros((dim,), jnp.float32),
        "pos_embedding": w((1, cfg["seq_length"] + 1, dim), 1.0),
        "cls_token": w((1, 1, dim), 1.0),
        "cls_ln_w": jnp.ones((1, dim), jnp.float32),
        "cls_ln_b": jnp.zeros((1, dim), jnp.float32),
        "cls_w": w((dim, cfg["num_classes"])),
        "cls_b": jnp.zeros((1, cfg["num_classes"]), jnp.float32),
        "bse_ln_w": jnp.ones((1, dim), jnp.float32),
        "bse_ln_b": jnp.zeros((1, dim), jnp.float32),
        "bse_w1": w((dim, 256)), "bse_b1": jnp.zeros((1, 256), jnp.float32),
        "bse_w2": w((256, 128)), "bse_b2": jnp.zeros((1, 128), jnp.float32),
        "bse_w3": w((128, 1)), "bse_b3": jnp.zeros((1, 1), jnp.float32),
        "layers": [],
    }
    for _ in range(depth):
        params["layers"].append({
            "ln1_w": jnp.ones((1, dim), jnp.float32),
            "ln1_b": jnp.zeros((1, dim), jnp.float32),
            "w_qkv": w((dim, 3 * inner)),              # to_qkv has no bias
            "w_out": w((inner, dim)),
            "b_out": jnp.zeros((1, dim), jnp.float32),
            "ln2_w": jnp.ones((1, dim), jnp.float32),
            "ln2_b": jnp.zeros((1, dim), jnp.float32),
            "w1": w((dim, mlp)), "b1": jnp.zeros((1, mlp), jnp.float32),
            "w2": w((mlp, dim)), "b2": jnp.zeros((1, dim), jnp.float32),
        })
    return params


if __name__ == "__main__":
    cfg = dict(
        seq_length=8, num_classes=2, dim=128, depth=2, heads=4,
        mlp_dim=256, channels=3, dim_head=32, image_size=8,
    )
    key = jax.random.PRNGKey(0)
    pkey, xkey = jax.random.split(key)
    raw_params = init_params(pkey, cfg)
    kparams = prepare_params(raw_params, cfg)

    img = jax.random.normal(
        xkey,
        (2, cfg["seq_length"], cfg["channels"], cfg["image_size"],
         cfg["image_size"]),
        dtype=jnp.float32,
    )

    fwd = jax.jit(lambda im: blinkformer_forward(im, kparams, cfg))
    out1, out2 = fwd(img)
    jax.block_until_ready((out1, out2))

    assert out1.shape == (2, cfg["num_classes"])
    assert out2.shape == (2, cfg["seq_length"])
    assert bool(jnp.all(jnp.isfinite(out1))) and bool(jnp.all(jnp.isfinite(out2)))

    # correctness vs. pure-JAX f32 reference (loose tol for bf16 matmuls)
    ref1, ref2 = blinkformer_reference(img, raw_params, cfg)
    assert bool(jnp.allclose(out1, ref1, atol=5e-2))
    assert bool(jnp.allclose(out2, ref2, atol=5e-2))

    print("KERNEL_OK")
</pallas_src>

<mosaic_0001>
module attributes {stable_mosaic.version = 11 : i64} {
  func.func @fused_blinkformer_kernel(%arg0: i32, %arg1: i32, %arg2: memref<128x192xbf16, #tpu.memory_space<vmem>>, %arg3: memref<192x128xbf16, #tpu.memory_space<vmem>>, %arg4: memref<128x128xf32, #tpu.memory_space<vmem>>, %arg5: memref<128x128xf32, #tpu.memory_space<vmem>>, %arg6: memref<1x1x128xf32, #tpu.memory_space<vmem>>, %arg7: memref<1x1x128xf32, #tpu.memory_space<vmem>>, %arg8: memref<1x128x384xbf16, #tpu.memory_space<vmem>>, %arg9: memref<1x128x128xbf16, #tpu.memory_space<vmem>>, %arg10: memref<1x1x128xf32, #tpu.memory_space<vmem>>, %arg11: memref<1x1x128xf32, #tpu.memory_space<vmem>>, %arg12: memref<1x1x128xf32, #tpu.memory_space<vmem>>, %arg13: memref<1x128x256xbf16, #tpu.memory_space<vmem>>, %arg14: memref<1x1x256xf32, #tpu.memory_space<vmem>>, %arg15: memref<1x256x128xbf16, #tpu.memory_space<vmem>>, %arg16: memref<1x1x128xf32, #tpu.memory_space<vmem>>, %arg17: memref<1x128xf32, #tpu.memory_space<vmem>>, %arg18: memref<1x128xf32, #tpu.memory_space<vmem>>, %arg19: memref<128x2xbf16, #tpu.memory_space<vmem>>, %arg20: memref<1x2xf32, #tpu.memory_space<vmem>>, %arg21: memref<1x128xf32, #tpu.memory_space<vmem>>, %arg22: memref<1x128xf32, #tpu.memory_space<vmem>>, %arg23: memref<128x256xbf16, #tpu.memory_space<vmem>>, %arg24: memref<1x256xf32, #tpu.memory_space<vmem>>, %arg25: memref<256x128xbf16, #tpu.memory_space<vmem>>, %arg26: memref<1x128xf32, #tpu.memory_space<vmem>>, %arg27: memref<1x128xbf16, #tpu.memory_space<vmem>>, %arg28: memref<1x1xf32, #tpu.memory_space<vmem>>, %arg29: memref<128x2xf32, #tpu.memory_space<vmem>>, %arg30: memref<1x1x128xf32, #tpu.memory_space<vmem>>, %arg31: memref<128x128xf32, #tpu.memory_space<vmem>>) attributes {dimension_semantics = [#tpu.dimension_semantics<parallel>, #tpu.dimension_semantics<arbitrary>], iteration_bounds = array<i64: 1, 2>, scalar_prefetch = 0 : i64, scratch_operands = 1 : i64, tpu.core_type = #tpu.core_type<tc>, window_params = [{transform_indices = @transform_0, window_bounds = array<i64: 128, 192>}, {pipeline_mode = #tpu.pipeline_mode<synchronous>, transform_indices = @transform_1, window_bounds = array<i64: 192, 128>}, {pipeline_mode = #tpu.pipeline_mode<synchronous>, transform_indices = @transform_2, window_bounds = array<i64: 128, 128>}, {pipeline_mode = #tpu.pipeline_mode<synchronous>, transform_indices = @transform_3, window_bounds = array<i64: 128, 128>}, {transform_indices = @transform_4, window_bounds = array<i64: 1, 1, 128>}, {transform_indices = @transform_5, window_bounds = array<i64: 1, 1, 128>}, {transform_indices = @transform_6, window_bounds = array<i64: 1, 128, 384>}, {transform_indices = @transform_7, window_bounds = array<i64: 1, 128, 128>}, {transform_indices = @transform_8, window_bounds = array<i64: 1, 1, 128>}, {transform_indices = @transform_9, window_bounds = array<i64: 1, 1, 128>}, {transform_indices = @transform_10, window_bounds = array<i64: 1, 1, 128>}, {transform_indices = @transform_11, window_bounds = array<i64: 1, 128, 256>}, {transform_indices = @transform_12, window_bounds = array<i64: 1, 1, 256>}, {transform_indices = @transform_13, window_bounds = array<i64: 1, 256, 128>}, {transform_indices = @transform_14, window_bounds = array<i64: 1, 1, 128>}, {pipeline_mode = #tpu.pipeline_mode<synchronous>, transform_indices = @transform_15, window_bounds = array<i64: 1, 128>}, {pipeline_mode = #tpu.pipeline_mode<synchronous>, transform_indices = @transform_16, window_bounds = array<i64: 1, 128>}, {pipeline_mode = #tpu.pipeline_mode<synchronous>, transform_indices = @transform_17, window_bounds = array<i64: 128, 2>}, {pipeline_mode = #tpu.pipeline_mode<synchronous>, transform_indices = @transform_18, window_bounds = array<i64: 1, 2>}, {pipeline_mode = #tpu.pipeline_mode<synchronous>, transform_indices = @transform_19, window_bounds = array<i64: 1, 128>}, {pipeline_mode = #tpu.pipeline_mode<synchronous>, transform_indices = @transform_20, window_bounds = array<i64: 1, 128>}, {pipeline_mode = #tpu.pipeline_mode<synchronous>, transform_indices = @transform_21, window_bounds = array<i64: 128, 256>}, {pipeline_mode = #tpu.pipeline_mode<synchronous>, transform_indices = @transform_22, window_bounds = array<i64: 1, 256>}, {pipeline_mode = #tpu.pipeline_mode<synchronous>, transform_indices = @transform_23, window_bounds = array<i64: 256, 128>}, {pipeline_mode = #tpu.pipeline_mode<synchronous>, transform_indices = @transform_24, window_bounds = array<i64: 1, 128>}, {pipeline_mode = #tpu.pipeline_mode<synchronous>, transform_indices = @transform_25, window_bounds = array<i64: 1, 128>}, {pipeline_mode = #tpu.pipeline_mode<synchronous>, transform_indices = @transform_26, window_bounds = array<i64: 1, 1>}, {transform_indices = @transform_27, window_bounds = array<i64: 128, 2>}, {transform_indices = @transform_28, window_bounds = array<i64: 1, 1, 128>}]} {
    %c0_i32 = arith.constant 0 : i32
    %0 = arith.cmpi eq, %arg1, %c0_i32 : i32
    %1 = arith.extui %0 : i1 to i32
    %c0_i32_0 = arith.constant 0 : i32
    %2 = arith.cmpi ne, %1, %c0_i32_0 : i32
    scf.if %2 {
      %c0_72 = arith.constant 0 : index
      %c0_73 = arith.constant 0 : index
      %169 = vector.load %arg2[%c0_72, %c0_73] : memref<128x192xbf16, #tpu.memory_space<vmem>>, vector<128x192xbf16>
      %c0_74 = arith.constant 0 : index
      %c0_75 = arith.constant 0 : index
      %170 = vector.load %arg3[%c0_74, %c0_75] : memref<192x128xbf16, #tpu.memory_space<vmem>>, vector<192x128xbf16>
      %cst_76 = arith.constant dense<0.000000e+00> : vector<128x128xf32>
      %171 = tpu.matmul %169, %170, %cst_76 {dimension_numbers = #tpu.dot_dimension_numbers<[1], [0], [0], [1], [0, 0, 1, 1], [], []>} : vector<128x192xbf16>, vector<192x128xbf16>, vector<128x128xf32> -> vector<128x128xf32>
      %c0_77 = arith.constant 0 : index
      %c0_78 = arith.constant 0 : index
      %172 = vector.load %arg4[%c0_77, %c0_78] : memref<128x128xf32, #tpu.memory_space<vmem>>, vector<128x128xf32>
      %173 = arith.addf %171, %172 : vector<128x128xf32>
      %c0_79 = arith.constant 0 : index
      %c0_80 = arith.constant 0 : index
      %174 = vector.load %arg31[%c0_79, %c0_80] : memref<128x128xf32, #tpu.memory_space<vmem>>, vector<128x128xf32>
      tpu.vector_store %arg31[%c0_79, %c0_80], %173 {strides = array<i32>} : memref<128x128xf32, #tpu.memory_space<vmem>>, vector<128x128xf32>,
    } else {
    }
    %c0 = arith.constant 0 : index
    %c0_1 = arith.constant 0 : index
    %3 = vector.load %arg31[%c0, %c0_1] : memref<128x128xf32, #tpu.memory_space<vmem>>, vector<128x128xf32>
    %c0_2 = arith.constant 0 : index
    %c0_3 = arith.constant 0 : index
    %c0_4 = arith.constant 0 : index
    %4 = vector.load %arg6[%c0_2, %c0_3, %c0_4] : memref<1x1x128xf32, #tpu.memory_space<vmem>>, vector<1x1x128xf32>
    %5 = vector.shape_cast %4 : vector<1x1x128xf32> to vector<1x128xf32>
    %c0_5 = arith.constant 0 : index
    %c0_6 = arith.constant 0 : index
    %c0_7 = arith.constant 0 : index
    %6 = vector.load %arg7[%c0_5, %c0_6, %c0_7] : memref<1x1x128xf32, #tpu.memory_space<vmem>>, vector<1x1x128xf32>
    %7 = vector.shape_cast %6 : vector<1x1x128xf32> to vector<1x128xf32>
    %cst = arith.constant dense<0.000000e+00> : vector<128xf32>
    %8 = vector.multi_reduction <add>, %3, %cst [1] : vector<128x128xf32> to vector<128xf32>
    %9 = vector.shape_cast %8 : vector<128xf32> to vector<128x1xf32>
    %cst_8 = arith.constant 1.280000e+02 : f32
    %10 = vector.broadcast %cst_8 : f32 to vector<128x1xf32>
    %11 = arith.divf %9, %10 : vector<128x1xf32>
    %12 = vector.broadcast %11 : vector<128x1xf32> to vector<128x128xf32>
    %13 = arith.subf %3, %12 : vector<128x128xf32>
    %14 = arith.mulf %13, %13 : vector<128x128xf32>
    %cst_9 = arith.constant dense<0.000000e+00> : vector<128xf32>
    %15 = vector.multi_reduction <add>, %14, %cst_9 [1] : vector<128x128xf32> to vector<128xf32>
    %16 = vector.shape_cast %15 : vector<128xf32> to vector<128x1xf32>
    %cst_10 = arith.constant 1.280000e+02 : f32
    %17 = vector.broadcast %cst_10 : f32 to vector<128x1xf32>
    %18 = arith.divf %16, %17 : vector<128x1xf32>
    %19 = vector.broadcast %11 : vector<128x1xf32> to vector<128x128xf32>
    %20 = arith.subf %3, %19 : vector<128x128xf32>
    %cst_11 = arith.constant 9.99999974E-6 : f32
    %21 = vector.broadcast %cst_11 : f32 to vector<128x1xf32>
    %22 = arith.addf %18, %21 : vector<128x1xf32>
    %23 = math.rsqrt %22 : vector<128x1xf32>
    %24 = vector.broadcast %23 : vector<128x1xf32> to vector<128x128xf32>
    %25 = arith.mulf %20, %24 : vector<128x128xf32>
    %26 = vector.broadcast %5 : vector<1x128xf32> to vector<128x128xf32>
    %27 = arith.mulf %25, %26 : vector<128x128xf32>
    %28 = vector.broadcast %7 : vector<1x128xf32> to vector<128x128xf32>
    %29 = arith.addf %27, %28 : vector<128x128xf32>
    %30 = arith.truncf %29 : vector<128x128xf32> to vector<128x128xbf16>
    %c0_12 = arith.constant 0 : index
    %c0_13 = arith.constant 0 : index
    %c0_14 = arith.constant 0 : index
    %31 = vector.load %arg8[%c0_12, %c0_13, %c0_14] : memref<1x128x384xbf16, #tpu.memory_space<vmem>>, vector<1x128x384xbf16>
    %32 = vector.shape_cast %31 : vector<1x128x384xbf16> to vector<128x384xbf16>
    %cst_15 = arith.constant dense<0.000000e+00> : vector<128x384xf32>
    %33 = tpu.matmul %30, %32, %cst_15 {dimension_numbers = #tpu.dot_dimension_numbers<[1], [0], [0], [1], [0, 0, 1, 1], [], []>} : vector<128x128xbf16>, vector<128x384xbf16>, vector<128x384xf32> -> vector<128x384xf32>
    %34 = arith.truncf %33 : vector<128x384xf32> to vector<128x384xbf16>
    %c0_16 = arith.constant 0 : index
    %c0_17 = arith.constant 0 : index
    %35 = vector.load %arg5[%c0_16, %c0_17] : memref<128x128xf32, #tpu.memory_space<vmem>>, vector<128x128xf32>
    %36 = vector.extract_strided_slice %34 {offsets = [0, 0], sizes = [128, 32], strides = [1, 1]} : vector<128x384xbf16> to vector<128x32xbf16>
    %37 = vector.extract_strided_slice %34 {offsets = [0, 128], sizes = [128, 32], strides = [1, 1]} : vector<128x384xbf16> to vector<128x32xbf16>
    %38 = vector.extract_strided_slice %34 {offsets = [0, 256], sizes = [128, 32], strides = [1, 1]} : vector<128x384xbf16> to vector<128x32xbf16>
    %cst_18 = arith.constant dense<0.000000e+00> : vector<128x128xf32>
    %39 = tpu.matmul %36, %37, %cst_18 {dimension_numbers = #tpu.dot_dimension_numbers<[1], [1], [0], [0], [0, 0, 1, 0], [], []>} : vector<128x32xbf16>, vector<128x32xbf16>, vector<128x128xf32> -> vector<128x128xf32>
    %40 = arith.addf %39, %35 : vector<128x128xf32>
    %cst_19 = arith.constant dense<0xFF800000> : vector<128xf32>
    %41 = vector.multi_reduction <maximumf>, %40, %cst_19 [1] : vector<128x128xf32> to vector<128xf32>
    %42 = vector.shape_cast %41 : vector<128xf32> to vector<128x1xf32>
    %43 = vector.broadcast %42 : vector<128x1xf32> to vector<128x128xf32>
    %44 = arith.subf %40, %43 : vector<128x128xf32>
    %45 = math.exp %44 : vector<128x128xf32>
    %cst_20 = arith.constant dense<0.000000e+00> : vector<128xf32>
    %46 = vector.multi_reduction <add>, %45, %cst_20 [1] : vector<128x128xf32> to vector<128xf32>
    %47 = vector.shape_cast %46 : vector<128xf32> to vector<128x1xf32>
    %48 = tpu.reciprocal %47 {approx = true} : vector<128x1xf32> -> vector<128x1xf32>
    %49 = vector.broadcast %48 : vector<128x1xf32> to vector<128x128xf32>
    %50 = arith.mulf %45, %49 : vector<128x128xf32>
    %51 = arith.truncf %50 : vector<128x128xf32> to vector<128x128xbf16>
    %cst_21 = arith.constant dense<0.000000e+00> : vector<128x32xf32>
    %52 = tpu.matmul %51, %38, %cst_21 {dimension_numbers = #tpu.dot_dimension_numbers<[1], [0], [0], [1], [0, 0, 1, 1], [], []>} : vector<128x128xbf16>, vector<128x32xbf16>, vector<128x32xf32> -> vector<128x32xf32>
    %53 = vector.extract_strided_slice %34 {offsets = [0, 32], sizes = [128, 32], strides = [1, 1]} : vector<128x384xbf16> to vector<128x32xbf16>
    %54 = vector.extract_strided_slice %34 {offsets = [0, 160], sizes = [128, 32], strides = [1, 1]} : vector<128x384xbf16> to vector<128x32xbf16>
    %55 = vector.extract_strided_slice %34 {offsets = [0, 288], sizes = [128, 32], strides = [1, 1]} : vector<128x384xbf16> to vector<128x32xbf16>
    %cst_22 = arith.constant dense<0.000000e+00> : vector<128x128xf32>
    %56 = tpu.matmul %53, %54, %cst_22 {dimension_numbers = #tpu.dot_dimension_numbers<[1], [1], [0], [0], [0, 0, 1, 0], [], []>} : vector<128x32xbf16>, vector<128x32xbf16>, vector<128x128xf32> -> vector<128x128xf32>
    %57 = arith.addf %56, %35 : vector<128x128xf32>
    %cst_23 = arith.constant dense<0xFF800000> : vector<128xf32>
    %58 = vector.multi_reduction <maximumf>, %57, %cst_23 [1] : vector<128x128xf32> to vector<128xf32>
    %59 = vector.shape_cast %58 : vector<128xf32> to vector<128x1xf32>
    %60 = vector.broadcast %59 : vector<128x1xf32> to vector<128x128xf32>
    %61 = arith.subf %57, %60 : vector<128x128xf32>
    %62 = math.exp %61 : vector<128x128xf32>
    %cst_24 = arith.constant dense<0.000000e+00> : vector<128xf32>
    %63 = vector.multi_reduction <add>, %62, %cst_24 [1] : vector<128x128xf32> to vector<128xf32>
    %64 = vector.shape_cast %63 : vector<128xf32> to vector<128x1xf32>
    %65 = tpu.reciprocal %64 {approx = true} : vector<128x1xf32> -> vector<128x1xf32>
    %66 = vector.broadcast %65 : vector<128x1xf32> to vector<128x128xf32>
    %67 = arith.mulf %62, %66 : vector<128x128xf32>
    %68 = arith.truncf %67 : vector<128x128xf32> to vector<128x128xbf16>
    %cst_25 = arith.constant dense<0.000000e+00> : vector<128x32xf32>
    %69 = tpu.matmul %68, %55, %cst_25 {dimension_numbers = #tpu.dot_dimension_numbers<[1], [0], [0], [1], [0, 0, 1, 1], [], []>} : vector<128x128xbf16>, vector<128x32xbf16>, vector<128x32xf32> -> vector<128x32xf32>
    %70 = vector.extract_strided_slice %34 {offsets = [0, 64], sizes = [128, 32], strides = [1, 1]} : vector<128x384xbf16> to vector<128x32xbf16>
    %71 = vector.extract_strided_slice %34 {offsets = [0, 192], sizes = [128, 32], strides = [1, 1]} : vector<128x384xbf16> to vector<128x32xbf16>
    %72 = vector.extract_strided_slice %34 {offsets = [0, 320], sizes = [128, 32], strides = [1, 1]} : vector<128x384xbf16> to vector<128x32xbf16>
    %cst_26 = arith.constant dense<0.000000e+00> : vector<128x128xf32>
    %73 = tpu.matmul %70, %71, %cst_26 {dimension_numbers = #tpu.dot_dimension_numbers<[1], [1], [0], [0], [0, 0, 1, 0], [], []>} : vector<128x32xbf16>, vector<128x32xbf16>, vector<128x128xf32> -> vector<128x128xf32>
    %74 = arith.addf %73, %35 : vector<128x128xf32>
    %cst_27 = arith.constant dense<0xFF800000> : vector<128xf32>
    %75 = vector.multi_reduction <maximumf>, %74, %cst_27 [1] : vector<128x128xf32> to vector<128xf32>
    %76 = vector.shape_cast %75 : vector<128xf32> to vector<128x1xf32>
    %77 = vector.broadcast %76 : vector<128x1xf32> to vector<128x128xf32>
    %78 = arith.subf %74, %77 : vector<128x128xf32>
    %79 = math.exp %78 : vector<128x128xf32>
    %cst_28 = arith.constant dense<0.000000e+00> : vector<128xf32>
    %80 = vector.multi_reduction <add>, %79, %cst_28 [1] : vector<128x128xf32> to vector<128xf32>
    %81 = vector.shape_cast %80 : vector<128xf32> to vector<128x1xf32>
    %82 = tpu.reciprocal %81 {approx = true} : vector<128x1xf32> -> vector<128x1xf32>
    %83 = vector.broadcast %82 : vector<128x1xf32> to vector<128x128xf32>
    %84 = arith.mulf %79, %83 : vector<128x128xf32>
    %85 = arith.truncf %84 : vector<128x128xf32> to vector<128x128xbf16>
    %cst_29 = arith.constant dense<0.000000e+00> : vector<128x32xf32>
    %86 = tpu.matmul %85, %72, %cst_29 {dimension_numbers = #tpu.dot_dimension_numbers<[1], [0], [0], [1], [0, 0, 1, 1], [], []>} : vector<128x128xbf16>, vector<128x32xbf16>, vector<128x32xf32> -> vector<128x32xf32>
    %87 = vector.extract_strided_slice %34 {offsets = [0, 96], sizes = [128, 32], strides = [1, 1]} : vector<128x384xbf16> to vector<128x32xbf16>
    %88 = vector.extract_strided_slice %34 {offsets = [0, 224], sizes = [128, 32], strides = [1, 1]} : vector<128x384xbf16> to vector<128x32xbf16>
    %89 = vector.extract_strided_slice %34 {offsets = [0, 352], sizes = [128, 32], strides = [1, 1]} : vector<128x384xbf16> to vector<128x32xbf16>
    %cst_30 = arith.constant dense<0.000000e+00> : vector<128x128xf32>
    %90 = tpu.matmul %87, %88, %cst_30 {dimension_numbers = #tpu.dot_dimension_numbers<[1], [1], [0], [0], [0, 0, 1, 0], [], []>} : vector<128x32xbf16>, vector<128x32xbf16>, vector<128x128xf32> -> vector<128x128xf32>
    %91 = arith.addf %90, %35 : vector<128x128xf32>
    %cst_31 = arith.constant dense<0xFF800000> : vector<128xf32>
    %92 = vector.multi_reduction <maximumf>, %91, %cst_31 [1] : vector<128x128xf32> to vector<128xf32>
    %93 = vector.shape_cast %92 : vector<128xf32> to vector<128x1xf32>
    %94 = vector.broadcast %93 : vector<128x1xf32> to vector<128x128xf32>
    %95 = arith.subf %91, %94 : vector<128x128xf32>
    %96 = math.exp %95 : vector<128x128xf32>
    %cst_32 = arith.constant dense<0.000000e+00> : vector<128xf32>
    %97 = vector.multi_reduction <add>, %96, %cst_32 [1] : vector<128x128xf32> to vector<128xf32>
    %98 = vector.shape_cast %97 : vector<128xf32> to vector<128x1xf32>
    %99 = tpu.reciprocal %98 {approx = true} : vector<128x1xf32> -> vector<128x1xf32>
    %100 = vector.broadcast %99 : vector<128x1xf32> to vector<128x128xf32>
    %101 = arith.mulf %96, %100 : vector<128x128xf32>
    %102 = arith.truncf %101 : vector<128x128xf32> to vector<128x128xbf16>
    %cst_33 = arith.constant dense<0.000000e+00> : vector<128x32xf32>
    %103 = tpu.matmul %102, %89, %cst_33 {dimension_numbers = #tpu.dot_dimension_numbers<[1], [0], [0], [1], [0, 0, 1, 1], [], []>} : vector<128x128xbf16>, vector<128x32xbf16>, vector<128x32xf32> -> vector<128x32xf32>
    %104 = tpu.concatenate %52, %69, %86, %103 in 1 : vector<128x32xf32>, vector<128x32xf32>, vector<128x32xf32>, vector<128x32xf32> -> vector<128x128xf32>
    %105 = arith.truncf %104 : vector<128x128xf32> to vector<128x128xbf16>
    %c0_34 = arith.constant 0 : index
    %c0_35 = arith.constant 0 : index
    %c0_36 = arith.constant 0 : index
    %106 = vector.load %arg9[%c0_34, %c0_35, %c0_36] : memref<1x128x128xbf16, #tpu.memory_space<vmem>>, vector<1x128x128xbf16>
    %107 = vector.shape_cast %106 : vector<1x128x128xbf16> to vector<128x128xbf16>
    %cst_37 = arith.constant dense<0.000000e+00> : vector<128x128xf32>
    %108 = tpu.matmul %105, %107, %cst_37 {dimension_numbers = #tpu.dot_dimension_numbers<[1], [0], [0], [1], [0, 0, 1, 1], [], []>} : vector<128x128xbf16>, vector<128x128xbf16>, vector<128x128xf32> -> vector<128x128xf32>
    %109 = arith.addf %3, %108 : vector<128x128xf32>
    %c0_38 = arith.constant 0 : index
    %c0_39 = arith.constant 0 : index
    %c0_40 = arith.constant 0 : index
    %110 = vector.load %arg10[%c0_38, %c0_39, %c0_40] : memref<1x1x128xf32, #tpu.memory_space<vmem>>, vector<1x1x128xf32>
    %111 = vector.shape_cast %110 : vector<1x1x128xf32> to vector<1x128xf32>
    %112 = vector.broadcast %111 : vector<1x128xf32> to vector<128x128xf32>
    %113 = arith.addf %109, %112 : vector<128x128xf32>
    %c0_41 = arith.constant 0 : index
    %c0_42 = arith.constant 0 : index
    %c0_43 = arith.constant 0 : index
    %114 = vector.load %arg11[%c0_41, %c0_42, %c0_43] : memref<1x1x128xf32, #tpu.memory_space<vmem>>, vector<1x1x128xf32>
    %115 = vector.shape_cast %114 : vector<1x1x128xf32> to vector<1x128xf32>
    %c0_44 = arith.constant 0 : index
    %c0_45 = arith.constant 0 : index
    %c0_46 = arith.constant 0 : index
    %116 = vector.load %arg12[%c0_44, %c0_45, %c0_46] : memref<1x1x128xf32, #tpu.memory_space<vmem>>, vector<1x1x128xf32>
    %117 = vector.shape_cast %116 : vector<1x1x128xf32> to vector<1x128xf32>
    %cst_47 = arith.constant dense<0.000000e+00> : vector<128xf32>
    %118 = vector.multi_reduction <add>, %113, %cst_47 [1] : vector<128x128xf32> to vector<128xf32>
    %119 = vector.shape_cast %118 : vector<128xf32> to vector<128x1xf32>
    %cst_48 = arith.constant 1.280000e+02 : f32
    %120 = vector.broadcast %cst_48 : f32 to vector<128x1xf32>
    %121 = arith.divf %119, %120 : vector<128x1xf32>
    %122 = vector.broadcast %121 : vector<128x1xf32> to vector<128x128xf32>
    %123 = arith.subf %113, %122 : vector<128x128xf32>
    %124 = arith.mulf %123, %123 : vector<128x128xf32>
    %cst_49 = arith.constant dense<0.000000e+00> : vector<128xf32>
    %125 = vector.multi_reduction <add>, %124, %cst_49 [1] : vector<128x128xf32> to vector<128xf32>
    %126 = vector.shape_cast %125 : vector<128xf32> to vector<128x1xf32>
    %cst_50 = arith.constant 1.280000e+02 : f32
    %127 = vector.broadcast %cst_50 : f32 to vector<128x1xf32>
    %128 = arith.divf %126, %127 : vector<128x1xf32>
    %129 = vector.broadcast %121 : vector<128x1xf32> to vector<128x128xf32>
    %130 = arith.subf %113, %129 : vector<128x128xf32>
    %cst_51 = arith.constant 9.99999974E-6 : f32
    %131 = vector.broadcast %cst_51 : f32 to vector<128x1xf32>
    %132 = arith.addf %128, %131 : vector<128x1xf32>
    %133 = math.rsqrt %132 : vector<128x1xf32>
    %134 = vector.broadcast %133 : vector<128x1xf32> to vector<128x128xf32>
    %135 = arith.mulf %130, %134 : vector<128x128xf32>
    %136 = vector.broadcast %115 : vector<1x128xf32> to vector<128x128xf32>
    %137 = arith.mulf %135, %136 : vector<128x128xf32>
    %138 = vector.broadcast %117 : vector<1x128xf32> to vector<128x128xf32>
    %139 = arith.addf %137, %138 : vector<128x128xf32>
    %140 = arith.truncf %139 : vector<128x128xf32> to vector<128x128xbf16>
    %c0_52 = arith.constant 0 : index
    %c0_53 = arith.constant 0 : index
    %c0_54 = arith.constant 0 : index
    %141 = vector.load %arg13[%c0_52, %c0_53, %c0_54] : memref<1x128x256xbf16, #tpu.memory_space<vmem>>, vector<1x128x256xbf16>
    %142 = vector.shape_cast %141 : vector<1x128x256xbf16> to vector<128x256xbf16>
    %cst_55 = arith.constant dense<0.000000e+00> : vector<128x256xf32>
    %143 = tpu.matmul %140, %142, %cst_55 {dimension_numbers = #tpu.dot_dimension_numbers<[1], [0], [0], [1], [0, 0, 1, 1], [], []>} : vector<128x128xbf16>, vector<128x256xbf16>, vector<128x256xf32> -> vector<128x256xf32>
    %c0_56 = arith.constant 0 : index
    %c0_57 = arith.constant 0 : index
    %c0_58 = arith.constant 0 : index
    %144 = vector.load %arg14[%c0_56, %c0_57, %c0_58] : memref<1x1x256xf32, #tpu.memory_space<vmem>>, vector<1x1x256xf32>
    %145 = vector.shape_cast %144 : vector<1x1x256xf32> to vector<1x256xf32>
    %146 = vector.broadcast %145 : vector<1x256xf32> to vector<128x256xf32>
    %147 = arith.addf %143, %146 : vector<128x256xf32>
    %cst_59 = arith.constant 5.000000e-01 : f32
    %148 = vector.broadcast %cst_59 : f32 to vector<128x256xf32>
    %149 = arith.mulf %148, %147 : vector<128x256xf32>
    %cst_60 = arith.constant 0.707106769 : f32
    %150 = vector.broadcast %cst_60 : f32 to vector<128x256xf32>
    %151 = arith.mulf %147, %150 : vector<128x256xf32>
    %152 = math.erf %151 : vector<128x256xf32>
    %cst_61 = arith.constant 1.000000e+00 : f32
    %153 = vector.broadcast %cst_61 : f32 to vector<128x256xf32>
    %154 = arith.addf %153, %152 : vector<128x256xf32>
    %155 = arith.mulf %149, %154 : vector<128x256xf32>
    %156 = arith.truncf %155 : vector<128x256xf32> to vector<128x256xbf16>
    %c0_62 = arith.constant 0 : index
    %c0_63 = arith.constant 0 : index
    %c0_64 = arith.constant 0 : index
    %157 = vector.load %arg15[%c0_62, %c0_63, %c0_64] : memref<1x256x128xbf16, #tpu.memory_space<vmem>>, vector<1x256x128xbf16>
    %158 = vector.shape_cast %157 : vector<1x256x128xbf16> to vector<256x128xbf16>
    %cst_65 = arith.constant dense<0.000000e+00> : vector<128x128xf32>
    %159 = tpu.matmul %156, %158, %cst_65 {dimension_numbers = #tpu.dot_dimension_numbers<[1], [0], [0], [1], [0, 0, 1, 1], [], []>} : vector<128x256xbf16>, vector<256x128xbf16>, vector<128x128xf32> -> vector<128x128xf32>
    %160 = arith.addf %113, %159 : vector<128x128xf32>
    %c0_66 = arith.constant 0 : index
    %c0_67 = arith.constant 0 : index
    %c0_68 = arith.constant 0 : index
    %161 = vector.load %arg16[%c0_66, %c0_67, %c0_68] : memref<1x1x128xf32, #tpu.memory_space<vmem>>, vector<1x1x128xf32>
    %162 = vector.shape_cast %161 : vector<1x1x128xf32> to vector<1x128xf32>
    %163 = vector.broadcast %162 : vector<1x128xf32> to vector<128x128xf32>
    %164 = arith.addf %160, %163 : vector<128x128xf32>
    %c0_69 = arith.constant 0 : index
    %c0_70 = arith.constant 0 : index
    %165 = vector.load %arg31[%c0_69, %c0_70] : memref<128x128xf32, #tpu.memory_space<vmem>>, vector<128x128xf32>
    tpu.vector_store %arg31[%c0_69, %c0_70], %164 {strides = array<i32>} : memref<128x128xf32, #tpu.memory_space<vmem>>, vector<128x128xf32>,
    %c1_i32 = arith.constant 1 : i32
    %166 = arith.cmpi eq, %arg1, %c1_i32 : i32
    %167 = arith.extui %166 : i1 to i32
    %c0_i32_71 = arith.constant 0 : i32
    %168 = arith.cmpi ne, %167, %c0_i32_71 : i32
    scf.if %168 {
      %c0_72 = arith.constant 0 : index
      %c0_73 = arith.constant 0 : index
      %169 = vector.load %arg17[%c0_72, %c0_73] : memref<1x128xf32, #tpu.memory_space<vmem>>, vector<1x128xf32>
      %c0_74 = arith.constant 0 : index
      %c0_75 = arith.constant 0 : index
      %170 = vector.load %arg18[%c0_74, %c0_75] : memref<1x128xf32, #tpu.memory_space<vmem>>, vector<1x128xf32>
      %cst_76 = arith.constant dense<0.000000e+00> : vector<128xf32>
      %171 = vector.multi_reduction <add>, %164, %cst_76 [1] : vector<128x128xf32> to vector<128xf32>
      %172 = vector.shape_cast %171 : vector<128xf32> to vector<128x1xf32>
      %cst_77 = arith.constant 1.280000e+02 : f32
      %173 = vector.broadcast %cst_77 : f32 to vector<128x1xf32>
      %174 = arith.divf %172, %173 : vector<128x1xf32>
      %175 = vector.broadcast %174 : vector<128x1xf32> to vector<128x128xf32>
      %176 = arith.subf %164, %175 : vector<128x128xf32>
      %177 = arith.mulf %176, %176 : vector<128x128xf32>
      %cst_78 = arith.constant dense<0.000000e+00> : vector<128xf32>
      %178 = vector.multi_reduction <add>, %177, %cst_78 [1] : vector<128x128xf32> to vector<128xf32>
      %179 = vector.shape_cast %178 : vector<128xf32> to vector<128x1xf32>
      %cst_79 = arith.constant 1.280000e+02 : f32
      %180 = vector.broadcast %cst_79 : f32 to vector<128x1xf32>
      %181 = arith.divf %179, %180 : vector<128x1xf32>
      %182 = vector.broadcast %174 : vector<128x1xf32> to vector<128x128xf32>
      %183 = arith.subf %164, %182 : vector<128x128xf32>
      %cst_80 = arith.constant 9.99999974E-6 : f32
      %184 = vector.broadcast %cst_80 : f32 to vector<128x1xf32>
      %185 = arith.addf %181, %184 : vector<128x1xf32>
      %186 = math.rsqrt %185 : vector<128x1xf32>
      %187 = vector.broadcast %186 : vector<128x1xf32> to vector<128x128xf32>
      %188 = arith.mulf %183, %187 : vector<128x128xf32>
      %189 = vector.broadcast %169 : vector<1x128xf32> to vector<128x128xf32>
      %190 = arith.mulf %188, %189 : vector<128x128xf32>
      %191 = vector.broadcast %170 : vector<1x128xf32> to vector<128x128xf32>
      %192 = arith.addf %190, %191 : vector<128x128xf32>
      %193 = arith.truncf %192 : vector<128x128xf32> to vector<128x128xbf16>
      %c0_81 = arith.constant 0 : index
      %c0_82 = arith.constant 0 : index
      %194 = vector.load %arg19[%c0_81, %c0_82] : memref<128x2xbf16, #tpu.memory_space<vmem>>, vector<128x2xbf16>
      %cst_83 = arith.constant dense<0.000000e+00> : vector<128x2xf32>
      %195 = tpu.matmul %193, %194, %cst_83 {dimension_numbers = #tpu.dot_dimension_numbers<[1], [0], [0], [1], [0, 0, 1, 1], [], []>} : vector<128x128xbf16>, vector<128x2xbf16>, vector<128x2xf32> -> vector<128x2xf32>
      %c0_84 = arith.constant 0 : index
      %c0_85 = arith.constant 0 : index
      %196 = vector.load %arg20[%c0_84, %c0_85] : memref<1x2xf32, #tpu.memory_space<vmem>>, vector<1x2xf32>
      %197 = vector.broadcast %196 : vector<1x2xf32> to vector<128x2xf32>
      %198 = arith.addf %195, %197 : vector<128x2xf32>
      %c0_86 = arith.constant 0 : index
      %c0_87 = arith.constant 0 : index
      %199 = vector.load %arg29[%c0_86, %c0_87] : memref<128x2xf32, #tpu.memory_space<vmem>>, vector<128x2xf32>
      tpu.vector_store %arg29[%c0_86, %c0_87], %198 {strides = array<i32>} : memref<128x2xf32, #tpu.memory_space<vmem>>, vector<128x2xf32>,
      %c0_88 = arith.constant 0 : index
      %c0_89 = arith.constant 0 : index
      %200 = vector.load %arg21[%c0_88, %c0_89] : memref<1x128xf32, #tpu.memory_space<vmem>>, vector<1x128xf32>
      %c0_90 = arith.constant 0 : index
      %c0_91 = arith.constant 0 : index
      %201 = vector.load %arg22[%c0_90, %c0_91] : memref<1x128xf32, #tpu.memory_space<vmem>>, vector<1x128xf32>
      %cst_92 = arith.constant dense<0.000000e+00> : vector<128xf32>
      %202 = vector.multi_reduction <add>, %164, %cst_92 [1] : vector<128x128xf32> to vector<128xf32>
      %203 = vector.shape_cast %202 : vector<128xf32> to vector<128x1xf32>
      %cst_93 = arith.constant 1.280000e+02 : f32
      %204 = vector.broadcast %cst_93 : f32 to vector<128x1xf32>
      %205 = arith.divf %203, %204 : vector<128x1xf32>
      %206 = vector.broadcast %205 : vector<128x1xf32> to vector<128x128xf32>
      %207 = arith.subf %164, %206 : vector<128x128xf32>
      %208 = arith.mulf %207, %207 : vector<128x128xf32>
      %cst_94 = arith.constant dense<0.000000e+00> : vector<128xf32>
      %209 = vector.multi_reduction <add>, %208, %cst_94 [1] : vector<128x128xf32> to vector<128xf32>
      %210 = vector.shape_cast %209 : vector<128xf32> to vector<128x1xf32>
      %cst_95 = arith.constant 1.280000e+02 : f32
      %211 = vector.broadcast %cst_95 : f32 to vector<128x1xf32>
      %212 = arith.divf %210, %211 : vector<128x1xf32>
      %213 = vector.broadcast %205 : vector<128x1xf32> to vector<128x128xf32>
      %214 = arith.subf %164, %213 : vector<128x128xf32>
      %cst_96 = arith.constant 9.99999974E-6 : f32
      %215 = vector.broadcast %cst_96 : f32 to vector<128x1xf32>
      %216 = arith.addf %212, %215 : vector<128x1xf32>
      %217 = math.rsqrt %216 : vector<128x1xf32>
      %218 = vector.broadcast %217 : vector<128x1xf32> to vector<128x128xf32>
      %219 = arith.mulf %214, %218 : vector<128x128xf32>
      %220 = vector.broadcast %200 : vector<1x128xf32> to vector<128x128xf32>
      %221 = arith.mulf %219, %220 : vector<128x128xf32>
      %222 = vector.broadcast %201 : vector<1x128xf32> to vector<128x128xf32>
      %223 = arith.addf %221, %222 : vector<128x128xf32>
      %224 = arith.truncf %223 : vector<128x128xf32> to vector<128x128xbf16>
      %c0_97 = arith.constant 0 : index
      %c0_98 = arith.constant 0 : index
      %225 = vector.load %arg23[%c0_97, %c0_98] : memref<128x256xbf16, #tpu.memory_space<vmem>>, vector<128x256xbf16>
      %cst_99 = arith.constant dense<0.000000e+00> : vector<128x256xf32>
      %226 = tpu.matmul %224, %225, %cst_99 {dimension_numbers = #tpu.dot_dimension_numbers<[1], [0], [0], [1], [0, 0, 1, 1], [], []>} : vector<128x128xbf16>, vector<128x256xbf16>, vector<128x256xf32> -> vector<128x256xf32>
      %c0_100 = arith.constant 0 : index
      %c0_101 = arith.constant 0 : index
      %227 = vector.load %arg24[%c0_100, %c0_101] : memref<1x256xf32, #tpu.memory_space<vmem>>, vector<1x256xf32>
      %228 = vector.broadcast %227 : vector<1x256xf32> to vector<128x256xf32>
      %229 = arith.addf %226, %228 : vector<128x256xf32>
      %230 = arith.truncf %229 : vector<128x256xf32> to vector<128x256xbf16>
      %c0_102 = arith.constant 0 : index
      %c0_103 = arith.constant 0 : index
      %231 = vector.load %arg25[%c0_102, %c0_103] : memref<256x128xbf16, #tpu.memory_space<vmem>>, vector<256x128xbf16>
      %cst_104 = arith.constant dense<0.000000e+00> : vector<128x128xf32>
      %232 = tpu.matmul %230, %231, %cst_104 {dimension_numbers = #tpu.dot_dimension_numbers<[1], [0], [0], [1], [0, 0, 1, 1], [], []>} : vector<128x256xbf16>, vector<256x128xbf16>, vector<128x128xf32> -> vector<128x128xf32>
      %c0_105 = arith.constant 0 : index
      %c0_106 = arith.constant 0 : index
      %233 = vector.load %arg26[%c0_105, %c0_106] : memref<1x128xf32, #tpu.memory_space<vmem>>, vector<1x128xf32>
      %234 = vector.broadcast %233 : vector<1x128xf32> to vector<128x128xf32>
      %235 = arith.addf %232, %234 : vector<128x128xf32>
      %236 = arith.truncf %235 : vector<128x128xf32> to vector<128x128xbf16>
      %c0_107 = arith.constant 0 : index
      %c0_108 = arith.constant 0 : index
      %237 = vector.load %arg27[%c0_107, %c0_108] : memref<1x128xbf16, #tpu.memory_space<vmem>>, vector<1x128xbf16>
      %cst_109 = arith.constant dense<0.000000e+00> : vector<1x128xf32>
      %238 = tpu.matmul %237, %236, %cst_109 {dimension_numbers = #tpu.dot_dimension_numbers<[1], [1], [0], [0], [0, 0, 1, 0], [], []>} : vector<1x128xbf16>, vector<128x128xbf16>, vector<1x128xf32> -> vector<1x128xf32>
      %c0_110 = arith.constant 0 : index
      %c0_111 = arith.constant 0 : index
      %239 = vector.load %arg28[%c0_110, %c0_111] : memref<1x1xf32, #tpu.memory_space<vmem>>, vector<1x1xf32>
      %240 = vector.broadcast %239 : vector<1x1xf32> to vector<1x128xf32>
      %241 = arith.addf %238, %240 : vector<1x128xf32>
      %242 = arith.negf %241 : vector<1x128xf32>
      %243 = math.exp %242 : vector<1x128xf32>
      %cst_112 = arith.constant 1.000000e+00 : f32
      %244 = vector.broadcast %cst_112 : f32 to vector<1x128xf32>
      %245 = arith.addf %244, %243 : vector<1x128xf32>
      %246 = arith.divf %244, %245 : vector<1x128xf32>
      %c0_113 = arith.constant 0 : index
      %c0_114 = arith.constant 0 : index
      %c0_115 = arith.constant 0 : index
      %247 = vector.load %arg30[%c0_113, %c0_114, %c0_115] : memref<1x1x128xf32, #tpu.memory_space<vmem>>, vector<1x1x128xf32>
      %248 = vector.shape_cast %247 : vector<1x1x128xf32> to vector<1x128xf32>
      %249 = vector.shape_cast %246 : vector<1x128xf32> to vector<1x1x128xf32>
      tpu.vector_store %arg30[%c0_113, %c0_114, %c0_115], %249 {strides = array<i32>} : memref<1x1x128xf32, #tpu.memory_space<vmem>>, vector<1x1x128xf32>,
    } else {
    }
    return
  }
  func.func @transform_0(%arg0: i32, %arg1: i32) -> (i32, i32) {
    %c0_i32 = arith.constant 0 : i32
    %c0_i32_0 = arith.constant 0 : i32
    return %arg0, %c0_i32 : i32, i32
  }
  func.func @transform_1(%arg0: i32, %arg1: i32) -> (i32, i32) {
    %c0_i32 = arith.constant 0 : i32
    %c0_i32_0 = arith.constant 0 : i32
    %c0_i32_1 = arith.constant 0 : i32
    return %c0_i32, %c0_i32_0 : i32, i32
  }
  func.func @transform_2(%arg0: i32, %arg1: i32) -> (i32, i32) {
    %c0_i32 = arith.constant 0 : i32
    %c0_i32_0 = arith.constant 0 : i32
    %c0_i32_1 = arith.constant 0 : i32
    return %c0_i32, %c0_i32_0 : i32, i32
  }
  func.func @transform_3(%arg0: i32, %arg1: i32) -> (i32, i32) {
    %c0_i32 = arith.constant 0 : i32
    %c0_i32_0 = arith.constant 0 : i32
    %c0_i32_1 = arith.constant 0 : i32
    return %c0_i32, %c0_i32_0 : i32, i32
  }
  func.func @transform_4(%arg0: i32, %arg1: i32) -> (i32, i32, i32) {
    %c0_i32 = arith.constant 0 : i32
    %c0_i32_0 = arith.constant 0 : i32
    %c0_i32_1 = arith.constant 0 : i32
    return %arg1, %c0_i32, %c0_i32_0 : i32, i32, i32
  }
  func.func @transform_5(%arg0: i32, %arg1: i32) -> (i32, i32, i32) {
    %c0_i32 = arith.constant 0 : i32
    %c0_i32_0 = arith.constant 0 : i32
    %c0_i32_1 = arith.constant 0 : i32
    return %arg1, %c0_i32, %c0_i32_0 : i32, i32, i32
  }
  func.func @transform_6(%arg0: i32, %arg1: i32) -> (i32, i32, i32) {
    %c0_i32 = arith.constant 0 : i32
    %c0_i32_0 = arith.constant 0 : i32
    %c0_i32_1 = arith.constant 0 : i32
    return %arg1, %c0_i32, %c0_i32_0 : i32, i32, i32
  }
  func.func @transform_7(%arg0: i32, %arg1: i32) -> (i32, i32, i32) {
    %c0_i32 = arith.constant 0 : i32
    %c0_i32_0 = arith.constant 0 : i32
    %c0_i32_1 = arith.constant 0 : i32
    return %arg1, %c0_i32, %c0_i32_0 : i32, i32, i32
  }
  func.func @transform_8(%arg0: i32, %arg1: i32) -> (i32, i32, i32) {
    %c0_i32 = arith.constant 0 : i32
    %c0_i32_0 = arith.constant 0 : i32
    %c0_i32_1 = arith.constant 0 : i32
    return %arg1, %c0_i32, %c0_i32_0 : i32, i32, i32
  }
  func.func @transform_9(%arg0: i32, %arg1: i32) -> (i32, i32, i32) {
    %c0_i32 = arith.constant 0 : i32
    %c0_i32_0 = arith.constant 0 : i32
    %c0_i32_1 = arith.constant 0 : i32
    return %arg1, %c0_i32, %c0_i32_0 : i32, i32, i32
  }
  func.func @transform_10(%arg0: i32, %arg1: i32) -> (i32, i32, i32) {
    %c0_i32 = arith.constant 0 : i32
    %c0_i32_0 = arith.constant 0 : i32
    %c0_i32_1 = arith.constant 0 : i32
    return %arg1, %c0_i32, %c0_i32_0 : i32, i32, i32
  }
  func.func @transform_11(%arg0: i32, %arg1: i32) -> (i32, i32, i32) {
    %c0_i32 = arith.constant 0 : i32
    %c0_i32_0 = arith.constant 0 : i32
    %c0_i32_1 = arith.constant 0 : i32
    return %arg1, %c0_i32, %c0_i32_0 : i32, i32, i32
  }
  func.func @transform_12(%arg0: i32, %arg1: i32) -> (i32, i32, i32) {
    %c0_i32 = arith.constant 0 : i32
    %c0_i32_0 = arith.constant 0 : i32
    %c0_i32_1 = arith.constant 0 : i32
    return %arg1, %c0_i32, %c0_i32_0 : i32, i32, i32
  }
  func.func @transform_13(%arg0: i32, %arg1: i32) -> (i32, i32, i32) {
    %c0_i32 = arith.constant 0 : i32
    %c0_i32_0 = arith.constant 0 : i32
    %c0_i32_1 = arith.constant 0 : i32
    return %arg1, %c0_i32, %c0_i32_0 : i32, i32, i32
  }
  func.func @transform_14(%arg0: i32, %arg1: i32) -> (i32, i32, i32) {
    %c0_i32 = arith.constant 0 : i32
    %c0_i32_0 = arith.constant 0 : i32
    %c0_i32_1 = arith.constant 0 : i32
    return %arg1, %c0_i32, %c0_i32_0 : i32, i32, i32
  }
  func.func @transform_15(%arg0: i32, %arg1: i32) -> (i32, i32) {
    %c0_i32 = arith.constant 0 : i32
    %c0_i32_0 = arith.constant 0 : i32
    %c0_i32_1 = arith.constant 0 : i32
    return %c0_i32, %c0_i32_0 : i32, i32
  }
  func.func @transform_16(%arg0: i32, %arg1: i32) -> (i32, i32) {
    %c0_i32 = arith.constant 0 : i32
    %c0_i32_0 = arith.constant 0 : i32
    %c0_i32_1 = arith.constant 0 : i32
    return %c0_i32, %c0_i32_0 : i32, i32
  }
  func.func @transform_17(%arg0: i32, %arg1: i32) -> (i32, i32) {
    %c0_i32 = arith.constant 0 : i32
    %c0_i32_0 = arith.constant 0 : i32
    %c0_i32_1 = arith.constant 0 : i32
    return %c0_i32, %c0_i32_0 : i32, i32
  }
  func.func @transform_18(%arg0: i32, %arg1: i32) -> (i32, i32) {
    %c0_i32 = arith.constant 0 : i32
    %c0_i32_0 = arith.constant 0 : i32
    %c0_i32_1 = arith.constant 0 : i32
    return %c0_i32, %c0_i32_0 : i32, i32
  }
  func.func @transform_19(%arg0: i32, %arg1: i32) -> (i32, i32) {
    %c0_i32 = arith.constant 0 : i32
    %c0_i32_0 = arith.constant 0 : i32
    %c0_i32_1 = arith.constant 0 : i32
    return %c0_i32, %c0_i32_0 : i32, i32
  }
  func.func @transform_20(%arg0: i32, %arg1: i32) -> (i32, i32) {
    %c0_i32 = arith.constant 0 : i32
    %c0_i32_0 = arith.constant 0 : i32
    %c0_i32_1 = arith.constant 0 : i32
    return %c0_i32, %c0_i32_0 : i32, i32
  }
  func.func @transform_21(%arg0: i32, %arg1: i32) -> (i32, i32) {
    %c0_i32 = arith.constant 0 : i32
    %c0_i32_0 = arith.constant 0 : i32
    %c0_i32_1 = arith.constant 0 : i32
    return %c0_i32, %c0_i32_0 : i32, i32
  }
  func.func @transform_22(%arg0: i32, %arg1: i32) -> (i32, i32) {
    %c0_i32 = arith.constant 0 : i32
    %c0_i32_0 = arith.constant 0 : i32
    %c0_i32_1 = arith.constant 0 : i32
    return %c0_i32, %c0_i32_0 : i32, i32
  }
  func.func @transform_23(%arg0: i32, %arg1: i32) -> (i32, i32) {
    %c0_i32 = arith.constant 0 : i32
    %c0_i32_0 = arith.constant 0 : i32
    %c0_i32_1 = arith.constant 0 : i32
    return %c0_i32, %c0_i32_0 : i32, i32
  }
  func.func @transform_24(%arg0: i32, %arg1: i32) -> (i32, i32) {
    %c0_i32 = arith.constant 0 : i32
    %c0_i32_0 = arith.constant 0 : i32
    %c0_i32_1 = arith.constant 0 : i32
    return %c0_i32, %c0_i32_0 : i32, i32
  }
  func.func @transform_25(%arg0: i32, %arg1: i32) -> (i32, i32) {
    %c0_i32 = arith.constant 0 : i32
    %c0_i32_0 = arith.constant 0 : i32
    %c0_i32_1 = arith.constant 0 : i32
    return %c0_i32, %c0_i32_0 : i32, i32
  }
  func.func @transform_26(%arg0: i32, %arg1: i32) -> (i32, i32) {
    %c0_i32 = arith.constant 0 : i32
    %c0_i32_0 = arith.constant 0 : i32
    %c0_i32_1 = arith.constant 0 : i32
    return %c0_i32, %c0_i32_0 : i32, i32
  }
  func.func @transform_27(%arg0: i32, %arg1: i32) -> (i32, i32) {
    %c0_i32 = arith.constant 0 : i32
    %c0_i32_0 = arith.constant 0 : i32
    return %arg0, %c0_i32 : i32, i32
  }
  func.func @transform_28(%arg0: i32, %arg1: i32) -> (i32, i32, i32) {
    %c0_i32 = arith.constant 0 : i32
    %c0_i32_0 = arith.constant 0 : i32
    %c0_i32_1 = arith.constant 0 : i32
    return %arg0, %c0_i32, %c0_i32_0 : i32, i32, i32
  }
}

</mosaic_0001>

<llo_original>
// kernel: _lambda_.1
$region0: #{_lambda_.1}
  #allocation0 [shape = 'u32[]', space=smem, size = 0x4, offset = 0x4, fixed_abs, tag = 'smem constant byte address 0x4 - core index']
  #allocation1 [shape = 'u32[144,128]{1,0:T(1,128)}', space=vmem, size = 0x12000, scoped, tag = 'internal scratch']
  #allocation2 [shape = 'f32[128,128]{1,0:T(8,128)}', space=vmem, size = 0x10000, scoped, tag = 'scratch operand']
  #allocation3 [shape = 'f32[1,1]{1,0:T(1,128)S(1)}', space=vmem, size = 0x200, scoped, tag = 'scoped memory for _lambda_.1']
  %s0 = inlined_call_operand.vmem [shape: bf16[128,192], index: 0, kind: input, shape index: {}]
  %s1 = inlined_call_operand.vmem [shape: bf16[192,128], index: 1, kind: input, shape index: {}]
  %s2 = inlined_call_operand.vmem [shape: f32[128,128], index: 2, kind: input, shape index: {}]
  %s3 = inlined_call_operand.vmem [shape: f32[128,128], index: 3, kind: input, shape index: {}]
  %s4 = inlined_call_operand.vmem [shape: f32[2,1,128], index: 4, kind: input, shape index: {}, may-alias: {4,9}]
  %s5 = inlined_call_operand.vmem [shape: f32[2,1,128], index: 5, kind: input, shape index: {}, may-alias: {5,8,10,14}]
  %s6 = inlined_call_operand.vmem [shape: bf16[2,128,384], index: 6, kind: input, shape index: {}]
  %s7 = inlined_call_operand.vmem [shape: bf16[2,128,128], index: 7, kind: input, shape index: {}]
  %s8 = inlined_call_operand.vmem [shape: f32[2,1,128], index: 8, kind: input, shape index: {}, may-alias: {5,8,10,14}]
  %s9 = inlined_call_operand.vmem [shape: f32[2,1,128], index: 9, kind: input, shape index: {}, may-alias: {4,9}]
  %s10 = inlined_call_operand.vmem [shape: f32[2,1,128], index: 10, kind: input, shape index: {}, may-alias: {5,8,10,14}]
  %s11 = inlined_call_operand.vmem [shape: bf16[2,128,256], index: 11, kind: input, shape index: {}]
  %s12 = inlined_call_operand.vmem [shape: f32[2,1,256], index: 12, kind: input, shape index: {}]
  %s13 = inlined_call_operand.vmem [shape: bf16[2,256,128], index: 13, kind: input, shape index: {}]
  %s14 = inlined_call_operand.vmem [shape: f32[2,1,128], index: 14, kind: input, shape index: {}, may-alias: {5,8,10,14}]
  %s15 = inlined_call_operand.vmem [shape: f32[1,128], index: 15, kind: input, shape index: {}, may-alias: {15,19}]
  %s16 = inlined_call_operand.vmem [shape: f32[1,128], index: 16, kind: input, shape index: {}, may-alias: {16,20,24}]
  %s17 = inlined_call_operand.hbm [shape: bf16[128,2], index: 17, kind: input, shape index: {}]
  %s18 = inlined_call_operand.vmem [shape: f32[1,2], index: 18, kind: input, shape index: {}]
  %s19 = inlined_call_operand.vmem [shape: f32[1,128], index: 19, kind: input, shape index: {}, may-alias: {15,19}]
  %s20 = inlined_call_operand.vmem [shape: f32[1,128], index: 20, kind: input, shape index: {}, may-alias: {16,20,24}]
  %s21 = inlined_call_operand.vmem [shape: bf16[128,256], index: 21, kind: input, shape index: {}]
  %s22 = inlined_call_operand.vmem [shape: f32[1,256], index: 22, kind: input, shape index: {}]
  %s23 = inlined_call_operand.hbm [shape: bf16[256,128], index: 23, kind: input, shape index: {}]
  %s24 = inlined_call_operand.vmem [shape: f32[1,128], index: 24, kind: input, shape index: {}, may-alias: {16,20,24}]
  %s25 = inlined_call_operand.vmem [shape: bf16[1,128], index: 25, kind: input, shape index: {}]
  %s26 = inlined_call_operand.<no memory space> [shape: f32[1,1], index: 26, kind: input, shape index: {}]
  %s27 = inlined_call_operand.vmem [shape: f32[128,2], index: 27, kind: output, shape index: {0}]
  %s28 = inlined_call_operand.vmem [shape: f32[1,1,128], index: 28, kind: output, shape index: {1}]
  %29 = xla_tuple %s27, %s28
  %s30 = sld [smem:[#allocation0]]
  $region165: #{_lambda_.1} parent=0
    _
  %s32 = ssub.s32 1, %s30
  %s33 = scalar_select 0, %s32, %s30
  %v34 = vstv %s26
  %35 = vst [vmem:[#allocation3] sm:$0x1] %v34
  $region1: #{_lambda_.1} parent=0
    #allocation4 [shape = 'u8[32768]{0}', space=vmem, size = 0x8000, scoped, tag = 'input window, operand 17, single buffered']
    #allocation5 [shape = 's32[2]{0}', space=sflag, size = 0x8, scoped, tag = 'scoped memory for _lambda_.1']
    #allocation6 [shape = 'u8[65536]{0}', space=vmem, size = 0x10000, scoped, tag = 'input window, operand 23, single buffered']
    #allocation7 [shape = 's32[1]{0}', space=sflag, size = 0x4, scoped, tag = 'scoped memory for _lambda_.1']
    %36 = vsyncpa [#allocation5], 0
    %37 = vsyncpa [#allocation7], 0
    loop: start=0, step=1, limit=4
    $region2: #{_lambda_.1} parent=1 // loop_pre_header
      _
    $region3: #{_lambda_.1} parent=1 // loop_header
      %s39 = sphi 0, %s43
      %p40 = scmp.ge.s32.totalorder %s39, 4
      %s46 = sphi 0, %s58
      %s47 = sphi 0, %s54
      %s48 = sphi 0, %s46
      %s49 = sphi 0, %s47
      %s50 = sphi 0, %s48
      %s51 = sphi 0, %s49
      %s61 = sphi 0, %s63
      %s64 = sphi 0, %s61
      %s65 = sphi 0, %s64
      %s81 = sphi 0, %s65
      %s85 = sphi 0, %s85
      %s87 = sphi 0, %s85
      %s88 = sphi 0, %s87
      %s102 = sphi 0, %s88
      %s106 = sphi 0, %s106
      %s108 = sphi 0, %s106
      %s109 = sphi 0, %s108
      %s123 = sphi 0, %s109
      %s127 = sphi 0, %s127
      %s129 = sphi 0, %s127
      %s130 = sphi 0, %s129
      %s144 = sphi 0, %s130
      %s150 = sphi 0, %s152
      %s153 = sphi 0, %s150
      %s154 = sphi 0, %s153
      %s170 = sphi 0, %s154
      %s176 = sphi 0, %s178
      %s179 = sphi 0, %s176
      %s180 = sphi 0, %s179
      %s196 = sphi 0, %s180
      %s202 = sphi 0, %s204
      %s205 = sphi 0, %s202
      %s206 = sphi 0, %s205
      %s222 = sphi 0, %s206
      %s228 = sphi 0, %s230
      %s231 = sphi 0, %s228
      %s232 = sphi 0, %s231
      %s248 = sphi 0, %s232
      %s254 = sphi 0, %s256
      %s257 = sphi 0, %s254
      %s258 = sphi 0, %s257
      %s274 = sphi 0, %s258
      %s280 = sphi 0, %s282
      %s283 = sphi 0, %s280
      %s284 = sphi 0, %s283
      %s300 = sphi 0, %s284
      %s306 = sphi 0, %s308
      %s309 = sphi 0, %s306
      %s310 = sphi 0, %s309
      %s326 = sphi 0, %s310
      %s332 = sphi 0, %s334
      %s335 = sphi 0, %s332
      %s336 = sphi 0, %s335
      %s352 = sphi 0, %s336
      %s358 = sphi 0, %s360
      %s361 = sphi 0, %s358
      %s362 = sphi 0, %s361
      %s378 = sphi 0, %s362
      %s384 = sphi 0, %s386
      %s387 = sphi 0, %s384
      %s388 = sphi 0, %s387
      %s404 = sphi 0, %s388
      %s410 = sphi 0, %s412
      %s413 = sphi 0, %s410
      %s414 = sphi 0, %s413
      %s430 = sphi 0, %s414
      %s434 = sphi 0, %s434
      %s436 = sphi 0, %s434
      %s437 = sphi 0, %s436
      %s451 = sphi 0, %s437
      %s455 = sphi 0, %s455
      %s457 = sphi 0, %s455
      %s458 = sphi 0, %s457
      %s472 = sphi 0, %s458
      %s476 = sphi 0, %s476
      %s478 = sphi 0, %s476
      %s479 = sphi 0, %s478
      %s493 = sphi 0, %s479
      %s497 = sphi 0, %s497
      %s499 = sphi 0, %s497
      %s500 = sphi 0, %s499
      %s514 = sphi 0, %s500
      %s518 = sphi 0, %s518
      %s520 = sphi 0, %s518
      %s521 = sphi 0, %s520
      %s535 = sphi 0, %s521
      %s539 = sphi 0, %s539
      %s541 = sphi 0, %s539
      %s542 = sphi 0, %s541
      %s556 = sphi 0, %s542
      %s560 = sphi 0, %s560
      %s562 = sphi 0, %s560
      %s563 = sphi 0, %s562
      %s577 = sphi 0, %s563
      %s581 = sphi 0, %s581
      %s583 = sphi 0, %s581
      %s584 = sphi 0, %s583
      %s598 = sphi 0, %s584
      %s602 = sphi 0, %s602
      %s604 = sphi 0, %s602
      %s605 = sphi 0, %s604
      %s619 = sphi 0, %s605
      %s623 = sphi 0, %s623
      %s625 = sphi 0, %s623
      %s626 = sphi 0, %s625
      %s640 = sphi 0, %s626
      %s644 = sphi 0, %s644
      %s646 = sphi 0, %s644
      %s647 = sphi 0, %s646
      %s661 = sphi 0, %s647
      %s665 = sphi 0, %s665
      %s667 = sphi 0, %s665
      %s668 = sphi 0, %s667
      %s682 = sphi 0, %s668
      %s688 = sphi 0, %s690
      %s691 = sphi 0, %s688
      %s692 = sphi 0, %s691
      %s708 = sphi 0, %s692
      %s714 = sphi 0, %s716
      %s717 = sphi 0, %s714
      %s718 = sphi 0, %s717
      %s734 = sphi 0, %s718
    $region4: #{_lambda_.1} parent=1 // loop_header_branch
      %42 = sbr.rel (%p40) target = $region8
    $region5: #{_lambda_.1} parent=1 // loop_body
      %s44 = ssub.s32 %s39, 1
      %s45 = ssub.s32 %s39, 2
      %s52 = sadd.s32 1, %s47
      %p53 = scmp.ge.s32.totalorder %s52, 2
      %s54 = scalar_select %p53, 0, %s52
      %s55 = sadd.s32 1, %s46
      %s56 = scalar_select %p53, %s55, %s46
      %p57 = scmp.ge.s32.totalorder %s56, 1
      %s58 = scalar_select %p57, 0, %s56
      %s59 = ssub.s32 %s46, %s58
      %p60 = scmp.eq.s32.totalorder %s59, 0
      %s62 = sadd.s32 %s61, 1
      %s63 = scalar_select %p60, %s61, %s62
      %p66 = pneg %p60
      %p67 = scmp.eq.s32.totalorder %s39, 1
      %p68 = por %p66, %p67
      %p69 = scmp.ne.s32.totalorder %s61, %s64
      %p70 = scmp.eq.s32.totalorder %s39, 0
      %p71 = por %p69, %p70
      %p72 = scmp.ne.s32.totalorder %s61, %s64
      %p73 = scmp.eq.s32.totalorder %s44, 1
      %p74 = por %p72, %p73
      %p75 = scmp.ne.s32.totalorder %s64, %s65
      %p76 = scmp.eq.s32.totalorder %s44, 0
      %p77 = por %p75, %p76
      %p78 = scmp.ne.s32.totalorder %s64, %s65
      %p79 = scmp.eq.s32.totalorder %s45, 1
      %p80 = por %p78, %p79
      %p82 = scmp.ne.s32.totalorder %s65, %s81
      %p83 = scmp.eq.s32.totalorder %s45, 0
      %p84 = por %p82, %p83
      %s86 = sadd.s32 %s85, 1
      %p89 = scmp.eq.s32.totalorder %s39, 1
      %p90 = scmp.ne.s32.totalorder %s85, %s87
      %p91 = scmp.eq.s32.totalorder %s39, 0
      %p92 = por %p90, %p91
      %p93 = scmp.ne.s32.totalorder %s85, %s87
      %p94 = scmp.eq.s32.totalorder %s44, 1
      %p95 = por %p93, %p94
      %p96 = scmp.ne.s32.totalorder %s87, %s88
      %p97 = scmp.eq.s32.totalorder %s44, 0
      %p98 = por %p96, %p97
      %p99 = scmp.ne.s32.totalorder %s87, %s88
      %p100 = scmp.eq.s32.totalorder %s45, 1
      %p101 = por %p99, %p100
      %p103 = scmp.ne.s32.totalorder %s88, %s102
      %p104 = scmp.eq.s32.totalorder %s45, 0
      %p105 = por %p103, %p104
      %s107 = sadd.s32 %s106, 1
      %p110 = scmp.eq.s32.totalorder %s39, 1
      %p111 = scmp.ne.s32.totalorder %s106, %s108
      %p112 = scmp.eq.s32.totalorder %s39, 0
      %p113 = por %p111, %p112
      %p114 = scmp.ne.s32.totalorder %s106, %s108
      %p115 = scmp.eq.s32.totalorder %s44, 1
      %p116 = por %p114, %p115
      %p117 = scmp.ne.s32.totalorder %s108, %s109
      %p118 = scmp.eq.s32.totalorder %s44, 0
      %p119 = por %p117, %p118
      %p120 = scmp.ne.s32.totalorder %s108, %s109
      %p121 = scmp.eq.s32.totalorder %s45, 1
      %p122 = por %p120, %p121
      %p124 = scmp.ne.s32.totalorder %s109, %s123
      %p125 = scmp.eq.s32.totalorder %s45, 0
      %p126 = por %p124, %p125
      %s128 = sadd.s32 %s127, 1
      %p131 = scmp.eq.s32.totalorder %s39, 1
      %p132 = scmp.ne.s32.totalorder %s127, %s129
      %p133 = scmp.eq.s32.totalorder %s39, 0
      %p134 = por %p132, %p133
      %p135 = scmp.ne.s32.totalorder %s127, %s129
      %p136 = scmp.eq.s32.totalorder %s44, 1
      %p137 = por %p135, %p136
      %p138 = scmp.ne.s32.totalorder %s129, %s130
      %p139 = scmp.eq.s32.totalorder %s44, 0
      %p140 = por %p138, %p139
      %p141 = scmp.ne.s32.totalorder %s129, %s130
      %p142 = scmp.eq.s32.totalorder %s45, 1
      %p143 = por %p141, %p142
      %p145 = scmp.ne.s32.totalorder %s130, %s144
      %p146 = scmp.eq.s32.totalorder %s45, 0
      %p147 = por %p145, %p146
      %s148 = ssub.s32 %s47, %s54
      %p149 = scmp.eq.s32.totalorder %s148, 0
      %s151 = sadd.s32 %s150, 1
      %s152 = scalar_select %p149, %s150, %s151
      %p155 = pneg %p149
      %p156 = scmp.eq.s32.totalorder %s39, 1
      %p157 = por %p155, %p156
      %p158 = scmp.ne.s32.totalorder %s150, %s153
      %p159 = scmp.eq.s32.totalorder %s39, 0
      %p160 = por %p158, %p159
      %p161 = scmp.ne.s32.totalorder %s150, %s153
      %p162 = scmp.eq.s32.totalorder %s44, 1
      %p163 = por %p161, %p162
      %p164 = scmp.ne.s32.totalorder %s153, %s154
      %p165 = scmp.eq.s32.totalorder %s44, 0
      %p166 = por %p164, %p165
      %p167 = scmp.ne.s32.totalorder %s153, %s154
      %p168 = scmp.eq.s32.totalorder %s45, 1
      %p169 = por %p167, %p168
      %p171 = scmp.ne.s32.totalorder %s154, %s170
      %p172 = scmp.eq.s32.totalorder %s45, 0
      %p173 = por %p171, %p172
      %s174 = ssub.s32 %s47, %s54
      %p175 = scmp.eq.s32.totalorder %s174, 0
      %s177 = sadd.s32 %s176, 1
      %s178 = scalar_select %p175, %s176, %s177
      %p181 = pneg %p175
      %p182 = scmp.eq.s32.totalorder %s39, 1
      %p183 = por %p181, %p182
      %p184 = scmp.ne.s32.totalorder %s176, %s179
      %p185 = scmp.eq.s32.totalorder %s39, 0
      %p186 = por %p184, %p185
      %p187 = scmp.ne.s32.totalorder %s176, %s179
      %p188 = scmp.eq.s32.totalorder %s44, 1
      %p189 = por %p187, %p188
      %p190 = scmp.ne.s32.totalorder %s179, %s180
      %p191 = scmp.eq.s32.totalorder %s44, 0
      %p192 = por %p190, %p191
      %p193 = scmp.ne.s32.totalorder %s179, %s180
      %p194 = scmp.eq.s32.totalorder %s45, 1
      %p195 = por %p193, %p194
      %p197 = scmp.ne.s32.totalorder %s180, %s196
      %p198 = scmp.eq.s32.totalorder %s45, 0
      %p199 = por %p197, %p198
      %s200 = ssub.s32 %s47, %s54
      %p201 = scmp.eq.s32.totalorder %s200, 0
      %s203 = sadd.s32 %s202, 1
      %s204 = scalar_select %p201, %s202, %s203
      %p207 = pneg %p201
      %p208 = scmp.eq.s32.totalorder %s39, 1
      %p209 = por %p207, %p208
      %p210 = scmp.ne.s32.totalorder %s202, %s205
      %p211 = scmp.eq.s32.totalorder %s39, 0
      %p212 = por %p210, %p211
      %p213 = scmp.ne.s32.totalorder %s202, %s205
      %p214 = scmp.eq.s32.totalorder %s44, 1
      %p215 = por %p213, %p214
      %p216 = scmp.ne.s32.totalorder %s205, %s206
      %p217 = scmp.eq.s32.totalorder %s44, 0
      %p218 = por %p216, %p217
      %p219 = scmp.ne.s32.totalorder %s205, %s206
      %p220 = scmp.eq.s32.totalorder %s45, 1
      %p221 = por %p219, %p220
      %p223 = scmp.ne.s32.totalorder %s206, %s222
      %p224 = scmp.eq.s32.totalorder %s45, 0
      %p225 = por %p223, %p224
      %s226 = ssub.s32 %s47, %s54
      %p227 = scmp.eq.s32.totalorder %s226, 0
      %s229 = sadd.s32 %s228, 1
      %s230 = scalar_select %p227, %s228, %s229
      %p233 = pneg %p227
      %p234 = scmp.eq.s32.totalorder %s39, 1
      %p235 = por %p233, %p234
      %p236 = scmp.ne.s32.totalorder %s228, %s231
      %p237 = scmp.eq.s32.totalorder %s39, 0
      %p238 = por %p236, %p237
      %p239 = scmp.ne.s32.totalorder %s228, %s231
      %p240 = scmp.eq.s32.totalorder %s44, 1
      %p241 = por %p239, %p240
      %p242 = scmp.ne.s32.totalorder %s231, %s232
      %p243 = scmp.eq.s32.totalorder %s44, 0
      %p244 = por %p242, %p243
      %p245 = scmp.ne.s32.totalorder %s231, %s232
      %p246 = scmp.eq.s32.totalorder %s45, 1
      %p247 = por %p245, %p246
      %p249 = scmp.ne.s32.totalorder %s232, %s248
      %p250 = scmp.eq.s32.totalorder %s45, 0
      %p251 = por %p249, %p250
      %s252 = ssub.s32 %s47, %s54
      %p253 = scmp.eq.s32.totalorder %s252, 0
      %s255 = sadd.s32 %s254, 1
      %s256 = scalar_select %p253, %s254, %s255
      %p259 = pneg %p253
      %p260 = scmp.eq.s32.totalorder %s39, 1
      %p261 = por %p259, %p260
      %p262 = scmp.ne.s32.totalorder %s254, %s257
      %p263 = scmp.eq.s32.totalorder %s39, 0
      %p264 = por %p262, %p263
      %p265 = scmp.ne.s32.totalorder %s254, %s257
      %p266 = scmp.eq.s32.totalorder %s44, 1
      %p267 = por %p265, %p266
      %p268 = scmp.ne.s32.totalorder %s257, %s258
      %p269 = scmp.eq.s32.totalorder %s44, 0
      %p270 = por %p268, %p269
      %p271 = scmp.ne.s32.totalorder %s257, %s258
      %p272 = scmp.eq.s32.totalorder %s45, 1
      %p273 = por %p271, %p272
      %p275 = scmp.ne.s32.totalorder %s258, %s274
      %p276 = scmp.eq.s32.totalorder %s45, 0
      %p277 = por %p275, %p276
      %s278 = ssub.s32 %s47, %s54
      %p279 = scmp.eq.s32.totalorder %s278, 0
      %s281 = sadd.s32 %s280, 1
      %s282 = scalar_select %p279, %s280, %s281
      %p285 = pneg %p279
      %p286 = scmp.eq.s32.totalorder %s39, 1
      %p287 = por %p285, %p286
      %p288 = scmp.ne.s32.totalorder %s280, %s283
      %p289 = scmp.eq.s32.totalorder %s39, 0
      %p290 = por %p288, %p289
      %p291 = scmp.ne.s32.totalorder %s280, %s283
      %p292 = scmp.eq.s32.totalorder %s44, 1
      %p293 = por %p291, %p292
      %p294 = scmp.ne.s32.totalorder %s283, %s284
      %p295 = scmp.eq.s32.totalorder %s44, 0
      %p296 = por %p294, %p295
      %p297 = scmp.ne.s32.totalorder %s283, %s284
      %p298 = scmp.eq.s32.totalorder %s45, 1
      %p299 = por %p297, %p298
      %p301 = scmp.ne.s32.totalorder %s284, %s300
      %p302 = scmp.eq.s32.totalorder %s45, 0
      %p303 = por %p301, %p302
      %s304 = ssub.s32 %s47, %s54
      %p305 = scmp.eq.s32.totalorder %s304, 0
      %s307 = sadd.s32 %s306, 1
      %s308 = scalar_select %p305, %s306, %s307
      %p311 = pneg %p305
      %p312 = scmp.eq.s32.totalorder %s39, 1
      %p313 = por %p311, %p312
      %p314 = scmp.ne.s32.totalorder %s306, %s309
      %p315 = scmp.eq.s32.totalorder %s39, 0
      %p316 = por %p314, %p315
      %p317 = scmp.ne.s32.totalorder %s306, %s309
      %p318 = scmp.eq.s32.totalorder %s44, 1
      %p319 = por %p317, %p318
      %p320 = scmp.ne.s32.totalorder %s309, %s310
      %p321 = scmp.eq.s32.totalorder %s44, 0
      %p322 = por %p320, %p321
      %p323 = scmp.ne.s32.totalorder %s309, %s310
      %p324 = scmp.eq.s32.totalorder %s45, 1
      %p325 = por %p323, %p324
      %p327 = scmp.ne.s32.totalorder %s310, %s326
      %p328 = scmp.eq.s32.totalorder %s45, 0
      %p329 = por %p327, %p328
      %s330 = ssub.s32 %s47, %s54
      %p331 = scmp.eq.s32.totalorder %s330, 0
      %s333 = sadd.s32 %s332, 1
      %s334 = scalar_select %p331, %s332, %s333
      %p337 = pneg %p331
      %p338 = scmp.eq.s32.totalorder %s39, 1
      %p339 = por %p337, %p338
      %p340 = scmp.ne.s32.totalorder %s332, %s335
      %p341 = scmp.eq.s32.totalorder %s39, 0
      %p342 = por %p340, %p341
      %p343 = scmp.ne.s32.totalorder %s332, %s335
      %p344 = scmp.eq.s32.totalorder %s44, 1
      %p345 = por %p343, %p344
      %p346 = scmp.ne.s32.totalorder %s335, %s336
      %p347 = scmp.eq.s32.totalorder %s44, 0
      %p348 = por %p346, %p347
      %p349 = scmp.ne.s32.totalorder %s335, %s336
      %p350 = scmp.eq.s32.totalorder %s45, 1
      %p351 = por %p349, %p350
      %p353 = scmp.ne.s32.totalorder %s336, %s352
      %p354 = scmp.eq.s32.totalorder %s45, 0
      %p355 = por %p353, %p354
      %s356 = ssub.s32 %s47, %s54
      %p357 = scmp.eq.s32.totalorder %s356, 0
      %s359 = sadd.s32 %s358, 1
      %s360 = scalar_select %p357, %s358, %s359
      %p363 = pneg %p357
      %p364 = scmp.eq.s32.totalorder %s39, 1
      %p365 = por %p363, %p364
      %p366 = scmp.ne.s32.totalorder %s358, %s361
      %p367 = scmp.eq.s32.totalorder %s39, 0
      %p368 = por %p366, %p367
      %p369 = scmp.ne.s32.totalorder %s358, %s361
      %p370 = scmp.eq.s32.totalorder %s44, 1
      %p371 = por %p369, %p370
      %p372 = scmp.ne.s32.totalorder %s361, %s362
      %p373 = scmp.eq.s32.totalorder %s44, 0
      %p374 = por %p372, %p373
      %p375 = scmp.ne.s32.totalorder %s361, %s362
      %p376 = scmp.eq.s32.totalorder %s45, 1
      %p377 = por %p375, %p376
      %p379 = scmp.ne.s32.totalorder %s362, %s378
      %p380 = scmp.eq.s32.totalorder %s45, 0
      %p381 = por %p379, %p380
      %s382 = ssub.s32 %s47, %s54
      %p383 = scmp.eq.s32.totalorder %s382, 0
      %s385 = sadd.s32 %s384, 1
      %s386 = scalar_select %p383, %s384, %s385
      %p389 = pneg %p383
      %p390 = scmp.eq.s32.totalorder %s39, 1
      %p391 = por %p389, %p390
      %p392 = scmp.ne.s32.totalorder %s384, %s387
      %p393 = scmp.eq.s32.totalorder %s39, 0
      %p394 = por %p392, %p393
      %p395 = scmp.ne.s32.totalorder %s384, %s387
      %p396 = scmp.eq.s32.totalorder %s44, 1
      %p397 = por %p395, %p396
      %p398 = scmp.ne.s32.totalorder %s387, %s388
      %p399 = scmp.eq.s32.totalorder %s44, 0
      %p400 = por %p398, %p399
      %p401 = scmp.ne.s32.totalorder %s387, %s388
      %p402 = scmp.eq.s32.totalorder %s45, 1
      %p403 = por %p401, %p402
      %p405 = scmp.ne.s32.totalorder %s388, %s404
      %p406 = scmp.eq.s32.totalorder %s45, 0
      %p407 = por %p405, %p406
      %s408 = ssub.s32 %s47, %s54
      %p409 = scmp.eq.s32.totalorder %s408, 0
      %s411 = sadd.s32 %s410, 1
      %s412 = scalar_select %p409, %s410, %s411
      %p415 = pneg %p409
      %p416 = scmp.eq.s32.totalorder %s39, 1
      %p417 = por %p415, %p416
      %p418 = scmp.ne.s32.totalorder %s410, %s413
      %p419 = scmp.eq.s32.totalorder %s39, 0
      %p420 = por %p418, %p419
      %p421 = scmp.ne.s32.totalorder %s410, %s413
      %p422 = scmp.eq.s32.totalorder %s44, 1
      %p423 = por %p421, %p422
      %p424 = scmp.ne.s32.totalorder %s413, %s414
      %p425 = scmp.eq.s32.totalorder %s44, 0
      %p426 = por %p424, %p425
      %p427 = scmp.ne.s32.totalorder %s413, %s414
      %p428 = scmp.eq.s32.totalorder %s45, 1
      %p429 = por %p427, %p428
      %p431 = scmp.ne.s32.totalorder %s414, %s430
      %p432 = scmp.eq.s32.totalorder %s45, 0
      %p433 = por %p431, %p432
      %s435 = sadd.s32 %s434, 1
      %p438 = scmp.eq.s32.totalorder %s39, 1
      %p439 = scmp.ne.s32.totalorder %s434, %s436
      %p440 = scmp.eq.s32.totalorder %s39, 0
      %p441 = por %p439, %p440
      %p442 = scmp.ne.s32.totalorder %s434, %s436
      %p443 = scmp.eq.s32.totalorder %s44, 1
      %p444 = por %p442, %p443
      %p445 = scmp.ne.s32.totalorder %s436, %s437
      %p446 = scmp.eq.s32.totalorder %s44, 0
      %p447 = por %p445, %p446
      %p448 = scmp.ne.s32.totalorder %s436, %s437
      %p449 = scmp.eq.s32.totalorder %s45, 1
      %p450 = por %p448, %p449
      %p452 = scmp.ne.s32.totalorder %s437, %s451
      %p453 = scmp.eq.s32.totalorder %s45, 0
      %p454 = por %p452, %p453
      %s456 = sadd.s32 %s455, 1
      %p459 = scmp.eq.s32.totalorder %s39, 1
      %p460 = scmp.ne.s32.totalorder %s455, %s457
      %p461 = scmp.eq.s32.totalorder %s39, 0
      %p462 = por %p460, %p461
      %p463 = scmp.ne.s32.totalorder %s455, %s457
      %p464 = scmp.eq.s32.totalorder %s44, 1
      %p465 = por %p463, %p464
      %p466 = scmp.ne.s32.totalorder %s457, %s458
      %p467 = scmp.eq.s32.totalorder %s44, 0
      %p468 = por %p466, %p467
      %p469 = scmp.ne.s32.totalorder %s457, %s458
      %p470 = scmp.eq.s32.totalorder %s45, 1
      %p471 = por %p469, %p470
      %p473 = scmp.ne.s32.totalorder %s458, %s472
      %p474 = scmp.eq.s32.totalorder %s45, 0
      %p475 = por %p473, %p474
      %s477 = sadd.s32 %s476, 1
      %p480 = scmp.eq.s32.totalorder %s39, 1
      %p481 = scmp.ne.s32.totalorder %s476, %s478
      %p482 = scmp.eq.s32.totalorder %s39, 0
      %p483 = por %p481, %p482
      %p484 = scmp.ne.s32.totalorder %s476, %s478
      %p485 = scmp.eq.s32.totalorder %s44, 1
      %p486 = por %p484, %p485
      %p487 = scmp.ne.s32.totalorder %s478, %s479
      %p488 = scmp.eq.s32.totalorder %s44, 0
      %p489 = por %p487, %p488
      %p490 = scmp.ne.s32.totalorder %s478, %s479
      %p491 = scmp.eq.s32.totalorder %s45, 1
      %p492 = por %p490, %p491
      %p494 = scmp.ne.s32.totalorder %s479, %s493
      %p495 = scmp.eq.s32.totalorder %s45, 0
      %p496 = por %p494, %p495
      %s498 = sadd.s32 %s497, 1
      %p501 = scmp.eq.s32.totalorder %s39, 1
      %p502 = scmp.ne.s32.totalorder %s497, %s499
      %p503 = scmp.eq.s32.totalorder %s39, 0
      %p504 = por %p502, %p503
      %p505 = scmp.ne.s32.totalorder %s497, %s499
      %p506 = scmp.eq.s32.totalorder %s44, 1
      %p507 = por %p505, %p506
      %p508 = scmp.ne.s32.totalorder %s499, %s500
      %p509 = scmp.eq.s32.totalorder %s44, 0
      %p510 = por %p508, %p509
      %p511 = scmp.ne.s32.totalorder %s499, %s500
      %p512 = scmp.eq.s32.totalorder %s45, 1
      %p513 = por %p511, %p512
      %p515 = scmp.ne.s32.totalorder %s500, %s514
      %p516 = scmp.eq.s32.totalorder %s45, 0
      %p517 = por %p515, %p516
      %s519 = sadd.s32 %s518, 1
      %p522 = scmp.eq.s32.totalorder %s39, 1
      %p523 = scmp.ne.s32.totalorder %s518, %s520
      %p524 = scmp.eq.s32.totalorder %s39, 0
      %p525 = por %p523, %p524
      %p526 = scmp.ne.s32.totalorder %s518, %s520
      %p527 = scmp.eq.s32.totalorder %s44, 1
      %p528 = por %p526, %p527
      %p529 = scmp.ne.s32.totalorder %s520, %s521
      %p530 = scmp.eq.s32.totalorder %s44, 0
      %p531 = por %p529, %p530
      %p532 = scmp.ne.s32.totalorder %s520, %s521
      %p533 = scmp.eq.s32.totalorder %s45, 1
      %p534 = por %p532, %p533
      %p536 = scmp.ne.s32.totalorder %s521, %s535
      %p537 = scmp.eq.s32.totalorder %s45, 0
      %p538 = por %p536, %p537
      %s540 = sadd.s32 %s539, 1
      %p543 = scmp.eq.s32.totalorder %s39, 1
      %p544 = scmp.ne.s32.totalorder %s539, %s541
      %p545 = scmp.eq.s32.totalorder %s39, 0
      %p546 = por %p544, %p545
      %p547 = scmp.ne.s32.totalorder %s539, %s541
      %p548 = scmp.eq.s32.totalorder %s44, 1
      %p549 = por %p547, %p548
      %p550 = scmp.ne.s32.totalorder %s541, %s542
      %p551 = scmp.eq.s32.totalorder %s44, 0
      %p552 = por %p550, %p551
      %p553 = scmp.ne.s32.totalorder %s541, %s542
      %p554 = scmp.eq.s32.totalorder %s45, 1
      %p555 = por %p553, %p554
      %p557 = scmp.ne.s32.totalorder %s542, %s556
      %p558 = scmp.eq.s32.totalorder %s45, 0
      %p559 = por %p557, %p558
      %s561 = sadd.s32 %s560, 1
      %p564 = scmp.eq.s32.totalorder %s39, 1
      %p565 = scmp.ne.s32.totalorder %s560, %s562
      %p566 = scmp.eq.s32.totalorder %s39, 0
      %p567 = por %p565, %p566
      %p568 = scmp.ne.s32.totalorder %s560, %s562
      %p569 = scmp.eq.s32.totalorder %s44, 1
      %p570 = por %p568, %p569
      %p571 = scmp.ne.s32.totalorder %s562, %s563
      %p572 = scmp.eq.s32.totalorder %s44, 0
      %p573 = por %p571, %p572
      %p574 = scmp.ne.s32.totalorder %s562, %s563
      %p575 = scmp.eq.s32.totalorder %s45, 1
      %p576 = por %p574, %p575
      %p578 = scmp.ne.s32.totalorder %s563, %s577
      %p579 = scmp.eq.s32.totalorder %s45, 0
      %p580 = por %p578, %p579
      %s582 = sadd.s32 %s581, 1
      %p585 = scmp.eq.s32.totalorder %s39, 1
      %p586 = scmp.ne.s32.totalorder %s581, %s583
      %p587 = scmp.eq.s32.totalorder %s39, 0
      %p588 = por %p586, %p587
      %p589 = scmp.ne.s32.totalorder %s581, %s583
      %p590 = scmp.eq.s32.totalorder %s44, 1
      %p591 = por %p589, %p590
      %p592 = scmp.ne.s32.totalorder %s583, %s584
      %p593 = scmp.eq.s32.totalorder %s44, 0
      %p594 = por %p592, %p593
      %p595 = scmp.ne.s32.totalorder %s583, %s584
      %p596 = scmp.eq.s32.totalorder %s45, 1
      %p597 = por %p595, %p596
      %p599 = scmp.ne.s32.totalorder %s584, %s598
      %p600 = scmp.eq.s32.totalorder %s45, 0
      %p601 = por %p599, %p600
      %s603 = sadd.s32 %s602, 1
      %p606 = scmp.eq.s32.totalorder %s39, 1
      %p607 = scmp.ne.s32.totalorder %s602, %s604
      %p608 = scmp.eq.s32.totalorder %s39, 0
      %p609 = por %p607, %p608
      %p610 = scmp.ne.s32.totalorder %s602, %s604
      %p611 = scmp.eq.s32.totalorder %s44, 1
      %p612 = por %p610, %p611
      %p613 = scmp.ne.s32.totalorder %s604, %s605
      %p614 = scmp.eq.s32.totalorder %s44, 0
      %p615 = por %p613, %p614
      %p616 = scmp.ne.s32.totalorder %s604, %s605
      %p617 = scmp.eq.s32.totalorder %s45, 1
      %p618 = por %p616, %p617
      %p620 = scmp.ne.s32.totalorder %s605, %s619
      %p621 = scmp.eq.s32.totalorder %s45, 0
      %p622 = por %p620, %p621
      %s624 = sadd.s32 %s623, 1
      %p627 = scmp.eq.s32.totalorder %s39, 1
      %p628 = scmp.ne.s32.totalorder %s623, %s625
      %p629 = scmp.eq.s32.totalorder %s39, 0
      %p630 = por %p628, %p629
      %p631 = scmp.ne.s32.totalorder %s623, %s625
      %p632 = scmp.eq.s32.totalorder %s44, 1
      %p633 = por %p631, %p632
      %p634 = scmp.ne.s32.totalorder %s625, %s626
      %p635 = scmp.eq.s32.totalorder %s44, 0
      %p636 = por %p634, %p635
      %p637 = scmp.ne.s32.totalorder %s625, %s626
      %p638 = scmp.eq.s32.totalorder %s45, 1
      %p639 = por %p637, %p638
      %p641 = scmp.ne.s32.totalorder %s626, %s640
      %p642 = scmp.eq.s32.totalorder %s45, 0
      %p643 = por %p641, %p642
      %s645 = sadd.s32 %s644, 1
      %p648 = scmp.eq.s32.totalorder %s39, 1
      %p649 = scmp.ne.s32.totalorder %s644, %s646
      %p650 = scmp.eq.s32.totalorder %s39, 0
      %p651 = por %p649, %p650
      %p652 = scmp.ne.s32.totalorder %s644, %s646
      %p653 = scmp.eq.s32.totalorder %s44, 1
      %p654 = por %p652, %p653
      %p655 = scmp.ne.s32.totalorder %s646, %s647
      %p656 = scmp.eq.s32.totalorder %s44, 0
      %p657 = por %p655, %p656
      %p658 = scmp.ne.s32.totalorder %s646, %s647
      %p659 = scmp.eq.s32.totalorder %s45, 1
      %p660 = por %p658, %p659
      %p662 = scmp.ne.s32.totalorder %s647, %s661
      %p663 = scmp.eq.s32.totalorder %s45, 0
      %p664 = por %p662, %p663
      %s666 = sadd.s32 %s665, 1
      %p669 = scmp.eq.s32.totalorder %s39, 1
      %p670 = scmp.ne.s32.totalorder %s665, %s667
      %p671 = scmp.eq.s32.totalorder %s39, 0
      %p672 = por %p670, %p671
      %p673 = scmp.ne.s32.totalorder %s665, %s667
      %p674 = scmp.eq.s32.totalorder %s44, 1
      %p675 = por %p673, %p674
      %p676 = scmp.ne.s32.totalorder %s667, %s668
      %p677 = scmp.eq.s32.totalorder %s44, 0
      %p678 = por %p676, %p677
      %p679 = scmp.ne.s32.totalorder %s667, %s668
      %p680 = scmp.eq.s32.totalorder %s45, 1
      %p681 = por %p679, %p680
      %p683 = scmp.ne.s32.totalorder %s668, %s682
      %p684 = scmp.eq.s32.totalorder %s45, 0
      %p685 = por %p683, %p684
      %s686 = ssub.s32 %s46, %s58
      %p687 = scmp.eq.s32.totalorder %s686, 0
      %s689 = sadd.s32 %s688, 1
      %s690 = scalar_select %p687, %s688, %s689
      %p693 = pneg %p687
      %p694 = scmp.eq.s32.totalorder %s39, 1
      %p695 = por %p693, %p694
      %p696 = scmp.ne.s32.totalorder %s688, %s691
      %p697 = scmp.eq.s32.totalorder %s39, 0
      %p698 = por %p696, %p697
      %p699 = scmp.ne.s32.totalorder %s688, %s691
      %p700 = scmp.eq.s32.totalorder %s44, 1
      %p701 = por %p699, %p700
      %p702 = scmp.ne.s32.totalorder %s691, %s692
      %p703 = scmp.eq.s32.totalorder %s44, 0
      %p704 = por %p702, %p703
      %p705 = scmp.ne.s32.totalorder %s691, %s692
      %p706 = scmp.eq.s32.totalorder %s45, 1
      %p707 = por %p705, %p706
      %p709 = scmp.ne.s32.totalorder %s692, %s708
      %p710 = scmp.eq.s32.totalorder %s45, 0
      %p711 = por %p709, %p710
      %s712 = ssub.s32 %s46, %s58
      %p713 = scmp.eq.s32.totalorder %s712, 0
      %s715 = sadd.s32 %s714, 1
      %s716 = scalar_select %p713, %s714, %s715
      %p719 = pneg %p713
      %p720 = scmp.eq.s32.totalorder %s39, 1
      %p721 = por %p719, %p720
      %p722 = scmp.ne.s32.totalorder %s714, %s717
      %p723 = scmp.eq.s32.totalorder %s39, 0
      %p724 = por %p722, %p723
      %p725 = scmp.ne.s32.totalorder %s714, %s717
      %p726 = scmp.eq.s32.totalorder %s44, 1
      %p727 = por %p725, %p726
      %p728 = scmp.ne.s32.totalorder %s717, %s718
      %p729 = scmp.eq.s32.totalorder %s44, 0
      %p730 = por %p728, %p729
      %p731 = scmp.ne.s32.totalorder %s717, %s718
      %p732 = scmp.eq.s32.totalorder %s45, 1
      %p733 = por %p731, %p732
      %p735 = scmp.ne.s32.totalorder %s718, %s734
      %p736 = scmp.eq.s32.totalorder %s45, 0
      %p737 = por %p735, %p736
      %p738 = scmp.le.s32.totalorder 1, %s39
      %p739 = scmp.lt.s32.totalorder %s39, 3
      %p740 = pnand %p738, %p739
      %p741 = pneg %p740
      // Predicated region
      $region9: #{_lambda_.1} parent=5 // pred_check
        _
      $region10: #{_lambda_.1} parent=5 // pred_check_branch
        %743 = sbr.rel (%p740) target = $region12
      $region11: #{_lambda_.1} parent=5 // pred_region
        %s744 = ssub.s32 %s39, 1
        // Predicated region
        $region13: #{_lambda_.1} parent=11 // pred_check
          %p745 = pneg %p77
        $region14: #{_lambda_.1} parent=11 // pred_check_branch
          %747 = sbr.rel (%p745) target = $region16
        $region15: #{_lambda_.1} parent=11 // pred_region
          %s748 = smul.u32 16, %s48
          %p749 = scmp.lt.s32.totalorder %s748, 15
          %s750 = scalar_select %p749, %s748, 15
          %s751 = smul.addr %s750, 2
          %s752 = smul.addr %s751, 4
          %s753 = scalar_lea.vmem %s0, %s752
          %s754 = smul.u32 16, %s48
        $region16: #{_lambda_.1} parent=11 // pred_fallthru
          _
        // Predicated region
        $region17: #{_lambda_.1} parent=11 // pred_check
          %p755 = pneg %p98
        $region18: #{_lambda_.1} parent=11 // pred_check_branch
          %757 = sbr.rel (%p755) target = $region20
        $region19: #{_lambda_.1} parent=11 // pred_region
          _
        $region20: #{_lambda_.1} parent=11 // pred_fallthru
          _
        // Predicated region
        $region21: #{_lambda_.1} parent=11 // pred_check
          %p758 = pneg %p119
        $region22: #{_lambda_.1} parent=11 // pred_check_branch
          %760 = sbr.rel (%p758) target = $region24
        $region23: #{_lambda_.1} parent=11 // pred_region
          _
        $region24: #{_lambda_.1} parent=11 // pred_fallthru
          _
        // Predicated region
        $region25: #{_lambda_.1} parent=11 // pred_check
          %p761 = pneg %p140
        $region26: #{_lambda_.1} parent=11 // pred_check_branch
          %763 = sbr.rel (%p761) target = $region28
        $region27: #{_lambda_.1} parent=11 // pred_region
          _
        $region28: #{_lambda_.1} parent=11 // pred_fallthru
          _
        // Predicated region
        $region29: #{_lambda_.1} parent=11 // pred_check
          %p764 = pneg %p447
        $region30: #{_lambda_.1} parent=11 // pred_check_branch
          %766 = sbr.rel (%p764) target = $region32
        $region31: #{_lambda_.1} parent=11 // pred_region
          _
        $region32: #{_lambda_.1} parent=11 // pred_fallthru
          _
        // Predicated region
        $region33: #{_lambda_.1} parent=11 // pred_check
          %p767 = pneg %p468
        $region34: #{_lambda_.1} parent=11 // pred_check_branch
          %769 = sbr.rel (%p767) target = $region36
        $region35: #{_lambda_.1} parent=11 // pred_region
          _
        $region36: #{_lambda_.1} parent=11 // pred_fallthru
          _
        // Predicated region
        $region37: #{_lambda_.1} parent=11 // pred_check
          %p770 = pneg %p489
        $region38: #{_lambda_.1} parent=11 // pred_check_branch
          %772 = sbr.rel (%p770) target = $region40
        $region39: #{_lambda_.1} parent=11 // pred_region
          %s774 = ssub.s32 1024, 1024
          %775 = vsyncadd [#allocation5], %s774
          %s776 = sshll.u32 [#allocation4], 4
          %s777 = int_to_ptr.vmem [resolvable:$true] %s776
          %782 = dma.hbm_to_vmem [thread:$0]  %s17, 1024, %s777, [#allocation5], 64, 64, 4
        $region40: #{_lambda_.1} parent=11 // pred_fallthru
          _
        // Predicated region
        $region41: #{_lambda_.1} parent=11 // pred_check
          %p783 = pneg %p510
        $region42: #{_lambda_.1} parent=11 // pred_check_branch
          %785 = sbr.rel (%p783) target = $region44
        $region43: #{_lambda_.1} parent=11 // pred_region
          _
        $region44: #{_lambda_.1} parent=11 // pred_fallthru
          _
        // Predicated region
        $region45: #{_lambda_.1} parent=11 // pred_check
          %p786 = pneg %p531
        $region46: #{_lambda_.1} parent=11 // pred_check_branch
          %788 = sbr.rel (%p786) target = $region48
        $region47: #{_lambda_.1} parent=11 // pred_region
          _
        $region48: #{_lambda_.1} parent=11 // pred_fallthru
          _
        // Predicated region
        $region49: #{_lambda_.1} parent=11 // pred_check
          %p789 = pneg %p552
        $region50: #{_lambda_.1} parent=11 // pred_check_branch
          %791 = sbr.rel (%p789) target = $region52
        $region51: #{_lambda_.1} parent=11 // pred_region
          _
        $region52: #{_lambda_.1} parent=11 // pred_fallthru
          _
        // Predicated region
        $region53: #{_lambda_.1} parent=11 // pred_check
          %p792 = pneg %p573
        $region54: #{_lambda_.1} parent=11 // pred_check_branch
          %794 = sbr.rel (%p792) target = $region56
        $region55: #{_lambda_.1} parent=11 // pred_region
          _
        $region56: #{_lambda_.1} parent=11 // pred_fallthru
          _
        // Predicated region
        $region57: #{_lambda_.1} parent=11 // pred_check
          %p795 = pneg %p594
        $region58: #{_lambda_.1} parent=11 // pred_check_branch
          %797 = sbr.rel (%p795) target = $region60
        $region59: #{_lambda_.1} parent=11 // pred_region
          _
        $region60: #{_lambda_.1} parent=11 // pred_fallthru
          _
        // Predicated region
        $region61: #{_lambda_.1} parent=11 // pred_check
          %p798 = pneg %p615
        $region62: #{_lambda_.1} parent=11 // pred_check_branch
          %800 = sbr.rel (%p798) target = $region64
        $region63: #{_lambda_.1} parent=11 // pred_region
          %s802 = ssub.s32 2048, 2048
          %803 = vsyncadd [#allocation7], %s802
          %s804 = sshll.u32 [#allocation6], 4
          %s805 = int_to_ptr.vmem [resolvable:$true] %s804
          %810 = dma.hbm_to_vmem [thread:$0]  %s23, 2048, %s805, [#allocation7], 64, 64, 4
        $region64: #{_lambda_.1} parent=11 // pred_fallthru
          _
        // Predicated region
        $region65: #{_lambda_.1} parent=11 // pred_check
          %p811 = pneg %p636
        $region66: #{_lambda_.1} parent=11 // pred_check_branch
          %813 = sbr.rel (%p811) target = $region68
        $region67: #{_lambda_.1} parent=11 // pred_region
          _
        $region68: #{_lambda_.1} parent=11 // pred_fallthru
          _
        // Predicated region
        $region69: #{_lambda_.1} parent=11 // pred_check
          %p814 = pneg %p657
        $region70: #{_lambda_.1} parent=11 // pred_check_branch
          %816 = sbr.rel (%p814) target = $region72
        $region71: #{_lambda_.1} parent=11 // pred_region
          _
        $region72: #{_lambda_.1} parent=11 // pred_fallthru
          _
        // Predicated region
        $region73: #{_lambda_.1} parent=11 // pred_check
          %p817 = pneg %p678
        $region74: #{_lambda_.1} parent=11 // pred_check_branch
          %819 = sbr.rel (%p817) target = $region76
        $region75: #{_lambda_.1} parent=11 // pred_region
          _
        $region76: #{_lambda_.1} parent=11 // pred_fallthru
          _
      $region12: #{_lambda_.1} parent=5 // pred_fallthru
        _
      %p820 = scmp.lt.s32.totalorder %s39, 2
      // Predicated region
      $region77: #{_lambda_.1} parent=5 // pred_check
        %p821 = pneg %p820
      $region78: #{_lambda_.1} parent=5 // pred_check_branch
        %823 = sbr.rel (%p821) target = $region80
      $region79: #{_lambda_.1} parent=5 // pred_region
        // Predicated region
        $region81: #{_lambda_.1} parent=79 // pred_check
          %p824 = pneg %p160
        $region82: #{_lambda_.1} parent=79 // pred_check_branch
          %826 = sbr.rel (%p824) target = $region84
        $region83: #{_lambda_.1} parent=79 // pred_region
          %p827 = scmp.lt.s32.totalorder %s47, 1
          %s828 = scalar_select %p827, %s47, 1
          %s829 = scalar_lea.vmem %s4, %s828
        $region84: #{_lambda_.1} parent=79 // pred_fallthru
          _
        // Predicated region
        $region85: #{_lambda_.1} parent=79 // pred_check
          %p830 = pneg %p186
        $region86: #{_lambda_.1} parent=79 // pred_check_branch
          %832 = sbr.rel (%p830) target = $region88
        $region87: #{_lambda_.1} parent=79 // pred_region
          %p833 = scmp.lt.s32.totalorder %s47, 1
          %s834 = scalar_select %p833, %s47, 1
          %s835 = scalar_lea.vmem %s5, %s834
        $region88: #{_lambda_.1} parent=79 // pred_fallthru
          _
        // Predicated region
        $region89: #{_lambda_.1} parent=79 // pred_check
          %p836 = pneg %p212
        $region90: #{_lambda_.1} parent=79 // pred_check_branch
          %838 = sbr.rel (%p836) target = $region92
        $region91: #{_lambda_.1} parent=79 // pred_region
          %p839 = scmp.lt.s32.totalorder %s47, 1
          %s840 = scalar_select %p839, %s47, 1
          %s841 = smul.addr %s840, 48
          %s842 = smul.addr %s841, 4
          %s843 = scalar_lea.vmem %s6, %s842
        $region92: #{_lambda_.1} parent=79 // pred_fallthru
          _
        // Predicated region
        $region93: #{_lambda_.1} parent=79 // pred_check
          %p844 = pneg %p238
        $region94: #{_lambda_.1} parent=79 // pred_check_branch
          %846 = sbr.rel (%p844) target = $region96
        $region95: #{_lambda_.1} parent=79 // pred_region
          %p847 = scmp.lt.s32.totalorder %s47, 1
          %s848 = scalar_select %p847, %s47, 1
          %s849 = smul.addr %s848, 16
          %s850 = smul.addr %s849, 4
          %s851 = scalar_lea.vmem %s7, %s850
        $region96: #{_lambda_.1} parent=79 // pred_fallthru
          _
        // Predicated region
        $region97: #{_lambda_.1} parent=79 // pred_check
          %p852 = pneg %p264
        $region98: #{_lambda_.1} parent=79 // pred_check_branch
          %854 = sbr.rel (%p852) target = $region100
        $region99: #{_lambda_.1} parent=79 // pred_region
          %p855 = scmp.lt.s32.totalorder %s47, 1
          %s856 = scalar_select %p855, %s47, 1
          %s857 = scalar_lea.vmem %s8, %s856
        $region100: #{_lambda_.1} parent=79 // pred_fallthru
          _
        // Predicated region
        $region101: #{_lambda_.1} parent=79 // pred_check
          %p858 = pneg %p290
        $region102: #{_lambda_.1} parent=79 // pred_check_branch
          %860 = sbr.rel (%p858) target = $region104
        $region103: #{_lambda_.1} parent=79 // pred_region
          %p861 = scmp.lt.s32.totalorder %s47, 1
          %s862 = scalar_select %p861, %s47, 1
          %s863 = scalar_lea.vmem %s9, %s862
        $region104: #{_lambda_.1} parent=79 // pred_fallthru
          _
        // Predicated region
        $region105: #{_lambda_.1} parent=79 // pred_check
          %p864 = pneg %p316
        $region106: #{_lambda_.1} parent=79 // pred_check_branch
          %866 = sbr.rel (%p864) target = $region108
        $region107: #{_lambda_.1} parent=79 // pred_region
          %p867 = scmp.lt.s32.totalorder %s47, 1
          %s868 = scalar_select %p867, %s47, 1
          %s869 = scalar_lea.vmem %s10, %s868
        $region108: #{_lambda_.1} parent=79 // pred_fallthru
          _
        // Predicated region
        $region109: #{_lambda_.1} parent=79 // pred_check
          %p870 = pneg %p342
        $region110: #{_lambda_.1} parent=79 // pred_check_branch
          %872 = sbr.rel (%p870) target = $region112
        $region111: #{_lambda_.1} parent=79 // pred_region
          %p873 = scmp.lt.s32.totalorder %s47, 1
          %s874 = scalar_select %p873, %s47, 1
          %s875 = smul.addr %s874, 32
          %s876 = smul.addr %s875, 4
          %s877 = scalar_lea.vmem %s11, %s876
        $region112: #{_lambda_.1} parent=79 // pred_fallthru
          _
        // Predicated region
        $region113: #{_lambda_.1} parent=79 // pred_check
          %p878 = pneg %p368
        $region114: #{_lambda_.1} parent=79 // pred_check_branch
          %880 = sbr.rel (%p878) target = $region116
        $region115: #{_lambda_.1} parent=79 // pred_region
          %p881 = scmp.lt.s32.totalorder %s47, 1
          %s882 = scalar_select %p881, %s47, 1
          %s883 = smul.addr %s882, 2
          %s884 = scalar_lea.vmem %s12, %s883
        $region116: #{_lambda_.1} parent=79 // pred_fallthru
          _
        // Predicated region
        $region117: #{_lambda_.1} parent=79 // pred_check
          %p885 = pneg %p394
        $region118: #{_lambda_.1} parent=79 // pred_check_branch
          %887 = sbr.rel (%p885) target = $region120
        $region119: #{_lambda_.1} parent=79 // pred_region
          %p888 = scmp.lt.s32.totalorder %s47, 1
          %s889 = scalar_select %p888, %s47, 1
          %s890 = smul.addr %s889, 32
          %s891 = smul.addr %s890, 4
          %s892 = scalar_lea.vmem %s13, %s891
        $region120: #{_lambda_.1} parent=79 // pred_fallthru
          _
        // Predicated region
        $region121: #{_lambda_.1} parent=79 // pred_check
          %p893 = pneg %p420
        $region122: #{_lambda_.1} parent=79 // pred_check_branch
          %895 = sbr.rel (%p893) target = $region124
        $region123: #{_lambda_.1} parent=79 // pred_region
          %p896 = scmp.lt.s32.totalorder %s47, 1
          %s897 = scalar_select %p896, %s47, 1
          %s898 = scalar_lea.vmem %s14, %s897
        $region124: #{_lambda_.1} parent=79 // pred_fallthru
          _
      $region80: #{_lambda_.1} parent=5 // pred_fallthru
        _
      %p899 = scmp.le.s32.totalorder 1, %s39
      %p900 = scmp.lt.s32.totalorder %s39, 3
      %p901 = pnand %p899, %p900
      %p902 = pneg %p901
      // Predicated region
      $region125: #{_lambda_.1} parent=5 // pred_check
        _
      $region126: #{_lambda_.1} parent=5 // pred_check_branch
        %904 = sbr.rel (%p901) target = $region128
      $region127: #{_lambda_.1} parent=5 // pred_region
        %s905 = ssub.s32 %s39, 1
        // Predicated region
        $region129: #{_lambda_.1} parent=127 // pred_check
          %p906 = pneg %p489
        $region130: #{_lambda_.1} parent=127 // pred_check_branch
          %908 = sbr.rel (%p906) target = $region132
        $region131: #{_lambda_.1} parent=127 // pred_region
          %909 = dma.done [#allocation5], 1024
        $region132: #{_lambda_.1} parent=127 // pred_fallthru
          _
        // Predicated region
        $region133: #{_lambda_.1} parent=127 // pred_check
          %p910 = pneg %p615
        $region134: #{_lambda_.1} parent=127 // pred_check_branch
          %912 = sbr.rel (%p910) target = $region136
        $region135: #{_lambda_.1} parent=127 // pred_region
          %913 = dma.done [#allocation7], 2048
        $region136: #{_lambda_.1} parent=127 // pred_fallthru
          _
        %s914 = smul.u32 16, %s48
        %p915 = scmp.lt.s32.totalorder %s914, 15
        %s916 = scalar_select %p915, %s914, 15
        %s917 = smul.addr %s916, 2
        %s918 = smul.addr %s917, 4
        %s919 = scalar_lea.vmem %s0, %s918
        %p920 = pneg %p77
        %p921 = pneg %p74
        %p922 = pneg %p98
        %p923 = pneg %p95
        %p924 = pneg %p119
        %p925 = pneg %p116
        %p926 = pneg %p140
        %p927 = pneg %p137
        %p928 = scmp.lt.s32.totalorder %s49, 1
        %s929 = scalar_select %p928, %s49, 1
        %s930 = scalar_lea.vmem %s4, %s929
        %p931 = pneg %p166
        %p932 = pneg %p163
        %p933 = scmp.lt.s32.totalorder %s49, 1
        %s934 = scalar_select %p933, %s49, 1
        %s935 = scalar_lea.vmem %s5, %s934
        %p936 = pneg %p192
        %p937 = pneg %p189
        %p938 = scmp.lt.s32.totalorder %s49, 1
        %s939 = scalar_select %p938, %s49, 1
        %s940 = smul.addr %s939, 48
        %s941 = smul.addr %s940, 4
        %s942 = scalar_lea.vmem %s6, %s941
        %p943 = pneg %p218
        %p944 = pneg %p215
        %p945 = scmp.lt.s32.totalorder %s49, 1
        %s946 = scalar_select %p945, %s49, 1
        %s947 = smul.addr %s946, 16
        %s948 = smul.addr %s947, 4
        %s949 = scalar_lea.vmem %s7, %s948
        %p950 = pneg %p244
        %p951 = pneg %p241
        %p952 = scmp.lt.s32.totalorder %s49, 1
        %s953 = scalar_select %p952, %s49, 1
        %s954 = scalar_lea.vmem %s8, %s953
        %p955 = pneg %p270
        %p956 = pneg %p267
        %p957 = scmp.lt.s32.totalorder %s49, 1
        %s958 = scalar_select %p957, %s49, 1
        %s959 = scalar_lea.vmem %s9, %s958
        %p960 = pneg %p296
        %p961 = pneg %p293
        %p962 = scmp.lt.s32.totalorder %s49, 1
        %s963 = scalar_select %p962, %s49, 1
        %s964 = scalar_lea.vmem %s10, %s963
        %p965 = pneg %p322
        %p966 = pneg %p319
        %p967 = scmp.lt.s32.totalorder %s49, 1
        %s968 = scalar_select %p967, %s49, 1
        %s969 = smul.addr %s968, 32
        %s970 = smul.addr %s969, 4
        %s971 = scalar_lea.vmem %s11, %s970
        %p972 = pneg %p348
        %p973 = pneg %p345
        %p974 = scmp.lt.s32.totalorder %s49, 1
        %s975 = scalar_select %p974, %s49, 1
        %s976 = smul.addr %s975, 2
        %s977 = scalar_lea.vmem %s12, %s976
        %p978 = pneg %p374
        %p979 = pneg %p371
        %p980 = scmp.lt.s32.totalorder %s49, 1
        %s981 = scalar_select %p980, %s49, 1
        %s982 = smul.addr %s981, 32
        %s983 = smul.addr %s982, 4
        %s984 = scalar_lea.vmem %s13, %s983
        %p985 = pneg %p400
        %p986 = pneg %p397
        %p987 = scmp.lt.s32.totalorder %s49, 1
        %s988 = scalar_select %p987, %s49, 1
        %s989 = scalar_lea.vmem %s14, %s988
        %p990 = pneg %p426
        %p991 = pneg %p423
        %p992 = pneg %p447
        %p993 = pneg %p444
        %p994 = pneg %p468
        %p995 = pneg %p465
        %p996 = pneg %p489
        %p997 = pneg %p486
        %p998 = pneg %p510
        %p999 = pneg %p507
        %p1000 = pneg %p531
        %p1001 = pneg %p528
        %p1002 = pneg %p552
        %p1003 = pneg %p549
        %p1004 = pneg %p573
        %p1005 = pneg %p570
        %p1006 = pneg %p594
        %p1007 = pneg %p591
        %p1008 = pneg %p615
        %p1009 = pneg %p612
        %p1010 = pneg %p636
        %p1011 = pneg %p633
        %p1012 = pneg %p657
        %p1013 = pneg %p654
        %p1014 = pneg %p678
        %p1015 = pneg %p675
        %p1016 = pneg %p704
        %p1017 = pneg %p701
        %s1018 = smul.u32 16, %s48
        %p1019 = scmp.lt.s32.totalorder %s1018, 15
        %s1020 = scalar_select %p1019, %s1018, 15
        %s1021 = smul.addr %s1020, 8
        %s1022 = scalar_lea.vmem %s27, %s1021
        %p1023 = pneg %p730
        %p1024 = pneg %p727
        %p1025 = scmp.lt.s32.totalorder %s48, 0
        %s1026 = scalar_select %p1025, %s48, 0
        %s1027 = scalar_lea.vmem %s28, %s1026
        %s1028 = smul.u32 16, %s48
        %p1029 = scmp.lt.s32.totalorder %s1028, 15
        %s1030 = scalar_select %p1029, %s1028, 15
        %s1031 = smul.addr %s1030, 2
        %s1032 = smul.addr %s1031, 4
        %s1033 = scalar_lea.vmem %s0, %s1032
        %s1034 = smul.u32 16, %s48
        %p1035 = scmp.lt.s32.totalorder %s49, 1
        %s1036 = scalar_select %p1035, %s49, 1
        %s1037 = scalar_lea.vmem %s4, %s1036
        %p1038 = scmp.lt.s32.totalorder %s49, 1
        %s1039 = scalar_select %p1038, %s49, 1
        %s1040 = scalar_lea.vmem %s5, %s1039
        %p1041 = scmp.lt.s32.totalorder %s49, 1
        %s1042 = scalar_select %p1041, %s49, 1
        %s1043 = smul.addr %s1042, 48
        %s1044 = smul.addr %s1043, 4
        %s1045 = scalar_lea.vmem %s6, %s1044
        %p1046 = scmp.lt.s32.totalorder %s49, 1
        %s1047 = scalar_select %p1046, %s49, 1
        %s1048 = smul.addr %s1047, 16
        %s1049 = smul.addr %s1048, 4
        %s1050 = scalar_lea.vmem %s7, %s1049
        %p1051 = scmp.lt.s32.totalorder %s49, 1
        %s1052 = scalar_select %p1051, %s49, 1
        %s1053 = scalar_lea.vmem %s8, %s1052
        %p1054 = scmp.lt.s32.totalorder %s49, 1
        %s1055 = scalar_select %p1054, %s49, 1
        %s1056 = scalar_lea.vmem %s9, %s1055
        %p1057 = scmp.lt.s32.totalorder %s49, 1
        %s1058 = scalar_select %p1057, %s49, 1
        %s1059 = scalar_lea.vmem %s10, %s1058
        %p1060 = scmp.lt.s32.totalorder %s49, 1
        %s1061 = scalar_select %p1060, %s49, 1
        %s1062 = smul.addr %s1061, 32
        %s1063 = smul.addr %s1062, 4
        %s1064 = scalar_lea.vmem %s11, %s1063
        %p1065 = scmp.lt.s32.totalorder %s49, 1
        %s1066 = scalar_select %p1065, %s49, 1
        %s1067 = smul.addr %s1066, 2
        %s1068 = scalar_lea.vmem %s12, %s1067
        %p1069 = scmp.lt.s32.totalorder %s49, 1
        %s1070 = scalar_select %p1069, %s49, 1
        %s1071 = smul.addr %s1070, 32
        %s1072 = smul.addr %s1071, 4
        %s1073 = scalar_lea.vmem %s13, %s1072
        %p1074 = scmp.lt.s32.totalorder %s49, 1
        %s1075 = scalar_select %p1074, %s49, 1
        %s1076 = scalar_lea.vmem %s14, %s1075
        %s1077 = smul.u32 16, %s48
        %p1078 = scmp.lt.s32.totalorder %s1077, 15
        %s1079 = scalar_select %p1078, %s1077, 15
        %s1080 = smul.addr %s1079, 8
        %s1081 = scalar_lea.vmem %s27, %s1080
        %s1082 = smul.u32 16, %s48
        %p1083 = scmp.lt.s32.totalorder %s48, 0
        %s1084 = scalar_select %p1083, %s48, 0
        %s1085 = scalar_lea.vmem %s28, %s1084
        %p1087 = scmp.eq.s32.totalorder %s49, 0
        // Predicated region
        $region137: #{_lambda_.1} parent=127 // pred_check
          %p1088 = pneg %p1087
        $region138: #{_lambda_.1} parent=127 // pred_check_branch
          %1090 = sbr.rel (%p1088) target = $region140
        $region139: #{_lambda_.1} parent=127 // pred_region
          %v1091 = vld [vmem:[%s1033] sm:$0xff]
          %v1092 = vld [vmem:[%s1033 + $0x8] sm:$0xff]
          %v1093 = vld [vmem:[%s1033 + $0x10] sm:$0xff]
          %v1094 = vld [vmem:[%s1033 + $0x18] sm:$0xff]
          %v1095 = vld [vmem:[%s1033 + $0x20] sm:$0xff]
          %v1096 = vld [vmem:[%s1033 + $0x28] sm:$0xff]
          %v1097 = vld [vmem:[%s1033 + $0x30] sm:$0xff]
          %v1098 = vld [vmem:[%s1033 + $0x38] sm:$0xff]
          %v1099 = vld [vmem:[%s1033 + $0x40] sm:$0xff]
          %v1100 = vld [vmem:[%s1033 + $0x48] sm:$0xff]
          %v1101 = vld [vmem:[%s1033 + $0x50] sm:$0xff]
          %v1102 = vld [vmem:[%s1033 + $0x58] sm:$0xff]
          %v1103 = vld [vmem:[%s1033 + $0x60] sm:$0xff]
          %v1104 = vld [vmem:[%s1033 + $0x68] sm:$0xff]
          %v1105 = vld [vmem:[%s1033 + $0x70] sm:$0xff]
          %v1106 = vld [vmem:[%s1033 + $0x78] sm:$0xff]
          %v1107 = vld [vmem:[%s1] sm:$0xf]
          %v1108 = vld [vmem:[%s1 + $0x4] sm:$0xf]
          %v1109 = vld [vmem:[%s1 + $0x8] sm:$0xf]
          %v1110 = vld [vmem:[%s1 + $0xc] sm:$0xf]
          %v1111 = vld [vmem:[%s1 + $0x10] sm:$0xf]
          %v1112 = vld [vmem:[%s1 + $0x14] sm:$0xf]
          %v1113 = vld [vmem:[%s1 + $0x18] sm:$0xf]
          %v1114 = vld [vmem:[%s1 + $0x1c] sm:$0xf]
          %v1115 = vld [vmem:[%s1 + $0x20] sm:$0xf]
          %v1116 = vld [vmem:[%s1 + $0x24] sm:$0xf]
          %v1117 = vld [vmem:[%s1 + $0x28] sm:$0xf]
          %v1118 = vld [vmem:[%s1 + $0x2c] sm:$0xf]
          %v1119 = vld [vmem:[%s1 + $0x30] sm:$0xf]
          %v1120 = vld [vmem:[%s1 + $0x34] sm:$0xf]
          %v1121 = vld [vmem:[%s1 + $0x38] sm:$0xf]
          %v1122 = vld [vmem:[%s1 + $0x3c] sm:$0xf]
          %v1123 = vld [vmem:[%s1 + $0x40] sm:$0xf]
          %v1124 = vld [vmem:[%s1 + $0x44] sm:$0xf]
          %v1125 = vld [vmem:[%s1 + $0x48] sm:$0xf]
          %v1126 = vld [vmem:[%s1 + $0x4c] sm:$0xf]
          %v1127 = vld [vmem:[%s1 + $0x50] sm:$0xf]
          %v1128 = vld [vmem:[%s1 + $0x54] sm:$0xf]
          %v1129 = vld [vmem:[%s1 + $0x58] sm:$0xf]
          %v1130 = vld [vmem:[%s1 + $0x5c] sm:$0xf]
          %v1131 = vld [vmem:[%s2] sm:$0xff]
          %v1132 = vld [vmem:[%s2 + $0x8] sm:$0xff]
          %v1133 = vld [vmem:[%s2 + $0x10] sm:$0xff]
          %v1134 = vld [vmem:[%s2 + $0x18] sm:$0xff]
          %v1135 = vld [vmem:[%s2 + $0x20] sm:$0xff]
          %v1136 = vld [vmem:[%s2 + $0x28] sm:$0xff]
          %v1137 = vld [vmem:[%s2 + $0x30] sm:$0xff]
          %v1138 = vld [vmem:[%s2 + $0x38] sm:$0xff]
          %v1139 = vld [vmem:[%s2 + $0x40] sm:$0xff]
          %v1140 = vld [vmem:[%s2 + $0x48] sm:$0xff]
          %v1141 = vld [vmem:[%s2 + $0x50] sm:$0xff]
          %v1142 = vld [vmem:[%s2 + $0x58] sm:$0xff]
          %v1143 = vld [vmem:[%s2 + $0x60] sm:$0xff]
          %v1144 = vld [vmem:[%s2 + $0x68] sm:$0xff]
          %v1145 = vld [vmem:[%s2 + $0x70] sm:$0xff]
          %v1146 = vld [vmem:[%s2 + $0x78] sm:$0xff]
          %v1163 = vunpack.c.l.b16 %v1091
          %v1164 = vunpack.c.h.b16 %v1091
          %v1165 = vunpack.c.l.b16 %v1092
          %v1166 = vunpack.c.h.b16 %v1092
          %v1167 = vunpack.c.l.b16 %v1093
          %v1168 = vunpack.c.h.b16 %v1093
          %v1169 = vunpack.c.l.b16 %v1094
          %v1170 = vunpack.c.h.b16 %v1094
          %v1171 = vunpack.c.l.b16 %v1095
          %v1172 = vunpack.c.h.b16 %v1095
          %v1173 = vunpack.c.l.b16 %v1096
          %v1174 = vunpack.c.h.b16 %v1096
          %v1175 = vunpack.c.l.b16 %v1097
          %v1176 = vunpack.c.h.b16 %v1097
          %v1177 = vunpack.c.l.b16 %v1098
          %v1178 = vunpack.c.h.b16 %v1098
          %v1179 = vunpack.c.l.b16 %v1099
          %v1180 = vunpack.c.h.b16 %v1099
          %v1181 = vunpack.c.l.b16 %v1100
          %v1182 = vunpack.c.h.b16 %v1100
          %v1183 = vunpack.c.l.b16 %v1101
          %v1184 = vunpack.c.h.b16 %v1101
          %v1185 = vunpack.c.l.b16 %v1102
          %v1186 = vunpack.c.h.b16 %v1102
          %v1187 = vunpack.c.l.b16 %v1103
          %v1188 = vunpack.c.h.b16 %v1103
          %v1189 = vunpack.c.l.b16 %v1104
          %v1190 = vunpack.c.h.b16 %v1104
          %v1191 = vunpack.c.l.b16 %v1105
          %v1192 = vunpack.c.h.b16 %v1105
          %v1193 = vunpack.c.l.b16 %v1106
          %v1194 = vunpack.c.h.b16 %v1106
          %v1195 = vpack.c.b16 %v1165, %v1163
          %v1196 = vpack.c.b16 %v1166, %v1164
          %v1197 = vpack.c.b16 %v1169, %v1167
          %v1198 = vpack.c.b16 %v1170, %v1168
          %v1199 = vpack.c.b16 %v1173, %v1171
          %v1200 = vpack.c.b16 %v1174, %v1172
          %v1201 = vpack.c.b16 %v1177, %v1175
          %v1202 = vpack.c.b16 %v1178, %v1176
          %v1203 = vpack.c.b16 %v1181, %v1179
          %v1204 = vpack.c.b16 %v1182, %v1180
          %v1205 = vpack.c.b16 %v1185, %v1183
          %v1206 = vpack.c.b16 %v1186, %v1184
          %v1207 = vpack.c.b16 %v1189, %v1187
          %v1208 = vpack.c.b16 %v1190, %v1188
          %v1209 = vpack.c.b16 %v1193, %v1191
          %v1210 = vpack.c.b16 %v1194, %v1192
          %v1243 = vunpack.c.l.b16 %v1107
          %v1244 = vunpack.c.l.b16 %v1108
          %v1245 = vunpack.c.l.b16 %v1109
          %v1246 = vunpack.c.l.b16 %v1110
          %v1247 = vunpack.c.l.b16 %v1111
          %v1248 = vunpack.c.l.b16 %v1112
          %v1249 = vunpack.c.l.b16 %v1113
          %v1250 = vunpack.c.l.b16 %v1114
          %v1251 = vunpack.c.l.b16 %v1115
          %v1252 = vunpack.c.l.b16 %v1116
          %v1253 = vunpack.c.l.b16 %v1117
          %v1254 = vunpack.c.l.b16 %v1118
          %v1255 = vunpack.c.l.b16 %v1119
          %v1256 = vunpack.c.l.b16 %v1120
          %v1257 = vunpack.c.l.b16 %v1121
          %v1258 = vunpack.c.l.b16 %v1122
          %v1259 = vunpack.c.l.b16 %v1123
          %v1260 = vunpack.c.l.b16 %v1124
          %v1261 = vunpack.c.l.b16 %v1125
          %v1262 = vunpack.c.l.b16 %v1126
          %v1263 = vunpack.c.l.b16 %v1127
          %v1264 = vunpack.c.l.b16 %v1128
          %v1265 = vunpack.c.l.b16 %v1129
          %v1266 = vunpack.c.l.b16 %v1130
          %v1267 = vpack.c.b16 %v1244, %v1243
          %v1268 = vpack.c.b16 %v1246, %v1245
          %v1269 = vpack.c.b16 %v1248, %v1247
          %v1270 = vpack.c.b16 %v1250, %v1249
          %v1271 = vpack.c.b16 %v1252, %v1251
          %v1272 = vpack.c.b16 %v1254, %v1253
          %v1273 = vpack.c.b16 %v1256, %v1255
          %v1274 = vpack.c.b16 %v1258, %v1257
          %v1275 = vpack.c.b16 %v1260, %v1259
          %v1276 = vpack.c.b16 %v1262, %v1261
          %v1277 = vpack.c.b16 %v1264, %v1263
          %v1278 = vpack.c.b16 %v1266, %v1265
          %vm1291 = vcmask 523264
          %v1293 = vsel %vm1291, %v1196, 0
          %v1296 = vsel %vm1291, %v1198, 0
          %v1299 = vsel %vm1291, %v1200, 0
          %v1302 = vsel %vm1291, %v1202, 0
          %v1305 = vsel %vm1291, %v1204, 0
          %v1308 = vsel %vm1291, %v1206, 0
          %v1311 = vsel %vm1291, %v1208, 0
          %v1314 = vsel %vm1291, %v1210, 0
          %1316 = vmatprep.subr.bf16.mxu0 0
          %1317 = vmatpush1.bf16.msra.mxu0 %v1274
          %1318 = vmatprep.subr.bf16.mxu0 0
          %1319 = vmatpush1.bf16.msra.mxu0 %v1273
          %1320 = vmatprep.subr.bf16.mxu0 0
          %1321 = vmatpush1.bf16.msra.mxu0 %v1272
          %1322 = vmatprep.subr.bf16.mxu0 0
          %1323 = vmatpush1.bf16.msra.mxu0 %v1271
          %1324 = vmatprep.subr.bf16.mxu0 0
          %1325 = vmatpush1.bf16.msra.mxu0 %v1270
          %1326 = vmatprep.subr.bf16.mxu0 0
          %1327 = vmatpush1.bf16.msra.mxu0 %v1269
          %1328 = vmatprep.subr.bf16.mxu0 0
          %1329 = vmatpush1.bf16.msra.mxu0 %v1268
          %1330 = vmatprep.subr.bf16.mxu0 0
          %1331 = vmatpush1.bf16.msra.mxu0 %v1267
          %1332 = vmatprep.subr.bf16.mxu0 0
          %1333 = vmatpush2.bf16.msra.mxu0 0
          %1334 = vmatprep.subr.bf16.mxu0 0
          %1335 = vmatpush2.bf16.msra.mxu0 0
          %1336 = vmatprep.subr.bf16.mxu0 0
          %1337 = vmatpush2.bf16.msra.mxu0 0
          %1338 = vmatprep.subr.bf16.mxu0 0
          %1339 = vmatpush2.bf16.msra.mxu0 0
          %1340 = vmatprep.subr.bf16.mxu0 0
          %1341 = vmatpush2.bf16.msra.mxu0 %v1278
          %1342 = vmatprep.subr.bf16.mxu0 0
          %1343 = vmatpush2.bf16.msra.mxu0 %v1277
          %1344 = vmatprep.subr.bf16.mxu0 0
          %1345 = vmatpush2.bf16.msra.mxu0 %v1276
          %1346 = vmatprep.subr.bf16.mxu0 0
          %1347 = vmatpush2.bf16.msra.mxu0 %v1275
          %1348 = vmatprep.mubr.bf16.mxu0 %v1293
          %1349 = vmatmul.mubr.bf16.gmra.mxu0 %v1195
          %v1350 = vpop.f32.mrf.mxu0
          %v1351 = vadd.f32 %v1131, %v1350
          %v1352 = vpop.f32.mrf.mxu0
          %v1353 = vpop.f32.mrf.mxu0
          %v1354 = vadd.f32 %v1132, %v1353
          %v1355 = vpop.f32.mrf.mxu0
          %1356 = vmatprep.mubr.bf16.mxu0 %v1296
          %1357 = vmatmul.mubr.bf16.gmra.mxu0 %v1197
          %v1358 = vpop.f32.mrf.mxu0
          %v1359 = vadd.f32 %v1133, %v1358
          %v1360 = vpop.f32.mrf.mxu0
          %v1361 = vpop.f32.mrf.mxu0
          %v1362 = vadd.f32 %v1134, %v1361
          %v1363 = vpop.f32.mrf.mxu0
          %1364 = vmatprep.mubr.bf16.mxu0 %v1299
          %1365 = vmatmul.mubr.bf16.gmra.mxu0 %v1199
          %v1366 = vpop.f32.mrf.mxu0
          %v1367 = vadd.f32 %v1135, %v1366
          %v1368 = vpop.f32.mrf.mxu0
          %v1369 = vpop.f32.mrf.mxu0
          %v1370 = vadd.f32 %v1136, %v1369
          %v1371 = vpop.f32.mrf.mxu0
          %1372 = vmatprep.mubr.bf16.mxu0 %v1302
          %1373 = vmatmul.mubr.bf16.gmra.mxu0 %v1201
          %v1374 = vpop.f32.mrf.mxu0
          %v1375 = vadd.f32 %v1137, %v1374
          %v1376 = vpop.f32.mrf.mxu0
          %v1377 = vpop.f32.mrf.mxu0
          %v1378 = vadd.f32 %v1138, %v1377
          %v1379 = vpop.f32.mrf.mxu0
          %1380 = vmatprep.mubr.bf16.mxu0 %v1305
          %1381 = vmatmul.mubr.bf16.gmra.mxu0 %v1203
          %v1382 = vpop.f32.mrf.mxu0
          %v1383 = vadd.f32 %v1139, %v1382
          %v1384 = vpop.f32.mrf.mxu0
          %v1385 = vpop.f32.mrf.mxu0
          %v1386 = vadd.f32 %v1140, %v1385
          %v1387 = vpop.f32.mrf.mxu0
          %1388 = vmatprep.mubr.bf16.mxu0 %v1308
          %1389 = vmatmul.mubr.bf16.gmra.mxu0 %v1205
          %v1390 = vpop.f32.mrf.mxu0
          %v1391 = vadd.f32 %v1141, %v1390
          %v1392 = vpop.f32.mrf.mxu0
          %v1393 = vpop.f32.mrf.mxu0
          %v1394 = vadd.f32 %v1142, %v1393
          %v1395 = vpop.f32.mrf.mxu0
          %1396 = vmatprep.mubr.bf16.mxu0 %v1311
          %1397 = vmatmul.mubr.bf16.gmra.mxu0 %v1207
          %v1398 = vpop.f32.mrf.mxu0
          %v1399 = vadd.f32 %v1143, %v1398
          %v1400 = vpop.f32.mrf.mxu0
          %v1401 = vpop.f32.mrf.mxu0
          %v1402 = vadd.f32 %v1144, %v1401
          %v1403 = vpop.f32.mrf.mxu0
          %1404 = vmatprep.mubr.bf16.mxu0 %v1314
          %1405 = vmatmul.mubr.bf16.gmra.mxu0 %v1209
          %v1406 = vpop.f32.mrf.mxu0
          %v1407 = vadd.f32 %v1145, %v1406
          %v1408 = vpop.f32.mrf.mxu0
          %v1409 = vpop.f32.mrf.mxu0
          %v1410 = vadd.f32 %v1146, %v1409
          %v1411 = vpop.f32.mrf.mxu0
          %1412 = vdwg.mxu0
          %1413 = vst [vmem:[#allocation2] sm:$0xff] %v1351
          %1414 = vst [vmem:[#allocation2 + $0x8] sm:$0xff] %v1354
          %1415 = vst [vmem:[#allocation2 + $0x10] sm:$0xff] %v1359
          %1416 = vst [vmem:[#allocation2 + $0x18] sm:$0xff] %v1362
          %1417 = vst [vmem:[#allocation2 + $0x20] sm:$0xff] %v1367
          %1418 = vst [vmem:[#allocation2 + $0x28] sm:$0xff] %v1370
          %1419 = vst [vmem:[#allocation2 + $0x30] sm:$0xff] %v1375
          %1420 = vst [vmem:[#allocation2 + $0x38] sm:$0xff] %v1378
          %1421 = vst [vmem:[#allocation2 + $0x40] sm:$0xff] %v1383
          %1422 = vst [vmem:[#allocation2 + $0x48] sm:$0xff] %v1386
          %1423 = vst [vmem:[#allocation2 + $0x50] sm:$0xff] %v1391
          %1424 = vst [vmem:[#allocation2 + $0x58] sm:$0xff] %v1394
          %1425 = vst [vmem:[#allocation2 + $0x60] sm:$0xff] %v1399
          %1426 = vst [vmem:[#allocation2 + $0x68] sm:$0xff] %v1402
          %1427 = vst [vmem:[#allocation2 + $0x70] sm:$0xff] %v1407
          %1428 = vst [vmem:[#allocation2 + $0x78] sm:$0xff] %v1410
        $region140: #{_lambda_.1} parent=127 // pred_fallthru
          _
        %v1429 = vld [vmem:[#allocation2] sm:$0xff]
        %v1430 = vld [vmem:[#allocation2 + $0x8] sm:$0xff]
        %v1431 = vld [vmem:[#allocation2 + $0x10] sm:$0xff]
        %v1432 = vld [vmem:[#allocation2 + $0x18] sm:$0xff]
        %v1433 = vld [vmem:[#allocation2 + $0x20] sm:$0xff]
        %v1434 = vld [vmem:[#allocation2 + $0x28] sm:$0xff]
        %v1435 = vld [vmem:[#allocation2 + $0x30] sm:$0xff]
        %v1436 = vld [vmem:[#allocation2 + $0x38] sm:$0xff]
        %v1437 = vld [vmem:[#allocation2 + $0x40] sm:$0xff]
        %v1438 = vld [vmem:[#allocation2 + $0x48] sm:$0xff]
        %v1439 = vld [vmem:[#allocation2 + $0x50] sm:$0xff]
        %v1440 = vld [vmem:[#allocation2 + $0x58] sm:$0xff]
        %v1441 = vld [vmem:[#allocation2 + $0x60] sm:$0xff]
        %v1442 = vld [vmem:[#allocation2 + $0x68] sm:$0xff]
        %v1443 = vld [vmem:[#allocation2 + $0x70] sm:$0xff]
        %v1444 = vld [vmem:[#allocation2 + $0x78] sm:$0xff]
        %v1445 = vld [vmem:[%s1037] sm:$0x1]
        %v1446 = vld [vmem:[%s1040] sm:$0x1]
        %1447 = vadd.xlane.f32.xlu0 %v1429
        %v1448 = vpop.xlane.xlu0 %1447
        %1449 = vadd.xlane.f32.xlu0 %v1430
        %v1450 = vpop.xlane.xlu0 %1449
        %1451 = vadd.xlane.f32.xlu0 %v1431
        %v1452 = vpop.xlane.xlu0 %1451
        %1453 = vadd.xlane.f32.xlu0 %v1432
        %v1454 = vpop.xlane.xlu0 %1453
        %1455 = vadd.xlane.f32.xlu0 %v1433
        %v1456 = vpop.xlane.xlu0 %1455
        %1457 = vadd.xlane.f32.xlu0 %v1434
        %v1458 = vpop.xlane.xlu0 %1457
        %1459 = vadd.xlane.f32.xlu0 %v1435
        %v1460 = vpop.xlane.xlu0 %1459
        %1461 = vadd.xlane.f32.xlu0 %v1436
        %v1462 = vpop.xlane.xlu0 %1461
        %1463 = vadd.xlane.f32.xlu0 %v1437
        %v1464 = vpop.xlane.xlu0 %1463
        %1465 = vadd.xlane.f32.xlu0 %v1438
        %v1466 = vpop.xlane.xlu0 %1465
        %1467 = vadd.xlane.f32.xlu0 %v1439
        %v1468 = vpop.xlane.xlu0 %1467
        %1469 = vadd.xlane.f32.xlu0 %v1440
        %v1470 = vpop.xlane.xlu0 %1469
        %1471 = vadd.xlane.f32.xlu0 %v1441
        %v1472 = vpop.xlane.xlu0 %1471
        %1473 = vadd.xlane.f32.xlu0 %v1442
        %v1474 = vpop.xlane.xlu0 %1473
        %1475 = vadd.xlane.f32.xlu0 %v1443
        %v1476 = vpop.xlane.xlu0 %1475
        %1477 = vadd.xlane.f32.xlu0 %v1444
        %v1478 = vpop.xlane.xlu0 %1477
        %v1479 = vrcp.pop 128.0
        %v1480 = vmul.f32 %v1448, %v1479
        %v1481 = vmul.f32 %v1450, %v1479
        %v1482 = vmul.f32 %v1452, %v1479
        %v1483 = vmul.f32 %v1454, %v1479
        %v1484 = vmul.f32 %v1456, %v1479
        %v1485 = vmul.f32 %v1458, %v1479
        %v1486 = vmul.f32 %v1460, %v1479
        %v1487 = vmul.f32 %v1462, %v1479
        %v1488 = vmul.f32 %v1464, %v1479
        %v1489 = vmul.f32 %v1466, %v1479
        %v1490 = vmul.f32 %v1468, %v1479
        %v1491 = vmul.f32 %v1470, %v1479
        %v1492 = vmul.f32 %v1472, %v1479
        %v1493 = vmul.f32 %v1474, %v1479
        %v1494 = vmul.f32 %v1476, %v1479
        %v1495 = vmul.f32 %v1478, %v1479
        %v1496 = vsub.f32 %v1429, %v1480
        %v1497 = vsub.f32 %v1430, %v1481
        %v1498 = vsub.f32 %v1431, %v1482
        %v1499 = vsub.f32 %v1432, %v1483
        %v1500 = vsub.f32 %v1433, %v1484
        %v1501 = vsub.f32 %v1434, %v1485
        %v1502 = vsub.f32 %v1435, %v1486
        %v1503 = vsub.f32 %v1436, %v1487
        %v1504 = vsub.f32 %v1437, %v1488
        %v1505 = vsub.f32 %v1438, %v1489
        %v1506 = vsub.f32 %v1439, %v1490
        %v1507 = vsub.f32 %v1440, %v1491
        %v1508 = vsub.f32 %v1441, %v1492
        %v1509 = vsub.f32 %v1442, %v1493
        %v1510 = vsub.f32 %v1443, %v1494
        %v1511 = vsub.f32 %v1444, %v1495
        %v1512 = vmul.f32 %v1496, %v1496
        %v1513 = vmul.f32 %v1497, %v1497
        %v1514 = vmul.f32 %v1498, %v1498
        %v1515 = vmul.f32 %v1499, %v1499
        %v1516 = vmul.f32 %v1500, %v1500
        %v1517 = vmul.f32 %v1501, %v1501
        %v1518 = vmul.f32 %v1502, %v1502
        %v1519 = vmul.f32 %v1503, %v1503
        %v1520 = vmul.f32 %v1504, %v1504
        %v1521 = vmul.f32 %v1505, %v1505
        %v1522 = vmul.f32 %v1506, %v1506
        %v1523 = vmul.f32 %v1507, %v1507
        %v1524 = vmul.f32 %v1508, %v1508
        %v1525 = vmul.f32 %v1509, %v1509
        %v1526 = vmul.f32 %v1510, %v1510
        %v1527 = vmul.f32 %v1511, %v1511
        %1528 = vadd.xlane.f32.xlu0 %v1512
        %v1529 = vpop.xlane.xlu0 %1528
        %1530 = vadd.xlane.f32.xlu0 %v1513
        %v1531 = vpop.xlane.xlu0 %1530
        %1532 = vadd.xlane.f32.xlu0 %v1514
        %v1533 = vpop.xlane.xlu0 %1532
        %1534 = vadd.xlane.f32.xlu0 %v1515
        %v1535 = vpop.xlane.xlu0 %1534
        %1536 = vadd.xlane.f32.xlu0 %v1516
        %v1537 = vpop.xlane.xlu0 %1536
        %1538 = vadd.xlane.f32.xlu0 %v1517
        %v1539 = vpop.xlane.xlu0 %1538
        %1540 = vadd.xlane.f32.xlu0 %v1518
        %v1541 = vpop.xlane.xlu0 %1540
        %1542 = vadd.xlane.f32.xlu0 %v1519
        %v1543 = vpop.xlane.xlu0 %1542
        %1544 = vadd.xlane.f32.xlu0 %v1520
        %v1545 = vpop.xlane.xlu0 %1544
        %1546 = vadd.xlane.f32.xlu0 %v1521
        %v1547 = vpop.xlane.xlu0 %1546
        %1548 = vadd.xlane.f32.xlu0 %v1522
        %v1549 = vpop.xlane.xlu0 %1548
        %1550 = vadd.xlane.f32.xlu0 %v1523
        %v1551 = vpop.xlane.xlu0 %1550
        %1552 = vadd.xlane.f32.xlu0 %v1524
        %v1553 = vpop.xlane.xlu0 %1552
        %1554 = vadd.xlane.f32.xlu0 %v1525
        %v1555 = vpop.xlane.xlu0 %1554
        %1556 = vadd.xlane.f32.xlu0 %v1526
        %v1557 = vpop.xlane.xlu0 %1556
        %1558 = vadd.xlane.f32.xlu0 %v1527
        %v1559 = vpop.xlane.xlu0 %1558
        %v1560 = vmul.f32 %v1529, %v1479
        %v1561 = vmul.f32 %v1531, %v1479
        %v1562 = vmul.f32 %v1533, %v1479
        %v1563 = vmul.f32 %v1535, %v1479
        %v1564 = vmul.f32 %v1537, %v1479
        %v1565 = vmul.f32 %v1539, %v1479
        %v1566 = vmul.f32 %v1541, %v1479
        %v1567 = vmul.f32 %v1543, %v1479
        %v1568 = vmul.f32 %v1545, %v1479
        %v1569 = vmul.f32 %v1547, %v1479
        %v1570 = vmul.f32 %v1549, %v1479
        %v1571 = vmul.f32 %v1551, %v1479
        %v1572 = vmul.f32 %v1553, %v1479
        %v1573 = vmul.f32 %v1555, %v1479
        %v1574 = vmul.f32 %v1557, %v1479
        %v1575 = vmul.f32 %v1559, %v1479
        %v1576 = vadd.f32 %v1560, 1e-05
        %v1577 = vadd.f32 %v1561, 1e-05
        %v1578 = vadd.f32 %v1562, 1e-05
        %v1579 = vadd.f32 %v1563, 1e-05
        %v1580 = vadd.f32 %v1564, 1e-05
        %v1581 = vadd.f32 %v1565, 1e-05
        %v1582 = vadd.f32 %v1566, 1e-05
        %v1583 = vadd.f32 %v1567, 1e-05
        %v1584 = vadd.f32 %v1568, 1e-05
        %v1585 = vadd.f32 %v1569, 1e-05
        %v1586 = vadd.f32 %v1570, 1e-05
        %v1587 = vadd.f32 %v1571, 1e-05
        %v1588 = vadd.f32 %v1572, 1e-05
        %v1589 = vadd.f32 %v1573, 1e-05
        %v1590 = vadd.f32 %v1574, 1e-05
        %v1591 = vadd.f32 %v1575, 1e-05
        %v1592 = vrsqrt.pop %v1576
        %v1593 = vrsqrt.pop %v1577
        %v1594 = vrsqrt.pop %v1578
        %v1595 = vrsqrt.pop %v1579
        %v1596 = vrsqrt.pop %v1580
        %v1597 = vrsqrt.pop %v1581
        %v1598 = vrsqrt.pop %v1582
        %v1599 = vrsqrt.pop %v1583
        %v1600 = vrsqrt.pop %v1584
        %v1601 = vrsqrt.pop %v1585
        %v1602 = vrsqrt.pop %v1586
        %v1603 = vrsqrt.pop %v1587
        %v1604 = vrsqrt.pop %v1588
        %v1605 = vrsqrt.pop %v1589
        %v1606 = vrsqrt.pop %v1590
        %v1607 = vrsqrt.pop %v1591
        %v1608 = vmul.f32 %v1496, %v1592
        %v1609 = vmul.f32 %v1497, %v1593
        %v1610 = vmul.f32 %v1498, %v1594
        %v1611 = vmul.f32 %v1499, %v1595
        %v1612 = vmul.f32 %v1500, %v1596
        %v1613 = vmul.f32 %v1501, %v1597
        %v1614 = vmul.f32 %v1502, %v1598
        %v1615 = vmul.f32 %v1503, %v1599
        %v1616 = vmul.f32 %v1504, %v1600
        %v1617 = vmul.f32 %v1505, %v1601
        %v1618 = vmul.f32 %v1506, %v1602
        %v1619 = vmul.f32 %v1507, %v1603
        %v1620 = vmul.f32 %v1508, %v1604
        %v1621 = vmul.f32 %v1509, %v1605
        %v1622 = vmul.f32 %v1510, %v1606
        %v1623 = vmul.f32 %v1511, %v1607
        %v1625 = vlaneseq
        %v1626 = vshrl.u32 %v1625, 7
        %v1627 = vsub.s32 0, %v1626
        %v1628 = vrot.slane %v1445, %v1627
        %v1630 = vmul.f32 %v1608, %v1628
        %v1631 = vmul.f32 %v1609, %v1628
        %v1632 = vmul.f32 %v1610, %v1628
        %v1633 = vmul.f32 %v1611, %v1628
        %v1634 = vmul.f32 %v1612, %v1628
        %v1635 = vmul.f32 %v1613, %v1628
        %v1636 = vmul.f32 %v1614, %v1628
        %v1637 = vmul.f32 %v1615, %v1628
        %v1638 = vmul.f32 %v1616, %v1628
        %v1639 = vmul.f32 %v1617, %v1628
        %v1640 = vmul.f32 %v1618, %v1628
        %v1641 = vmul.f32 %v1619, %v1628
        %v1642 = vmul.f32 %v1620, %v1628
        %v1643 = vmul.f32 %v1621, %v1628
        %v1644 = vmul.f32 %v1622, %v1628
        %v1645 = vmul.f32 %v1623, %v1628
        %v1647 = vlaneseq
        %v1648 = vshrl.u32 %v1647, 7
        %v1649 = vsub.s32 0, %v1648
        %v1650 = vrot.slane %v1446, %v1649
        %v1652 = vadd.f32 %v1630, %v1650
        %v1653 = vadd.f32 %v1631, %v1650
        %v1654 = vadd.f32 %v1632, %v1650
        %v1655 = vadd.f32 %v1633, %v1650
        %v1656 = vadd.f32 %v1634, %v1650
        %v1657 = vadd.f32 %v1635, %v1650
        %v1658 = vadd.f32 %v1636, %v1650
        %v1659 = vadd.f32 %v1637, %v1650
        %v1660 = vadd.f32 %v1638, %v1650
        %v1661 = vadd.f32 %v1639, %v1650
        %v1662 = vadd.f32 %v1640, %v1650
        %v1663 = vadd.f32 %v1641, %v1650
        %v1664 = vadd.f32 %v1642, %v1650
        %v1665 = vadd.f32 %v1643, %v1650
        %v1666 = vadd.f32 %v1644, %v1650
        %v1667 = vadd.f32 %v1645, %v1650
        %v1668 = vpack.c.bf16 %v1653, %v1652
        %v1669 = vpack.c.bf16 %v1655, %v1654
        %v1670 = vpack.c.bf16 %v1657, %v1656
        %v1671 = vpack.c.bf16 %v1659, %v1658
        %v1672 = vpack.c.bf16 %v1661, %v1660
        %v1673 = vpack.c.bf16 %v1663, %v1662
        %v1674 = vpack.c.bf16 %v1665, %v1664
        %v1675 = vpack.c.bf16 %v1667, %v1666
        %v1676 = vld [vmem:[%s1045] sm:$0xff]
        %v1677 = vld [vmem:[%s1045 + $0x8] sm:$0xf]
        %v1678 = vld [vmem:[%s1045 + $0xc] sm:$0xff]
        %v1679 = vld [vmem:[%s1045 + $0x14] sm:$0xf]
        %v1680 = vld [vmem:[%s1045 + $0x18] sm:$0xff]
        %v1681 = vld [vmem:[%s1045 + $0x20] sm:$0xf]
        %v1682 = vld [vmem:[%s1045 + $0x24] sm:$0xff]
        %v1683 = vld [vmem:[%s1045 + $0x2c] sm:$0xf]
        %v1684 = vld [vmem:[%s1045 + $0x30] sm:$0xff]
        %v1685 = vld [vmem:[%s1045 + $0x38] sm:$0xf]
        %v1686 = vld [vmem:[%s1045 + $0x3c] sm:$0xff]
        %v1687 = vld [vmem:[%s1045 + $0x44] sm:$0xf]
        %v1688 = vld [vmem:[%s1045 + $0x48] sm:$0xff]
        %v1689 = vld [vmem:[%s1045 + $0x50] sm:$0xf]
        %v1690 = vld [vmem:[%s1045 + $0x54] sm:$0xff]
        %v1691 = vld [vmem:[%s1045 + $0x5c] sm:$0xf]
        %v1692 = vld [vmem:[%s1045 + $0x60] sm:$0xff]
        %v1693 = vld [vmem:[%s1045 + $0x68] sm:$0xf]
        %v1694 = vld [vmem:[%s1045 + $0x6c] sm:$0xff]
        %v1695 = vld [vmem:[%s1045 + $0x74] sm:$0xf]
        %v1696 = vld [vmem:[%s1045 + $0x78] sm:$0xff]
        %v1697 = vld [vmem:[%s1045 + $0x80] sm:$0xf]
        %v1698 = vld [vmem:[%s1045 + $0x84] sm:$0xff]
        %v1699 = vld [vmem:[%s1045 + $0x8c] sm:$0xf]
        %v1700 = vld [vmem:[%s1045 + $0x90] sm:$0xff]
        %v1701 = vld [vmem:[%s1045 + $0x98] sm:$0xf]
        %v1702 = vld [vmem:[%s1045 + $0x9c] sm:$0xff]
        %v1703 = vld [vmem:[%s1045 + $0xa4] sm:$0xf]
        %v1704 = vld [vmem:[%s1045 + $0xa8] sm:$0xff]
        %v1705 = vld [vmem:[%s1045 + $0xb0] sm:$0xf]
        %v1706 = vld [vmem:[%s1045 + $0xb4] sm:$0xff]
        %v1707 = vld [vmem:[%s1045 + $0xbc] sm:$0xf]
        %v1740 = vunpack.c.l.b16 %v1676
        %v1741 = vunpack.c.h.b16 %v1676
        %v1742 = vunpack.c.l.b16 %v1677
        %v1743 = vunpack.c.l.b16 %v1678
        %v1744 = vunpack.c.h.b16 %v1678
        %v1745 = vunpack.c.l.b16 %v1679
        %v1746 = vunpack.c.l.b16 %v1680
        %v1747 = vunpack.c.h.b16 %v1680
        %v1748 = vunpack.c.l.b16 %v1681
        %v1749 = vunpack.c.l.b16 %v1682
        %v1750 = vunpack.c.h.b16 %v1682
        %v1751 = vunpack.c.l.b16 %v1683
        %v1752 = vunpack.c.l.b16 %v1684
        %v1753 = vunpack.c.h.b16 %v1684
        %v1754 = vunpack.c.l.b16 %v1685
        %v1755 = vunpack.c.l.b16 %v1686
        %v1756 = vunpack.c.h.b16 %v1686
        %v1757 = vunpack.c.l.b16 %v1687
        %v1758 = vunpack.c.l.b16 %v1688
        %v1759 = vunpack.c.h.b16 %v1688
        %v1760 = vunpack.c.l.b16 %v1689
        %v1761 = vunpack.c.l.b16 %v1690
        %v1762 = vunpack.c.h.b16 %v1690
        %v1763 = vunpack.c.l.b16 %v1691
        %v1764 = vunpack.c.l.b16 %v1692
        %v1765 = vunpack.c.h.b16 %v1692
        %v1766 = vunpack.c.l.b16 %v1693
        %v1767 = vunpack.c.l.b16 %v1694
        %v1768 = vunpack.c.h.b16 %v1694
        %v1769 = vunpack.c.l.b16 %v1695
        %v1770 = vunpack.c.l.b16 %v1696
        %v1771 = vunpack.c.h.b16 %v1696
        %v1772 = vunpack.c.l.b16 %v1697
        %v1773 = vunpack.c.l.b16 %v1698
        %v1774 = vunpack.c.h.b16 %v1698
        %v1775 = vunpack.c.l.b16 %v1699
        %v1776 = vunpack.c.l.b16 %v1700
        %v1777 = vunpack.c.h.b16 %v1700
        %v1778 = vunpack.c.l.b16 %v1701
        %v1779 = vunpack.c.l.b16 %v1702
        %v1780 = vunpack.c.h.b16 %v1702
        %v1781 = vunpack.c.l.b16 %v1703
        %v1782 = vunpack.c.l.b16 %v1704
        %v1783 = vunpack.c.h.b16 %v1704
        %v1784 = vunpack.c.l.b16 %v1705
        %v1785 = vunpack.c.l.b16 %v1706
        %v1786 = vunpack.c.h.b16 %v1706
        %v1787 = vunpack.c.l.b16 %v1707
        %v1788 = vpack.c.b16 %v1743, %v1740
        %v1789 = vpack.c.b16 %v1744, %v1741
        %v1790 = vpack.c.b16 %v1745, %v1742
        %v1791 = vpack.c.b16 %v1749, %v1746
        %v1792 = vpack.c.b16 %v1750, %v1747
        %v1793 = vpack.c.b16 %v1751, %v1748
        %v1794 = vpack.c.b16 %v1755, %v1752
        %v1795 = vpack.c.b16 %v1756, %v1753
        %v1796 = vpack.c.b16 %v1757, %v1754
        %v1797 = vpack.c.b16 %v1761, %v1758
        %v1798 = vpack.c.b16 %v1762, %v1759
        %v1799 = vpack.c.b16 %v1763, %v1760
        %v1800 = vpack.c.b16 %v1767, %v1764
        %v1801 = vpack.c.b16 %v1768, %v1765
        %v1802 = vpack.c.b16 %v1769, %v1766
        %v1803 = vpack.c.b16 %v1773, %v1770
        %v1804 = vpack.c.b16 %v1774, %v1771
        %v1805 = vpack.c.b16 %v1775, %v1772
        %v1806 = vpack.c.b16 %v1779, %v1776
        %v1807 = vpack.c.b16 %v1780, %v1777
        %v1808 = vpack.c.b16 %v1781, %v1778
        %v1809 = vpack.c.b16 %v1785, %v1782
        %v1810 = vpack.c.b16 %v1786, %v1783
        %v1811 = vpack.c.b16 %v1787, %v1784
        %1836 = vmatprep.subr.bf16.mxu0 %v1810
        %1837 = vmatpush1.bf16.msra.mxu0 %v1809
        %1838 = vmatprep.subr.bf16.mxu0 %v1807
        %1839 = vmatpush1.bf16.msra.mxu0 %v1806
        %1840 = vmatprep.subr.bf16.mxu0 %v1804
        %1841 = vmatpush1.bf16.msra.mxu0 %v1803
        %1842 = vmatprep.subr.bf16.mxu0 %v1801
        %1843 = vmatpush1.bf16.msra.mxu0 %v1800
        %1844 = vmatprep.subr.bf16.mxu0 %v1798
        %1845 = vmatpush1.bf16.msra.mxu0 %v1797
        %1846 = vmatprep.subr.bf16.mxu0 %v1795
        %1847 = vmatpush1.bf16.msra.mxu0 %v1794
        %1848 = vmatprep.subr.bf16.mxu0 %v1792
        %1849 = vmatpush1.bf16.msra.mxu0 %v1791
        %1850 = vmatprep.subr.bf16.mxu0 %v1789
        %1851 = vmatpush1.bf16.msra.mxu0 %v1788
        %1852 = vmatprep.subr.bf16.mxu0 0
        %1853 = vmatpush2.bf16.msra.mxu0 0
        %1854 = vmatprep.subr.bf16.mxu0 0
        %1855 = vmatpush2.bf16.msra.mxu0 0
        %1856 = vmatprep.subr.bf16.mxu0 0
        %1857 = vmatpush2.bf16.msra.mxu0 0
        %1858 = vmatprep.subr.bf16.mxu0 0
        %1859 = vmatpush2.bf16.msra.mxu0 0
        %1860 = vmatprep.subr.bf16.mxu0 0
        %1861 = vmatpush2.bf16.msra.mxu0 0
        %1862 = vmatprep.subr.bf16.mxu0 0
        %1863 = vmatpush2.bf16.msra.mxu0 0
        %1864 = vmatprep.subr.bf16.mxu0 0
        %1865 = vmatpush2.bf16.msra.mxu0 0
        %1866 = vmatprep.subr.bf16.mxu0 0
        %1867 = vmatpush2.bf16.msra.mxu0 0
        %1868 = vmatprep.mubr.bf16.mxu0 0
        %1869 = vmatmul.mubr.bf16.gmra.mxu0 %v1668
        %v1870 = vpop.f32.mrf.mxu0
        %v1871 = vadd.f32 0.0, %v1870
        %v1872 = vpop.f32.mrf.mxu0
        %v1873 = vadd.f32 0.0, %v1872
        %v1874 = vpop.f32.mrf.mxu0
        %v1875 = vadd.f32 0.0, %v1874
        %v1876 = vpop.f32.mrf.mxu0
        %v1877 = vadd.f32 0.0, %v1876
        %1878 = vmatprep.mubr.bf16.mxu0 0
        %1879 = vmatmul.mubr.bf16.gmra.mxu0 %v1669
        %v1880 = vpop.f32.mrf.mxu0
        %v1881 = vadd.f32 0.0, %v1880
        %v1882 = vpop.f32.mrf.mxu0
        %v1883 = vadd.f32 0.0, %v1882
        %v1884 = vpop.f32.mrf.mxu0
        %v1885 = vadd.f32 0.0, %v1884
        %v1886 = vpop.f32.mrf.mxu0
        %v1887 = vadd.f32 0.0, %v1886
        %1888 = vmatprep.mubr.bf16.mxu0 0
        %1889 = vmatmul.mubr.bf16.gmra.mxu0 %v1670
        %v1890 = vpop.f32.mrf.mxu0
        %v1891 = vadd.f32 0.0, %v1890
        %v1892 = vpop.f32.mrf.mxu0
        %v1893 = vadd.f32 0.0, %v1892
        %v1894 = vpop.f32.mrf.mxu0
        %v1895 = vadd.f32 0.0, %v1894
        %v1896 = vpop.f32.mrf.mxu0
        %v1897 = vadd.f32 0.0, %v1896
        %1898 = vmatprep.mubr.bf16.mxu0 0
        %1899 = vmatmul.mubr.bf16.gmra.mxu0 %v1671
        %v1900 = vpop.f32.mrf.mxu0
        %v1901 = vadd.f32 0.0, %v1900
        %v1902 = vpop.f32.mrf.mxu0
        %v1903 = vadd.f32 0.0, %v1902
        %v1904 = vpop.f32.mrf.mxu0
        %v1905 = vadd.f32 0.0, %v1904
        %v1906 = vpop.f32.mrf.mxu0
        %v1907 = vadd.f32 0.0, %v1906
        %1908 = vmatprep.mubr.bf16.mxu0 0
        %1909 = vmatmul.mubr.bf16.gmra.mxu0 %v1672
        %v1910 = vpop.f32.mrf.mxu0
        %v1911 = vadd.f32 0.0, %v1910
        %v1912 = vpop.f32.mrf.mxu0
        %v1913 = vadd.f32 0.0, %v1912
        %v1914 = vpop.f32.mrf.mxu0
        %v1915 = vadd.f32 0.0, %v1914
        %v1916 = vpop.f32.mrf.mxu0
        %v1917 = vadd.f32 0.0, %v1916
        %1918 = vmatprep.mubr.bf16.mxu0 0
        %1919 = vmatmul.mubr.bf16.gmra.mxu0 %v1673
        %v1920 = vpop.f32.mrf.mxu0
        %v1921 = vadd.f32 0.0, %v1920
        %v1922 = vpop.f32.mrf.mxu0
        %v1923 = vadd.f32 0.0, %v1922
        %v1924 = vpop.f32.mrf.mxu0
        %v1925 = vadd.f32 0.0, %v1924
        %v1926 = vpop.f32.mrf.mxu0
        %v1927 = vadd.f32 0.0, %v1926
        %1928 = vmatprep.mubr.bf16.mxu0 0
        %1929 = vmatmul.mubr.bf16.gmra.mxu0 %v1674
        %v1930 = vpop.f32.mrf.mxu0
        %v1931 = vadd.f32 0.0, %v1930
        %v1932 = vpop.f32.mrf.mxu0
        %v1933 = vadd.f32 0.0, %v1932
        %v1934 = vpop.f32.mrf.mxu0
        %v1935 = vadd.f32 0.0, %v1934
        %v1936 = vpop.f32.mrf.mxu0
        %v1937 = vadd.f32 0.0, %v1936
        %1938 = vmatprep.mubr.bf16.mxu0 0
        %1939 = vmatmul.mubr.bf16.gmra.mxu0 %v1675
        %v1940 = vpop.f32.mrf.mxu0
        %v1941 = vadd.f32 0.0, %v1940
        %v1942 = vpop.f32.mrf.mxu0
        %v1943 = vadd.f32 0.0, %v1942
        %v1944 = vpop.f32.mrf.mxu0
        %v1945 = vadd.f32 0.0, %v1944
        %v1946 = vpop.f32.mrf.mxu0
        %v1947 = vadd.f32 0.0, %v1946
        %1948 = vdwg.mxu0
        %1949 = vmatprep.subr.bf16.mxu0 0
        %1950 = vmatpush1.bf16.msra.mxu0 %v1811
        %1951 = vmatprep.subr.bf16.mxu0 0
        %1952 = vmatpush1.bf16.msra.mxu0 %v1808
        %1953 = vmatprep.subr.bf16.mxu0 0
        %1954 = vmatpush1.bf16.msra.mxu0 %v1805
        %1955 = vmatprep.subr.bf16.mxu0 0
        %1956 = vmatpush1.bf16.msra.mxu0 %v1802
        %1957 = vmatprep.subr.bf16.mxu0 0
        %1958 = vmatpush1.bf16.msra.mxu0 %v1799
        %1959 = vmatprep.subr.bf16.mxu0 0
        %1960 = vmatpush1.bf16.msra.mxu0 %v1796
        %1961 = vmatprep.subr.bf16.mxu0 0
        %1962 = vmatpush1.bf16.msra.mxu0 %v1793
        %1963 = vmatprep.subr.bf16.mxu0 0
        %1964 = vmatpush1.bf16.msra.mxu0 %v1790
        %1965 = vmatprep.subr.bf16.mxu0 0
        %1966 = vmatpush2.bf16.msra.mxu0 0
        %1967 = vmatprep.subr.bf16.mxu0 0
        %1968 = vmatpush2.bf16.msra.mxu0 0
        %1969 = vmatprep.subr.bf16.mxu0 0
        %1970 = vmatpush2.bf16.msra.mxu0 0
        %1971 = vmatprep.subr.bf16.mxu0 0
        %1972 = vmatpush2.bf16.msra.mxu0 0
        %1973 = vmatprep.subr.bf16.mxu0 0
        %1974 = vmatpush2.bf16.msra.mxu0 0
        %1975 = vmatprep.subr.bf16.mxu0 0
        %1976 = vmatpush2.bf16.msra.mxu0 0
        %1977 = vmatprep.subr.bf16.mxu0 0
        %1978 = vmatpush2.bf16.msra.mxu0 0
        %1979 = vmatprep.subr.bf16.mxu0 0
        %1980 = vmatpush2.bf16.msra.mxu0 0
        %1981 = vmatprep.mubr.bf16.mxu0 0
        %1982 = vmatmul.mubr.bf16.gmra.mxu0 %v1668
        %v1983 = vpop.f32.mrf.mxu0
        %v1984 = vadd.f32 0.0, %v1983
        %v1985 = vpop.f32.mrf.mxu0
        %v1986 = vpop.f32.mrf.mxu0
        %v1987 = vadd.f32 0.0, %v1986
        %v1988 = vpop.f32.mrf.mxu0
        %1989 = vmatprep.mubr.bf16.mxu0 0
        %1990 = vmatmul.mubr.bf16.gmra.mxu0 %v1669
        %v1991 = vpop.f32.mrf.mxu0
        %v1992 = vadd.f32 0.0, %v1991
        %v1993 = vpop.f32.mrf.mxu0
        %v1994 = vpop.f32.mrf.mxu0
        %v1995 = vadd.f32 0.0, %v1994
        %v1996 = vpop.f32.mrf.mxu0
        %1997 = vmatprep.mubr.bf16.mxu0 0
        %1998 = vmatmul.mubr.bf16.gmra.mxu0 %v1670
        %v1999 = vpop.f32.mrf.mxu0
        %v2000 = vadd.f32 0.0, %v1999
        %v2001 = vpop.f32.mrf.mxu0
        %v2002 = vpop.f32.mrf.mxu0
        %v2003 = vadd.f32 0.0, %v2002
        %v2004 = vpop.f32.mrf.mxu0
        %2005 = vmatprep.mubr.bf16.mxu0 0
        %2006 = vmatmul.mubr.bf16.gmra.mxu0 %v1671
        %v2007 = vpop.f32.mrf.mxu0
        %v2008 = vadd.f32 0.0, %v2007
        %v2009 = vpop.f32.mrf.mxu0
        %v2010 = vpop.f32.mrf.mxu0
        %v2011 = vadd.f32 0.0, %v2010
        %v2012 = vpop.f32.mrf.mxu0
        %2013 = vmatprep.mubr.bf16.mxu0 0
        %2014 = vmatmul.mubr.bf16.gmra.mxu0 %v1672
        %v2015 = vpop.f32.mrf.mxu0
        %v2016 = vadd.f32 0.0, %v2015
        %v2017 = vpop.f32.mrf.mxu0
        %v2018 = vpop.f32.mrf.mxu0
        %v2019 = vadd.f32 0.0, %v2018
        %v2020 = vpop.f32.mrf.mxu0
        %2021 = vmatprep.mubr.bf16.mxu0 0
        %2022 = vmatmul.mubr.bf16.gmra.mxu0 %v1673
        %v2023 = vpop.f32.mrf.mxu0
        %v2024 = vadd.f32 0.0, %v2023
        %v2025 = vpop.f32.mrf.mxu0
        %v2026 = vpop.f32.mrf.mxu0
        %v2027 = vadd.f32 0.0, %v2026
        %v2028 = vpop.f32.mrf.mxu0
        %2029 = vmatprep.mubr.bf16.mxu0 0
        %2030 = vmatmul.mubr.bf16.gmra.mxu0 %v1674
        %v2031 = vpop.f32.mrf.mxu0
        %v2032 = vadd.f32 0.0, %v2031
        %v2033 = vpop.f32.mrf.mxu0
        %v2034 = vpop.f32.mrf.mxu0
        %v2035 = vadd.f32 0.0, %v2034
        %v2036 = vpop.f32.mrf.mxu0
        %2037 = vmatprep.mubr.bf16.mxu0 0
        %2038 = vmatmul.mubr.bf16.gmra.mxu0 %v1675
        %v2039 = vpop.f32.mrf.mxu0
        %v2040 = vadd.f32 0.0, %v2039
        %v2041 = vpop.f32.mrf.mxu0
        %v2042 = vpop.f32.mrf.mxu0
        %v2043 = vadd.f32 0.0, %v2042
        %v2044 = vpop.f32.mrf.mxu0
        %2045 = vdwg.mxu0
        %v2046 = vpack.c.bf16 %v1875, %v1871
        %v2047 = vpack.c.bf16 %v1877, %v1873
        %v2048 = vpack.c.bf16 %v1987, %v1984
        %v2049 = vpack.c.bf16 %v1885, %v1881
        %v2050 = vpack.c.bf16 %v1887, %v1883
        %v2051 = vpack.c.bf16 %v1995, %v1992
        %v2052 = vpack.c.bf16 %v1895, %v1891
        %v2053 = vpack.c.bf16 %v1897, %v1893
        %v2054 = vpack.c.bf16 %v2003, %v2000
        %v2055 = vpack.c.bf16 %v1905, %v1901
        %v2056 = vpack.c.bf16 %v1907, %v1903
        %v2057 = vpack.c.bf16 %v2011, %v2008
        %v2058 = vpack.c.bf16 %v1915, %v1911
        %v2059 = vpack.c.bf16 %v1917, %v1913
        %v2060 = vpack.c.bf16 %v2019, %v2016
        %v2061 = vpack.c.bf16 %v1925, %v1921
        %v2062 = vpack.c.bf16 %v1927, %v1923
        %v2063 = vpack.c.bf16 %v2027, %v2024
        %v2064 = vpack.c.bf16 %v1935, %v1931
        %v2065 = vpack.c.bf16 %v1937, %v1933
        %v2066 = vpack.c.bf16 %v2035, %v2032
        %v2067 = vpack.c.bf16 %v1945, %v1941
        %v2068 = vpack.c.bf16 %v1947, %v1943
        %v2069 = vpack.c.bf16 %v2043, %v2040
        %v2070 = vld [vmem:[%s3] sm:$0xff]
        %v2071 = vld [vmem:[%s3 + $0x8] sm:$0xff]
        %v2072 = vld [vmem:[%s3 + $0x10] sm:$0xff]
        %v2073 = vld [vmem:[%s3 + $0x18] sm:$0xff]
        %v2074 = vld [vmem:[%s3 + $0x20] sm:$0xff]
        %v2075 = vld [vmem:[%s3 + $0x28] sm:$0xff]
        %v2076 = vld [vmem:[%s3 + $0x30] sm:$0xff]
        %v2077 = vld [vmem:[%s3 + $0x38] sm:$0xff]
        %v2078 = vld [vmem:[%s3 + $0x40] sm:$0xff]
        %v2079 = vld [vmem:[%s3 + $0x48] sm:$0xff]
        %v2080 = vld [vmem:[%s3 + $0x50] sm:$0xff]
        %v2081 = vld [vmem:[%s3 + $0x58] sm:$0xff]
        %v2082 = vld [vmem:[%s3 + $0x60] sm:$0xff]
        %v2083 = vld [vmem:[%s3 + $0x68] sm:$0xff]
        %v2084 = vld [vmem:[%s3 + $0x70] sm:$0xff]
        %v2085 = vld [vmem:[%s3 + $0x78] sm:$0xff]
        %vm2086 = vcmask 261120
        %v2088 = vsel %vm2086, %v2046, 0
        %v2091 = vsel %vm2086, %v2049, 0
        %v2094 = vsel %vm2086, %v2052, 0
        %v2097 = vsel %vm2086, %v2055, 0
        %v2100 = vsel %vm2086, %v2058, 0
        %v2103 = vsel %vm2086, %v2061, 0
        %v2106 = vsel %vm2086, %v2064, 0
        %v2109 = vsel %vm2086, %v2067, 0
        %v2112 = vsel %vm2086, %v2047, 0
        %v2115 = vsel %vm2086, %v2050, 0
        %v2118 = vsel %vm2086, %v2053, 0
        %v2121 = vsel %vm2086, %v2056, 0
        %v2124 = vsel %vm2086, %v2059, 0
        %v2127 = vsel %vm2086, %v2062, 0
        %v2130 = vsel %vm2086, %v2065, 0
        %v2133 = vsel %vm2086, %v2068, 0
        %2135 = vmatprep.subr.bf16.mxu0 0
        %2136 = vmatpush1.bf16.xpose.msra.mxu0 %v2133
        %2137 = vmatprep.subr.bf16.mxu0 0
        %2138 = vmatpush1.bf16.xpose.msra.mxu0 %v2130
        %2139 = vmatprep.subr.bf16.mxu0 0
        %2140 = vmatpush1.bf16.xpose.msra.mxu0 %v2127
        %2141 = vmatprep.subr.bf16.mxu0 0
        %2142 = vmatpush1.bf16.xpose.msra.mxu0 %v2124
        %2143 = vmatprep.subr.bf16.mxu0 0
        %2144 = vmatpush1.bf16.xpose.msra.mxu0 %v2121
        %2145 = vmatprep.subr.bf16.mxu0 0
        %2146 = vmatpush1.bf16.xpose.msra.mxu0 %v2118
        %2147 = vmatprep.subr.bf16.mxu0 0
        %2148 = vmatpush1.bf16.xpose.msra.mxu0 %v2115
        %2149 = vmatprep.subr.bf16.mxu0 0
        %2150 = vmatpush1.bf16.xpose.msra.mxu0 %v2112
        %2151 = vmatprep.subr.bf16.mxu0 0
        %2152 = vmatpush2.bf16.xpose.msra.mxu0 0
        %2153 = vmatprep.subr.bf16.mxu0 0
        %2154 = vmatpush2.bf16.xpose.msra.mxu0 0
        %2155 = vmatprep.subr.bf16.mxu0 0
        %2156 = vmatpush2.bf16.xpose.msra.mxu0 0
        %2157 = vmatprep.subr.bf16.mxu0 0
        %2158 = vmatpush2.bf16.xpose.msra.mxu0 0
        %2159 = vmatprep.subr.bf16.mxu0 0
        %2160 = vmatpush2.bf16.xpose.msra.mxu0 0
        %2161 = vmatprep.subr.bf16.mxu0 0
        %2162 = vmatpush2.bf16.xpose.msra.mxu0 0
        %2163 = vmatprep.subr.bf16.mxu0 0
        %2164 = vmatpush2.bf16.xpose.msra.mxu0 0
        %2165 = vmatprep.subr.bf16.mxu0 0
        %2166 = vmatpush2.bf16.xpose.msra.mxu0 0
        %2167 = vmatprep.mubr.bf16.mxu0 0
        %2168 = vmatmul.mubr.bf16.gmra.mxu0 %v2088
        %v2169 = vpop.f32.mrf.mxu0
        %v2170 = vadd.f32 %v2070, %v2169
        %v2171 = vpop.f32.mrf.mxu0
        %v2172 = vpop.f32.mrf.mxu0
        %v2173 = vadd.f32 %v2071, %v2172
        %v2174 = vpop.f32.mrf.mxu0
        %2175 = vmatprep.mubr.bf16.mxu0 0
        %2176 = vmatmul.mubr.bf16.gmra.mxu0 %v2091
        %v2177 = vpop.f32.mrf.mxu0
        %v2178 = vadd.f32 %v2072, %v2177
        %v2179 = vpop.f32.mrf.mxu0
        %v2180 = vpop.f32.mrf.mxu0
        %v2181 = vadd.f32 %v2073, %v2180
        %v2182 = vpop.f32.mrf.mxu0
        %2183 = vmatprep.mubr.bf16.mxu0 0
        %2184 = vmatmul.mubr.bf16.gmra.mxu0 %v2094
        %v2185 = vpop.f32.mrf.mxu0
        %v2186 = vadd.f32 %v2074, %v2185
        %v2187 = vpop.f32.mrf.mxu0
        %v2188 = vpop.f32.mrf.mxu0
        %v2189 = vadd.f32 %v2075, %v2188
        %v2190 = vpop.f32.mrf.mxu0
        %2191 = vmatprep.mubr.bf16.mxu0 0
        %2192 = vmatmul.mubr.bf16.gmra.mxu0 %v2097
        %v2193 = vpop.f32.mrf.mxu0
        %v2194 = vadd.f32 %v2076, %v2193
        %v2195 = vpop.f32.mrf.mxu0
        %v2196 = vpop.f32.mrf.mxu0
        %v2197 = vadd.f32 %v2077, %v2196
        %v2198 = vpop.f32.mrf.mxu0
        %2199 = vmatprep.mubr.bf16.mxu0 0
        %2200 = vmatmul.mubr.bf16.gmra.mxu0 %v2100
        %v2201 = vpop.f32.mrf.mxu0
        %v2202 = vadd.f32 %v2078, %v2201
        %v2203 = vpop.f32.mrf.mxu0
        %v2204 = vpop.f32.mrf.mxu0
        %v2205 = vadd.f32 %v2079, %v2204
        %v2206 = vpop.f32.mrf.mxu0
        %2207 = vmatprep.mubr.bf16.mxu0 0
        %2208 = vmatmul.mubr.bf16.gmra.mxu0 %v2103
        %v2209 = vpop.f32.mrf.mxu0
        %v2210 = vadd.f32 %v2080, %v2209
        %v2211 = vpop.f32.mrf.mxu0
        %v2212 = vpop.f32.mrf.mxu0
        %v2213 = vadd.f32 %v2081, %v2212
        %v2214 = vpop.f32.mrf.mxu0
        %2215 = vmatprep.mubr.bf16.mxu0 0
        %2216 = vmatmul.mubr.bf16.gmra.mxu0 %v2106
        %v2217 = vpop.f32.mrf.mxu0
        %v2218 = vadd.f32 %v2082, %v2217
        %v2219 = vpop.f32.mrf.mxu0
        %v2220 = vpop.f32.mrf.mxu0
        %v2221 = vadd.f32 %v2083, %v2220
        %v2222 = vpop.f32.mrf.mxu0
        %2223 = vmatprep.mubr.bf16.mxu0 0
        %2224 = vmatmul.mubr.bf16.gmra.mxu0 %v2109
        %v2225 = vpop.f32.mrf.mxu0
        %v2226 = vadd.f32 %v2084, %v2225
        %v2227 = vpop.f32.mrf.mxu0
        %v2228 = vpop.f32.mrf.mxu0
        %v2229 = vadd.f32 %v2085, %v2228
        %v2230 = vpop.f32.mrf.mxu0
        %2231 = vdwg.mxu0
        %2232 = vmax.xlane.f32.xlu0 %v2170
        %v2233 = vpop.xlane.xlu0 %2232
        %2234 = vmax.xlane.f32.xlu0 %v2173
        %v2235 = vpop.xlane.xlu0 %2234
        %2236 = vmax.xlane.f32.xlu0 %v2178
        %v2237 = vpop.xlane.xlu0 %2236
        %2238 = vmax.xlane.f32.xlu0 %v2181
        %v2239 = vpop.xlane.xlu0 %2238
        %2240 = vmax.xlane.f32.xlu0 %v2186
        %v2241 = vpop.xlane.xlu0 %2240
        %2242 = vmax.xlane.f32.xlu0 %v2189
        %v2243 = vpop.xlane.xlu0 %2242
        %2244 = vmax.xlane.f32.xlu0 %v2194
        %v2245 = vpop.xlane.xlu0 %2244
        %2246 = vmax.xlane.f32.xlu0 %v2197
        %v2247 = vpop.xlane.xlu0 %2246
        %2248 = vmax.xlane.f32.xlu0 %v2202
        %v2249 = vpop.xlane.xlu0 %2248
        %2250 = vmax.xlane.f32.xlu0 %v2205
        %v2251 = vpop.xlane.xlu0 %2250
        %2252 = vmax.xlane.f32.xlu0 %v2210
        %v2253 = vpop.xlane.xlu0 %2252
        %2254 = vmax.xlane.f32.xlu0 %v2213
        %v2255 = vpop.xlane.xlu0 %2254
        %2256 = vmax.xlane.f32.xlu0 %v2218
        %v2257 = vpop.xlane.xlu0 %2256
        %2258 = vmax.xlane.f32.xlu0 %v2221
        %v2259 = vpop.xlane.xlu0 %2258
        %2260 = vmax.xlane.f32.xlu0 %v2226
        %v2261 = vpop.xlane.xlu0 %2260
        %2262 = vmax.xlane.f32.xlu0 %v2229
        %v2263 = vpop.xlane.xlu0 %2262
        %v2264 = vsub.f32 %v2170, %v2233
        %v2265 = vsub.f32 %v2173, %v2235
        %v2266 = vsub.f32 %v2178, %v2237
        %v2267 = vsub.f32 %v2181, %v2239
        %v2268 = vsub.f32 %v2186, %v2241
        %v2269 = vsub.f32 %v2189, %v2243
        %v2270 = vsub.f32 %v2194, %v2245
        %v2271 = vsub.f32 %v2197, %v2247
        %v2272 = vsub.f32 %v2202, %v2249
        %v2273 = vsub.f32 %v2205, %v2251
        %v2274 = vsub.f32 %v2210, %v2253
        %v2275 = vsub.f32 %v2213, %v2255
        %v2276 = vsub.f32 %v2218, %v2257
        %v2277 = vsub.f32 %v2221, %v2259
        %v2278 = vsub.f32 %v2226, %v2261
        %v2279 = vsub.f32 %v2229, %v2263
        %v2280 = vmul.f32 %v2264, 1.442695
        %v2281 = vpow.pop %v2280
        %v2282 = vmul.f32 %v2265, 1.442695
        %v2283 = vpow.pop %v2282
        %v2284 = vmul.f32 %v2266, 1.442695
        %v2285 = vpow.pop %v2284
        %v2286 = vmul.f32 %v2267, 1.442695
        %v2287 = vpow.pop %v2286
        %v2288 = vmul.f32 %v2268, 1.442695
        %v2289 = vpow.pop %v2288
        %v2290 = vmul.f32 %v2269, 1.442695
        %v2291 = vpow.pop %v2290
        %v2292 = vmul.f32 %v2270, 1.442695
        %v2293 = vpow.pop %v2292
        %v2294 = vmul.f32 %v2271, 1.442695
        %v2295 = vpow.pop %v2294
        %v2296 = vmul.f32 %v2272, 1.442695
        %v2297 = vpow.pop %v2296
        %v2298 = vmul.f32 %v2273, 1.442695
        %v2299 = vpow.pop %v2298
        %v2300 = vmul.f32 %v2274, 1.442695
        %v2301 = vpow.pop %v2300
        %v2302 = vmul.f32 %v2275, 1.442695
        %v2303 = vpow.pop %v2302
        %v2304 = vmul.f32 %v2276, 1.442695
        %v2305 = vpow.pop %v2304
        %v2306 = vmul.f32 %v2277, 1.442695
        %v2307 = vpow.pop %v2306
        %v2308 = vmul.f32 %v2278, 1.442695
        %v2309 = vpow.pop %v2308
        %v2310 = vmul.f32 %v2279, 1.442695
        %v2311 = vpow.pop %v2310
        %2312 = vadd.xlane.f32.xlu0 %v2281
        %v2313 = vpop.xlane.xlu0 %2312
        %2314 = vadd.xlane.f32.xlu0 %v2283
        %v2315 = vpop.xlane.xlu0 %2314
        %2316 = vadd.xlane.f32.xlu0 %v2285
        %v2317 = vpop.xlane.xlu0 %2316
        %2318 = vadd.xlane.f32.xlu0 %v2287
        %v2319 = vpop.xlane.xlu0 %2318
        %2320 = vadd.xlane.f32.xlu0 %v2289
        %v2321 = vpop.xlane.xlu0 %2320
        %2322 = vadd.xlane.f32.xlu0 %v2291
        %v2323 = vpop.xlane.xlu0 %2322
        %2324 = vadd.xlane.f32.xlu0 %v2293
        %v2325 = vpop.xlane.xlu0 %2324
        %2326 = vadd.xlane.f32.xlu0 %v2295
        %v2327 = vpop.xlane.xlu0 %2326
        %2328 = vadd.xlane.f32.xlu0 %v2297
        %v2329 = vpop.xlane.xlu0 %2328
        %2330 = vadd.xlane.f32.xlu0 %v2299
        %v2331 = vpop.xlane.xlu0 %2330
        %2332 = vadd.xlane.f32.xlu0 %v2301
        %v2333 = vpop.xlane.xlu0 %2332
        %2334 = vadd.xlane.f32.xlu0 %v2303
        %v2335 = vpop.xlane.xlu0 %2334
        %2336 = vadd.xlane.f32.xlu0 %v2305
        %v2337 = vpop.xlane.xlu0 %2336
        %2338 = vadd.xlane.f32.xlu0 %v2307
        %v2339 = vpop.xlane.xlu0 %2338
        %2340 = vadd.xlane.f32.xlu0 %v2309
        %v2341 = vpop.xlane.xlu0 %2340
        %2342 = vadd.xlane.f32.xlu0 %v2311
        %v2343 = vpop.xlane.xlu0 %2342
        %v2344 = vrcp.pop %v2313
        %v2345 = vrcp.pop %v2315
        %v2346 = vrcp.pop %v2317
        %v2347 = vrcp.pop %v2319
        %v2348 = vrcp.pop %v2321
        %v2349 = vrcp.pop %v2323
        %v2350 = vrcp.pop %v2325
        %v2351 = vrcp.pop %v2327
        %v2352 = vrcp.pop %v2329
        %v2353 = vrcp.pop %v2331
        %v2354 = vrcp.pop %v2333
        %v2355 = vrcp.pop %v2335
        %v2356 = vrcp.pop %v2337
        %v2357 = vrcp.pop %v2339
        %v2358 = vrcp.pop %v2341
        %v2359 = vrcp.pop %v2343
        %v2360 = vmul.f32 %v2281, %v2344
        %v2361 = vmul.f32 %v2283, %v2345
        %v2362 = vmul.f32 %v2285, %v2346
        %v2363 = vmul.f32 %v2287, %v2347
        %v2364 = vmul.f32 %v2289, %v2348
        %v2365 = vmul.f32 %v2291, %v2349
        %v2366 = vmul.f32 %v2293, %v2350
        %v2367 = vmul.f32 %v2295, %v2351
        %v2368 = vmul.f32 %v2297, %v2352
        %v2369 = vmul.f32 %v2299, %v2353
        %v2370 = vmul.f32 %v2301, %v2354
        %v2371 = vmul.f32 %v2303, %v2355
        %v2372 = vmul.f32 %v2305, %v2356
        %v2373 = vmul.f32 %v2307, %v2357
        %v2374 = vmul.f32 %v2309, %v2358
        %v2375 = vmul.f32 %v2311, %v2359
        %v2376 = vpack.c.bf16 %v2361, %v2360
        %v2377 = vpack.c.bf16 %v2363, %v2362
        %v2378 = vpack.c.bf16 %v2365, %v2364
        %v2379 = vpack.c.bf16 %v2367, %v2366
        %v2380 = vpack.c.bf16 %v2369, %v2368
        %v2381 = vpack.c.bf16 %v2371, %v2370
        %v2382 = vpack.c.bf16 %v2373, %v2372
        %v2383 = vpack.c.bf16 %v2375, %v2374
        %2384 = vmatprep.subr.bf16.mxu0 0
        %2385 = vmatpush1.bf16.msra.mxu0 %v2069
        %2386 = vmatprep.subr.bf16.mxu0 0
        %2387 = vmatpush1.bf16.msra.mxu0 %v2066
        %2388 = vmatprep.subr.bf16.mxu0 0
        %2389 = vmatpush1.bf16.msra.mxu0 %v2063
        %2390 = vmatprep.subr.bf16.mxu0 0
        %2391 = vmatpush1.bf16.msra.mxu0 %v2060
        %2392 = vmatprep.subr.bf16.mxu0 0
        %2393 = vmatpush1.bf16.msra.mxu0 %v2057
        %2394 = vmatprep.subr.bf16.mxu0 0
        %2395 = vmatpush1.bf16.msra.mxu0 %v2054
        %2396 = vmatprep.subr.bf16.mxu0 0
        %2397 = vmatpush1.bf16.msra.mxu0 %v2051
        %2398 = vmatprep.subr.bf16.mxu0 0
        %2399 = vmatpush1.bf16.msra.mxu0 %v2048
        %2400 = vmatprep.subr.bf16.mxu0 0
        %2401 = vmatpush2.bf16.msra.mxu0 0
        %2402 = vmatprep.subr.bf16.mxu0 0
        %2403 = vmatpush2.bf16.msra.mxu0 0
        %2404 = vmatprep.subr.bf16.mxu0 0
        %2405 = vmatpush2.bf16.msra.mxu0 0
        %2406 = vmatprep.subr.bf16.mxu0 0
        %2407 = vmatpush2.bf16.msra.mxu0 0
        %2408 = vmatprep.subr.bf16.mxu0 0
        %2409 = vmatpush2.bf16.msra.mxu0 0
        %2410 = vmatprep.subr.bf16.mxu0 0
        %2411 = vmatpush2.bf16.msra.mxu0 0
        %2412 = vmatprep.subr.bf16.mxu0 0
        %2413 = vmatpush2.bf16.msra.mxu0 0
        %2414 = vmatprep.subr.bf16.mxu0 0
        %2415 = vmatpush2.bf16.msra.mxu0 0
        %2416 = vmatprep.mubr.bf16.mxu0 0
        %2417 = vmatmul.mubr.bf16.gmra.mxu0 %v2376
        %v2418 = vpop.f32.mrf.mxu0
        %v2419 = vadd.f32 0.0, %v2418
        %v2420 = vpop.f32.mrf.mxu0
        %v2421 = vpop.f32.mrf.mxu0
        %v2422 = vadd.f32 0.0, %v2421
        %v2423 = vpop.f32.mrf.mxu0
        %2424 = vmatprep.mubr.bf16.mxu0 0
        %2425 = vmatmul.mubr.bf16.gmra.mxu0 %v2377
        %v2426 = vpop.f32.mrf.mxu0
        %v2427 = vadd.f32 0.0, %v2426
        %v2428 = vpop.f32.mrf.mxu0
        %v2429 = vpop.f32.mrf.mxu0
        %v2430 = vadd.f32 0.0, %v2429
        %v2431 = vpop.f32.mrf.mxu0
        %2432 = vmatprep.mubr.bf16.mxu0 0
        %2433 = vmatmul.mubr.bf16.gmra.mxu0 %v2378
        %v2434 = vpop.f32.mrf.mxu0
        %v2435 = vadd.f32 0.0, %v2434
        %v2436 = vpop.f32.mrf.mxu0
        %v2437 = vpop.f32.mrf.mxu0
        %v2438 = vadd.f32 0.0, %v2437
        %v2439 = vpop.f32.mrf.mxu0
        %2440 = vmatprep.mubr.bf16.mxu0 0
        %2441 = vmatmul.mubr.bf16.gmra.mxu0 %v2379
        %v2442 = vpop.f32.mrf.mxu0
        %v2443 = vadd.f32 0.0, %v2442
        %v2444 = vpop.f32.mrf.mxu0
        %v2445 = vpop.f32.mrf.mxu0
        %v2446 = vadd.f32 0.0, %v2445
        %v2447 = vpop.f32.mrf.mxu0
        %2448 = vmatprep.mubr.bf16.mxu0 0
        %2449 = vmatmul.mubr.bf16.gmra.mxu0 %v2380
        %v2450 = vpop.f32.mrf.mxu0
        %v2451 = vadd.f32 0.0, %v2450
        %v2452 = vpop.f32.mrf.mxu0
        %v2453 = vpop.f32.mrf.mxu0
        %v2454 = vadd.f32 0.0, %v2453
        %v2455 = vpop.f32.mrf.mxu0
        %2456 = vmatprep.mubr.bf16.mxu0 0
        %2457 = vmatmul.mubr.bf16.gmra.mxu0 %v2381
        %v2458 = vpop.f32.mrf.mxu0
        %v2459 = vadd.f32 0.0, %v2458
        %v2460 = vpop.f32.mrf.mxu0
        %v2461 = vpop.f32.mrf.mxu0
        %v2462 = vadd.f32 0.0, %v2461
        %v2463 = vpop.f32.mrf.mxu0
        %2464 = vmatprep.mubr.bf16.mxu0 0
        %2465 = vmatmul.mubr.bf16.gmra.mxu0 %v2382
        %v2466 = vpop.f32.mrf.mxu0
        %v2467 = vadd.f32 0.0, %v2466
        %v2468 = vpop.f32.mrf.mxu0
        %v2469 = vpop.f32.mrf.mxu0
        %v2470 = vadd.f32 0.0, %v2469
        %v2471 = vpop.f32.mrf.mxu0
        %2472 = vmatprep.mubr.bf16.mxu0 0
        %2473 = vmatmul.mubr.bf16.gmra.mxu0 %v2383
        %v2474 = vpop.f32.mrf.mxu0
        %v2475 = vadd.f32 0.0, %v2474
        %v2476 = vpop.f32.mrf.mxu0
        %v2477 = vpop.f32.mrf.mxu0
        %v2478 = vadd.f32 0.0, %v2477
        %v2479 = vpop.f32.mrf.mxu0
        %2480 = vdwg.mxu0
        %2489 = vrot.lane.b32.xlu0 %v2046, 96
        %v2490 = vpop.permute.xlu0 %2489
        %2491 = vrot.lane.b32.xlu0 %v2049, 96
        %v2492 = vpop.permute.xlu0 %2491
        %2493 = vrot.lane.b32.xlu0 %v2052, 96
        %v2494 = vpop.permute.xlu0 %2493
        %2495 = vrot.lane.b32.xlu0 %v2055, 96
        %v2496 = vpop.permute.xlu0 %2495
        %2497 = vrot.lane.b32.xlu0 %v2058, 96
        %v2498 = vpop.permute.xlu0 %2497
        %2499 = vrot.lane.b32.xlu0 %v2061, 96
        %v2500 = vpop.permute.xlu0 %2499
        %2501 = vrot.lane.b32.xlu0 %v2064, 96
        %v2502 = vpop.permute.xlu0 %2501
        %2503 = vrot.lane.b32.xlu0 %v2067, 96
        %v2504 = vpop.permute.xlu0 %2503
        %2513 = vrot.lane.b32.xlu0 %v2047, 96
        %v2514 = vpop.permute.xlu0 %2513
        %2515 = vrot.lane.b32.xlu0 %v2050, 96
        %v2516 = vpop.permute.xlu0 %2515
        %2517 = vrot.lane.b32.xlu0 %v2053, 96
        %v2518 = vpop.permute.xlu0 %2517
        %2519 = vrot.lane.b32.xlu0 %v2056, 96
        %v2520 = vpop.permute.xlu0 %2519
        %2521 = vrot.lane.b32.xlu0 %v2059, 96
        %v2522 = vpop.permute.xlu0 %2521
        %2523 = vrot.lane.b32.xlu0 %v2062, 96
        %v2524 = vpop.permute.xlu0 %2523
        %2525 = vrot.lane.b32.xlu0 %v2065, 96
        %v2526 = vpop.permute.xlu0 %2525
        %2527 = vrot.lane.b32.xlu0 %v2068, 96
        %v2528 = vpop.permute.xlu0 %2527
        %v2530 = vsel %vm2086, %v2490, 0
        %v2533 = vsel %vm2086, %v2492, 0
        %v2536 = vsel %vm2086, %v2494, 0
        %v2539 = vsel %vm2086, %v2496, 0
        %v2542 = vsel %vm2086, %v2498, 0
        %v2545 = vsel %vm2086, %v2500, 0
        %v2548 = vsel %vm2086, %v2502, 0
        %v2551 = vsel %vm2086, %v2504, 0
        %v2554 = vsel %vm2086, %v2514, 0
        %v2557 = vsel %vm2086, %v2516, 0
        %v2560 = vsel %vm2086, %v2518, 0
        %v2563 = vsel %vm2086, %v2520, 0
        %v2566 = vsel %vm2086, %v2522, 0
        %v2569 = vsel %vm2086, %v2524, 0
        %v2572 = vsel %vm2086, %v2526, 0
        %v2575 = vsel %vm2086, %v2528, 0
        %2577 = vmatprep.subr.bf16.mxu0 0
        %2578 = vmatpush1.bf16.xpose.msra.mxu0 %v2575
        %2579 = vmatprep.subr.bf16.mxu0 0
        %2580 = vmatpush1.bf16.xpose.msra.mxu0 %v2572
        %2581 = vmatprep.subr.bf16.mxu0 0
        %2582 = vmatpush1.bf16.xpose.msra.mxu0 %v2569
        %2583 = vmatprep.subr.bf16.mxu0 0
        %2584 = vmatpush1.bf16.xpose.msra.mxu0 %v2566
        %2585 = vmatprep.subr.bf16.mxu0 0
        %2586 = vmatpush1.bf16.xpose.msra.mxu0 %v2563
        %2587 = vmatprep.subr.bf16.mxu0 0
        %2588 = vmatpush1.bf16.xpose.msra.mxu0 %v2560
        %2589 = vmatprep.subr.bf16.mxu0 0
        %2590 = vmatpush1.bf16.xpose.msra.mxu0 %v2557
        %2591 = vmatprep.subr.bf16.mxu0 0
        %2592 = vmatpush1.bf16.xpose.msra.mxu0 %v2554
        %2593 = vmatprep.subr.bf16.mxu0 0
        %2594 = vmatpush2.bf16.xpose.msra.mxu0 0
        %2595 = vmatprep.subr.bf16.mxu0 0
        %2596 = vmatpush2.bf16.xpose.msra.mxu0 0
        %2597 = vmatprep.subr.bf16.mxu0 0
        %2598 = vmatpush2.bf16.xpose.msra.mxu0 0
        %2599 = vmatprep.subr.bf16.mxu0 0
        %2600 = vmatpush2.bf16.xpose.msra.mxu0 0
        %2601 = vmatprep.subr.bf16.mxu0 0
        %2602 = vmatpush2.bf16.xpose.msra.mxu0 0
        %2603 = vmatprep.subr.bf16.mxu0 0
        %2604 = vmatpush2.bf16.xpose.msra.mxu0 0
        %2605 = vmatprep.subr.bf16.mxu0 0
        %2606 = vmatpush2.bf16.xpose.msra.mxu0 0
        %2607 = vmatprep.subr.bf16.mxu0 0
        %2608 = vmatpush2.bf16.xpose.msra.mxu0 0
        %2609 = vmatprep.mubr.bf16.mxu0 0
        %2610 = vmatmul.mubr.bf16.gmra.mxu0 %v2530
        %v2611 = vpop.f32.mrf.mxu0
        %v2612 = vadd.f32 %v2070, %v2611
        %v2613 = vpop.f32.mrf.mxu0
        %v2614 = vpop.f32.mrf.mxu0
        %v2615 = vadd.f32 %v2071, %v2614
        %v2616 = vpop.f32.mrf.mxu0
        %2617 = vmatprep.mubr.bf16.mxu0 0
        %2618 = vmatmul.mubr.bf16.gmra.mxu0 %v2533
        %v2619 = vpop.f32.mrf.mxu0
        %v2620 = vadd.f32 %v2072, %v2619
        %v2621 = vpop.f32.mrf.mxu0
        %v2622 = vpop.f32.mrf.mxu0
        %v2623 = vadd.f32 %v2073, %v2622
        %v2624 = vpop.f32.mrf.mxu0
        %2625 = vmatprep.mubr.bf16.mxu0 0
        %2626 = vmatmul.mubr.bf16.gmra.mxu0 %v2536
        %v2627 = vpop.f32.mrf.mxu0
        %v2628 = vadd.f32 %v2074, %v2627
        %v2629 = vpop.f32.mrf.mxu0
        %v2630 = vpop.f32.mrf.mxu0
        %v2631 = vadd.f32 %v2075, %v2630
        %v2632 = vpop.f32.mrf.mxu0
        %2633 = vmatprep.mubr.bf16.mxu0 0
        %2634 = vmatmul.mubr.bf16.gmra.mxu0 %v2539
        %v2635 = vpop.f32.mrf.mxu0
        %v2636 = vadd.f32 %v2076, %v2635
        %v2637 = vpop.f32.mrf.mxu0
        %v2638 = vpop.f32.mrf.mxu0
        %v2639 = vadd.f32 %v2077, %v2638
        %v2640 = vpop.f32.mrf.mxu0
        %2641 = vmatprep.mubr.bf16.mxu0 0
        %2642 = vmatmul.mubr.bf16.gmra.mxu0 %v2542
        %v2643 = vpop.f32.mrf.mxu0
        %v2644 = vadd.f32 %v2078, %v2643
        %v2645 = vpop.f32.mrf.mxu0
        %v2646 = vpop.f32.mrf.mxu0
        %v2647 = vadd.f32 %v2079, %v2646
        %v2648 = vpop.f32.mrf.mxu0
        %2649 = vmatprep.mubr.bf16.mxu0 0
        %2650 = vmatmul.mubr.bf16.gmra.mxu0 %v2545
        %v2651 = vpop.f32.mrf.mxu0
        %v2652 = vadd.f32 %v2080, %v2651
        %v2653 = vpop.f32.mrf.mxu0
        %v2654 = vpop.f32.mrf.mxu0
        %v2655 = vadd.f32 %v2081, %v2654
        %v2656 = vpop.f32.mrf.mxu0
        %2657 = vmatprep.mubr.bf16.mxu0 0
        %2658 = vmatmul.mubr.bf16.gmra.mxu0 %v2548
        %v2659 = vpop.f32.mrf.mxu0
        %v2660 = vadd.f32 %v2082, %v2659
        %v2661 = vpop.f32.mrf.mxu0
        %v2662 = vpop.f32.mrf.mxu0
        %v2663 = vadd.f32 %v2083, %v2662
        %v2664 = vpop.f32.mrf.mxu0
        %2665 = vmatprep.mubr.bf16.mxu0 0
        %2666 = vmatmul.mubr.bf16.gmra.mxu0 %v2551
        %v2667 = vpop.f32.mrf.mxu0
        %v2668 = vadd.f32 %v2084, %v2667
        %v2669 = vpop.f32.mrf.mxu0
        %v2670 = vpop.f32.mrf.mxu0
        %v2671 = vadd.f32 %v2085, %v2670
        %v2672 = vpop.f32.mrf.mxu0
        %2673 = vdwg.mxu0
        %2674 = vmax.xlane.f32.xlu0 %v2612
        %v2675 = vpop.xlane.xlu0 %2674
        %2676 = vmax.xlane.f32.xlu0 %v2615
        %v2677 = vpop.xlane.xlu0 %2676
        %2678 = vmax.xlane.f32.xlu0 %v2620
        %v2679 = vpop.xlane.xlu0 %2678
        %2680 = vmax.xlane.f32.xlu0 %v2623
        %v2681 = vpop.xlane.xlu0 %2680
        %2682 = vmax.xlane.f32.xlu0 %v2628
        %v2683 = vpop.xlane.xlu0 %2682
        %2684 = vmax.xlane.f32.xlu0 %v2631
        %v2685 = vpop.xlane.xlu0 %2684
        %2686 = vmax.xlane.f32.xlu0 %v2636
        %v2687 = vpop.xlane.xlu0 %2686
        %2688 = vmax.xlane.f32.xlu0 %v2639
        %v2689 = vpop.xlane.xlu0 %2688
        %2690 = vmax.xlane.f32.xlu0 %v2644
        %v2691 = vpop.xlane.xlu0 %2690
        %2692 = vmax.xlane.f32.xlu0 %v2647
        %v2693 = vpop.xlane.xlu0 %2692
        %2694 = vmax.xlane.f32.xlu0 %v2652
        %v2695 = vpop.xlane.xlu0 %2694
        %2696 = vmax.xlane.f32.xlu0 %v2655
        %v2697 = vpop.xlane.xlu0 %2696
        %2698 = vmax.xlane.f32.xlu0 %v2660
        %v2699 = vpop.xlane.xlu0 %2698
        %2700 = vmax.xlane.f32.xlu0 %v2663
        %v2701 = vpop.xlane.xlu0 %2700
        %2702 = vmax.xlane.f32.xlu0 %v2668
        %v2703 = vpop.xlane.xlu0 %2702
        %2704 = vmax.xlane.f32.xlu0 %v2671
        %v2705 = vpop.xlane.xlu0 %2704
        %v2706 = vsub.f32 %v2612, %v2675
        %v2707 = vsub.f32 %v2615, %v2677
        %v2708 = vsub.f32 %v2620, %v2679
        %v2709 = vsub.f32 %v2623, %v2681
        %v2710 = vsub.f32 %v2628, %v2683
        %v2711 = vsub.f32 %v2631, %v2685
        %v2712 = vsub.f32 %v2636, %v2687
        %v2713 = vsub.f32 %v2639, %v2689
        %v2714 = vsub.f32 %v2644, %v2691
        %v2715 = vsub.f32 %v2647, %v2693
        %v2716 = vsub.f32 %v2652, %v2695
        %v2717 = vsub.f32 %v2655, %v2697
        %v2718 = vsub.f32 %v2660, %v2699
        %v2719 = vsub.f32 %v2663, %v2701
        %v2720 = vsub.f32 %v2668, %v2703
        %v2721 = vsub.f32 %v2671, %v2705
        %v2722 = vmul.f32 %v2706, 1.442695
        %v2723 = vpow.pop %v2722
        %v2724 = vmul.f32 %v2707, 1.442695
        %v2725 = vpow.pop %v2724
        %v2726 = vmul.f32 %v2708, 1.442695
        %v2727 = vpow.pop %v2726
        %v2728 = vmul.f32 %v2709, 1.442695
        %v2729 = vpow.pop %v2728
        %v2730 = vmul.f32 %v2710, 1.442695
        %v2731 = vpow.pop %v2730
        %v2732 = vmul.f32 %v2711, 1.442695
        %v2733 = vpow.pop %v2732
        %v2734 = vmul.f32 %v2712, 1.442695
        %v2735 = vpow.pop %v2734
        %v2736 = vmul.f32 %v2713, 1.442695
        %v2737 = vpow.pop %v2736
        %v2738 = vmul.f32 %v2714, 1.442695
        %v2739 = vpow.pop %v2738
        %v2740 = vmul.f32 %v2715, 1.442695
        %v2741 = vpow.pop %v2740
        %v2742 = vmul.f32 %v2716, 1.442695
        %v2743 = vpow.pop %v2742
        %v2744 = vmul.f32 %v2717, 1.442695
        %v2745 = vpow.pop %v2744
        %v2746 = vmul.f32 %v2718, 1.442695
        %v2747 = vpow.pop %v2746
        %v2748 = vmul.f32 %v2719, 1.442695
        %v2749 = vpow.pop %v2748
        %v2750 = vmul.f32 %v2720, 1.442695
        %v2751 = vpow.pop %v2750
        %v2752 = vmul.f32 %v2721, 1.442695
        %v2753 = vpow.pop %v2752
        %2754 = vadd.xlane.f32.xlu0 %v2723
        %v2755 = vpop.xlane.xlu0 %2754
        %2756 = vadd.xlane.f32.xlu0 %v2725
        %v2757 = vpop.xlane.xlu0 %2756
        %2758 = vadd.xlane.f32.xlu0 %v2727
        %v2759 = vpop.xlane.xlu0 %2758
        %2760 = vadd.xlane.f32.xlu0 %v2729
        %v2761 = vpop.xlane.xlu0 %2760
        %2762 = vadd.xlane.f32.xlu0 %v2731
        %v2763 = vpop.xlane.xlu0 %2762
        %2764 = vadd.xlane.f32.xlu0 %v2733
        %v2765 = vpop.xlane.xlu0 %2764
        %2766 = vadd.xlane.f32.xlu0 %v2735
        %v2767 = vpop.xlane.xlu0 %2766
        %2768 = vadd.xlane.f32.xlu0 %v2737
        %v2769 = vpop.xlane.xlu0 %2768
        %2770 = vadd.xlane.f32.xlu0 %v2739
        %v2771 = vpop.xlane.xlu0 %2770
        %2772 = vadd.xlane.f32.xlu0 %v2741
        %v2773 = vpop.xlane.xlu0 %2772
        %2774 = vadd.xlane.f32.xlu0 %v2743
        %v2775 = vpop.xlane.xlu0 %2774
        %2776 = vadd.xlane.f32.xlu0 %v2745
        %v2777 = vpop.xlane.xlu0 %2776
        %2778 = vadd.xlane.f32.xlu0 %v2747
        %v2779 = vpop.xlane.xlu0 %2778
        %2780 = vadd.xlane.f32.xlu0 %v2749
        %v2781 = vpop.xlane.xlu0 %2780
        %2782 = vadd.xlane.f32.xlu0 %v2751
        %v2783 = vpop.xlane.xlu0 %2782
        %2784 = vadd.xlane.f32.xlu0 %v2753
        %v2785 = vpop.xlane.xlu0 %2784
        %v2786 = vrcp.pop %v2755
        %v2787 = vrcp.pop %v2757
        %v2788 = vrcp.pop %v2759
        %v2789 = vrcp.pop %v2761
        %v2790 = vrcp.pop %v2763
        %v2791 = vrcp.pop %v2765
        %v2792 = vrcp.pop %v2767
        %v2793 = vrcp.pop %v2769
        %v2794 = vrcp.pop %v2771
        %v2795 = vrcp.pop %v2773
        %v2796 = vrcp.pop %v2775
        %v2797 = vrcp.pop %v2777
        %v2798 = vrcp.pop %v2779
        %v2799 = vrcp.pop %v2781
        %v2800 = vrcp.pop %v2783
        %v2801 = vrcp.pop %v2785
        %v2802 = vmul.f32 %v2723, %v2786
        %v2803 = vmul.f32 %v2725, %v2787
        %v2804 = vmul.f32 %v2727, %v2788
        %v2805 = vmul.f32 %v2729, %v2789
        %v2806 = vmul.f32 %v2731, %v2790
        %v2807 = vmul.f32 %v2733, %v2791
        %v2808 = vmul.f32 %v2735, %v2792
        %v2809 = vmul.f32 %v2737, %v2793
        %v2810 = vmul.f32 %v2739, %v2794
        %v2811 = vmul.f32 %v2741, %v2795
        %v2812 = vmul.f32 %v2743, %v2796
        %v2813 = vmul.f32 %v2745, %v2797
        %v2814 = vmul.f32 %v2747, %v2798
        %v2815 = vmul.f32 %v2749, %v2799
        %v2816 = vmul.f32 %v2751, %v2800
        %v2817 = vmul.f32 %v2753, %v2801
        %v2818 = vpack.c.bf16 %v2803, %v2802
        %v2819 = vpack.c.bf16 %v2805, %v2804
        %v2820 = vpack.c.bf16 %v2807, %v2806
        %v2821 = vpack.c.bf16 %v2809, %v2808
        %v2822 = vpack.c.bf16 %v2811, %v2810
        %v2823 = vpack.c.bf16 %v2813, %v2812
        %v2824 = vpack.c.bf16 %v2815, %v2814
        %v2825 = vpack.c.bf16 %v2817, %v2816
        %2834 = vrot.lane.b32.xlu0 %v2048, 96
        %v2835 = vpop.permute.xlu0 %2834
        %2836 = vrot.lane.b32.xlu0 %v2051, 96
        %v2837 = vpop.permute.xlu0 %2836
        %2838 = vrot.lane.b32.xlu0 %v2054, 96
        %v2839 = vpop.permute.xlu0 %2838
        %2840 = vrot.lane.b32.xlu0 %v2057, 96
        %v2841 = vpop.permute.xlu0 %2840
        %2842 = vrot.lane.b32.xlu0 %v2060, 96
        %v2843 = vpop.permute.xlu0 %2842
        %2844 = vrot.lane.b32.xlu0 %v2063, 96
        %v2845 = vpop.permute.xlu0 %2844
        %2846 = vrot.lane.b32.xlu0 %v2066, 96
        %v2847 = vpop.permute.xlu0 %2846
        %2848 = vrot.lane.b32.xlu0 %v2069, 96
        %v2849 = vpop.permute.xlu0 %2848
        %2858 = vmatprep.subr.bf16.mxu0 0
        %2859 = vmatpush1.bf16.msra.mxu0 %v2849
        %2860 = vmatprep.subr.bf16.mxu0 0
        %2861 = vmatpush1.bf16.msra.mxu0 %v2847
        %2862 = vmatprep.subr.bf16.mxu0 0
        %2863 = vmatpush1.bf16.msra.mxu0 %v2845
        %2864 = vmatprep.subr.bf16.mxu0 0
        %2865 = vmatpush1.bf16.msra.mxu0 %v2843
        %2866 = vmatprep.subr.bf16.mxu0 0
        %2867 = vmatpush1.bf16.msra.mxu0 %v2841
        %2868 = vmatprep.subr.bf16.mxu0 0
        %2869 = vmatpush1.bf16.msra.mxu0 %v2839
        %2870 = vmatprep.subr.bf16.mxu0 0
        %2871 = vmatpush1.bf16.msra.mxu0 %v2837
        %2872 = vmatprep.subr.bf16.mxu0 0
        %2873 = vmatpush1.bf16.msra.mxu0 %v2835
        %2874 = vmatprep.subr.bf16.mxu0 0
        %2875 = vmatpush2.bf16.msra.mxu0 0
        %2876 = vmatprep.subr.bf16.mxu0 0
        %2877 = vmatpush2.bf16.msra.mxu0 0
        %2878 = vmatprep.subr.bf16.mxu0 0
        %2879 = vmatpush2.bf16.msra.mxu0 0
        %2880 = vmatprep.subr.bf16.mxu0 0
        %2881 = vmatpush2.bf16.msra.mxu0 0
        %2882 = vmatprep.subr.bf16.mxu0 0
        %2883 = vmatpush2.bf16.msra.mxu0 0
        %2884 = vmatprep.subr.bf16.mxu0 0
        %2885 = vmatpush2.bf16.msra.mxu0 0
        %2886 = vmatprep.subr.bf16.mxu0 0
        %2887 = vmatpush2.bf16.msra.mxu0 0
        %2888 = vmatprep.subr.bf16.mxu0 0
        %2889 = vmatpush2.bf16.msra.mxu0 0
        %2890 = vmatprep.mubr.bf16.mxu0 0
        %2891 = vmatmul.mubr.bf16.gmra.mxu0 %v2818
        %v2892 = vpop.f32.mrf.mxu0
        %v2893 = vadd.f32 0.0, %v2892
        %v2894 = vpop.f32.mrf.mxu0
        %v2895 = vpop.f32.mrf.mxu0
        %v2896 = vadd.f32 0.0, %v2895
        %v2897 = vpop.f32.mrf.mxu0
        %2898 = vmatprep.mubr.bf16.mxu0 0
        %2899 = vmatmul.mubr.bf16.gmra.mxu0 %v2819
        %v2900 = vpop.f32.mrf.mxu0
        %v2901 = vadd.f32 0.0, %v2900
        %v2902 = vpop.f32.mrf.mxu0
        %v2903 = vpop.f32.mrf.mxu0
        %v2904 = vadd.f32 0.0, %v2903
        %v2905 = vpop.f32.mrf.mxu0
        %2906 = vmatprep.mubr.bf16.mxu0 0
        %2907 = vmatmul.mubr.bf16.gmra.mxu0 %v2820
        %v2908 = vpop.f32.mrf.mxu0
        %v2909 = vadd.f32 0.0, %v2908
        %v2910 = vpop.f32.mrf.mxu0
        %v2911 = vpop.f32.mrf.mxu0
        %v2912 = vadd.f32 0.0, %v2911
        %v2913 = vpop.f32.mrf.mxu0
        %2914 = vmatprep.mubr.bf16.mxu0 0
        %2915 = vmatmul.mubr.bf16.gmra.mxu0 %v2821
        %v2916 = vpop.f32.mrf.mxu0
        %v2917 = vadd.f32 0.0, %v2916
        %v2918 = vpop.f32.mrf.mxu0
        %v2919 = vpop.f32.mrf.mxu0
        %v2920 = vadd.f32 0.0, %v2919
        %v2921 = vpop.f32.mrf.mxu0
        %2922 = vmatprep.mubr.bf16.mxu0 0
        %2923 = vmatmul.mubr.bf16.gmra.mxu0 %v2822
        %v2924 = vpop.f32.mrf.mxu0
        %v2925 = vadd.f32 0.0, %v2924
        %v2926 = vpop.f32.mrf.mxu0
        %v2927 = vpop.f32.mrf.mxu0
        %v2928 = vadd.f32 0.0, %v2927
        %v2929 = vpop.f32.mrf.mxu0
        %2930 = vmatprep.mubr.bf16.mxu0 0
        %2931 = vmatmul.mubr.bf16.gmra.mxu0 %v2823
        %v2932 = vpop.f32.mrf.mxu0
        %v2933 = vadd.f32 0.0, %v2932
        %v2934 = vpop.f32.mrf.mxu0
        %v2935 = vpop.f32.mrf.mxu0
        %v2936 = vadd.f32 0.0, %v2935
        %v2937 = vpop.f32.mrf.mxu0
        %2938 = vmatprep.mubr.bf16.mxu0 0
        %2939 = vmatmul.mubr.bf16.gmra.mxu0 %v2824
        %v2940 = vpop.f32.mrf.mxu0
        %v2941 = vadd.f32 0.0, %v2940
        %v2942 = vpop.f32.mrf.mxu0
        %v2943 = vpop.f32.mrf.mxu0
        %v2944 = vadd.f32 0.0, %v2943
        %v2945 = vpop.f32.mrf.mxu0
        %2946 = vmatprep.mubr.bf16.mxu0 0
        %2947 = vmatmul.mubr.bf16.gmra.mxu0 %v2825
        %v2948 = vpop.f32.mrf.mxu0
        %v2949 = vadd.f32 0.0, %v2948
        %v2950 = vpop.f32.mrf.mxu0
        %v2951 = vpop.f32.mrf.mxu0
        %v2952 = vadd.f32 0.0, %v2951
        %v2953 = vpop.f32.mrf.mxu0
        %2954 = vdwg.mxu0
        %2955 = vrot.lane.b32.xlu0 %v2046, 64
        %v2956 = vpop.permute.xlu0 %2955
        %2957 = vrot.lane.b32.xlu0 %v2049, 64
        %v2958 = vpop.permute.xlu0 %2957
        %2959 = vrot.lane.b32.xlu0 %v2052, 64
        %v2960 = vpop.permute.xlu0 %2959
        %2961 = vrot.lane.b32.xlu0 %v2055, 64
        %v2962 = vpop.permute.xlu0 %2961
        %2963 = vrot.lane.b32.xlu0 %v2058, 64
        %v2964 = vpop.permute.xlu0 %2963
        %2965 = vrot.lane.b32.xlu0 %v2061, 64
        %v2966 = vpop.permute.xlu0 %2965
        %2967 = vrot.lane.b32.xlu0 %v2064, 64
        %v2968 = vpop.permute.xlu0 %2967
        %2969 = vrot.lane.b32.xlu0 %v2067, 64
        %v2970 = vpop.permute.xlu0 %2969
        %2971 = vrot.lane.b32.xlu0 %v2047, 64
        %v2972 = vpop.permute.xlu0 %2971
        %2973 = vrot.lane.b32.xlu0 %v2050, 64
        %v2974 = vpop.permute.xlu0 %2973
        %2975 = vrot.lane.b32.xlu0 %v2053, 64
        %v2976 = vpop.permute.xlu0 %2975
        %2977 = vrot.lane.b32.xlu0 %v2056, 64
        %v2978 = vpop.permute.xlu0 %2977
        %2979 = vrot.lane.b32.xlu0 %v2059, 64
        %v2980 = vpop.permute.xlu0 %2979
        %2981 = vrot.lane.b32.xlu0 %v2062, 64
        %v2982 = vpop.permute.xlu0 %2981
        %2983 = vrot.lane.b32.xlu0 %v2065, 64
        %v2984 = vpop.permute.xlu0 %2983
        %2985 = vrot.lane.b32.xlu0 %v2068, 64
        %v2986 = vpop.permute.xlu0 %2985
        %v2988 = vsel %vm2086, %v2956, 0
        %v2991 = vsel %vm2086, %v2958, 0
        %v2994 = vsel %vm2086, %v2960, 0
        %v2997 = vsel %vm2086, %v2962, 0
        %v3000 = vsel %vm2086, %v2964, 0
        %v3003 = vsel %vm2086, %v2966, 0
        %v3006 = vsel %vm2086, %v2968, 0
        %v3009 = vsel %vm2086, %v2970, 0
        %v3012 = vsel %vm2086, %v2972, 0
        %v3015 = vsel %vm2086, %v2974, 0
        %v3018 = vsel %vm2086, %v2976, 0
        %v3021 = vsel %vm2086, %v2978, 0
        %v3024 = vsel %vm2086, %v2980, 0
        %v3027 = vsel %vm2086, %v2982, 0
        %v3030 = vsel %vm2086, %v2984, 0
        %v3033 = vsel %vm2086, %v2986, 0
        %3035 = vmatprep.subr.bf16.mxu0 0
        %3036 = vmatpush1.bf16.xpose.msra.mxu0 %v3033
        %3037 = vmatprep.subr.bf16.mxu0 0
        %3038 = vmatpush1.bf16.xpose.msra.mxu0 %v3030
        %3039 = vmatprep.subr.bf16.mxu0 0
        %3040 = vmatpush1.bf16.xpose.msra.mxu0 %v3027
        %3041 = vmatprep.subr.bf16.mxu0 0
        %3042 = vmatpush1.bf16.xpose.msra.mxu0 %v3024
        %3043 = vmatprep.subr.bf16.mxu0 0
        %3044 = vmatpush1.bf16.xpose.msra.mxu0 %v3021
        %3045 = vmatprep.subr.bf16.mxu0 0
        %3046 = vmatpush1.bf16.xpose.msra.mxu0 %v3018
        %3047 = vmatprep.subr.bf16.mxu0 0
        %3048 = vmatpush1.bf16.xpose.msra.mxu0 %v3015
        %3049 = vmatprep.subr.bf16.mxu0 0
        %3050 = vmatpush1.bf16.xpose.msra.mxu0 %v3012
        %3051 = vmatprep.subr.bf16.mxu0 0
        %3052 = vmatpush2.bf16.xpose.msra.mxu0 0
        %3053 = vmatprep.subr.bf16.mxu0 0
        %3054 = vmatpush2.bf16.xpose.msra.mxu0 0
        %3055 = vmatprep.subr.bf16.mxu0 0
        %3056 = vmatpush2.bf16.xpose.msra.mxu0 0
        %3057 = vmatprep.subr.bf16.mxu0 0
        %3058 = vmatpush2.bf16.xpose.msra.mxu0 0
        %3059 = vmatprep.subr.bf16.mxu0 0
        %3060 = vmatpush2.bf16.xpose.msra.mxu0 0
        %3061 = vmatprep.subr.bf16.mxu0 0
        %3062 = vmatpush2.bf16.xpose.msra.mxu0 0
        %3063 = vmatprep.subr.bf16.mxu0 0
        %3064 = vmatpush2.bf16.xpose.msra.mxu0 0
        %3065 = vmatprep.subr.bf16.mxu0 0
        %3066 = vmatpush2.bf16.xpose.msra.mxu0 0
        %3067 = vmatprep.mubr.bf16.mxu0 0
        %3068 = vmatmul.mubr.bf16.gmra.mxu0 %v2988
        %v3069 = vpop.f32.mrf.mxu0
        %v3070 = vadd.f32 %v2070, %v3069
        %v3071 = vpop.f32.mrf.mxu0
        %v3072 = vpop.f32.mrf.mxu0
        %v3073 = vadd.f32 %v2071, %v3072
        %v3074 = vpop.f32.mrf.mxu0
        %3075 = vmatprep.mubr.bf16.mxu0 0
        %3076 = vmatmul.mubr.bf16.gmra.mxu0 %v2991
        %v3077 = vpop.f32.mrf.mxu0
        %v3078 = vadd.f32 %v2072, %v3077
        %v3079 = vpop.f32.mrf.mxu0
        %v3080 = vpop.f32.mrf.mxu0
        %v3081 = vadd.f32 %v2073, %v3080
        %v3082 = vpop.f32.mrf.mxu0
        %3083 = vmatprep.mubr.bf16.mxu0 0
        %3084 = vmatmul.mubr.bf16.gmra.mxu0 %v2994
        %v3085 = vpop.f32.mrf.mxu0
        %v3086 = vadd.f32 %v2074, %v3085
        %v3087 = vpop.f32.mrf.mxu0
        %v3088 = vpop.f32.mrf.mxu0
        %v3089 = vadd.f32 %v2075, %v3088
        %v3090 = vpop.f32.mrf.mxu0
        %3091 = vmatprep.mubr.bf16.mxu0 0
        %3092 = vmatmul.mubr.bf16.gmra.mxu0 %v2997
        %v3093 = vpop.f32.mrf.mxu0
        %v3094 = vadd.f32 %v2076, %v3093
        %v3095 = vpop.f32.mrf.mxu0
        %v3096 = vpop.f32.mrf.mxu0
        %v3097 = vadd.f32 %v2077, %v3096
        %v3098 = vpop.f32.mrf.mxu0
        %3099 = vmatprep.mubr.bf16.mxu0 0
        %3100 = vmatmul.mubr.bf16.gmra.mxu0 %v3000
        %v3101 = vpop.f32.mrf.mxu0
        %v3102 = vadd.f32 %v2078, %v3101
        %v3103 = vpop.f32.mrf.mxu0
        %v3104 = vpop.f32.mrf.mxu0
        %v3105 = vadd.f32 %v2079, %v3104
        %v3106 = vpop.f32.mrf.mxu0
        %3107 = vmatprep.mubr.bf16.mxu0 0
        %3108 = vmatmul.mubr.bf16.gmra.mxu0 %v3003
        %v3109 = vpop.f32.mrf.mxu0
        %v3110 = vadd.f32 %v2080, %v3109
        %v3111 = vpop.f32.mrf.mxu0
        %v3112 = vpop.f32.mrf.mxu0
        %v3113 = vadd.f32 %v2081, %v3112
        %v3114 = vpop.f32.mrf.mxu0
        %3115 = vmatprep.mubr.bf16.mxu0 0
        %3116 = vmatmul.mubr.bf16.gmra.mxu0 %v3006
        %v3117 = vpop.f32.mrf.mxu0
        %v3118 = vadd.f32 %v2082, %v3117
        %v3119 = vpop.f32.mrf.mxu0
        %v3120 = vpop.f32.mrf.mxu0
        %v3121 = vadd.f32 %v2083, %v3120
        %v3122 = vpop.f32.mrf.mxu0
        %3123 = vmatprep.mubr.bf16.mxu0 0
        %3124 = vmatmul.mubr.bf16.gmra.mxu0 %v3009
        %v3125 = vpop.f32.mrf.mxu0
        %v3126 = vadd.f32 %v2084, %v3125
        %v3127 = vpop.f32.mrf.mxu0
        %v3128 = vpop.f32.mrf.mxu0
        %v3129 = vadd.f32 %v2085, %v3128
        %v3130 = vpop.f32.mrf.mxu0
        %3131 = vdwg.mxu0
        %3132 = vmax.xlane.f32.xlu0 %v3070
        %v3133 = vpop.xlane.xlu0 %3132
        %3134 = vmax.xlane.f32.xlu0 %v3073
        %v3135 = vpop.xlane.xlu0 %3134
        %3136 = vmax.xlane.f32.xlu0 %v3078
        %v3137 = vpop.xlane.xlu0 %3136
        %3138 = vmax.xlane.f32.xlu0 %v3081
        %v3139 = vpop.xlane.xlu0 %3138
        %3140 = vmax.xlane.f32.xlu0 %v3086
        %v3141 = vpop.xlane.xlu0 %3140
        %3142 = vmax.xlane.f32.xlu0 %v3089
        %v3143 = vpop.xlane.xlu0 %3142
        %3144 = vmax.xlane.f32.xlu0 %v3094
        %v3145 = vpop.xlane.xlu0 %3144
        %3146 = vmax.xlane.f32.xlu0 %v3097
        %v3147 = vpop.xlane.xlu0 %3146
        %3148 = vmax.xlane.f32.xlu0 %v3102
        %v3149 = vpop.xlane.xlu0 %3148
        %3150 = vmax.xlane.f32.xlu0 %v3105
        %v3151 = vpop.xlane.xlu0 %3150
        %3152 = vmax.xlane.f32.xlu0 %v3110
        %v3153 = vpop.xlane.xlu0 %3152
        %3154 = vmax.xlane.f32.xlu0 %v3113
        %v3155 = vpop.xlane.xlu0 %3154
        %3156 = vmax.xlane.f32.xlu0 %v3118
        %v3157 = vpop.xlane.xlu0 %3156
        %3158 = vmax.xlane.f32.xlu0 %v3121
        %v3159 = vpop.xlane.xlu0 %3158
        %3160 = vmax.xlane.f32.xlu0 %v3126
        %v3161 = vpop.xlane.xlu0 %3160
        %3162 = vmax.xlane.f32.xlu0 %v3129
        %v3163 = vpop.xlane.xlu0 %3162
        %v3164 = vsub.f32 %v3070, %v3133
        %v3165 = vsub.f32 %v3073, %v3135
        %v3166 = vsub.f32 %v3078, %v3137
        %v3167 = vsub.f32 %v3081, %v3139
        %v3168 = vsub.f32 %v3086, %v3141
        %v3169 = vsub.f32 %v3089, %v3143
        %v3170 = vsub.f32 %v3094, %v3145
        %v3171 = vsub.f32 %v3097, %v3147
        %v3172 = vsub.f32 %v3102, %v3149
        %v3173 = vsub.f32 %v3105, %v3151
        %v3174 = vsub.f32 %v3110, %v3153
        %v3175 = vsub.f32 %v3113, %v3155
        %v3176 = vsub.f32 %v3118, %v3157
        %v3177 = vsub.f32 %v3121, %v3159
        %v3178 = vsub.f32 %v3126, %v3161
        %v3179 = vsub.f32 %v3129, %v3163
        %v3180 = vmul.f32 %v3164, 1.442695
        %v3181 = vpow.pop %v3180
        %v3182 = vmul.f32 %v3165, 1.442695
        %v3183 = vpow.pop %v3182
        %v3184 = vmul.f32 %v3166, 1.442695
        %v3185 = vpow.pop %v3184
        %v3186 = vmul.f32 %v3167, 1.442695
        %v3187 = vpow.pop %v3186
        %v3188 = vmul.f32 %v3168, 1.442695
        %v3189 = vpow.pop %v3188
        %v3190 = vmul.f32 %v3169, 1.442695
        %v3191 = vpow.pop %v3190
        %v3192 = vmul.f32 %v3170, 1.442695
        %v3193 = vpow.pop %v3192
        %v3194 = vmul.f32 %v3171, 1.442695
        %v3195 = vpow.pop %v3194
        %v3196 = vmul.f32 %v3172, 1.442695
        %v3197 = vpow.pop %v3196
        %v3198 = vmul.f32 %v3173, 1.442695
        %v3199 = vpow.pop %v3198
        %v3200 = vmul.f32 %v3174, 1.442695
        %v3201 = vpow.pop %v3200
        %v3202 = vmul.f32 %v3175, 1.442695
        %v3203 = vpow.pop %v3202
        %v3204 = vmul.f32 %v3176, 1.442695
        %v3205 = vpow.pop %v3204
        %v3206 = vmul.f32 %v3177, 1.442695
        %v3207 = vpow.pop %v3206
        %v3208 = vmul.f32 %v3178, 1.442695
        %v3209 = vpow.pop %v3208
        %v3210 = vmul.f32 %v3179, 1.442695
        %v3211 = vpow.pop %v3210
        %3212 = vadd.xlane.f32.xlu0 %v3181
        %v3213 = vpop.xlane.xlu0 %3212
        %3214 = vadd.xlane.f32.xlu0 %v3183
        %v3215 = vpop.xlane.xlu0 %3214
        %3216 = vadd.xlane.f32.xlu0 %v3185
        %v3217 = vpop.xlane.xlu0 %3216
        %3218 = vadd.xlane.f32.xlu0 %v3187
        %v3219 = vpop.xlane.xlu0 %3218
        %3220 = vadd.xlane.f32.xlu0 %v3189
        %v3221 = vpop.xlane.xlu0 %3220
        %3222 = vadd.xlane.f32.xlu0 %v3191
        %v3223 = vpop.xlane.xlu0 %3222
        %3224 = vadd.xlane.f32.xlu0 %v3193
        %v3225 = vpop.xlane.xlu0 %3224
        %3226 = vadd.xlane.f32.xlu0 %v3195
        %v3227 = vpop.xlane.xlu0 %3226
        %3228 = vadd.xlane.f32.xlu0 %v3197
        %v3229 = vpop.xlane.xlu0 %3228
        %3230 = vadd.xlane.f32.xlu0 %v3199
        %v3231 = vpop.xlane.xlu0 %3230
        %3232 = vadd.xlane.f32.xlu0 %v3201
        %v3233 = vpop.xlane.xlu0 %3232
        %3234 = vadd.xlane.f32.xlu0 %v3203
        %v3235 = vpop.xlane.xlu0 %3234
        %3236 = vadd.xlane.f32.xlu0 %v3205
        %v3237 = vpop.xlane.xlu0 %3236
        %3238 = vadd.xlane.f32.xlu0 %v3207
        %v3239 = vpop.xlane.xlu0 %3238
        %3240 = vadd.xlane.f32.xlu0 %v3209
        %v3241 = vpop.xlane.xlu0 %3240
        %3242 = vadd.xlane.f32.xlu0 %v3211
        %v3243 = vpop.xlane.xlu0 %3242
        %v3244 = vrcp.pop %v3213
        %v3245 = vrcp.pop %v3215
        %v3246 = vrcp.pop %v3217
        %v3247 = vrcp.pop %v3219
        %v3248 = vrcp.pop %v3221
        %v3249 = vrcp.pop %v3223
        %v3250 = vrcp.pop %v3225
        %v3251 = vrcp.pop %v3227
        %v3252 = vrcp.pop %v3229
        %v3253 = vrcp.pop %v3231
        %v3254 = vrcp.pop %v3233
        %v3255 = vrcp.pop %v3235
        %v3256 = vrcp.pop %v3237
        %v3257 = vrcp.pop %v3239
        %v3258 = vrcp.pop %v3241
        %v3259 = vrcp.pop %v3243
        %v3260 = vmul.f32 %v3181, %v3244
        %v3261 = vmul.f32 %v3183, %v3245
        %v3262 = vmul.f32 %v3185, %v3246
        %v3263 = vmul.f32 %v3187, %v3247
        %v3264 = vmul.f32 %v3189, %v3248
        %v3265 = vmul.f32 %v3191, %v3249
        %v3266 = vmul.f32 %v3193, %v3250
        %v3267 = vmul.f32 %v3195, %v3251
        %v3268 = vmul.f32 %v3197, %v3252
        %v3269 = vmul.f32 %v3199, %v3253
        %v3270 = vmul.f32 %v3201, %v3254
        %v3271 = vmul.f32 %v3203, %v3255
        %v3272 = vmul.f32 %v3205, %v3256
        %v3273 = vmul.f32 %v3207, %v3257
        %v3274 = vmul.f32 %v3209, %v3258
        %v3275 = vmul.f32 %v3211, %v3259
        %v3276 = vpack.c.bf16 %v3261, %v3260
        %v3277 = vpack.c.bf16 %v3263, %v3262
        %v3278 = vpack.c.bf16 %v3265, %v3264
        %v3279 = vpack.c.bf16 %v3267, %v3266
        %v3280 = vpack.c.bf16 %v3269, %v3268
        %v3281 = vpack.c.bf16 %v3271, %v3270
        %v3282 = vpack.c.bf16 %v3273, %v3272
        %v3283 = vpack.c.bf16 %v3275, %v3274
        %3284 = vrot.lane.b32.xlu0 %v2048, 64
        %v3285 = vpop.permute.xlu0 %3284
        %3286 = vrot.lane.b32.xlu0 %v2051, 64
        %v3287 = vpop.permute.xlu0 %3286
        %3288 = vrot.lane.b32.xlu0 %v2054, 64
        %v3289 = vpop.permute.xlu0 %3288
        %3290 = vrot.lane.b32.xlu0 %v2057, 64
        %v3291 = vpop.permute.xlu0 %3290
        %3292 = vrot.lane.b32.xlu0 %v2060, 64
        %v3293 = vpop.permute.xlu0 %3292
        %3294 = vrot.lane.b32.xlu0 %v2063, 64
        %v3295 = vpop.permute.xlu0 %3294
        %3296 = vrot.lane.b32.xlu0 %v2066, 64
        %v3297 = vpop.permute.xlu0 %3296
        %3298 = vrot.lane.b32.xlu0 %v2069, 64
        %v3299 = vpop.permute.xlu0 %3298
        %3308 = vmatprep.subr.bf16.mxu0 0
        %3309 = vmatpush1.bf16.msra.mxu0 %v3299
        %3310 = vmatprep.subr.bf16.mxu0 0
        %3311 = vmatpush1.bf16.msra.mxu0 %v3297
        %3312 = vmatprep.subr.bf16.mxu0 0
        %3313 = vmatpush1.bf16.msra.mxu0 %v3295
        %3314 = vmatprep.subr.bf16.mxu0 0
        %3315 = vmatpush1.bf16.msra.mxu0 %v3293
        %3316 = vmatprep.subr.bf16.mxu0 0
        %3317 = vmatpush1.bf16.msra.mxu0 %v3291
        %3318 = vmatprep.subr.bf16.mxu0 0
        %3319 = vmatpush1.bf16.msra.mxu0 %v3289
        %3320 = vmatprep.subr.bf16.mxu0 0
        %3321 = vmatpush1.bf16.msra.mxu0 %v3287
        %3322 = vmatprep.subr.bf16.mxu0 0
        %3323 = vmatpush1.bf16.msra.mxu0 %v3285
        %3324 = vmatprep.subr.bf16.mxu0 0
        %3325 = vmatpush2.bf16.msra.mxu0 0
        %3326 = vmatprep.subr.bf16.mxu0 0
        %3327 = vmatpush2.bf16.msra.mxu0 0
        %3328 = vmatprep.subr.bf16.mxu0 0
        %3329 = vmatpush2.bf16.msra.mxu0 0
        %3330 = vmatprep.subr.bf16.mxu0 0
        %3331 = vmatpush2.bf16.msra.mxu0 0
        %3332 = vmatprep.subr.bf16.mxu0 0
        %3333 = vmatpush2.bf16.msra.mxu0 0
        %3334 = vmatprep.subr.bf16.mxu0 0
        %3335 = vmatpush2.bf16.msra.mxu0 0
        %3336 = vmatprep.subr.bf16.mxu0 0
        %3337 = vmatpush2.bf16.msra.mxu0 0
        %3338 = vmatprep.subr.bf16.mxu0 0
        %3339 = vmatpush2.bf16.msra.mxu0 0
        %3340 = vmatprep.mubr.bf16.mxu0 0
        %3341 = vmatmul.mubr.bf16.gmra.mxu0 %v3276
        %v3342 = vpop.f32.mrf.mxu0
        %v3343 = vadd.f32 0.0, %v3342
        %v3344 = vpop.f32.mrf.mxu0
        %v3345 = vpop.f32.mrf.mxu0
        %v3346 = vadd.f32 0.0, %v3345
        %v3347 = vpop.f32.mrf.mxu0
        %3348 = vmatprep.mubr.bf16.mxu0 0
        %3349 = vmatmul.mubr.bf16.gmra.mxu0 %v3277
        %v3350 = vpop.f32.mrf.mxu0
        %v3351 = vadd.f32 0.0, %v3350
        %v3352 = vpop.f32.mrf.mxu0
        %v3353 = vpop.f32.mrf.mxu0
        %v3354 = vadd.f32 0.0, %v3353
        %v3355 = vpop.f32.mrf.mxu0
        %3356 = vmatprep.mubr.bf16.mxu0 0
        %3357 = vmatmul.mubr.bf16.gmra.mxu0 %v3278
        %v3358 = vpop.f32.mrf.mxu0
        %v3359 = vadd.f32 0.0, %v3358
        %v3360 = vpop.f32.mrf.mxu0
        %v3361 = vpop.f32.mrf.mxu0
        %v3362 = vadd.f32 0.0, %v3361
        %v3363 = vpop.f32.mrf.mxu0
        %3364 = vmatprep.mubr.bf16.mxu0 0
        %3365 = vmatmul.mubr.bf16.gmra.mxu0 %v3279
        %v3366 = vpop.f32.mrf.mxu0
        %v3367 = vadd.f32 0.0, %v3366
        %v3368 = vpop.f32.mrf.mxu0
        %v3369 = vpop.f32.mrf.mxu0
        %v3370 = vadd.f32 0.0, %v3369
        %v3371 = vpop.f32.mrf.mxu0
        %3372 = vmatprep.mubr.bf16.mxu0 0
        %3373 = vmatmul.mubr.bf16.gmra.mxu0 %v3280
        %v3374 = vpop.f32.mrf.mxu0
        %v3375 = vadd.f32 0.0, %v3374
        %v3376 = vpop.f32.mrf.mxu0
        %v3377 = vpop.f32.mrf.mxu0
        %v3378 = vadd.f32 0.0, %v3377
        %v3379 = vpop.f32.mrf.mxu0
        %3380 = vmatprep.mubr.bf16.mxu0 0
        %3381 = vmatmul.mubr.bf16.gmra.mxu0 %v3281
        %v3382 = vpop.f32.mrf.mxu0
        %v3383 = vadd.f32 0.0, %v3382
        %v3384 = vpop.f32.mrf.mxu0
        %v3385 = vpop.f32.mrf.mxu0
        %v3386 = vadd.f32 0.0, %v3385
        %v3387 = vpop.f32.mrf.mxu0
        %3388 = vmatprep.mubr.bf16.mxu0 0
        %3389 = vmatmul.mubr.bf16.gmra.mxu0 %v3282
        %v3390 = vpop.f32.mrf.mxu0
        %v3391 = vadd.f32 0.0, %v3390
        %v3392 = vpop.f32.mrf.mxu0
        %v3393 = vpop.f32.mrf.mxu0
        %v3394 = vadd.f32 0.0, %v3393
        %v3395 = vpop.f32.mrf.mxu0
        %3396 = vmatprep.mubr.bf16.mxu0 0
        %3397 = vmatmul.mubr.bf16.gmra.mxu0 %v3283
        %v3398 = vpop.f32.mrf.mxu0
        %v3399 = vadd.f32 0.0, %v3398
        %v3400 = vpop.f32.mrf.mxu0
        %v3401 = vpop.f32.mrf.mxu0
        %v3402 = vadd.f32 0.0, %v3401
        %v3403 = vpop.f32.mrf.mxu0
        %3404 = vdwg.mxu0
        %3405 = vrot.lane.b32.xlu0 %v2046, 32
        %v3406 = vpop.permute.xlu0 %3405
        %3407 = vrot.lane.b32.xlu0 %v2049, 32
        %v3408 = vpop.permute.xlu0 %3407
        %3409 = vrot.lane.b32.xlu0 %v2052, 32
        %v3410 = vpop.permute.xlu0 %3409
        %3411 = vrot.lane.b32.xlu0 %v2055, 32
        %v3412 = vpop.permute.xlu0 %3411
        %3413 = vrot.lane.b32.xlu0 %v2058, 32
        %v3414 = vpop.permute.xlu0 %3413
        %3415 = vrot.lane.b32.xlu0 %v2061, 32
        %v3416 = vpop.permute.xlu0 %3415
        %3417 = vrot.lane.b32.xlu0 %v2064, 32
        %v3418 = vpop.permute.xlu0 %3417
        %3419 = vrot.lane.b32.xlu0 %v2067, 32
        %v3420 = vpop.permute.xlu0 %3419
        %3421 = vrot.lane.b32.xlu0 %v2047, 32
        %v3422 = vpop.permute.xlu0 %3421
        %3423 = vrot.lane.b32.xlu0 %v2050, 32
        %v3424 = vpop.permute.xlu0 %3423
        %3425 = vrot.lane.b32.xlu0 %v2053, 32
        %v3426 = vpop.permute.xlu0 %3425
        %3427 = vrot.lane.b32.xlu0 %v2056, 32
        %v3428 = vpop.permute.xlu0 %3427
        %3429 = vrot.lane.b32.xlu0 %v2059, 32
        %v3430 = vpop.permute.xlu0 %3429
        %3431 = vrot.lane.b32.xlu0 %v2062, 32
        %v3432 = vpop.permute.xlu0 %3431
        %3433 = vrot.lane.b32.xlu0 %v2065, 32
        %v3434 = vpop.permute.xlu0 %3433
        %3435 = vrot.lane.b32.xlu0 %v2068, 32
        %v3436 = vpop.permute.xlu0 %3435
        %v3438 = vsel %vm2086, %v3406, 0
        %v3441 = vsel %vm2086, %v3408, 0
        %v3444 = vsel %vm2086, %v3410, 0
        %v3447 = vsel %vm2086, %v3412, 0
        %v3450 = vsel %vm2086, %v3414, 0
        %v3453 = vsel %vm2086, %v3416, 0
        %v3456 = vsel %vm2086, %v3418, 0
        %v3459 = vsel %vm2086, %v3420, 0
        %v3462 = vsel %vm2086, %v3422, 0
        %v3465 = vsel %vm2086, %v3424, 0
        %v3468 = vsel %vm2086, %v3426, 0
        %v3471 = vsel %vm2086, %v3428, 0
        %v3474 = vsel %vm2086, %v3430, 0
        %v3477 = vsel %vm2086, %v3432, 0
        %v3480 = vsel %vm2086, %v3434, 0
        %v3483 = vsel %vm2086, %v3436, 0
        %3485 = vmatprep.subr.bf16.mxu0 0
        %3486 = vmatpush1.bf16.xpose.msra.mxu0 %v3483
        %3487 = vmatprep.subr.bf16.mxu0 0
        %3488 = vmatpush1.bf16.xpose.msra.mxu0 %v3480
        %3489 = vmatprep.subr.bf16.mxu0 0
        %3490 = vmatpush1.bf16.xpose.msra.mxu0 %v3477
        %3491 = vmatprep.subr.bf16.mxu0 0
        %3492 = vmatpush1.bf16.xpose.msra.mxu0 %v3474
        %3493 = vmatprep.subr.bf16.mxu0 0
        %3494 = vmatpush1.bf16.xpose.msra.mxu0 %v3471
        %3495 = vmatprep.subr.bf16.mxu0 0
        %3496 = vmatpush1.bf16.xpose.msra.mxu0 %v3468
        %3497 = vmatprep.subr.bf16.mxu0 0
        %3498 = vmatpush1.bf16.xpose.msra.mxu0 %v3465
        %3499 = vmatprep.subr.bf16.mxu0 0
        %3500 = vmatpush1.bf16.xpose.msra.mxu0 %v3462
        %3501 = vmatprep.subr.bf16.mxu0 0
        %3502 = vmatpush2.bf16.xpose.msra.mxu0 0
        %3503 = vmatprep.subr.bf16.mxu0 0
        %3504 = vmatpush2.bf16.xpose.msra.mxu0 0
        %3505 = vmatprep.subr.bf16.mxu0 0
        %3506 = vmatpush2.bf16.xpose.msra.mxu0 0
        %3507 = vmatprep.subr.bf16.mxu0 0
        %3508 = vmatpush2.bf16.xpose.msra.mxu0 0
        %3509 = vmatprep.subr.bf16.mxu0 0
        %3510 = vmatpush2.bf16.xpose.msra.mxu0 0
        %3511 = vmatprep.subr.bf16.mxu0 0
        %3512 = vmatpush2.bf16.xpose.msra.mxu0 0
        %3513 = vmatprep.subr.bf16.mxu0 0
        %3514 = vmatpush2.bf16.xpose.msra.mxu0 0
        %3515 = vmatprep.subr.bf16.mxu0 0
        %3516 = vmatpush2.bf16.xpose.msra.mxu0 0
        %3517 = vmatprep.mubr.bf16.mxu0 0
        %3518 = vmatmul.mubr.bf16.gmra.mxu0 %v3438
        %v3519 = vpop.f32.mrf.mxu0
        %v3520 = vadd.f32 %v2070, %v3519
        %v3521 = vpop.f32.mrf.mxu0
        %v3522 = vpop.f32.mrf.mxu0
        %v3523 = vadd.f32 %v2071, %v3522
        %v3524 = vpop.f32.mrf.mxu0
        %3525 = vmatprep.mubr.bf16.mxu0 0
        %3526 = vmatmul.mubr.bf16.gmra.mxu0 %v3441
        %v3527 = vpop.f32.mrf.mxu0
        %v3528 = vadd.f32 %v2072, %v3527
        %v3529 = vpop.f32.mrf.mxu0
        %v3530 = vpop.f32.mrf.mxu0
        %v3531 = vadd.f32 %v2073, %v3530
        %v3532 = vpop.f32.mrf.mxu0
        %3533 = vmatprep.mubr.bf16.mxu0 0
        %3534 = vmatmul.mubr.bf16.gmra.mxu0 %v3444
        %v3535 = vpop.f32.mrf.mxu0
        %v3536 = vadd.f32 %v2074, %v3535
        %v3537 = vpop.f32.mrf.mxu0
        %v3538 = vpop.f32.mrf.mxu0
        %v3539 = vadd.f32 %v2075, %v3538
        %v3540 = vpop.f32.mrf.mxu0
        %3541 = vmatprep.mubr.bf16.mxu0 0
        %3542 = vmatmul.mubr.bf16.gmra.mxu0 %v3447
        %v3543 = vpop.f32.mrf.mxu0
        %v3544 = vadd.f32 %v2076, %v3543
        %v3545 = vpop.f32.mrf.mxu0
        %v3546 = vpop.f32.mrf.mxu0
        %v3547 = vadd.f32 %v2077, %v3546
        %v3548 = vpop.f32.mrf.mxu0
        %3549 = vmatprep.mubr.bf16.mxu0 0
        %3550 = vmatmul.mubr.bf16.gmra.mxu0 %v3450
        %v3551 = vpop.f32.mrf.mxu0
        %v3552 = vadd.f32 %v2078, %v3551
        %v3553 = vpop.f32.mrf.mxu0
        %v3554 = vpop.f32.mrf.mxu0
        %v3555 = vadd.f32 %v2079, %v3554
        %v3556 = vpop.f32.mrf.mxu0
        %3557 = vmatprep.mubr.bf16.mxu0 0
        %3558 = vmatmul.mubr.bf16.gmra.mxu0 %v3453
        %v3559 = vpop.f32.mrf.mxu0
        %v3560 = vadd.f32 %v2080, %v3559
        %v3561 = vpop.f32.mrf.mxu0
        %v3562 = vpop.f32.mrf.mxu0
        %v3563 = vadd.f32 %v2081, %v3562
        %v3564 = vpop.f32.mrf.mxu0
        %3565 = vmatprep.mubr.bf16.mxu0 0
        %3566 = vmatmul.mubr.bf16.gmra.mxu0 %v3456
        %v3567 = vpop.f32.mrf.mxu0
        %v3568 = vadd.f32 %v2082, %v3567
        %v3569 = vpop.f32.mrf.mxu0
        %v3570 = vpop.f32.mrf.mxu0
        %v3571 = vadd.f32 %v2083, %v3570
        %v3572 = vpop.f32.mrf.mxu0
        %3573 = vmatprep.mubr.bf16.mxu0 0
        %3574 = vmatmul.mubr.bf16.gmra.mxu0 %v3459
        %v3575 = vpop.f32.mrf.mxu0
        %v3576 = vadd.f32 %v2084, %v3575
        %v3577 = vpop.f32.mrf.mxu0
        %v3578 = vpop.f32.mrf.mxu0
        %v3579 = vadd.f32 %v2085, %v3578
        %v3580 = vpop.f32.mrf.mxu0
        %3581 = vdwg.mxu0
        %3582 = vmax.xlane.f32.xlu0 %v3520
        %v3583 = vpop.xlane.xlu0 %3582
        %3584 = vmax.xlane.f32.xlu0 %v3523
        %v3585 = vpop.xlane.xlu0 %3584
        %3586 = vmax.xlane.f32.xlu0 %v3528
        %v3587 = vpop.xlane.xlu0 %3586
        %3588 = vmax.xlane.f32.xlu0 %v3531
        %v3589 = vpop.xlane.xlu0 %3588
        %3590 = vmax.xlane.f32.xlu0 %v3536
        %v3591 = vpop.xlane.xlu0 %3590
        %3592 = vmax.xlane.f32.xlu0 %v3539
        %v3593 = vpop.xlane.xlu0 %3592
        %3594 = vmax.xlane.f32.xlu0 %v3544
        %v3595 = vpop.xlane.xlu0 %3594
        %3596 = vmax.xlane.f32.xlu0 %v3547
        %v3597 = vpop.xlane.xlu0 %3596
        %3598 = vmax.xlane.f32.xlu0 %v3552
        %v3599 = vpop.xlane.xlu0 %3598
        %3600 = vmax.xlane.f32.xlu0 %v3555
        %v3601 = vpop.xlane.xlu0 %3600
        %3602 = vmax.xlane.f32.xlu0 %v3560
        %v3603 = vpop.xlane.xlu0 %3602
        %3604 = vmax.xlane.f32.xlu0 %v3563
        %v3605 = vpop.xlane.xlu0 %3604
        %3606 = vmax.xlane.f32.xlu0 %v3568
        %v3607 = vpop.xlane.xlu0 %3606
        %3608 = vmax.xlane.f32.xlu0 %v3571
        %v3609 = vpop.xlane.xlu0 %3608
        %3610 = vmax.xlane.f32.xlu0 %v3576
        %v3611 = vpop.xlane.xlu0 %3610
        %3612 = vmax.xlane.f32.xlu0 %v3579
        %v3613 = vpop.xlane.xlu0 %3612
        %v3614 = vsub.f32 %v3520, %v3583
        %v3615 = vsub.f32 %v3523, %v3585
        %v3616 = vsub.f32 %v3528, %v3587
        %v3617 = vsub.f32 %v3531, %v3589
        %v3618 = vsub.f32 %v3536, %v3591
        %v3619 = vsub.f32 %v3539, %v3593
        %v3620 = vsub.f32 %v3544, %v3595
        %v3621 = vsub.f32 %v3547, %v3597
        %v3622 = vsub.f32 %v3552, %v3599
        %v3623 = vsub.f32 %v3555, %v3601
        %v3624 = vsub.f32 %v3560, %v3603
        %v3625 = vsub.f32 %v3563, %v3605
        %v3626 = vsub.f32 %v3568, %v3607
        %v3627 = vsub.f32 %v3571, %v3609
        %v3628 = vsub.f32 %v3576, %v3611
        %v3629 = vsub.f32 %v3579, %v3613
        %v3630 = vmul.f32 %v3614, 1.442695
        %v3631 = vpow.pop %v3630
        %v3632 = vmul.f32 %v3615, 1.442695
        %v3633 = vpow.pop %v3632
        %v3634 = vmul.f32 %v3616, 1.442695
        %v3635 = vpow.pop %v3634
        %v3636 = vmul.f32 %v3617, 1.442695
        %v3637 = vpow.pop %v3636
        %v3638 = vmul.f32 %v3618, 1.442695
        %v3639 = vpow.pop %v3638
        %v3640 = vmul.f32 %v3619, 1.442695
        %v3641 = vpow.pop %v3640
        %v3642 = vmul.f32 %v3620, 1.442695
        %v3643 = vpow.pop %v3642
        %v3644 = vmul.f32 %v3621, 1.442695
        %v3645 = vpow.pop %v3644
        %v3646 = vmul.f32 %v3622, 1.442695
        %v3647 = vpow.pop %v3646
        %v3648 = vmul.f32 %v3623, 1.442695
        %v3649 = vpow.pop %v3648
        %v3650 = vmul.f32 %v3624, 1.442695
        %v3651 = vpow.pop %v3650
        %v3652 = vmul.f32 %v3625, 1.442695
        %v3653 = vpow.pop %v3652
        %v3654 = vmul.f32 %v3626, 1.442695
        %v3655 = vpow.pop %v3654
        %v3656 = vmul.f32 %v3627, 1.442695
        %v3657 = vpow.pop %v3656
        %v3658 = vmul.f32 %v3628, 1.442695
        %v3659 = vpow.pop %v3658
        %v3660 = vmul.f32 %v3629, 1.442695
        %v3661 = vpow.pop %v3660
        %3662 = vadd.xlane.f32.xlu0 %v3631
        %v3663 = vpop.xlane.xlu0 %3662
        %3664 = vadd.xlane.f32.xlu0 %v3633
        %v3665 = vpop.xlane.xlu0 %3664
        %3666 = vadd.xlane.f32.xlu0 %v3635
        %v3667 = vpop.xlane.xlu0 %3666
        %3668 = vadd.xlane.f32.xlu0 %v3637
        %v3669 = vpop.xlane.xlu0 %3668
        %3670 = vadd.xlane.f32.xlu0 %v3639
        %v3671 = vpop.xlane.xlu0 %3670
        %3672 = vadd.xlane.f32.xlu0 %v3641
        %v3673 = vpop.xlane.xlu0 %3672
        %3674 = vadd.xlane.f32.xlu0 %v3643
        %v3675 = vpop.xlane.xlu0 %3674
        %3676 = vadd.xlane.f32.xlu0 %v3645
        %v3677 = vpop.xlane.xlu0 %3676
        %3678 = vadd.xlane.f32.xlu0 %v3647
        %v3679 = vpop.xlane.xlu0 %3678
        %3680 = vadd.xlane.f32.xlu0 %v3649
        %v3681 = vpop.xlane.xlu0 %3680
        %3682 = vadd.xlane.f32.xlu0 %v3651
        %v3683 = vpop.xlane.xlu0 %3682
        %3684 = vadd.xlane.f32.xlu0 %v3653
        %v3685 = vpop.xlane.xlu0 %3684
        %3686 = vadd.xlane.f32.xlu0 %v3655
        %v3687 = vpop.xlane.xlu0 %3686
        %3688 = vadd.xlane.f32.xlu0 %v3657
        %v3689 = vpop.xlane.xlu0 %3688
        %3690 = vadd.xlane.f32.xlu0 %v3659
        %v3691 = vpop.xlane.xlu0 %3690
        %3692 = vadd.xlane.f32.xlu0 %v3661
        %v3693 = vpop.xlane.xlu0 %3692
        %v3694 = vrcp.pop %v3663
        %v3695 = vrcp.pop %v3665
        %v3696 = vrcp.pop %v3667
        %v3697 = vrcp.pop %v3669
        %v3698 = vrcp.pop %v3671
        %v3699 = vrcp.pop %v3673
        %v3700 = vrcp.pop %v3675
        %v3701 = vrcp.pop %v3677
        %v3702 = vrcp.pop %v3679
        %v3703 = vrcp.pop %v3681
        %v3704 = vrcp.pop %v3683
        %v3705 = vrcp.pop %v3685
        %v3706 = vrcp.pop %v3687
        %v3707 = vrcp.pop %v3689
        %v3708 = vrcp.pop %v3691
        %v3709 = vrcp.pop %v3693
        %v3710 = vmul.f32 %v3631, %v3694
        %v3711 = vmul.f32 %v3633, %v3695
        %v3712 = vmul.f32 %v3635, %v3696
        %v3713 = vmul.f32 %v3637, %v3697
        %v3714 = vmul.f32 %v3639, %v3698
        %v3715 = vmul.f32 %v3641, %v3699
        %v3716 = vmul.f32 %v3643, %v3700
        %v3717 = vmul.f32 %v3645, %v3701
        %v3718 = vmul.f32 %v3647, %v3702
        %v3719 = vmul.f32 %v3649, %v3703
        %v3720 = vmul.f32 %v3651, %v3704
        %v3721 = vmul.f32 %v3653, %v3705
        %v3722 = vmul.f32 %v3655, %v3706
        %v3723 = vmul.f32 %v3657, %v3707
        %v3724 = vmul.f32 %v3659, %v3708
        %v3725 = vmul.f32 %v3661, %v3709
        %v3726 = vpack.c.bf16 %v3711, %v3710
        %v3727 = vpack.c.bf16 %v3713, %v3712
        %v3728 = vpack.c.bf16 %v3715, %v3714
        %v3729 = vpack.c.bf16 %v3717, %v3716
        %v3730 = vpack.c.bf16 %v3719, %v3718
        %v3731 = vpack.c.bf16 %v3721, %v3720
        %v3732 = vpack.c.bf16 %v3723, %v3722
        %v3733 = vpack.c.bf16 %v3725, %v3724
        %3734 = vrot.lane.b32.xlu0 %v2048, 32
        %v3735 = vpop.permute.xlu0 %3734
        %3736 = vrot.lane.b32.xlu0 %v2051, 32
        %v3737 = vpop.permute.xlu0 %3736
        %3738 = vrot.lane.b32.xlu0 %v2054, 32
        %v3739 = vpop.permute.xlu0 %3738
        %3740 = vrot.lane.b32.xlu0 %v2057, 32
        %v3741 = vpop.permute.xlu0 %3740
        %3742 = vrot.lane.b32.xlu0 %v2060, 32
        %v3743 = vpop.permute.xlu0 %3742
        %3744 = vrot.lane.b32.xlu0 %v2063, 32
        %v3745 = vpop.permute.xlu0 %3744
        %3746 = vrot.lane.b32.xlu0 %v2066, 32
        %v3747 = vpop.permute.xlu0 %3746
        %3748 = vrot.lane.b32.xlu0 %v2069, 32
        %v3749 = vpop.permute.xlu0 %3748
        %3758 = vmatprep.subr.bf16.mxu0 0
        %3759 = vmatpush1.bf16.msra.mxu0 %v3749
        %3760 = vmatprep.subr.bf16.mxu0 0
        %3761 = vmatpush1.bf16.msra.mxu0 %v3747
        %3762 = vmatprep.subr.bf16.mxu0 0
        %3763 = vmatpush1.bf16.msra.mxu0 %v3745
        %3764 = vmatprep.subr.bf16.mxu0 0
        %3765 = vmatpush1.bf16.msra.mxu0 %v3743
        %3766 = vmatprep.subr.bf16.mxu0 0
        %3767 = vmatpush1.bf16.msra.mxu0 %v3741
        %3768 = vmatprep.subr.bf16.mxu0 0
        %3769 = vmatpush1.bf16.msra.mxu0 %v3739
        %3770 = vmatprep.subr.bf16.mxu0 0
        %3771 = vmatpush1.bf16.msra.mxu0 %v3737
        %3772 = vmatprep.subr.bf16.mxu0 0
        %3773 = vmatpush1.bf16.msra.mxu0 %v3735
        %3774 = vmatprep.subr.bf16.mxu0 0
        %3775 = vmatpush2.bf16.msra.mxu0 0
        %3776 = vmatprep.subr.bf16.mxu0 0
        %3777 = vmatpush2.bf16.msra.mxu0 0
        %3778 = vmatprep.subr.bf16.mxu0 0
        %3779 = vmatpush2.bf16.msra.mxu0 0
        %3780 = vmatprep.subr.bf16.mxu0 0
        %3781 = vmatpush2.bf16.msra.mxu0 0
        %3782 = vmatprep.subr.bf16.mxu0 0
        %3783 = vmatpush2.bf16.msra.mxu0 0
        %3784 = vmatprep.subr.bf16.mxu0 0
        %3785 = vmatpush2.bf16.msra.mxu0 0
        %3786 = vmatprep.subr.bf16.mxu0 0
        %3787 = vmatpush2.bf16.msra.mxu0 0
        %3788 = vmatprep.subr.bf16.mxu0 0
        %3789 = vmatpush2.bf16.msra.mxu0 0
        %3790 = vmatprep.mubr.bf16.mxu0 0
        %3791 = vmatmul.mubr.bf16.gmra.mxu0 %v3726
        %v3792 = vpop.f32.mrf.mxu0
        %v3793 = vadd.f32 0.0, %v3792
        %v3794 = vpop.f32.mrf.mxu0
        %v3795 = vpop.f32.mrf.mxu0
        %v3796 = vadd.f32 0.0, %v3795
        %v3797 = vpop.f32.mrf.mxu0
        %3798 = vmatprep.mubr.bf16.mxu0 0
        %3799 = vmatmul.mubr.bf16.gmra.mxu0 %v3727
        %v3800 = vpop.f32.mrf.mxu0
        %v3801 = vadd.f32 0.0, %v3800
        %v3802 = vpop.f32.mrf.mxu0
        %v3803 = vpop.f32.mrf.mxu0
        %v3804 = vadd.f32 0.0, %v3803
        %v3805 = vpop.f32.mrf.mxu0
        %3806 = vmatprep.mubr.bf16.mxu0 0
        %3807 = vmatmul.mubr.bf16.gmra.mxu0 %v3728
        %v3808 = vpop.f32.mrf.mxu0
        %v3809 = vadd.f32 0.0, %v3808
        %v3810 = vpop.f32.mrf.mxu0
        %v3811 = vpop.f32.mrf.mxu0
        %v3812 = vadd.f32 0.0, %v3811
        %v3813 = vpop.f32.mrf.mxu0
        %3814 = vmatprep.mubr.bf16.mxu0 0
        %3815 = vmatmul.mubr.bf16.gmra.mxu0 %v3729
        %v3816 = vpop.f32.mrf.mxu0
        %v3817 = vadd.f32 0.0, %v3816
        %v3818 = vpop.f32.mrf.mxu0
        %v3819 = vpop.f32.mrf.mxu0
        %v3820 = vadd.f32 0.0, %v3819
        %v3821 = vpop.f32.mrf.mxu0
        %3822 = vmatprep.mubr.bf16.mxu0 0
        %3823 = vmatmul.mubr.bf16.gmra.mxu0 %v3730
        %v3824 = vpop.f32.mrf.mxu0
        %v3825 = vadd.f32 0.0, %v3824
        %v3826 = vpop.f32.mrf.mxu0
        %v3827 = vpop.f32.mrf.mxu0
        %v3828 = vadd.f32 0.0, %v3827
        %v3829 = vpop.f32.mrf.mxu0
        %3830 = vmatprep.mubr.bf16.mxu0 0
        %3831 = vmatmul.mubr.bf16.gmra.mxu0 %v3731
        %v3832 = vpop.f32.mrf.mxu0
        %v3833 = vadd.f32 0.0, %v3832
        %v3834 = vpop.f32.mrf.mxu0
        %v3835 = vpop.f32.mrf.mxu0
        %v3836 = vadd.f32 0.0, %v3835
        %v3837 = vpop.f32.mrf.mxu0
        %3838 = vmatprep.mubr.bf16.mxu0 0
        %3839 = vmatmul.mubr.bf16.gmra.mxu0 %v3732
        %v3840 = vpop.f32.mrf.mxu0
        %v3841 = vadd.f32 0.0, %v3840
        %v3842 = vpop.f32.mrf.mxu0
        %v3843 = vpop.f32.mrf.mxu0
        %v3844 = vadd.f32 0.0, %v3843
        %v3845 = vpop.f32.mrf.mxu0
        %3846 = vmatprep.mubr.bf16.mxu0 0
        %3847 = vmatmul.mubr.bf16.gmra.mxu0 %v3733
        %v3848 = vpop.f32.mrf.mxu0
        %v3849 = vadd.f32 0.0, %v3848
        %v3850 = vpop.f32.mrf.mxu0
        %v3851 = vpop.f32.mrf.mxu0
        %v3852 = vadd.f32 0.0, %v3851
        %v3853 = vpop.f32.mrf.mxu0
        %3854 = vdwg.mxu0
        %3871 = vrot.lane.b32.xlu0 %v2893, 32
        %v3872 = vpop.permute.xlu0 %3871
        %3873 = vrot.lane.b32.xlu0 %v2896, 32
        %v3874 = vpop.permute.xlu0 %3873
        %3875 = vrot.lane.b32.xlu0 %v2901, 32
        %v3876 = vpop.permute.xlu0 %3875
        %3877 = vrot.lane.b32.xlu0 %v2904, 32
        %v3878 = vpop.permute.xlu0 %3877
        %3879 = vrot.lane.b32.xlu0 %v2909, 32
        %v3880 = vpop.permute.xlu0 %3879
        %3881 = vrot.lane.b32.xlu0 %v2912, 32
        %v3882 = vpop.permute.xlu0 %3881
        %3883 = vrot.lane.b32.xlu0 %v2917, 32
        %v3884 = vpop.permute.xlu0 %3883
        %3885 = vrot.lane.b32.xlu0 %v2920, 32
        %v3886 = vpop.permute.xlu0 %3885
        %3887 = vrot.lane.b32.xlu0 %v2925, 32
        %v3888 = vpop.permute.xlu0 %3887
        %3889 = vrot.lane.b32.xlu0 %v2928, 32
        %v3890 = vpop.permute.xlu0 %3889
        %3891 = vrot.lane.b32.xlu0 %v2933, 32
        %v3892 = vpop.permute.xlu0 %3891
        %3893 = vrot.lane.b32.xlu0 %v2936, 32
        %v3894 = vpop.permute.xlu0 %3893
        %3895 = vrot.lane.b32.xlu0 %v2941, 32
        %v3896 = vpop.permute.xlu0 %3895
        %3897 = vrot.lane.b32.xlu0 %v2944, 32
        %v3898 = vpop.permute.xlu0 %3897
        %3899 = vrot.lane.b32.xlu0 %v2949, 32
        %v3900 = vpop.permute.xlu0 %3899
        %3901 = vrot.lane.b32.xlu0 %v2952, 32
        %v3902 = vpop.permute.xlu0 %3901
        %3935 = vrot.lane.b32.xlu0 %v3343, 64
        %v3936 = vpop.permute.xlu0 %3935
        %3937 = vrot.lane.b32.xlu0 %v3346, 64
        %v3938 = vpop.permute.xlu0 %3937
        %3939 = vrot.lane.b32.xlu0 %v3351, 64
        %v3940 = vpop.permute.xlu0 %3939
        %3941 = vrot.lane.b32.xlu0 %v3354, 64
        %v3942 = vpop.permute.xlu0 %3941
        %3943 = vrot.lane.b32.xlu0 %v3359, 64
        %v3944 = vpop.permute.xlu0 %3943
        %3945 = vrot.lane.b32.xlu0 %v3362, 64
        %v3946 = vpop.permute.xlu0 %3945
        %3947 = vrot.lane.b32.xlu0 %v3367, 64
        %v3948 = vpop.permute.xlu0 %3947
        %3949 = vrot.lane.b32.xlu0 %v3370, 64
        %v3950 = vpop.permute.xlu0 %3949
        %3951 = vrot.lane.b32.xlu0 %v3375, 64
        %v3952 = vpop.permute.xlu0 %3951
        %3953 = vrot.lane.b32.xlu0 %v3378, 64
        %v3954 = vpop.permute.xlu0 %3953
        %3955 = vrot.lane.b32.xlu0 %v3383, 64
        %v3956 = vpop.permute.xlu0 %3955
        %3957 = vrot.lane.b32.xlu0 %v3386, 64
        %v3958 = vpop.permute.xlu0 %3957
        %3959 = vrot.lane.b32.xlu0 %v3391, 64
        %v3960 = vpop.permute.xlu0 %3959
        %3961 = vrot.lane.b32.xlu0 %v3394, 64
        %v3962 = vpop.permute.xlu0 %3961
        %3963 = vrot.lane.b32.xlu0 %v3399, 64
        %v3964 = vpop.permute.xlu0 %3963
        %3965 = vrot.lane.b32.xlu0 %v3402, 64
        %v3966 = vpop.permute.xlu0 %3965
        %3999 = vrot.lane.b32.xlu0 %v3793, 96
        %v4000 = vpop.permute.xlu0 %3999
        %4001 = vrot.lane.b32.xlu0 %v3796, 96
        %v4002 = vpop.permute.xlu0 %4001
        %4003 = vrot.lane.b32.xlu0 %v3801, 96
        %v4004 = vpop.permute.xlu0 %4003
        %4005 = vrot.lane.b32.xlu0 %v3804, 96
        %v4006 = vpop.permute.xlu0 %4005
        %4007 = vrot.lane.b32.xlu0 %v3809, 96
        %v4008 = vpop.permute.xlu0 %4007
        %4009 = vrot.lane.b32.xlu0 %v3812, 96
        %v4010 = vpop.permute.xlu0 %4009
        %4011 = vrot.lane.b32.xlu0 %v3817, 96
        %v4012 = vpop.permute.xlu0 %4011
        %4013 = vrot.lane.b32.xlu0 %v3820, 96
        %v4014 = vpop.permute.xlu0 %4013
        %4015 = vrot.lane.b32.xlu0 %v3825, 96
        %v4016 = vpop.permute.xlu0 %4015
        %4017 = vrot.lane.b32.xlu0 %v3828, 96
        %v4018 = vpop.permute.xlu0 %4017
        %4019 = vrot.lane.b32.xlu0 %v3833, 96
        %v4020 = vpop.permute.xlu0 %4019
        %4021 = vrot.lane.b32.xlu0 %v3836, 96
        %v4022 = vpop.permute.xlu0 %4021
        %4023 = vrot.lane.b32.xlu0 %v3841, 96
        %v4024 = vpop.permute.xlu0 %4023
        %4025 = vrot.lane.b32.xlu0 %v3844, 96
        %v4026 = vpop.permute.xlu0 %4025
        %4027 = vrot.lane.b32.xlu0 %v3849, 96
        %v4028 = vpop.permute.xlu0 %4027
        %4029 = vrot.lane.b32.xlu0 %v3852, 96
        %v4030 = vpop.permute.xlu0 %4029
        %v4047 = vsel %vm2086, %v2419, %v3872
        %v4048 = vsel %vm2086, %v2422, %v3874
        %v4049 = vsel %vm2086, %v2427, %v3876
        %v4050 = vsel %vm2086, %v2430, %v3878
        %v4051 = vsel %vm2086, %v2435, %v3880
        %v4052 = vsel %vm2086, %v2438, %v3882
        %v4053 = vsel %vm2086, %v2443, %v3884
        %v4054 = vsel %vm2086, %v2446, %v3886
        %v4055 = vsel %vm2086, %v2451, %v3888
        %v4056 = vsel %vm2086, %v2454, %v3890
        %v4057 = vsel %vm2086, %v2459, %v3892
        %v4058 = vsel %vm2086, %v2462, %v3894
        %v4059 = vsel %vm2086, %v2467, %v3896
        %v4060 = vsel %vm2086, %v2470, %v3898
        %v4061 = vsel %vm2086, %v2475, %v3900
        %v4062 = vsel %vm2086, %v2478, %v3902
        %vm4063 = vcmask 523264
        %v4064 = vsel %vm4063, %v4047, %v3936
        %v4065 = vsel %vm4063, %v4048, %v3938
        %v4066 = vsel %vm4063, %v4049, %v3940
        %v4067 = vsel %vm4063, %v4050, %v3942
        %v4068 = vsel %vm4063, %v4051, %v3944
        %v4069 = vsel %vm4063, %v4052, %v3946
        %v4070 = vsel %vm4063, %v4053, %v3948
        %v4071 = vsel %vm4063, %v4054, %v3950
        %v4072 = vsel %vm4063, %v4055, %v3952
        %v4073 = vsel %vm4063, %v4056, %v3954
        %v4074 = vsel %vm4063, %v4057, %v3956
        %v4075 = vsel %vm4063, %v4058, %v3958
        %v4076 = vsel %vm4063, %v4059, %v3960
        %v4077 = vsel %vm4063, %v4060, %v3962
        %v4078 = vsel %vm4063, %v4061, %v3964
        %v4079 = vsel %vm4063, %v4062, %v3966
        %vm4080 = vcmask 785408
        %v4081 = vsel %vm4080, %v4064, %v4000
        %v4082 = vsel %vm4080, %v4065, %v4002
        %v4083 = vsel %vm4080, %v4066, %v4004
        %v4084 = vsel %vm4080, %v4067, %v4006
        %v4085 = vsel %vm4080, %v4068, %v4008
        %v4086 = vsel %vm4080, %v4069, %v4010
        %v4087 = vsel %vm4080, %v4070, %v4012
        %v4088 = vsel %vm4080, %v4071, %v4014
        %v4089 = vsel %vm4080, %v4072, %v4016
        %v4090 = vsel %vm4080, %v4073, %v4018
        %v4091 = vsel %vm4080, %v4074, %v4020
        %v4092 = vsel %vm4080, %v4075, %v4022
        %v4093 = vsel %vm4080, %v4076, %v4024
        %v4094 = vsel %vm4080, %v4077, %v4026
        %v4095 = vsel %vm4080, %v4078, %v4028
        %v4096 = vsel %vm4080, %v4079, %v4030
        %v4097 = vpack.c.bf16 %v4082, %v4081
        %v4098 = vpack.c.bf16 %v4084, %v4083
        %v4099 = vpack.c.bf16 %v4086, %v4085
        %v4100 = vpack.c.bf16 %v4088, %v4087
        %v4101 = vpack.c.bf16 %v4090, %v4089
        %v4102 = vpack.c.bf16 %v4092, %v4091
        %v4103 = vpack.c.bf16 %v4094, %v4093
        %v4104 = vpack.c.bf16 %v4096, %v4095
        %v4105 = vld [vmem:[%s1050] sm:$0xf]
        %v4106 = vld [vmem:[%s1050 + $0x4] sm:$0xf]
        %v4107 = vld [vmem:[%s1050 + $0x8] sm:$0xf]
        %v4108 = vld [vmem:[%s1050 + $0xc] sm:$0xf]
        %v4109 = vld [vmem:[%s1050 + $0x10] sm:$0xf]
        %v4110 = vld [vmem:[%s1050 + $0x14] sm:$0xf]
        %v4111 = vld [vmem:[%s1050 + $0x18] sm:$0xf]
        %v4112 = vld [vmem:[%s1050 + $0x1c] sm:$0xf]
        %v4113 = vld [vmem:[%s1050 + $0x20] sm:$0xf]
        %v4114 = vld [vmem:[%s1050 + $0x24] sm:$0xf]
        %v4115 = vld [vmem:[%s1050 + $0x28] sm:$0xf]
        %v4116 = vld [vmem:[%s1050 + $0x2c] sm:$0xf]
        %v4117 = vld [vmem:[%s1050 + $0x30] sm:$0xf]
        %v4118 = vld [vmem:[%s1050 + $0x34] sm:$0xf]
        %v4119 = vld [vmem:[%s1050 + $0x38] sm:$0xf]
        %v4120 = vld [vmem:[%s1050 + $0x3c] sm:$0xf]
        %v4137 = vunpack.c.l.b16 %v4105
        %v4138 = vunpack.c.l.b16 %v4106
        %v4139 = vunpack.c.l.b16 %v4107
        %v4140 = vunpack.c.l.b16 %v4108
        %v4141 = vunpack.c.l.b16 %v4109
        %v4142 = vunpack.c.l.b16 %v4110
        %v4143 = vunpack.c.l.b16 %v4111
        %v4144 = vunpack.c.l.b16 %v4112
        %v4145 = vunpack.c.l.b16 %v4113
        %v4146 = vunpack.c.l.b16 %v4114
        %v4147 = vunpack.c.l.b16 %v4115
        %v4148 = vunpack.c.l.b16 %v4116
        %v4149 = vunpack.c.l.b16 %v4117
        %v4150 = vunpack.c.l.b16 %v4118
        %v4151 = vunpack.c.l.b16 %v4119
        %v4152 = vunpack.c.l.b16 %v4120
        %v4153 = vpack.c.b16 %v4138, %v4137
        %v4154 = vpack.c.b16 %v4140, %v4139
        %v4155 = vpack.c.b16 %v4142, %v4141
        %v4156 = vpack.c.b16 %v4144, %v4143
        %v4157 = vpack.c.b16 %v4146, %v4145
        %v4158 = vpack.c.b16 %v4148, %v4147
        %v4159 = vpack.c.b16 %v4150, %v4149
        %v4160 = vpack.c.b16 %v4152, %v4151
        %4169 = vmatprep.subr.bf16.mxu0 0
        %4170 = vmatpush1.bf16.msra.mxu0 %v4160
        %4171 = vmatprep.subr.bf16.mxu0 0
        %4172 = vmatpush1.bf16.msra.mxu0 %v4159
        %4173 = vmatprep.subr.bf16.mxu0 0
        %4174 = vmatpush1.bf16.msra.mxu0 %v4158
        %4175 = vmatprep.subr.bf16.mxu0 0
        %4176 = vmatpush1.bf16.msra.mxu0 %v4157
        %4177 = vmatprep.subr.bf16.mxu0 0
        %4178 = vmatpush1.bf16.msra.mxu0 %v4156
        %4179 = vmatprep.subr.bf16.mxu0 0
        %4180 = vmatpush1.bf16.msra.mxu0 %v4155
        %4181 = vmatprep.subr.bf16.mxu0 0
        %4182 = vmatpush1.bf16.msra.mxu0 %v4154
        %4183 = vmatprep.subr.bf16.mxu0 0
        %4184 = vmatpush1.bf16.msra.mxu0 %v4153
        %4185 = vmatprep.subr.bf16.mxu0 0
        %4186 = vmatpush2.bf16.msra.mxu0 0
        %4187 = vmatprep.subr.bf16.mxu0 0
        %4188 = vmatpush2.bf16.msra.mxu0 0
        %4189 = vmatprep.subr.bf16.mxu0 0
        %4190 = vmatpush2.bf16.msra.mxu0 0
        %4191 = vmatprep.subr.bf16.mxu0 0
        %4192 = vmatpush2.bf16.msra.mxu0 0
        %4193 = vmatprep.subr.bf16.mxu0 0
        %4194 = vmatpush2.bf16.msra.mxu0 0
        %4195 = vmatprep.subr.bf16.mxu0 0
        %4196 = vmatpush2.bf16.msra.mxu0 0
        %4197 = vmatprep.subr.bf16.mxu0 0
        %4198 = vmatpush2.bf16.msra.mxu0 0
        %4199 = vmatprep.subr.bf16.mxu0 0
        %4200 = vmatpush2.bf16.msra.mxu0 0
        %4201 = vmatprep.mubr.bf16.mxu0 0
        %4202 = vmatmul.mubr.bf16.gmra.mxu0 %v4097
        %v4203 = vpop.f32.mrf.mxu0
        %v4204 = vadd.f32 0.0, %v4203
        %v4205 = vpop.f32.mrf.mxu0
        %v4206 = vpop.f32.mrf.mxu0
        %v4207 = vadd.f32 0.0, %v4206
        %v4208 = vpop.f32.mrf.mxu0
        %4209 = vmatprep.mubr.bf16.mxu0 0
        %4210 = vmatmul.mubr.bf16.gmra.mxu0 %v4098
        %v4211 = vpop.f32.mrf.mxu0
        %v4212 = vadd.f32 0.0, %v4211
        %v4213 = vpop.f32.mrf.mxu0
        %v4214 = vpop.f32.mrf.mxu0
        %v4215 = vadd.f32 0.0, %v4214
        %v4216 = vpop.f32.mrf.mxu0
        %4217 = vmatprep.mubr.bf16.mxu0 0
        %4218 = vmatmul.mubr.bf16.gmra.mxu0 %v4099
        %v4219 = vpop.f32.mrf.mxu0
        %v4220 = vadd.f32 0.0, %v4219
        %v4221 = vpop.f32.mrf.mxu0
        %v4222 = vpop.f32.mrf.mxu0
        %v4223 = vadd.f32 0.0, %v4222
        %v4224 = vpop.f32.mrf.mxu0
        %4225 = vmatprep.mubr.bf16.mxu0 0
        %4226 = vmatmul.mubr.bf16.gmra.mxu0 %v4100
        %v4227 = vpop.f32.mrf.mxu0
        %v4228 = vadd.f32 0.0, %v4227
        %v4229 = vpop.f32.mrf.mxu0
        %v4230 = vpop.f32.mrf.mxu0
        %v4231 = vadd.f32 0.0, %v4230
        %v4232 = vpop.f32.mrf.mxu0
        %4233 = vmatprep.mubr.bf16.mxu0 0
        %4234 = vmatmul.mubr.bf16.gmra.mxu0 %v4101
        %v4235 = vpop.f32.mrf.mxu0
        %v4236 = vadd.f32 0.0, %v4235
        %v4237 = vpop.f32.mrf.mxu0
        %v4238 = vpop.f32.mrf.mxu0
        %v4239 = vadd.f32 0.0, %v4238
        %v4240 = vpop.f32.mrf.mxu0
        %4241 = vmatprep.mubr.bf16.mxu0 0
        %4242 = vmatmul.mubr.bf16.gmra.mxu0 %v4102
        %v4243 = vpop.f32.mrf.mxu0
        %v4244 = vadd.f32 0.0, %v4243
        %v4245 = vpop.f32.mrf.mxu0
        %v4246 = vpop.f32.mrf.mxu0
        %v4247 = vadd.f32 0.0, %v4246
        %v4248 = vpop.f32.mrf.mxu0
        %4249 = vmatprep.mubr.bf16.mxu0 0
        %4250 = vmatmul.mubr.bf16.gmra.mxu0 %v4103
        %v4251 = vpop.f32.mrf.mxu0
        %v4252 = vadd.f32 0.0, %v4251
        %v4253 = vpop.f32.mrf.mxu0
        %v4254 = vpop.f32.mrf.mxu0
        %v4255 = vadd.f32 0.0, %v4254
        %v4256 = vpop.f32.mrf.mxu0
        %4257 = vmatprep.mubr.bf16.mxu0 0
        %4258 = vmatmul.mubr.bf16.gmra.mxu0 %v4104
        %v4259 = vpop.f32.mrf.mxu0
        %v4260 = vadd.f32 0.0, %v4259
        %v4261 = vpop.f32.mrf.mxu0
        %v4262 = vpop.f32.mrf.mxu0
        %v4263 = vadd.f32 0.0, %v4262
        %v4264 = vpop.f32.mrf.mxu0
        %4265 = vdwg.mxu0
        %v4266 = vadd.f32 %v1429, %v4204
        %v4267 = vadd.f32 %v1430, %v4207
        %v4268 = vadd.f32 %v1431, %v4212
        %v4269 = vadd.f32 %v1432, %v4215
        %v4270 = vadd.f32 %v1433, %v4220
        %v4271 = vadd.f32 %v1434, %v4223
        %v4272 = vadd.f32 %v1435, %v4228
        %v4273 = vadd.f32 %v1436, %v4231
        %v4274 = vadd.f32 %v1437, %v4236
        %v4275 = vadd.f32 %v1438, %v4239
        %v4276 = vadd.f32 %v1439, %v4244
        %v4277 = vadd.f32 %v1440, %v4247
        %v4278 = vadd.f32 %v1441, %v4252
        %v4279 = vadd.f32 %v1442, %v4255
        %v4280 = vadd.f32 %v1443, %v4260
        %v4281 = vadd.f32 %v1444, %v4263
        %v4282 = vld [vmem:[%s1053] sm:$0x1]
        %v4284 = vlaneseq
        %v4285 = vshrl.u32 %v4284, 7
        %v4286 = vsub.s32 0, %v4285
        %v4287 = vrot.slane %v4282, %v4286
        %v4289 = vadd.f32 %v4266, %v4287
        %v4290 = vadd.f32 %v4267, %v4287
        %v4291 = vadd.f32 %v4268, %v4287
        %v4292 = vadd.f32 %v4269, %v4287
        %v4293 = vadd.f32 %v4270, %v4287
        %v4294 = vadd.f32 %v4271, %v4287
        %v4295 = vadd.f32 %v4272, %v4287
        %v4296 = vadd.f32 %v4273, %v4287
        %v4297 = vadd.f32 %v4274, %v4287
        %v4298 = vadd.f32 %v4275, %v4287
        %v4299 = vadd.f32 %v4276, %v4287
        %v4300 = vadd.f32 %v4277, %v4287
        %v4301 = vadd.f32 %v4278, %v4287
        %v4302 = vadd.f32 %v4279, %v4287
        %v4303 = vadd.f32 %v4280, %v4287
        %v4304 = vadd.f32 %v4281, %v4287
        %v4305 = vld [vmem:[%s1056] sm:$0x1]
        %v4306 = vld [vmem:[%s1059] sm:$0x1]
        %4307 = vadd.xlane.f32.xlu0 %v4289
        %v4308 = vpop.xlane.xlu0 %4307
        %4309 = vadd.xlane.f32.xlu0 %v4290
        %v4310 = vpop.xlane.xlu0 %4309
        %4311 = vadd.xlane.f32.xlu0 %v4291
        %v4312 = vpop.xlane.xlu0 %4311
        %4313 = vadd.xlane.f32.xlu0 %v4292
        %v4314 = vpop.xlane.xlu0 %4313
        %4315 = vadd.xlane.f32.xlu0 %v4293
        %v4316 = vpop.xlane.xlu0 %4315
        %4317 = vadd.xlane.f32.xlu0 %v4294
        %v4318 = vpop.xlane.xlu0 %4317
        %4319 = vadd.xlane.f32.xlu0 %v4295
        %v4320 = vpop.xlane.xlu0 %4319
        %4321 = vadd.xlane.f32.xlu0 %v4296
        %v4322 = vpop.xlane.xlu0 %4321
        %4323 = vadd.xlane.f32.xlu0 %v4297
        %v4324 = vpop.xlane.xlu0 %4323
        %4325 = vadd.xlane.f32.xlu0 %v4298
        %v4326 = vpop.xlane.xlu0 %4325
        %4327 = vadd.xlane.f32.xlu0 %v4299
        %v4328 = vpop.xlane.xlu0 %4327
        %4329 = vadd.xlane.f32.xlu0 %v4300
        %v4330 = vpop.xlane.xlu0 %4329
        %4331 = vadd.xlane.f32.xlu0 %v4301
        %v4332 = vpop.xlane.xlu0 %4331
        %4333 = vadd.xlane.f32.xlu0 %v4302
        %v4334 = vpop.xlane.xlu0 %4333
        %4335 = vadd.xlane.f32.xlu0 %v4303
        %v4336 = vpop.xlane.xlu0 %4335
        %4337 = vadd.xlane.f32.xlu0 %v4304
        %v4338 = vpop.xlane.xlu0 %4337
        %v4339 = vmul.f32 %v4308, %v1479
        %v4340 = vmul.f32 %v4310, %v1479
        %v4341 = vmul.f32 %v4312, %v1479
        %v4342 = vmul.f32 %v4314, %v1479
        %v4343 = vmul.f32 %v4316, %v1479
        %v4344 = vmul.f32 %v4318, %v1479
        %v4345 = vmul.f32 %v4320, %v1479
        %v4346 = vmul.f32 %v4322, %v1479
        %v4347 = vmul.f32 %v4324, %v1479
        %v4348 = vmul.f32 %v4326, %v1479
        %v4349 = vmul.f32 %v4328, %v1479
        %v4350 = vmul.f32 %v4330, %v1479
        %v4351 = vmul.f32 %v4332, %v1479
        %v4352 = vmul.f32 %v4334, %v1479
        %v4353 = vmul.f32 %v4336, %v1479
        %v4354 = vmul.f32 %v4338, %v1479
        %v4355 = vsub.f32 %v4289, %v4339
        %v4356 = vsub.f32 %v4290, %v4340
        %v4357 = vsub.f32 %v4291, %v4341
        %v4358 = vsub.f32 %v4292, %v4342
        %v4359 = vsub.f32 %v4293, %v4343
        %v4360 = vsub.f32 %v4294, %v4344
        %v4361 = vsub.f32 %v4295, %v4345
        %v4362 = vsub.f32 %v4296, %v4346
        %v4363 = vsub.f32 %v4297, %v4347
        %v4364 = vsub.f32 %v4298, %v4348
        %v4365 = vsub.f32 %v4299, %v4349
        %v4366 = vsub.f32 %v4300, %v4350
        %v4367 = vsub.f32 %v4301, %v4351
        %v4368 = vsub.f32 %v4302, %v4352
        %v4369 = vsub.f32 %v4303, %v4353
        %v4370 = vsub.f32 %v4304, %v4354
        %v4371 = vmul.f32 %v4355, %v4355
        %v4372 = vmul.f32 %v4356, %v4356
        %v4373 = vmul.f32 %v4357, %v4357
        %v4374 = vmul.f32 %v4358, %v4358
        %v4375 = vmul.f32 %v4359, %v4359
        %v4376 = vmul.f32 %v4360, %v4360
        %v4377 = vmul.f32 %v4361, %v4361
        %v4378 = vmul.f32 %v4362, %v4362
        %v4379 = vmul.f32 %v4363, %v4363
        %v4380 = vmul.f32 %v4364, %v4364
        %v4381 = vmul.f32 %v4365, %v4365
        %v4382 = vmul.f32 %v4366, %v4366
        %v4383 = vmul.f32 %v4367, %v4367
        %v4384 = vmul.f32 %v4368, %v4368
        %v4385 = vmul.f32 %v4369, %v4369
        %v4386 = vmul.f32 %v4370, %v4370
        %4387 = vadd.xlane.f32.xlu0 %v4371
        %v4388 = vpop.xlane.xlu0 %4387
        %4389 = vadd.xlane.f32.xlu0 %v4372
        %v4390 = vpop.xlane.xlu0 %4389
        %4391 = vadd.xlane.f32.xlu0 %v4373
        %v4392 = vpop.xlane.xlu0 %4391
        %4393 = vadd.xlane.f32.xlu0 %v4374
        %v4394 = vpop.xlane.xlu0 %4393
        %4395 = vadd.xlane.f32.xlu0 %v4375
        %v4396 = vpop.xlane.xlu0 %4395
        %4397 = vadd.xlane.f32.xlu0 %v4376
        %v4398 = vpop.xlane.xlu0 %4397
        %4399 = vadd.xlane.f32.xlu0 %v4377
        %v4400 = vpop.xlane.xlu0 %4399
        %4401 = vadd.xlane.f32.xlu0 %v4378
        %v4402 = vpop.xlane.xlu0 %4401
        %4403 = vadd.xlane.f32.xlu0 %v4379
        %v4404 = vpop.xlane.xlu0 %4403
        %4405 = vadd.xlane.f32.xlu0 %v4380
        %v4406 = vpop.xlane.xlu0 %4405
        %4407 = vadd.xlane.f32.xlu0 %v4381
        %v4408 = vpop.xlane.xlu0 %4407
        %4409 = vadd.xlane.f32.xlu0 %v4382
        %v4410 = vpop.xlane.xlu0 %4409
        %4411 = vadd.xlane.f32.xlu0 %v4383
        %v4412 = vpop.xlane.xlu0 %4411
        %4413 = vadd.xlane.f32.xlu0 %v4384
        %v4414 = vpop.xlane.xlu0 %4413
        %4415 = vadd.xlane.f32.xlu0 %v4385
        %v4416 = vpop.xlane.xlu0 %4415
        %4417 = vadd.xlane.f32.xlu0 %v4386
        %v4418 = vpop.xlane.xlu0 %4417
        %v4419 = vmul.f32 %v4388, %v1479
        %v4420 = vmul.f32 %v4390, %v1479
        %v4421 = vmul.f32 %v4392, %v1479
        %v4422 = vmul.f32 %v4394, %v1479
        %v4423 = vmul.f32 %v4396, %v1479
        %v4424 = vmul.f32 %v4398, %v1479
        %v4425 = vmul.f32 %v4400, %v1479
        %v4426 = vmul.f32 %v4402, %v1479
        %v4427 = vmul.f32 %v4404, %v1479
        %v4428 = vmul.f32 %v4406, %v1479
        %v4429 = vmul.f32 %v4408, %v1479
        %v4430 = vmul.f32 %v4410, %v1479
        %v4431 = vmul.f32 %v4412, %v1479
        %v4432 = vmul.f32 %v4414, %v1479
        %v4433 = vmul.f32 %v4416, %v1479
        %v4434 = vmul.f32 %v4418, %v1479
        %v4435 = vadd.f32 %v4419, 1e-05
        %v4436 = vadd.f32 %v4420, 1e-05
        %v4437 = vadd.f32 %v4421, 1e-05
        %v4438 = vadd.f32 %v4422, 1e-05
        %v4439 = vadd.f32 %v4423, 1e-05
        %v4440 = vadd.f32 %v4424, 1e-05
        %v4441 = vadd.f32 %v4425, 1e-05
        %v4442 = vadd.f32 %v4426, 1e-05
        %v4443 = vadd.f32 %v4427, 1e-05
        %v4444 = vadd.f32 %v4428, 1e-05
        %v4445 = vadd.f32 %v4429, 1e-05
        %v4446 = vadd.f32 %v4430, 1e-05
        %v4447 = vadd.f32 %v4431, 1e-05
        %v4448 = vadd.f32 %v4432, 1e-05
        %v4449 = vadd.f32 %v4433, 1e-05
        %v4450 = vadd.f32 %v4434, 1e-05
        %v4451 = vrsqrt.pop %v4435
        %v4452 = vrsqrt.pop %v4436
        %v4453 = vrsqrt.pop %v4437
        %v4454 = vrsqrt.pop %v4438
        %v4455 = vrsqrt.pop %v4439
        %v4456 = vrsqrt.pop %v4440
        %v4457 = vrsqrt.pop %v4441
        %v4458 = vrsqrt.pop %v4442
        %v4459 = vrsqrt.pop %v4443
        %v4460 = vrsqrt.pop %v4444
        %v4461 = vrsqrt.pop %v4445
        %v4462 = vrsqrt.pop %v4446
        %v4463 = vrsqrt.pop %v4447
        %v4464 = vrsqrt.pop %v4448
        %v4465 = vrsqrt.pop %v4449
        %v4466 = vrsqrt.pop %v4450
        %v4467 = vmul.f32 %v4355, %v4451
        %v4468 = vmul.f32 %v4356, %v4452
        %v4469 = vmul.f32 %v4357, %v4453
        %v4470 = vmul.f32 %v4358, %v4454
        %v4471 = vmul.f32 %v4359, %v4455
        %v4472 = vmul.f32 %v4360, %v4456
        %v4473 = vmul.f32 %v4361, %v4457
        %v4474 = vmul.f32 %v4362, %v4458
        %v4475 = vmul.f32 %v4363, %v4459
        %v4476 = vmul.f32 %v4364, %v4460
        %v4477 = vmul.f32 %v4365, %v4461
        %v4478 = vmul.f32 %v4366, %v4462
        %v4479 = vmul.f32 %v4367, %v4463
        %v4480 = vmul.f32 %v4368, %v4464
        %v4481 = vmul.f32 %v4369, %v4465
        %v4482 = vmul.f32 %v4370, %v4466
        %v4484 = vlaneseq
        %v4485 = vshrl.u32 %v4484, 7
        %v4486 = vsub.s32 0, %v4485
        %v4487 = vrot.slane %v4305, %v4486
        %v4489 = vmul.f32 %v4467, %v4487
        %v4490 = vmul.f32 %v4468, %v4487
        %v4491 = vmul.f32 %v4469, %v4487
        %v4492 = vmul.f32 %v4470, %v4487
        %v4493 = vmul.f32 %v4471, %v4487
        %v4494 = vmul.f32 %v4472, %v4487
        %v4495 = vmul.f32 %v4473, %v4487
        %v4496 = vmul.f32 %v4474, %v4487
        %v4497 = vmul.f32 %v4475, %v4487
        %v4498 = vmul.f32 %v4476, %v4487
        %v4499 = vmul.f32 %v4477, %v4487
        %v4500 = vmul.f32 %v4478, %v4487
        %v4501 = vmul.f32 %v4479, %v4487
        %v4502 = vmul.f32 %v4480, %v4487
        %v4503 = vmul.f32 %v4481, %v4487
        %v4504 = vmul.f32 %v4482, %v4487
        %v4506 = vlaneseq
        %v4507 = vshrl.u32 %v4506, 7
        %v4508 = vsub.s32 0, %v4507
        %v4509 = vrot.slane %v4306, %v4508
        %v4511 = vadd.f32 %v4489, %v4509
        %v4512 = vadd.f32 %v4490, %v4509
        %v4513 = vadd.f32 %v4491, %v4509
        %v4514 = vadd.f32 %v4492, %v4509
        %v4515 = vadd.f32 %v4493, %v4509
        %v4516 = vadd.f32 %v4494, %v4509
        %v4517 = vadd.f32 %v4495, %v4509
        %v4518 = vadd.f32 %v4496, %v4509
        %v4519 = vadd.f32 %v4497, %v4509
        %v4520 = vadd.f32 %v4498, %v4509
        %v4521 = vadd.f32 %v4499, %v4509
        %v4522 = vadd.f32 %v4500, %v4509
        %v4523 = vadd.f32 %v4501, %v4509
        %v4524 = vadd.f32 %v4502, %v4509
        %v4525 = vadd.f32 %v4503, %v4509
        %v4526 = vadd.f32 %v4504, %v4509
        %v4527 = vpack.c.bf16 %v4512, %v4511
        %v4528 = vpack.c.bf16 %v4514, %v4513
        %v4529 = vpack.c.bf16 %v4516, %v4515
        %v4530 = vpack.c.bf16 %v4518, %v4517
        %v4531 = vpack.c.bf16 %v4520, %v4519
        %v4532 = vpack.c.bf16 %v4522, %v4521
        %v4533 = vpack.c.bf16 %v4524, %v4523
        %v4534 = vpack.c.bf16 %v4526, %v4525
        %v4535 = vld [vmem:[%s1064] sm:$0xff]
        %v4536 = vld [vmem:[%s1064 + $0x8] sm:$0xff]
        %v4537 = vld [vmem:[%s1064 + $0x10] sm:$0xff]
        %v4538 = vld [vmem:[%s1064 + $0x18] sm:$0xff]
        %v4539 = vld [vmem:[%s1064 + $0x20] sm:$0xff]
        %v4540 = vld [vmem:[%s1064 + $0x28] sm:$0xff]
        %v4541 = vld [vmem:[%s1064 + $0x30] sm:$0xff]
        %v4542 = vld [vmem:[%s1064 + $0x38] sm:$0xff]
        %v4543 = vld [vmem:[%s1064 + $0x40] sm:$0xff]
        %v4544 = vld [vmem:[%s1064 + $0x48] sm:$0xff]
        %v4545 = vld [vmem:[%s1064 + $0x50] sm:$0xff]
        %v4546 = vld [vmem:[%s1064 + $0x58] sm:$0xff]
        %v4547 = vld [vmem:[%s1064 + $0x60] sm:$0xff]
        %v4548 = vld [vmem:[%s1064 + $0x68] sm:$0xff]
        %v4549 = vld [vmem:[%s1064 + $0x70] sm:$0xff]
        %v4550 = vld [vmem:[%s1064 + $0x78] sm:$0xff]
        %v4551 = vld [vmem:[%s1068] sm:$0x3]
        %v4553 = vlaneseq
        %v4554 = vshrl.u32 %v4553, 7
        %v4555 = vsub.s32 0, %v4554
        %v4556 = vrot.slane %v4551, %v4555
        %v4557 = vlaneseq
        %v4558 = vshrl.u32 %v4557, 7
        %v4559 = vsub.s32 1, %v4558
        %v4560 = vrot.slane %v4551, %v4559
        %v4579 = vunpack.c.l.b16 %v4535
        %v4580 = vunpack.c.h.b16 %v4535
        %v4581 = vunpack.c.l.b16 %v4536
        %v4582 = vunpack.c.h.b16 %v4536
        %v4583 = vunpack.c.l.b16 %v4537
        %v4584 = vunpack.c.h.b16 %v4537
        %v4585 = vunpack.c.l.b16 %v4538
        %v4586 = vunpack.c.h.b16 %v4538
        %v4587 = vunpack.c.l.b16 %v4539
        %v4588 = vunpack.c.h.b16 %v4539
        %v4589 = vunpack.c.l.b16 %v4540
        %v4590 = vunpack.c.h.b16 %v4540
        %v4591 = vunpack.c.l.b16 %v4541
        %v4592 = vunpack.c.h.b16 %v4541
        %v4593 = vunpack.c.l.b16 %v4542
        %v4594 = vunpack.c.h.b16 %v4542
        %v4595 = vunpack.c.l.b16 %v4543
        %v4596 = vunpack.c.h.b16 %v4543
        %v4597 = vunpack.c.l.b16 %v4544
        %v4598 = vunpack.c.h.b16 %v4544
        %v4599 = vunpack.c.l.b16 %v4545
        %v4600 = vunpack.c.h.b16 %v4545
        %v4601 = vunpack.c.l.b16 %v4546
        %v4602 = vunpack.c.h.b16 %v4546
        %v4603 = vunpack.c.l.b16 %v4547
        %v4604 = vunpack.c.h.b16 %v4547
        %v4605 = vunpack.c.l.b16 %v4548
        %v4606 = vunpack.c.h.b16 %v4548
        %v4607 = vunpack.c.l.b16 %v4549
        %v4608 = vunpack.c.h.b16 %v4549
        %v4609 = vunpack.c.l.b16 %v4550
        %v4610 = vunpack.c.h.b16 %v4550
        %v4611 = vpack.c.b16 %v4581, %v4579
        %v4612 = vpack.c.b16 %v4582, %v4580
        %v4613 = vpack.c.b16 %v4585, %v4583
        %v4614 = vpack.c.b16 %v4586, %v4584
        %v4615 = vpack.c.b16 %v4589, %v4587
        %v4616 = vpack.c.b16 %v4590, %v4588
        %v4617 = vpack.c.b16 %v4593, %v4591
        %v4618 = vpack.c.b16 %v4594, %v4592
        %v4619 = vpack.c.b16 %v4597, %v4595
        %v4620 = vpack.c.b16 %v4598, %v4596
        %v4621 = vpack.c.b16 %v4601, %v4599
        %v4622 = vpack.c.b16 %v4602, %v4600
        %v4623 = vpack.c.b16 %v4605, %v4603
        %v4624 = vpack.c.b16 %v4606, %v4604
        %v4625 = vpack.c.b16 %v4609, %v4607
        %v4626 = vpack.c.b16 %v4610, %v4608
        %4643 = vmatprep.subr.bf16.mxu0 %v4626
        %4644 = vmatpush1.bf16.msra.mxu0 %v4625
        %4645 = vmatprep.subr.bf16.mxu0 %v4624
        %4646 = vmatpush1.bf16.msra.mxu0 %v4623
        %4647 = vmatprep.subr.bf16.mxu0 %v4622
        %4648 = vmatpush1.bf16.msra.mxu0 %v4621
        %4649 = vmatprep.subr.bf16.mxu0 %v4620
        %4650 = vmatpush1.bf16.msra.mxu0 %v4619
        %4651 = vmatprep.subr.bf16.mxu0 %v4618
        %4652 = vmatpush1.bf16.msra.mxu0 %v4617
        %4653 = vmatprep.subr.bf16.mxu0 %v4616
        %4654 = vmatpush1.bf16.msra.mxu0 %v4615
        %4655 = vmatprep.subr.bf16.mxu0 %v4614
        %4656 = vmatpush1.bf16.msra.mxu0 %v4613
        %4657 = vmatprep.subr.bf16.mxu0 %v4612
        %4658 = vmatpush1.bf16.msra.mxu0 %v4611
        %4659 = vmatprep.subr.bf16.mxu0 0
        %4660 = vmatpush2.bf16.msra.mxu0 0
        %4661 = vmatprep.subr.bf16.mxu0 0
        %4662 = vmatpush2.bf16.msra.mxu0 0
        %4663 = vmatprep.subr.bf16.mxu0 0
        %4664 = vmatpush2.bf16.msra.mxu0 0
        %4665 = vmatprep.subr.bf16.mxu0 0
        %4666 = vmatpush2.bf16.msra.mxu0 0
        %4667 = vmatprep.subr.bf16.mxu0 0
        %4668 = vmatpush2.bf16.msra.mxu0 0
        %4669 = vmatprep.subr.bf16.mxu0 0
        %4670 = vmatpush2.bf16.msra.mxu0 0
        %4671 = vmatprep.subr.bf16.mxu0 0
        %4672 = vmatpush2.bf16.msra.mxu0 0
        %4673 = vmatprep.subr.bf16.mxu0 0
        %4674 = vmatpush2.bf16.msra.mxu0 0
        %4675 = vmatprep.mubr.bf16.mxu0 0
        %4676 = vmatmul.mubr.bf16.gmra.mxu0 %v4527
        %v4677 = vpop.f32.mrf.mxu0
        %v4678 = vadd.f32 %v4556, %v4677
        %v4679 = vpop.f32.mrf.mxu0
        %v4680 = vadd.f32 %v4560, %v4679
        %v4681 = vpop.f32.mrf.mxu0
        %v4682 = vadd.f32 %v4556, %v4681
        %v4683 = vpop.f32.mrf.mxu0
        %v4684 = vadd.f32 %v4560, %v4683
        %4685 = vmatprep.mubr.bf16.mxu0 0
        %4686 = vmatmul.mubr.bf16.gmra.mxu0 %v4528
        %v4687 = vpop.f32.mrf.mxu0
        %v4688 = vadd.f32 %v4556, %v4687
        %v4689 = vpop.f32.mrf.mxu0
        %v4690 = vadd.f32 %v4560, %v4689
        %v4691 = vpop.f32.mrf.mxu0
        %v4692 = vadd.f32 %v4556, %v4691
        %v4693 = vpop.f32.mrf.mxu0
        %v4694 = vadd.f32 %v4560, %v4693
        %4695 = vmatprep.mubr.bf16.mxu0 0
        %4696 = vmatmul.mubr.bf16.gmra.mxu0 %v4529
        %v4697 = vpop.f32.mrf.mxu0
        %v4698 = vadd.f32 %v4556, %v4697
        %v4699 = vpop.f32.mrf.mxu0
        %v4700 = vadd.f32 %v4560, %v4699
        %v4701 = vpop.f32.mrf.mxu0
        %v4702 = vadd.f32 %v4556, %v4701
        %v4703 = vpop.f32.mrf.mxu0
        %v4704 = vadd.f32 %v4560, %v4703
        %4705 = vmatprep.mubr.bf16.mxu0 0
        %4706 = vmatmul.mubr.bf16.gmra.mxu0 %v4530
        %v4707 = vpop.f32.mrf.mxu0
        %v4708 = vadd.f32 %v4556, %v4707
        %v4709 = vpop.f32.mrf.mxu0
        %v4710 = vadd.f32 %v4560, %v4709
        %v4711 = vpop.f32.mrf.mxu0
        %v4712 = vadd.f32 %v4556, %v4711
        %v4713 = vpop.f32.mrf.mxu0
        %v4714 = vadd.f32 %v4560, %v4713
        %4715 = vmatprep.mubr.bf16.mxu0 0
        %4716 = vmatmul.mubr.bf16.gmra.mxu0 %v4531
        %v4717 = vpop.f32.mrf.mxu0
        %v4718 = vadd.f32 %v4556, %v4717
        %v4719 = vpop.f32.mrf.mxu0
        %v4720 = vadd.f32 %v4560, %v4719
        %v4721 = vpop.f32.mrf.mxu0
        %v4722 = vadd.f32 %v4556, %v4721
        %v4723 = vpop.f32.mrf.mxu0
        %v4724 = vadd.f32 %v4560, %v4723
        %4725 = vmatprep.mubr.bf16.mxu0 0
        %4726 = vmatmul.mubr.bf16.gmra.mxu0 %v4532
        %v4727 = vpop.f32.mrf.mxu0
        %v4728 = vadd.f32 %v4556, %v4727
        %v4729 = vpop.f32.mrf.mxu0
        %v4730 = vadd.f32 %v4560, %v4729
        %v4731 = vpop.f32.mrf.mxu0
        %v4732 = vadd.f32 %v4556, %v4731
        %v4733 = vpop.f32.mrf.mxu0
        %v4734 = vadd.f32 %v4560, %v4733
        %4735 = vmatprep.mubr.bf16.mxu0 0
        %4736 = vmatmul.mubr.bf16.gmra.mxu0 %v4533
        %v4737 = vpop.f32.mrf.mxu0
        %v4738 = vadd.f32 %v4556, %v4737
        %v4739 = vpop.f32.mrf.mxu0
        %v4740 = vadd.f32 %v4560, %v4739
        %v4741 = vpop.f32.mrf.mxu0
        %v4742 = vadd.f32 %v4556, %v4741
        %v4743 = vpop.f32.mrf.mxu0
        %v4744 = vadd.f32 %v4560, %v4743
        %4745 = vmatprep.mubr.bf16.mxu0 0
        %4746 = vmatmul.mubr.bf16.gmra.mxu0 %v4534
        %v4747 = vpop.f32.mrf.mxu0
        %v4748 = vadd.f32 %v4556, %v4747
        %v4749 = vpop.f32.mrf.mxu0
        %v4750 = vadd.f32 %v4560, %v4749
        %v4751 = vpop.f32.mrf.mxu0
        %v4752 = vadd.f32 %v4556, %v4751
        %v4753 = vpop.f32.mrf.mxu0
        %v4754 = vadd.f32 %v4560, %v4753
        %4755 = vdwg.mxu0
        %v4756 = vmul.f32 %v4678, 0.5
        %v4757 = vmul.f32 %v4680, 0.5
        %v4758 = vmul.f32 %v4682, 0.5
        %v4759 = vmul.f32 %v4684, 0.5
        %v4760 = vmul.f32 %v4688, 0.5
        %v4761 = vmul.f32 %v4690, 0.5
        %v4762 = vmul.f32 %v4692, 0.5
        %v4763 = vmul.f32 %v4694, 0.5
        %v4764 = vmul.f32 %v4698, 0.5
        %v4765 = vmul.f32 %v4700, 0.5
        %v4766 = vmul.f32 %v4702, 0.5
        %v4767 = vmul.f32 %v4704, 0.5
        %v4768 = vmul.f32 %v4708, 0.5
        %v4769 = vmul.f32 %v4710, 0.5
        %v4770 = vmul.f32 %v4712, 0.5
        %v4771 = vmul.f32 %v4714, 0.5
        %v4772 = vmul.f32 %v4718, 0.5
        %v4773 = vmul.f32 %v4720, 0.5
        %v4774 = vmul.f32 %v4722, 0.5
        %v4775 = vmul.f32 %v4724, 0.5
        %v4776 = vmul.f32 %v4728, 0.5
        %v4777 = vmul.f32 %v4730, 0.5
        %v4778 = vmul.f32 %v4732, 0.5
        %v4779 = vmul.f32 %v4734, 0.5
        %v4780 = vmul.f32 %v4738, 0.5
        %v4781 = vmul.f32 %v4740, 0.5
        %v4782 = vmul.f32 %v4742, 0.5
        %v4783 = vmul.f32 %v4744, 0.5
        %v4784 = vmul.f32 %v4748, 0.5
        %v4785 = vmul.f32 %v4750, 0.5
        %v4786 = vmul.f32 %v4752, 0.5
        %v4787 = vmul.f32 %v4754, 0.5
        %v4788 = vmul.f32 %v4678, 0.70710677
        %v4789 = vmul.f32 %v4680, 0.70710677
        %v4790 = vmul.f32 %v4682, 0.70710677
        %v4791 = vmul.f32 %v4684, 0.70710677
        %v4792 = vmul.f32 %v4688, 0.70710677
        %v4793 = vmul.f32 %v4690, 0.70710677
        %v4794 = vmul.f32 %v4692, 0.70710677
        %v4795 = vmul.f32 %v4694, 0.70710677
        %v4796 = vmul.f32 %v4698, 0.70710677
        %v4797 = vmul.f32 %v4700, 0.70710677
        %v4798 = vmul.f32 %v4702, 0.70710677
        %v4799 = vmul.f32 %v4704, 0.70710677
        %v4800 = vmul.f32 %v4708, 0.70710677
        %v4801 = vmul.f32 %v4710, 0.70710677
        %v4802 = vmul.f32 %v4712, 0.70710677
        %v4803 = vmul.f32 %v4714, 0.70710677
        %v4804 = vmul.f32 %v4718, 0.70710677
        %v4805 = vmul.f32 %v4720, 0.70710677
        %v4806 = vmul.f32 %v4722, 0.70710677
        %v4807 = vmul.f32 %v4724, 0.70710677
        %v4808 = vmul.f32 %v4728, 0.70710677
        %v4809 = vmul.f32 %v4730, 0.70710677
        %v4810 = vmul.f32 %v4732, 0.70710677
        %v4811 = vmul.f32 %v4734, 0.70710677
        %v4812 = vmul.f32 %v4738, 0.70710677
        %v4813 = vmul.f32 %v4740, 0.70710677
        %v4814 = vmul.f32 %v4742, 0.70710677
        %v4815 = vmul.f32 %v4744, 0.70710677
        %v4816 = vmul.f32 %v4748, 0.70710677
        %v4817 = vmul.f32 %v4750, 0.70710677
        %v4818 = vmul.f32 %v4752, 0.70710677
        %v4819 = vmul.f32 %v4754, 0.70710677
        %v4820 = verf.f32.pop %v4788
        %v4821 = verf.f32.pop %v4789
        %v4822 = verf.f32.pop %v4790
        %v4823 = verf.f32.pop %v4791
        %v4824 = verf.f32.pop %v4792
        %v4825 = verf.f32.pop %v4793
        %v4826 = verf.f32.pop %v4794
        %v4827 = verf.f32.pop %v4795
        %v4828 = verf.f32.pop %v4796
        %v4829 = verf.f32.pop %v4797
        %v4830 = verf.f32.pop %v4798
        %v4831 = verf.f32.pop %v4799
        %v4832 = verf.f32.pop %v4800
        %v4833 = verf.f32.pop %v4801
        %v4834 = verf.f32.pop %v4802
        %v4835 = verf.f32.pop %v4803
        %v4836 = verf.f32.pop %v4804
        %v4837 = verf.f32.pop %v4805
        %v4838 = verf.f32.pop %v4806
        %v4839 = verf.f32.pop %v4807
        %v4840 = verf.f32.pop %v4808
        %v4841 = verf.f32.pop %v4809
        %v4842 = verf.f32.pop %v4810
        %v4843 = verf.f32.pop %v4811
        %v4844 = verf.f32.pop %v4812
        %v4845 = verf.f32.pop %v4813
        %v4846 = verf.f32.pop %v4814
        %v4847 = verf.f32.pop %v4815
        %v4848 = verf.f32.pop %v4816
        %v4849 = verf.f32.pop %v4817
        %v4850 = verf.f32.pop %v4818
        %v4851 = verf.f32.pop %v4819
        %v4852 = vadd.f32 %v4820, 1.0
        %v4853 = vadd.f32 %v4821, 1.0
        %v4854 = vadd.f32 %v4822, 1.0
        %v4855 = vadd.f32 %v4823, 1.0
        %v4856 = vadd.f32 %v4824, 1.0
        %v4857 = vadd.f32 %v4825, 1.0
        %v4858 = vadd.f32 %v4826, 1.0
        %v4859 = vadd.f32 %v4827, 1.0
        %v4860 = vadd.f32 %v4828, 1.0
        %v4861 = vadd.f32 %v4829, 1.0
        %v4862 = vadd.f32 %v4830, 1.0
        %v4863 = vadd.f32 %v4831, 1.0
        %v4864 = vadd.f32 %v4832, 1.0
        %v4865 = vadd.f32 %v4833, 1.0
        %v4866 = vadd.f32 %v4834, 1.0
        %v4867 = vadd.f32 %v4835, 1.0
        %v4868 = vadd.f32 %v4836, 1.0
        %v4869 = vadd.f32 %v4837, 1.0
        %v4870 = vadd.f32 %v4838, 1.0
        %v4871 = vadd.f32 %v4839, 1.0
        %v4872 = vadd.f32 %v4840, 1.0
        %v4873 = vadd.f32 %v4841, 1.0
        %v4874 = vadd.f32 %v4842, 1.0
        %v4875 = vadd.f32 %v4843, 1.0
        %v4876 = vadd.f32 %v4844, 1.0
        %v4877 = vadd.f32 %v4845, 1.0
        %v4878 = vadd.f32 %v4846, 1.0
        %v4879 = vadd.f32 %v4847, 1.0
        %v4880 = vadd.f32 %v4848, 1.0
        %v4881 = vadd.f32 %v4849, 1.0
        %v4882 = vadd.f32 %v4850, 1.0
        %v4883 = vadd.f32 %v4851, 1.0
        %v4884 = vmul.f32 %v4756, %v4852
        %v4885 = vmul.f32 %v4757, %v4853
        %v4886 = vmul.f32 %v4758, %v4854
        %v4887 = vmul.f32 %v4759, %v4855
        %v4888 = vmul.f32 %v4760, %v4856
        %v4889 = vmul.f32 %v4761, %v4857
        %v4890 = vmul.f32 %v4762, %v4858
        %v4891 = vmul.f32 %v4763, %v4859
        %v4892 = vmul.f32 %v4764, %v4860
        %v4893 = vmul.f32 %v4765, %v4861
        %v4894 = vmul.f32 %v4766, %v4862
        %v4895 = vmul.f32 %v4767, %v4863
        %v4896 = vmul.f32 %v4768, %v4864
        %v4897 = vmul.f32 %v4769, %v4865
        %v4898 = vmul.f32 %v4770, %v4866
        %v4899 = vmul.f32 %v4771, %v4867
        %v4900 = vmul.f32 %v4772, %v4868
        %v4901 = vmul.f32 %v4773, %v4869
        %v4902 = vmul.f32 %v4774, %v4870
        %v4903 = vmul.f32 %v4775, %v4871
        %v4904 = vmul.f32 %v4776, %v4872
        %v4905 = vmul.f32 %v4777, %v4873
        %v4906 = vmul.f32 %v4778, %v4874
        %v4907 = vmul.f32 %v4779, %v4875
        %v4908 = vmul.f32 %v4780, %v4876
        %v4909 = vmul.f32 %v4781, %v4877
        %v4910 = vmul.f32 %v4782, %v4878
        %v4911 = vmul.f32 %v4783, %v4879
        %v4912 = vmul.f32 %v4784, %v4880
        %v4913 = vmul.f32 %v4785, %v4881
        %v4914 = vmul.f32 %v4786, %v4882
        %v4915 = vmul.f32 %v4787, %v4883
        %v4916 = vpack.c.bf16 %v4886, %v4884
        %v4917 = vpack.c.bf16 %v4887, %v4885
        %v4918 = vpack.c.bf16 %v4890, %v4888
        %v4919 = vpack.c.bf16 %v4891, %v4889
        %v4920 = vpack.c.bf16 %v4894, %v4892
        %v4921 = vpack.c.bf16 %v4895, %v4893
        %v4922 = vpack.c.bf16 %v4898, %v4896
        %v4923 = vpack.c.bf16 %v4899, %v4897
        %v4924 = vpack.c.bf16 %v4902, %v4900
        %v4925 = vpack.c.bf16 %v4903, %v4901
        %v4926 = vpack.c.bf16 %v4906, %v4904
        %v4927 = vpack.c.bf16 %v4907, %v4905
        %v4928 = vpack.c.bf16 %v4910, %v4908
        %v4929 = vpack.c.bf16 %v4911, %v4909
        %v4930 = vpack.c.bf16 %v4914, %v4912
        %v4931 = vpack.c.bf16 %v4915, %v4913
        %v4932 = vld [vmem:[%s1073] sm:$0xf]
        %v4933 = vld [vmem:[%s1073 + $0x4] sm:$0xf]
        %v4934 = vld [vmem:[%s1073 + $0x8] sm:$0xf]
        %v4935 = vld [vmem:[%s1073 + $0xc] sm:$0xf]
        %v4936 = vld [vmem:[%s1073 + $0x10] sm:$0xf]
        %v4937 = vld [vmem:[%s1073 + $0x14] sm:$0xf]
        %v4938 = vld [vmem:[%s1073 + $0x18] sm:$0xf]
        %v4939 = vld [vmem:[%s1073 + $0x1c] sm:$0xf]
        %v4940 = vld [vmem:[%s1073 + $0x20] sm:$0xf]
        %v4941 = vld [vmem:[%s1073 + $0x24] sm:$0xf]
        %v4942 = vld [vmem:[%s1073 + $0x28] sm:$0xf]
        %v4943 = vld [vmem:[%s1073 + $0x2c] sm:$0xf]
        %v4944 = vld [vmem:[%s1073 + $0x30] sm:$0xf]
        %v4945 = vld [vmem:[%s1073 + $0x34] sm:$0xf]
        %v4946 = vld [vmem:[%s1073 + $0x38] sm:$0xf]
        %v4947 = vld [vmem:[%s1073 + $0x3c] sm:$0xf]
        %v4948 = vld [vmem:[%s1073 + $0x40] sm:$0xf]
        %v4949 = vld [vmem:[%s1073 + $0x44] sm:$0xf]
        %v4950 = vld [vmem:[%s1073 + $0x48] sm:$0xf]
        %v4951 = vld [vmem:[%s1073 + $0x4c] sm:$0xf]
        %v4952 = vld [vmem:[%s1073 + $0x50] sm:$0xf]
        %v4953 = vld [vmem:[%s1073 + $0x54] sm:$0xf]
        %v4954 = vld [vmem:[%s1073 + $0x58] sm:$0xf]
        %v4955 = vld [vmem:[%s1073 + $0x5c] sm:$0xf]
        %v4956 = vld [vmem:[%s1073 + $0x60] sm:$0xf]
        %v4957 = vld [vmem:[%s1073 + $0x64] sm:$0xf]
        %v4958 = vld [vmem:[%s1073 + $0x68] sm:$0xf]
        %v4959 = vld [vmem:[%s1073 + $0x6c] sm:$0xf]
        %v4960 = vld [vmem:[%s1073 + $0x70] sm:$0xf]
        %v4961 = vld [vmem:[%s1073 + $0x74] sm:$0xf]
        %v4962 = vld [vmem:[%s1073 + $0x78] sm:$0xf]
        %v4963 = vld [vmem:[%s1073 + $0x7c] sm:$0xf]
        %v4996 = vunpack.c.l.b16 %v4932
        %v4997 = vunpack.c.l.b16 %v4933
        %v4998 = vunpack.c.l.b16 %v4934
        %v4999 = vunpack.c.l.b16 %v4935
        %v5000 = vunpack.c.l.b16 %v4936
        %v5001 = vunpack.c.l.b16 %v4937
        %v5002 = vunpack.c.l.b16 %v4938
        %v5003 = vunpack.c.l.b16 %v4939
        %v5004 = vunpack.c.l.b16 %v4940
        %v5005 = vunpack.c.l.b16 %v4941
        %v5006 = vunpack.c.l.b16 %v4942
        %v5007 = vunpack.c.l.b16 %v4943
        %v5008 = vunpack.c.l.b16 %v4944
        %v5009 = vunpack.c.l.b16 %v4945
        %v5010 = vunpack.c.l.b16 %v4946
        %v5011 = vunpack.c.l.b16 %v4947
        %v5012 = vunpack.c.l.b16 %v4948
        %v5013 = vunpack.c.l.b16 %v4949
        %v5014 = vunpack.c.l.b16 %v4950
        %v5015 = vunpack.c.l.b16 %v4951
        %v5016 = vunpack.c.l.b16 %v4952
        %v5017 = vunpack.c.l.b16 %v4953
        %v5018 = vunpack.c.l.b16 %v4954
        %v5019 = vunpack.c.l.b16 %v4955
        %v5020 = vunpack.c.l.b16 %v4956
        %v5021 = vunpack.c.l.b16 %v4957
        %v5022 = vunpack.c.l.b16 %v4958
        %v5023 = vunpack.c.l.b16 %v4959
        %v5024 = vunpack.c.l.b16 %v4960
        %v5025 = vunpack.c.l.b16 %v4961
        %v5026 = vunpack.c.l.b16 %v4962
        %v5027 = vunpack.c.l.b16 %v4963
        %v5028 = vpack.c.b16 %v4997, %v4996
        %v5029 = vpack.c.b16 %v4999, %v4998
        %v5030 = vpack.c.b16 %v5001, %v5000
        %v5031 = vpack.c.b16 %v5003, %v5002
        %v5032 = vpack.c.b16 %v5005, %v5004
        %v5033 = vpack.c.b16 %v5007, %v5006
        %v5034 = vpack.c.b16 %v5009, %v5008
        %v5035 = vpack.c.b16 %v5011, %v5010
        %v5036 = vpack.c.b16 %v5013, %v5012
        %v5037 = vpack.c.b16 %v5015, %v5014
        %v5038 = vpack.c.b16 %v5017, %v5016
        %v5039 = vpack.c.b16 %v5019, %v5018
        %v5040 = vpack.c.b16 %v5021, %v5020
        %v5041 = vpack.c.b16 %v5023, %v5022
        %v5042 = vpack.c.b16 %v5025, %v5024
        %v5043 = vpack.c.b16 %v5027, %v5026
        %5060 = vmatprep.subr.bf16.mxu0 0
        %5061 = vmatpush1.bf16.msra.mxu0 %v5035
        %5062 = vmatprep.subr.bf16.mxu0 0
        %5063 = vmatpush1.bf16.msra.mxu0 %v5034
        %5064 = vmatprep.subr.bf16.mxu0 0
        %5065 = vmatpush1.bf16.msra.mxu0 %v5033
        %5066 = vmatprep.subr.bf16.mxu0 0
        %5067 = vmatpush1.bf16.msra.mxu0 %v5032
        %5068 = vmatprep.subr.bf16.mxu0 0
        %5069 = vmatpush1.bf16.msra.mxu0 %v5031
        %5070 = vmatprep.subr.bf16.mxu0 0
        %5071 = vmatpush1.bf16.msra.mxu0 %v5030
        %5072 = vmatprep.subr.bf16.mxu0 0
        %5073 = vmatpush1.bf16.msra.mxu0 %v5029
        %5074 = vmatprep.subr.bf16.mxu0 0
        %5075 = vmatpush1.bf16.msra.mxu0 %v5028
        %5076 = vmatprep.subr.bf16.mxu0 0
        %5077 = vmatpush2.bf16.msra.mxu0 %v5043
        %5078 = vmatprep.subr.bf16.mxu0 0
        %5079 = vmatpush2.bf16.msra.mxu0 %v5042
        %5080 = vmatprep.subr.bf16.mxu0 0
        %5081 = vmatpush2.bf16.msra.mxu0 %v5041
        %5082 = vmatprep.subr.bf16.mxu0 0
        %5083 = vmatpush2.bf16.msra.mxu0 %v5040
        %5084 = vmatprep.subr.bf16.mxu0 0
        %5085 = vmatpush2.bf16.msra.mxu0 %v5039
        %5086 = vmatprep.subr.bf16.mxu0 0
        %5087 = vmatpush2.bf16.msra.mxu0 %v5038
        %5088 = vmatprep.subr.bf16.mxu0 0
        %5089 = vmatpush2.bf16.msra.mxu0 %v5037
        %5090 = vmatprep.subr.bf16.mxu0 0
        %5091 = vmatpush2.bf16.msra.mxu0 %v5036
        %5092 = vmatprep.mubr.bf16.mxu0 %v4917
        %5093 = vmatmul.mubr.bf16.gmra.mxu0 %v4916
        %v5094 = vpop.f32.mrf.mxu0
        %v5095 = vadd.f32 0.0, %v5094
        %v5096 = vpop.f32.mrf.mxu0
        %v5097 = vpop.f32.mrf.mxu0
        %v5098 = vadd.f32 0.0, %v5097
        %v5099 = vpop.f32.mrf.mxu0
        %5100 = vmatprep.mubr.bf16.mxu0 %v4919
        %5101 = vmatmul.mubr.bf16.gmra.mxu0 %v4918
        %v5102 = vpop.f32.mrf.mxu0
        %v5103 = vadd.f32 0.0, %v5102
        %v5104 = vpop.f32.mrf.mxu0
        %v5105 = vpop.f32.mrf.mxu0
        %v5106 = vadd.f32 0.0, %v5105
        %v5107 = vpop.f32.mrf.mxu0
        %5108 = vmatprep.mubr.bf16.mxu0 %v4921
        %5109 = vmatmul.mubr.bf16.gmra.mxu0 %v4920
        %v5110 = vpop.f32.mrf.mxu0
        %v5111 = vadd.f32 0.0, %v5110
        %v5112 = vpop.f32.mrf.mxu0
        %v5113 = vpop.f32.mrf.mxu0
        %v5114 = vadd.f32 0.0, %v5113
        %v5115 = vpop.f32.mrf.mxu0
        %5116 = vmatprep.mubr.bf16.mxu0 %v4923
        %5117 = vmatmul.mubr.bf16.gmra.mxu0 %v4922
        %v5118 = vpop.f32.mrf.mxu0
        %v5119 = vadd.f32 0.0, %v5118
        %v5120 = vpop.f32.mrf.mxu0
        %v5121 = vpop.f32.mrf.mxu0
        %v5122 = vadd.f32 0.0, %v5121
        %v5123 = vpop.f32.mrf.mxu0
        %5124 = vmatprep.mubr.bf16.mxu0 %v4925
        %5125 = vmatmul.mubr.bf16.gmra.mxu0 %v4924
        %v5126 = vpop.f32.mrf.mxu0
        %v5127 = vadd.f32 0.0, %v5126
        %v5128 = vpop.f32.mrf.mxu0
        %v5129 = vpop.f32.mrf.mxu0
        %v5130 = vadd.f32 0.0, %v5129
        %v5131 = vpop.f32.mrf.mxu0
        %5132 = vmatprep.mubr.bf16.mxu0 %v4927
        %5133 = vmatmul.mubr.bf16.gmra.mxu0 %v4926
        %v5134 = vpop.f32.mrf.mxu0
        %v5135 = vadd.f32 0.0, %v5134
        %v5136 = vpop.f32.mrf.mxu0
        %v5137 = vpop.f32.mrf.mxu0
        %v5138 = vadd.f32 0.0, %v5137
        %v5139 = vpop.f32.mrf.mxu0
        %5140 = vmatprep.mubr.bf16.mxu0 %v4929
        %5141 = vmatmul.mubr.bf16.gmra.mxu0 %v4928
        %v5142 = vpop.f32.mrf.mxu0
        %v5143 = vadd.f32 0.0, %v5142
        %v5144 = vpop.f32.mrf.mxu0
        %v5145 = vpop.f32.mrf.mxu0
        %v5146 = vadd.f32 0.0, %v5145
        %v5147 = vpop.f32.mrf.mxu0
        %5148 = vmatprep.mubr.bf16.mxu0 %v4931
        %5149 = vmatmul.mubr.bf16.gmra.mxu0 %v4930
        %v5150 = vpop.f32.mrf.mxu0
        %v5151 = vadd.f32 0.0, %v5150
        %v5152 = vpop.f32.mrf.mxu0
        %v5153 = vpop.f32.mrf.mxu0
        %v5154 = vadd.f32 0.0, %v5153
        %v5155 = vpop.f32.mrf.mxu0
        %5156 = vdwg.mxu0
        %v5157 = vadd.f32 %v4289, %v5095
        %v5158 = vadd.f32 %v4290, %v5098
        %v5159 = vadd.f32 %v4291, %v5103
        %v5160 = vadd.f32 %v4292, %v5106
        %v5161 = vadd.f32 %v4293, %v5111
        %v5162 = vadd.f32 %v4294, %v5114
        %v5163 = vadd.f32 %v4295, %v5119
        %v5164 = vadd.f32 %v4296, %v5122
        %v5165 = vadd.f32 %v4297, %v5127
        %v5166 = vadd.f32 %v4298, %v5130
        %v5167 = vadd.f32 %v4299, %v5135
        %v5168 = vadd.f32 %v4300, %v5138
        %v5169 = vadd.f32 %v4301, %v5143
        %v5170 = vadd.f32 %v4302, %v5146
        %v5171 = vadd.f32 %v4303, %v5151
        %v5172 = vadd.f32 %v4304, %v5154
        %v5173 = vld [vmem:[%s1076] sm:$0x1]
        %v5175 = vlaneseq
        %v5176 = vshrl.u32 %v5175, 7
        %v5177 = vsub.s32 0, %v5176
        %v5178 = vrot.slane %v5173, %v5177
        %v5180 = vadd.f32 %v5157, %v5178
        %v5181 = vadd.f32 %v5158, %v5178
        %v5182 = vadd.f32 %v5159, %v5178
        %v5183 = vadd.f32 %v5160, %v5178
        %v5184 = vadd.f32 %v5161, %v5178
        %v5185 = vadd.f32 %v5162, %v5178
        %v5186 = vadd.f32 %v5163, %v5178
        %v5187 = vadd.f32 %v5164, %v5178
        %v5188 = vadd.f32 %v5165, %v5178
        %v5189 = vadd.f32 %v5166, %v5178
        %v5190 = vadd.f32 %v5167, %v5178
        %v5191 = vadd.f32 %v5168, %v5178
        %v5192 = vadd.f32 %v5169, %v5178
        %v5193 = vadd.f32 %v5170, %v5178
        %v5194 = vadd.f32 %v5171, %v5178
        %v5195 = vadd.f32 %v5172, %v5178
        %5196 = vst [vmem:[#allocation2] sm:$0xff] %v5180
        %5197 = vst [vmem:[#allocation2 + $0x8] sm:$0xff] %v5181
        %5198 = vst [vmem:[#allocation2 + $0x10] sm:$0xff] %v5182
        %5199 = vst [vmem:[#allocation2 + $0x18] sm:$0xff] %v5183
        %5200 = vst [vmem:[#allocation2 + $0x20] sm:$0xff] %v5184
        %5201 = vst [vmem:[#allocation2 + $0x28] sm:$0xff] %v5185
        %5202 = vst [vmem:[#allocation2 + $0x30] sm:$0xff] %v5186
        %5203 = vst [vmem:[#allocation2 + $0x38] sm:$0xff] %v5187
        %5204 = vst [vmem:[#allocation2 + $0x40] sm:$0xff] %v5188
        %5205 = vst [vmem:[#allocation2 + $0x48] sm:$0xff] %v5189
        %5206 = vst [vmem:[#allocation2 + $0x50] sm:$0xff] %v5190
        %5207 = vst [vmem:[#allocation2 + $0x58] sm:$0xff] %v5191
        %5208 = vst [vmem:[#allocation2 + $0x60] sm:$0xff] %v5192
        %5209 = vst [vmem:[#allocation2 + $0x68] sm:$0xff] %v5193
        %5210 = vst [vmem:[#allocation2 + $0x70] sm:$0xff] %v5194
        %5211 = vst [vmem:[#allocation2 + $0x78] sm:$0xff] %v5195
        %p5212 = scmp.eq.s32.totalorder %s49, 1
        // Predicated region
        $region141: #{_lambda_.1} parent=127 // pred_check
          %p5213 = pneg %p5212
        $region142: #{_lambda_.1} parent=127 // pred_check_branch
          %5215 = sbr.rel (%p5213) target = $region144
        $region143: #{_lambda_.1} parent=127 // pred_region
          %v5216 = vld [vmem:[%s15] sm:$0x1]
          %v5217 = vld [vmem:[%s16] sm:$0x1]
          %5218 = vadd.xlane.f32.xlu0 %v5180
          %v5219 = vpop.xlane.xlu0 %5218
          %5220 = vadd.xlane.f32.xlu0 %v5181
          %v5221 = vpop.xlane.xlu0 %5220
          %5222 = vadd.xlane.f32.xlu0 %v5182
          %v5223 = vpop.xlane.xlu0 %5222
          %5224 = vadd.xlane.f32.xlu0 %v5183
          %v5225 = vpop.xlane.xlu0 %5224
          %5226 = vadd.xlane.f32.xlu0 %v5184
          %v5227 = vpop.xlane.xlu0 %5226
          %5228 = vadd.xlane.f32.xlu0 %v5185
          %v5229 = vpop.xlane.xlu0 %5228
          %5230 = vadd.xlane.f32.xlu0 %v5186
          %v5231 = vpop.xlane.xlu0 %5230
          %5232 = vadd.xlane.f32.xlu0 %v5187
          %v5233 = vpop.xlane.xlu0 %5232
          %5234 = vadd.xlane.f32.xlu0 %v5188
          %v5235 = vpop.xlane.xlu0 %5234
          %5236 = vadd.xlane.f32.xlu0 %v5189
          %v5237 = vpop.xlane.xlu0 %5236
          %5238 = vadd.xlane.f32.xlu0 %v5190
          %v5239 = vpop.xlane.xlu0 %5238
          %5240 = vadd.xlane.f32.xlu0 %v5191
          %v5241 = vpop.xlane.xlu0 %5240
          %5242 = vadd.xlane.f32.xlu0 %v5192
          %v5243 = vpop.xlane.xlu0 %5242
          %5244 = vadd.xlane.f32.xlu0 %v5193
          %v5245 = vpop.xlane.xlu0 %5244
          %5246 = vadd.xlane.f32.xlu0 %v5194
          %v5247 = vpop.xlane.xlu0 %5246
          %5248 = vadd.xlane.f32.xlu0 %v5195
          %v5249 = vpop.xlane.xlu0 %5248
          %v5250 = vmul.f32 %v5219, %v1479
          %v5251 = vmul.f32 %v5221, %v1479
          %v5252 = vmul.f32 %v5223, %v1479
          %v5253 = vmul.f32 %v5225, %v1479
          %v5254 = vmul.f32 %v5227, %v1479
          %v5255 = vmul.f32 %v5229, %v1479
          %v5256 = vmul.f32 %v5231, %v1479
          %v5257 = vmul.f32 %v5233, %v1479
          %v5258 = vmul.f32 %v5235, %v1479
          %v5259 = vmul.f32 %v5237, %v1479
          %v5260 = vmul.f32 %v5239, %v1479
          %v5261 = vmul.f32 %v5241, %v1479
          %v5262 = vmul.f32 %v5243, %v1479
          %v5263 = vmul.f32 %v5245, %v1479
          %v5264 = vmul.f32 %v5247, %v1479
          %v5265 = vmul.f32 %v5249, %v1479
          %v5266 = vsub.f32 %v5180, %v5250
          %v5267 = vsub.f32 %v5181, %v5251
          %v5268 = vsub.f32 %v5182, %v5252
          %v5269 = vsub.f32 %v5183, %v5253
          %v5270 = vsub.f32 %v5184, %v5254
          %v5271 = vsub.f32 %v5185, %v5255
          %v5272 = vsub.f32 %v5186, %v5256
          %v5273 = vsub.f32 %v5187, %v5257
          %v5274 = vsub.f32 %v5188, %v5258
          %v5275 = vsub.f32 %v5189, %v5259
          %v5276 = vsub.f32 %v5190, %v5260
          %v5277 = vsub.f32 %v5191, %v5261
          %v5278 = vsub.f32 %v5192, %v5262
          %v5279 = vsub.f32 %v5193, %v5263
          %v5280 = vsub.f32 %v5194, %v5264
          %v5281 = vsub.f32 %v5195, %v5265
          %v5282 = vmul.f32 %v5266, %v5266
          %v5283 = vmul.f32 %v5267, %v5267
          %v5284 = vmul.f32 %v5268, %v5268
          %v5285 = vmul.f32 %v5269, %v5269
          %v5286 = vmul.f32 %v5270, %v5270
          %v5287 = vmul.f32 %v5271, %v5271
          %v5288 = vmul.f32 %v5272, %v5272
          %v5289 = vmul.f32 %v5273, %v5273
          %v5290 = vmul.f32 %v5274, %v5274
          %v5291 = vmul.f32 %v5275, %v5275
          %v5292 = vmul.f32 %v5276, %v5276
          %v5293 = vmul.f32 %v5277, %v5277
          %v5294 = vmul.f32 %v5278, %v5278
          %v5295 = vmul.f32 %v5279, %v5279
          %v5296 = vmul.f32 %v5280, %v5280
          %v5297 = vmul.f32 %v5281, %v5281
          %5298 = vadd.xlane.f32.xlu0 %v5282
          %v5299 = vpop.xlane.xlu0 %5298
          %5300 = vadd.xlane.f32.xlu0 %v5283
          %v5301 = vpop.xlane.xlu0 %5300
          %5302 = vadd.xlane.f32.xlu0 %v5284
          %v5303 = vpop.xlane.xlu0 %5302
          %5304 = vadd.xlane.f32.xlu0 %v5285
          %v5305 = vpop.xlane.xlu0 %5304
          %5306 = vadd.xlane.f32.xlu0 %v5286
          %v5307 = vpop.xlane.xlu0 %5306
          %5308 = vadd.xlane.f32.xlu0 %v5287
          %v5309 = vpop.xlane.xlu0 %5308
          %5310 = vadd.xlane.f32.xlu0 %v5288
          %v5311 = vpop.xlane.xlu0 %5310
          %5312 = vadd.xlane.f32.xlu0 %v5289
          %v5313 = vpop.xlane.xlu0 %5312
          %5314 = vadd.xlane.f32.xlu0 %v5290
          %v5315 = vpop.xlane.xlu0 %5314
          %5316 = vadd.xlane.f32.xlu0 %v5291
          %v5317 = vpop.xlane.xlu0 %5316
          %5318 = vadd.xlane.f32.xlu0 %v5292
          %v5319 = vpop.xlane.xlu0 %5318
          %5320 = vadd.xlane.f32.xlu0 %v5293
          %v5321 = vpop.xlane.xlu0 %5320
          %5322 = vadd.xlane.f32.xlu0 %v5294
          %v5323 = vpop.xlane.xlu0 %5322
          %5324 = vadd.xlane.f32.xlu0 %v5295
          %v5325 = vpop.xlane.xlu0 %5324
          %5326 = vadd.xlane.f32.xlu0 %v5296
          %v5327 = vpop.xlane.xlu0 %5326
          %5328 = vadd.xlane.f32.xlu0 %v5297
          %v5329 = vpop.xlane.xlu0 %5328
          %v5330 = vmul.f32 %v5299, %v1479
          %v5331 = vmul.f32 %v5301, %v1479
          %v5332 = vmul.f32 %v5303, %v1479
          %v5333 = vmul.f32 %v5305, %v1479
          %v5334 = vmul.f32 %v5307, %v1479
          %v5335 = vmul.f32 %v5309, %v1479
          %v5336 = vmul.f32 %v5311, %v1479
          %v5337 = vmul.f32 %v5313, %v1479
          %v5338 = vmul.f32 %v5315, %v1479
          %v5339 = vmul.f32 %v5317, %v1479
          %v5340 = vmul.f32 %v5319, %v1479
          %v5341 = vmul.f32 %v5321, %v1479
          %v5342 = vmul.f32 %v5323, %v1479
          %v5343 = vmul.f32 %v5325, %v1479
          %v5344 = vmul.f32 %v5327, %v1479
          %v5345 = vmul.f32 %v5329, %v1479
          %v5346 = vadd.f32 %v5330, 1e-05
          %v5347 = vadd.f32 %v5331, 1e-05
          %v5348 = vadd.f32 %v5332, 1e-05
          %v5349 = vadd.f32 %v5333, 1e-05
          %v5350 = vadd.f32 %v5334, 1e-05
          %v5351 = vadd.f32 %v5335, 1e-05
          %v5352 = vadd.f32 %v5336, 1e-05
          %v5353 = vadd.f32 %v5337, 1e-05
          %v5354 = vadd.f32 %v5338, 1e-05
          %v5355 = vadd.f32 %v5339, 1e-05
          %v5356 = vadd.f32 %v5340, 1e-05
          %v5357 = vadd.f32 %v5341, 1e-05
          %v5358 = vadd.f32 %v5342, 1e-05
          %v5359 = vadd.f32 %v5343, 1e-05
          %v5360 = vadd.f32 %v5344, 1e-05
          %v5361 = vadd.f32 %v5345, 1e-05
          %v5362 = vrsqrt.pop %v5346
          %v5363 = vrsqrt.pop %v5347
          %v5364 = vrsqrt.pop %v5348
          %v5365 = vrsqrt.pop %v5349
          %v5366 = vrsqrt.pop %v5350
          %v5367 = vrsqrt.pop %v5351
          %v5368 = vrsqrt.pop %v5352
          %v5369 = vrsqrt.pop %v5353
          %v5370 = vrsqrt.pop %v5354
          %v5371 = vrsqrt.pop %v5355
          %v5372 = vrsqrt.pop %v5356
          %v5373 = vrsqrt.pop %v5357
          %v5374 = vrsqrt.pop %v5358
          %v5375 = vrsqrt.pop %v5359
          %v5376 = vrsqrt.pop %v5360
          %v5377 = vrsqrt.pop %v5361
          %v5378 = vmul.f32 %v5266, %v5362
          %v5379 = vmul.f32 %v5267, %v5363
          %v5380 = vmul.f32 %v5268, %v5364
          %v5381 = vmul.f32 %v5269, %v5365
          %v5382 = vmul.f32 %v5270, %v5366
          %v5383 = vmul.f32 %v5271, %v5367
          %v5384 = vmul.f32 %v5272, %v5368
          %v5385 = vmul.f32 %v5273, %v5369
          %v5386 = vmul.f32 %v5274, %v5370
          %v5387 = vmul.f32 %v5275, %v5371
          %v5388 = vmul.f32 %v5276, %v5372
          %v5389 = vmul.f32 %v5277, %v5373
          %v5390 = vmul.f32 %v5278, %v5374
          %v5391 = vmul.f32 %v5279, %v5375
          %v5392 = vmul.f32 %v5280, %v5376
          %v5393 = vmul.f32 %v5281, %v5377
          %v5395 = vlaneseq
          %v5396 = vshrl.u32 %v5395, 7
          %v5397 = vsub.s32 0, %v5396
          %v5398 = vrot.slane %v5216, %v5397
          %v5400 = vmul.f32 %v5378, %v5398
          %v5401 = vmul.f32 %v5379, %v5398
          %v5402 = vmul.f32 %v5380, %v5398
          %v5403 = vmul.f32 %v5381, %v5398
          %v5404 = vmul.f32 %v5382, %v5398
          %v5405 = vmul.f32 %v5383, %v5398
          %v5406 = vmul.f32 %v5384, %v5398
          %v5407 = vmul.f32 %v5385, %v5398
          %v5408 = vmul.f32 %v5386, %v5398
          %v5409 = vmul.f32 %v5387, %v5398
          %v5410 = vmul.f32 %v5388, %v5398
          %v5411 = vmul.f32 %v5389, %v5398
          %v5412 = vmul.f32 %v5390, %v5398
          %v5413 = vmul.f32 %v5391, %v5398
          %v5414 = vmul.f32 %v5392, %v5398
          %v5415 = vmul.f32 %v5393, %v5398
          %v5417 = vlaneseq
          %v5418 = vshrl.u32 %v5417, 7
          %v5419 = vsub.s32 0, %v5418
          %v5420 = vrot.slane %v5217, %v5419
          %v5422 = vadd.f32 %v5400, %v5420
          %v5423 = vadd.f32 %v5401, %v5420
          %v5424 = vadd.f32 %v5402, %v5420
          %v5425 = vadd.f32 %v5403, %v5420
          %v5426 = vadd.f32 %v5404, %v5420
          %v5427 = vadd.f32 %v5405, %v5420
          %v5428 = vadd.f32 %v5406, %v5420
          %v5429 = vadd.f32 %v5407, %v5420
          %v5430 = vadd.f32 %v5408, %v5420
          %v5431 = vadd.f32 %v5409, %v5420
          %v5432 = vadd.f32 %v5410, %v5420
          %v5433 = vadd.f32 %v5411, %v5420
          %v5434 = vadd.f32 %v5412, %v5420
          %v5435 = vadd.f32 %v5413, %v5420
          %v5436 = vadd.f32 %v5414, %v5420
          %v5437 = vadd.f32 %v5415, %v5420
          %v5438 = vpack.c.bf16 %v5423, %v5422
          %v5439 = vpack.c.bf16 %v5425, %v5424
          %v5440 = vpack.c.bf16 %v5427, %v5426
          %v5441 = vpack.c.bf16 %v5429, %v5428
          %v5442 = vpack.c.bf16 %v5431, %v5430
          %v5443 = vpack.c.bf16 %v5433, %v5432
          %v5444 = vpack.c.bf16 %v5435, %v5434
          %v5445 = vpack.c.bf16 %v5437, %v5436
          %v5446 = vld [vmem:[#allocation4] sm:$0xf]
          %v5447 = vld [vmem:[#allocation4 + $0x4] sm:$0xf]
          %v5448 = vld [vmem:[#allocation4 + $0x8] sm:$0xf]
          %v5449 = vld [vmem:[#allocation4 + $0xc] sm:$0xf]
          %v5450 = vld [vmem:[#allocation4 + $0x10] sm:$0xf]
          %v5451 = vld [vmem:[#allocation4 + $0x14] sm:$0xf]
          %v5452 = vld [vmem:[#allocation4 + $0x18] sm:$0xf]
          %v5453 = vld [vmem:[#allocation4 + $0x1c] sm:$0xf]
          %v5454 = vld [vmem:[#allocation4 + $0x20] sm:$0xf]
          %v5455 = vld [vmem:[#allocation4 + $0x24] sm:$0xf]
          %v5456 = vld [vmem:[#allocation4 + $0x28] sm:$0xf]
          %v5457 = vld [vmem:[#allocation4 + $0x2c] sm:$0xf]
          %v5458 = vld [vmem:[#allocation4 + $0x30] sm:$0xf]
          %v5459 = vld [vmem:[#allocation4 + $0x34] sm:$0xf]
          %v5460 = vld [vmem:[#allocation4 + $0x38] sm:$0xf]
          %v5461 = vld [vmem:[#allocation4 + $0x3c] sm:$0xf]
          %v5462 = vld [vmem:[%s18] sm:$0x1]
          %v5464 = vlaneseq
          %v5465 = vshrl.u32 %v5464, 7
          %v5466 = vsub.s32 0, %v5465
          %v5467 = vrot.slane %v5462, %v5466
          %v5485 = vunpack.c.l.b16 %v5446
          %v5486 = vunpack.c.l.b16 %v5447
          %v5487 = vunpack.c.l.b16 %v5448
          %v5488 = vunpack.c.l.b16 %v5449
          %v5489 = vunpack.c.l.b16 %v5450
          %v5490 = vunpack.c.l.b16 %v5451
          %v5491 = vunpack.c.l.b16 %v5452
          %v5492 = vunpack.c.l.b16 %v5453
          %v5493 = vunpack.c.l.b16 %v5454
          %v5494 = vunpack.c.l.b16 %v5455
          %v5495 = vunpack.c.l.b16 %v5456
          %v5496 = vunpack.c.l.b16 %v5457
          %v5497 = vunpack.c.l.b16 %v5458
          %v5498 = vunpack.c.l.b16 %v5459
          %v5499 = vunpack.c.l.b16 %v5460
          %v5500 = vunpack.c.l.b16 %v5461
          %v5501 = vpack.c.b16 %v5486, %v5485
          %v5502 = vpack.c.b16 %v5488, %v5487
          %v5503 = vpack.c.b16 %v5490, %v5489
          %v5504 = vpack.c.b16 %v5492, %v5491
          %v5505 = vpack.c.b16 %v5494, %v5493
          %v5506 = vpack.c.b16 %v5496, %v5495
          %v5507 = vpack.c.b16 %v5498, %v5497
          %v5508 = vpack.c.b16 %v5500, %v5499
          %5517 = vmatprep.subr.bf16.mxu0 0
          %5518 = vmatpush1.bf16.msra.mxu0 %v5508
          %5519 = vmatprep.subr.bf16.mxu0 0
          %5520 = vmatpush1.bf16.msra.mxu0 %v5507
          %5521 = vmatprep.subr.bf16.mxu0 0
          %5522 = vmatpush1.bf16.msra.mxu0 %v5506
          %5523 = vmatprep.subr.bf16.mxu0 0
          %5524 = vmatpush1.bf16.msra.mxu0 %v5505
          %5525 = vmatprep.subr.bf16.mxu0 0
          %5526 = vmatpush1.bf16.msra.mxu0 %v5504
          %5527 = vmatprep.subr.bf16.mxu0 0
          %5528 = vmatpush1.bf16.msra.mxu0 %v5503
          %5529 = vmatprep.subr.bf16.mxu0 0
          %5530 = vmatpush1.bf16.msra.mxu0 %v5502
          %5531 = vmatprep.subr.bf16.mxu0 0
          %5532 = vmatpush1.bf16.msra.mxu0 %v5501
          %5533 = vmatprep.subr.bf16.mxu0 0
          %5534 = vmatpush2.bf16.msra.mxu0 0
          %5535 = vmatprep.subr.bf16.mxu0 0
          %5536 = vmatpush2.bf16.msra.mxu0 0
          %5537 = vmatprep.subr.bf16.mxu0 0
          %5538 = vmatpush2.bf16.msra.mxu0 0
          %5539 = vmatprep.subr.bf16.mxu0 0
          %5540 = vmatpush2.bf16.msra.mxu0 0
          %5541 = vmatprep.subr.bf16.mxu0 0
          %5542 = vmatpush2.bf16.msra.mxu0 0
          %5543 = vmatprep.subr.bf16.mxu0 0
          %5544 = vmatpush2.bf16.msra.mxu0 0
          %5545 = vmatprep.subr.bf16.mxu0 0
          %5546 = vmatpush2.bf16.msra.mxu0 0
          %5547 = vmatprep.subr.bf16.mxu0 0
          %5548 = vmatpush2.bf16.msra.mxu0 0
          %5549 = vmatprep.mubr.bf16.mxu0 0
          %5550 = vmatmul.mubr.bf16.gmra.mxu0 %v5438
          %v5551 = vpop.f32.mrf.mxu0
          %v5552 = vadd.f32 %v5467, %v5551
          %v5553 = vpop.f32.mrf.mxu0
          %v5554 = vpop.f32.mrf.mxu0
          %v5555 = vadd.f32 %v5467, %v5554
          %v5556 = vpop.f32.mrf.mxu0
          %5557 = vmatprep.mubr.bf16.mxu0 0
          %5558 = vmatmul.mubr.bf16.gmra.mxu0 %v5439
          %v5559 = vpop.f32.mrf.mxu0
          %v5560 = vadd.f32 %v5467, %v5559
          %v5561 = vpop.f32.mrf.mxu0
          %v5562 = vpop.f32.mrf.mxu0
          %v5563 = vadd.f32 %v5467, %v5562
          %v5564 = vpop.f32.mrf.mxu0
          %5565 = vmatprep.mubr.bf16.mxu0 0
          %5566 = vmatmul.mubr.bf16.gmra.mxu0 %v5440
          %v5567 = vpop.f32.mrf.mxu0
          %v5568 = vadd.f32 %v5467, %v5567
          %v5569 = vpop.f32.mrf.mxu0
          %v5570 = vpop.f32.mrf.mxu0
          %v5571 = vadd.f32 %v5467, %v5570
          %v5572 = vpop.f32.mrf.mxu0
          %5573 = vmatprep.mubr.bf16.mxu0 0
          %5574 = vmatmul.mubr.bf16.gmra.mxu0 %v5441
          %v5575 = vpop.f32.mrf.mxu0
          %v5576 = vadd.f32 %v5467, %v5575
          %v5577 = vpop.f32.mrf.mxu0
          %v5578 = vpop.f32.mrf.mxu0
          %v5579 = vadd.f32 %v5467, %v5578
          %v5580 = vpop.f32.mrf.mxu0
          %5581 = vmatprep.mubr.bf16.mxu0 0
          %5582 = vmatmul.mubr.bf16.gmra.mxu0 %v5442
          %v5583 = vpop.f32.mrf.mxu0
          %v5584 = vadd.f32 %v5467, %v5583
          %v5585 = vpop.f32.mrf.mxu0
          %v5586 = vpop.f32.mrf.mxu0
          %v5587 = vadd.f32 %v5467, %v5586
          %v5588 = vpop.f32.mrf.mxu0
          %5589 = vmatprep.mubr.bf16.mxu0 0
          %5590 = vmatmul.mubr.bf16.gmra.mxu0 %v5443
          %v5591 = vpop.f32.mrf.mxu0
          %v5592 = vadd.f32 %v5467, %v5591
          %v5593 = vpop.f32.mrf.mxu0
          %v5594 = vpop.f32.mrf.mxu0
          %v5595 = vadd.f32 %v5467, %v5594
          %v5596 = vpop.f32.mrf.mxu0
          %5597 = vmatprep.mubr.bf16.mxu0 0
          %5598 = vmatmul.mubr.bf16.gmra.mxu0 %v5444
          %v5599 = vpop.f32.mrf.mxu0
          %v5600 = vadd.f32 %v5467, %v5599
          %v5601 = vpop.f32.mrf.mxu0
          %v5602 = vpop.f32.mrf.mxu0
          %v5603 = vadd.f32 %v5467, %v5602
          %v5604 = vpop.f32.mrf.mxu0
          %5605 = vmatprep.mubr.bf16.mxu0 0
          %5606 = vmatmul.mubr.bf16.gmra.mxu0 %v5445
          %v5607 = vpop.f32.mrf.mxu0
          %v5608 = vadd.f32 %v5467, %v5607
          %v5609 = vpop.f32.mrf.mxu0
          %v5610 = vpop.f32.mrf.mxu0
          %v5611 = vadd.f32 %v5467, %v5610
          %v5612 = vpop.f32.mrf.mxu0
          %5613 = vdwg.mxu0
          %vm5614 = vcmask 15360
          %5615 = vst.msk [vmem:[%s1081] sm:$0xff] %vm5614, %v5552
          %5616 = vst.msk [vmem:[%s1081 + $0x8] sm:$0xff] %vm5614, %v5555
          %5617 = vst.msk [vmem:[%s1081 + $0x10] sm:$0xff] %vm5614, %v5560
          %5618 = vst.msk [vmem:[%s1081 + $0x18] sm:$0xff] %vm5614, %v5563
          %5619 = vst.msk [vmem:[%s1081 + $0x20] sm:$0xff] %vm5614, %v5568
          %5620 = vst.msk [vmem:[%s1081 + $0x28] sm:$0xff] %vm5614, %v5571
          %5621 = vst.msk [vmem:[%s1081 + $0x30] sm:$0xff] %vm5614, %v5576
          %5622 = vst.msk [vmem:[%s1081 + $0x38] sm:$0xff] %vm5614, %v5579
          %5623 = vst.msk [vmem:[%s1081 + $0x40] sm:$0xff] %vm5614, %v5584
          %5624 = vst.msk [vmem:[%s1081 + $0x48] sm:$0xff] %vm5614, %v5587
          %5625 = vst.msk [vmem:[%s1081 + $0x50] sm:$0xff] %vm5614, %v5592
          %5626 = vst.msk [vmem:[%s1081 + $0x58] sm:$0xff] %vm5614, %v5595
          %5627 = vst.msk [vmem:[%s1081 + $0x60] sm:$0xff] %vm5614, %v5600
          %5628 = vst.msk [vmem:[%s1081 + $0x68] sm:$0xff] %vm5614, %v5603
          %5629 = vst.msk [vmem:[%s1081 + $0x70] sm:$0xff] %vm5614, %v5608
          %5630 = vst.msk [vmem:[%s1081 + $0x78] sm:$0xff] %vm5614, %v5611
          %v5631 = vld [vmem:[%s19] sm:$0x1]
          %v5632 = vld [vmem:[%s20] sm:$0x1]
          %v5634 = vlaneseq
          %v5635 = vshrl.u32 %v5634, 7
          %v5636 = vsub.s32 0, %v5635
          %v5637 = vrot.slane %v5631, %v5636
          %v5639 = vmul.f32 %v5378, %v5637
          %v5640 = vmul.f32 %v5379, %v5637
          %v5641 = vmul.f32 %v5380, %v5637
          %v5642 = vmul.f32 %v5381, %v5637
          %v5643 = vmul.f32 %v5382, %v5637
          %v5644 = vmul.f32 %v5383, %v5637
          %v5645 = vmul.f32 %v5384, %v5637
          %v5646 = vmul.f32 %v5385, %v5637
          %v5647 = vmul.f32 %v5386, %v5637
          %v5648 = vmul.f32 %v5387, %v5637
          %v5649 = vmul.f32 %v5388, %v5637
          %v5650 = vmul.f32 %v5389, %v5637
          %v5651 = vmul.f32 %v5390, %v5637
          %v5652 = vmul.f32 %v5391, %v5637
          %v5653 = vmul.f32 %v5392, %v5637
          %v5654 = vmul.f32 %v5393, %v5637
          %v5656 = vlaneseq
          %v5657 = vshrl.u32 %v5656, 7
          %v5658 = vsub.s32 0, %v5657
          %v5659 = vrot.slane %v5632, %v5658
          %v5661 = vadd.f32 %v5639, %v5659
          %v5662 = vadd.f32 %v5640, %v5659
          %v5663 = vadd.f32 %v5641, %v5659
          %v5664 = vadd.f32 %v5642, %v5659
          %v5665 = vadd.f32 %v5643, %v5659
          %v5666 = vadd.f32 %v5644, %v5659
          %v5667 = vadd.f32 %v5645, %v5659
          %v5668 = vadd.f32 %v5646, %v5659
          %v5669 = vadd.f32 %v5647, %v5659
          %v5670 = vadd.f32 %v5648, %v5659
          %v5671 = vadd.f32 %v5649, %v5659
          %v5672 = vadd.f32 %v5650, %v5659
          %v5673 = vadd.f32 %v5651, %v5659
          %v5674 = vadd.f32 %v5652, %v5659
          %v5675 = vadd.f32 %v5653, %v5659
          %v5676 = vadd.f32 %v5654, %v5659
          %v5677 = vpack.c.bf16 %v5662, %v5661
          %v5678 = vpack.c.bf16 %v5664, %v5663
          %v5679 = vpack.c.bf16 %v5666, %v5665
          %v5680 = vpack.c.bf16 %v5668, %v5667
          %v5681 = vpack.c.bf16 %v5670, %v5669
          %v5682 = vpack.c.bf16 %v5672, %v5671
          %v5683 = vpack.c.bf16 %v5674, %v5673
          %v5684 = vpack.c.bf16 %v5676, %v5675
          %v5685 = vld [vmem:[%s21] sm:$0xff]
          %v5686 = vld [vmem:[%s21 + $0x8] sm:$0xff]
          %v5687 = vld [vmem:[%s21 + $0x10] sm:$0xff]
          %v5688 = vld [vmem:[%s21 + $0x18] sm:$0xff]
          %v5689 = vld [vmem:[%s21 + $0x20] sm:$0xff]
          %v5690 = vld [vmem:[%s21 + $0x28] sm:$0xff]
          %v5691 = vld [vmem:[%s21 + $0x30] sm:$0xff]
          %v5692 = vld [vmem:[%s21 + $0x38] sm:$0xff]
          %v5693 = vld [vmem:[%s21 + $0x40] sm:$0xff]
          %v5694 = vld [vmem:[%s21 + $0x48] sm:$0xff]
          %v5695 = vld [vmem:[%s21 + $0x50] sm:$0xff]
          %v5696 = vld [vmem:[%s21 + $0x58] sm:$0xff]
          %v5697 = vld [vmem:[%s21 + $0x60] sm:$0xff]
          %v5698 = vld [vmem:[%s21 + $0x68] sm:$0xff]
          %v5699 = vld [vmem:[%s21 + $0x70] sm:$0xff]
          %v5700 = vld [vmem:[%s21 + $0x78] sm:$0xff]
          %v5701 = vld [vmem:[%s22] sm:$0x3]
          %v5703 = vlaneseq
          %v5704 = vshrl.u32 %v5703, 7
          %v5705 = vsub.s32 0, %v5704
          %v5706 = vrot.slane %v5701, %v5705
          %v5707 = vlaneseq
          %v5708 = vshrl.u32 %v5707, 7
          %v5709 = vsub.s32 1, %v5708
          %v5710 = vrot.slane %v5701, %v5709
          %v5729 = vunpack.c.l.b16 %v5685
          %v5730 = vunpack.c.h.b16 %v5685
          %v5731 = vunpack.c.l.b16 %v5686
          %v5732 = vunpack.c.h.b16 %v5686
          %v5733 = vunpack.c.l.b16 %v5687
          %v5734 = vunpack.c.h.b16 %v5687
          %v5735 = vunpack.c.l.b16 %v5688
          %v5736 = vunpack.c.h.b16 %v5688
          %v5737 = vunpack.c.l.b16 %v5689
          %v5738 = vunpack.c.h.b16 %v5689
          %v5739 = vunpack.c.l.b16 %v5690
          %v5740 = vunpack.c.h.b16 %v5690
          %v5741 = vunpack.c.l.b16 %v5691
          %v5742 = vunpack.c.h.b16 %v5691
          %v5743 = vunpack.c.l.b16 %v5692
          %v5744 = vunpack.c.h.b16 %v5692
          %v5745 = vunpack.c.l.b16 %v5693
          %v5746 = vunpack.c.h.b16 %v5693
          %v5747 = vunpack.c.l.b16 %v5694
          %v5748 = vunpack.c.h.b16 %v5694
          %v5749 = vunpack.c.l.b16 %v5695
          %v5750 = vunpack.c.h.b16 %v5695
          %v5751 = vunpack.c.l.b16 %v5696
          %v5752 = vunpack.c.h.b16 %v5696
          %v5753 = vunpack.c.l.b16 %v5697
          %v5754 = vunpack.c.h.b16 %v5697
          %v5755 = vunpack.c.l.b16 %v5698
          %v5756 = vunpack.c.h.b16 %v5698
          %v5757 = vunpack.c.l.b16 %v5699
          %v5758 = vunpack.c.h.b16 %v5699
          %v5759 = vunpack.c.l.b16 %v5700
          %v5760 = vunpack.c.h.b16 %v5700
          %v5761 = vpack.c.b16 %v5731, %v5729
          %v5762 = vpack.c.b16 %v5732, %v5730
          %v5763 = vpack.c.b16 %v5735, %v5733
          %v5764 = vpack.c.b16 %v5736, %v5734
          %v5765 = vpack.c.b16 %v5739, %v5737
          %v5766 = vpack.c.b16 %v5740, %v5738
          %v5767 = vpack.c.b16 %v5743, %v5741
          %v5768 = vpack.c.b16 %v5744, %v5742
          %v5769 = vpack.c.b16 %v5747, %v5745
          %v5770 = vpack.c.b16 %v5748, %v5746
          %v5771 = vpack.c.b16 %v5751, %v5749
          %v5772 = vpack.c.b16 %v5752, %v5750
          %v5773 = vpack.c.b16 %v5755, %v5753
          %v5774 = vpack.c.b16 %v5756, %v5754
          %v5775 = vpack.c.b16 %v5759, %v5757
          %v5776 = vpack.c.b16 %v5760, %v5758
          %5793 = vmatprep.subr.bf16.mxu0 %v5776
          %5794 = vmatpush1.bf16.msra.mxu0 %v5775
          %5795 = vmatprep.subr.bf16.mxu0 %v5774
          %5796 = vmatpush1.bf16.msra.mxu0 %v5773
          %5797 = vmatprep.subr.bf16.mxu0 %v5772
          %5798 = vmatpush1.bf16.msra.mxu0 %v5771
          %5799 = vmatprep.subr.bf16.mxu0 %v5770
          %5800 = vmatpush1.bf16.msra.mxu0 %v5769
          %5801 = vmatprep.subr.bf16.mxu0 %v5768
          %5802 = vmatpush1.bf16.msra.mxu0 %v5767
          %5803 = vmatprep.subr.bf16.mxu0 %v5766
          %5804 = vmatpush1.bf16.msra.mxu0 %v5765
          %5805 = vmatprep.subr.bf16.mxu0 %v5764
          %5806 = vmatpush1.bf16.msra.mxu0 %v5763
          %5807 = vmatprep.subr.bf16.mxu0 %v5762
          %5808 = vmatpush1.bf16.msra.mxu0 %v5761
          %5809 = vmatprep.subr.bf16.mxu0 0
          %5810 = vmatpush2.bf16.msra.mxu0 0
          %5811 = vmatprep.subr.bf16.mxu0 0
          %5812 = vmatpush2.bf16.msra.mxu0 0
          %5813 = vmatprep.subr.bf16.mxu0 0
          %5814 = vmatpush2.bf16.msra.mxu0 0
          %5815 = vmatprep.subr.bf16.mxu0 0
          %5816 = vmatpush2.bf16.msra.mxu0 0
          %5817 = vmatprep.subr.bf16.mxu0 0
          %5818 = vmatpush2.bf16.msra.mxu0 0
          %5819 = vmatprep.subr.bf16.mxu0 0
          %5820 = vmatpush2.bf16.msra.mxu0 0
          %5821 = vmatprep.subr.bf16.mxu0 0
          %5822 = vmatpush2.bf16.msra.mxu0 0
          %5823 = vmatprep.subr.bf16.mxu0 0
          %5824 = vmatpush2.bf16.msra.mxu0 0
          %5825 = vmatprep.mubr.bf16.mxu0 0
          %5826 = vmatmul.mubr.bf16.gmra.mxu0 %v5677
          %v5827 = vpop.f32.mrf.mxu0
          %v5828 = vadd.f32 %v5706, %v5827
          %v5829 = vpop.f32.mrf.mxu0
          %v5830 = vadd.f32 %v5710, %v5829
          %v5831 = vpop.f32.mrf.mxu0
          %v5832 = vadd.f32 %v5706, %v5831
          %v5833 = vpop.f32.mrf.mxu0
          %v5834 = vadd.f32 %v5710, %v5833
          %5835 = vmatprep.mubr.bf16.mxu0 0
          %5836 = vmatmul.mubr.bf16.gmra.mxu0 %v5678
          %v5837 = vpop.f32.mrf.mxu0
          %v5838 = vadd.f32 %v5706, %v5837
          %v5839 = vpop.f32.mrf.mxu0
          %v5840 = vadd.f32 %v5710, %v5839
          %v5841 = vpop.f32.mrf.mxu0
          %v5842 = vadd.f32 %v5706, %v5841
          %v5843 = vpop.f32.mrf.mxu0
          %v5844 = vadd.f32 %v5710, %v5843
          %5845 = vmatprep.mubr.bf16.mxu0 0
          %5846 = vmatmul.mubr.bf16.gmra.mxu0 %v5679
          %v5847 = vpop.f32.mrf.mxu0
          %v5848 = vadd.f32 %v5706, %v5847
          %v5849 = vpop.f32.mrf.mxu0
          %v5850 = vadd.f32 %v5710, %v5849
          %v5851 = vpop.f32.mrf.mxu0
          %v5852 = vadd.f32 %v5706, %v5851
          %v5853 = vpop.f32.mrf.mxu0
          %v5854 = vadd.f32 %v5710, %v5853
          %5855 = vmatprep.mubr.bf16.mxu0 0
          %5856 = vmatmul.mubr.bf16.gmra.mxu0 %v5680
          %v5857 = vpop.f32.mrf.mxu0
          %v5858 = vadd.f32 %v5706, %v5857
          %v5859 = vpop.f32.mrf.mxu0
          %v5860 = vadd.f32 %v5710, %v5859
          %v5861 = vpop.f32.mrf.mxu0
          %v5862 = vadd.f32 %v5706, %v5861
          %v5863 = vpop.f32.mrf.mxu0
          %v5864 = vadd.f32 %v5710, %v5863
          %5865 = vmatprep.mubr.bf16.mxu0 0
          %5866 = vmatmul.mubr.bf16.gmra.mxu0 %v5681
          %v5867 = vpop.f32.mrf.mxu0
          %v5868 = vadd.f32 %v5706, %v5867
          %v5869 = vpop.f32.mrf.mxu0
          %v5870 = vadd.f32 %v5710, %v5869
          %v5871 = vpop.f32.mrf.mxu0
          %v5872 = vadd.f32 %v5706, %v5871
          %v5873 = vpop.f32.mrf.mxu0
          %v5874 = vadd.f32 %v5710, %v5873
          %5875 = vmatprep.mubr.bf16.mxu0 0
          %5876 = vmatmul.mubr.bf16.gmra.mxu0 %v5682
          %v5877 = vpop.f32.mrf.mxu0
          %v5878 = vadd.f32 %v5706, %v5877
          %v5879 = vpop.f32.mrf.mxu0
          %v5880 = vadd.f32 %v5710, %v5879
          %v5881 = vpop.f32.mrf.mxu0
          %v5882 = vadd.f32 %v5706, %v5881
          %v5883 = vpop.f32.mrf.mxu0
          %v5884 = vadd.f32 %v5710, %v5883
          %5885 = vmatprep.mubr.bf16.mxu0 0
          %5886 = vmatmul.mubr.bf16.gmra.mxu0 %v5683
          %v5887 = vpop.f32.mrf.mxu0
          %v5888 = vadd.f32 %v5706, %v5887
          %v5889 = vpop.f32.mrf.mxu0
          %v5890 = vadd.f32 %v5710, %v5889
          %v5891 = vpop.f32.mrf.mxu0
          %v5892 = vadd.f32 %v5706, %v5891
          %v5893 = vpop.f32.mrf.mxu0
          %v5894 = vadd.f32 %v5710, %v5893
          %5895 = vmatprep.mubr.bf16.mxu0 0
          %5896 = vmatmul.mubr.bf16.gmra.mxu0 %v5684
          %v5897 = vpop.f32.mrf.mxu0
          %v5898 = vadd.f32 %v5706, %v5897
          %v5899 = vpop.f32.mrf.mxu0
          %v5900 = vadd.f32 %v5710, %v5899
          %v5901 = vpop.f32.mrf.mxu0
          %v5902 = vadd.f32 %v5706, %v5901
          %v5903 = vpop.f32.mrf.mxu0
          %v5904 = vadd.f32 %v5710, %v5903
          %5905 = vdwg.mxu0
          %v5906 = vpack.c.bf16 %v5832, %v5828
          %v5907 = vpack.c.bf16 %v5834, %v5830
          %v5908 = vpack.c.bf16 %v5842, %v5838
          %v5909 = vpack.c.bf16 %v5844, %v5840
          %v5910 = vpack.c.bf16 %v5852, %v5848
          %v5911 = vpack.c.bf16 %v5854, %v5850
          %v5912 = vpack.c.bf16 %v5862, %v5858
          %v5913 = vpack.c.bf16 %v5864, %v5860
          %v5914 = vpack.c.bf16 %v5872, %v5868
          %v5915 = vpack.c.bf16 %v5874, %v5870
          %v5916 = vpack.c.bf16 %v5882, %v5878
          %v5917 = vpack.c.bf16 %v5884, %v5880
          %v5918 = vpack.c.bf16 %v5892, %v5888
          %v5919 = vpack.c.bf16 %v5894, %v5890
          %v5920 = vpack.c.bf16 %v5902, %v5898
          %v5921 = vpack.c.bf16 %v5904, %v5900
          %v5922 = vld [vmem:[#allocation6] sm:$0xf]
          %v5923 = vld [vmem:[#allocation6 + $0x4] sm:$0xf]
          %v5924 = vld [vmem:[#allocation6 + $0x8] sm:$0xf]
          %v5925 = vld [vmem:[#allocation6 + $0xc] sm:$0xf]
          %v5926 = vld [vmem:[#allocation6 + $0x10] sm:$0xf]
          %v5927 = vld [vmem:[#allocation6 + $0x14] sm:$0xf]
          %v5928 = vld [vmem:[#allocation6 + $0x18] sm:$0xf]
          %v5929 = vld [vmem:[#allocation6 + $0x1c] sm:$0xf]
          %v5930 = vld [vmem:[#allocation6 + $0x20] sm:$0xf]
          %v5931 = vld [vmem:[#allocation6 + $0x24] sm:$0xf]
          %v5932 = vld [vmem:[#allocation6 + $0x28] sm:$0xf]
          %v5933 = vld [vmem:[#allocation6 + $0x2c] sm:$0xf]
          %v5934 = vld [vmem:[#allocation6 + $0x30] sm:$0xf]
          %v5935 = vld [vmem:[#allocation6 + $0x34] sm:$0xf]
          %v5936 = vld [vmem:[#allocation6 + $0x38] sm:$0xf]
          %v5937 = vld [vmem:[#allocation6 + $0x3c] sm:$0xf]
          %v5938 = vld [vmem:[#allocation6 + $0x40] sm:$0xf]
          %v5939 = vld [vmem:[#allocation6 + $0x44] sm:$0xf]
          %v5940 = vld [vmem:[#allocation6 + $0x48] sm:$0xf]
          %v5941 = vld [vmem:[#allocation6 + $0x4c] sm:$0xf]
          %v5942 = vld [vmem:[#allocation6 + $0x50] sm:$0xf]
          %v5943 = vld [vmem:[#allocation6 + $0x54] sm:$0xf]
          %v5944 = vld [vmem:[#allocation6 + $0x58] sm:$0xf]
          %v5945 = vld [vmem:[#allocation6 + $0x5c] sm:$0xf]
          %v5946 = vld [vmem:[#allocation6 + $0x60] sm:$0xf]
          %v5947 = vld [vmem:[#allocation6 + $0x64] sm:$0xf]
          %v5948 = vld [vmem:[#allocation6 + $0x68] sm:$0xf]
          %v5949 = vld [vmem:[#allocation6 + $0x6c] sm:$0xf]
          %v5950 = vld [vmem:[#allocation6 + $0x70] sm:$0xf]
          %v5951 = vld [vmem:[#allocation6 + $0x74] sm:$0xf]
          %v5952 = vld [vmem:[#allocation6 + $0x78] sm:$0xf]
          %v5953 = vld [vmem:[#allocation6 + $0x7c] sm:$0xf]
          %v5954 = vld [vmem:[%s24] sm:$0x1]
          %v5956 = vlaneseq
          %v5957 = vshrl.u32 %v5956, 7
          %v5958 = vsub.s32 0, %v5957
          %v5959 = vrot.slane %v5954, %v5958
          %v5993 = vunpack.c.l.b16 %v5922
          %v5994 = vunpack.c.l.b16 %v5923
          %v5995 = vunpack.c.l.b16 %v5924
          %v5996 = vunpack.c.l.b16 %v5925
          %v5997 = vunpack.c.l.b16 %v5926
          %v5998 = vunpack.c.l.b16 %v5927
          %v5999 = vunpack.c.l.b16 %v5928
          %v6000 = vunpack.c.l.b16 %v5929
          %v6001 = vunpack.c.l.b16 %v5930
          %v6002 = vunpack.c.l.b16 %v5931
          %v6003 = vunpack.c.l.b16 %v5932
          %v6004 = vunpack.c.l.b16 %v5933
          %v6005 = vunpack.c.l.b16 %v5934
          %v6006 = vunpack.c.l.b16 %v5935
          %v6007 = vunpack.c.l.b16 %v5936
          %v6008 = vunpack.c.l.b16 %v5937
          %v6009 = vunpack.c.l.b16 %v5938
          %v6010 = vunpack.c.l.b16 %v5939
          %v6011 = vunpack.c.l.b16 %v5940
          %v6012 = vunpack.c.l.b16 %v5941
          %v6013 = vunpack.c.l.b16 %v5942
          %v6014 = vunpack.c.l.b16 %v5943
          %v6015 = vunpack.c.l.b16 %v5944
          %v6016 = vunpack.c.l.b16 %v5945
          %v6017 = vunpack.c.l.b16 %v5946
          %v6018 = vunpack.c.l.b16 %v5947
          %v6019 = vunpack.c.l.b16 %v5948
          %v6020 = vunpack.c.l.b16 %v5949
          %v6021 = vunpack.c.l.b16 %v5950
          %v6022 = vunpack.c.l.b16 %v5951
          %v6023 = vunpack.c.l.b16 %v5952
          %v6024 = vunpack.c.l.b16 %v5953
          %v6025 = vpack.c.b16 %v5994, %v5993
          %v6026 = vpack.c.b16 %v5996, %v5995
          %v6027 = vpack.c.b16 %v5998, %v5997
          %v6028 = vpack.c.b16 %v6000, %v5999
          %v6029 = vpack.c.b16 %v6002, %v6001
          %v6030 = vpack.c.b16 %v6004, %v6003
          %v6031 = vpack.c.b16 %v6006, %v6005
          %v6032 = vpack.c.b16 %v6008, %v6007
          %v6033 = vpack.c.b16 %v6010, %v6009
          %v6034 = vpack.c.b16 %v6012, %v6011
          %v6035 = vpack.c.b16 %v6014, %v6013
          %v6036 = vpack.c.b16 %v6016, %v6015
          %v6037 = vpack.c.b16 %v6018, %v6017
          %v6038 = vpack.c.b16 %v6020, %v6019
          %v6039 = vpack.c.b16 %v6022, %v6021
          %v6040 = vpack.c.b16 %v6024, %v6023
          %6057 = vmatprep.subr.bf16.mxu0 0
          %6058 = vmatpush1.bf16.msra.mxu0 %v6032
          %6059 = vmatprep.subr.bf16.mxu0 0
          %6060 = vmatpush1.bf16.msra.mxu0 %v6031
          %6061 = vmatprep.subr.bf16.mxu0 0
          %6062 = vmatpush1.bf16.msra.mxu0 %v6030
          %6063 = vmatprep.subr.bf16.mxu0 0
          %6064 = vmatpush1.bf16.msra.mxu0 %v6029
          %6065 = vmatprep.subr.bf16.mxu0 0
          %6066 = vmatpush1.bf16.msra.mxu0 %v6028
          %6067 = vmatprep.subr.bf16.mxu0 0
          %6068 = vmatpush1.bf16.msra.mxu0 %v6027
          %6069 = vmatprep.subr.bf16.mxu0 0
          %6070 = vmatpush1.bf16.msra.mxu0 %v6026
          %6071 = vmatprep.subr.bf16.mxu0 0
          %6072 = vmatpush1.bf16.msra.mxu0 %v6025
          %6073 = vmatprep.subr.bf16.mxu0 0
          %6074 = vmatpush2.bf16.msra.mxu0 %v6040
          %6075 = vmatprep.subr.bf16.mxu0 0
          %6076 = vmatpush2.bf16.msra.mxu0 %v6039
          %6077 = vmatprep.subr.bf16.mxu0 0
          %6078 = vmatpush2.bf16.msra.mxu0 %v6038
          %6079 = vmatprep.subr.bf16.mxu0 0
          %6080 = vmatpush2.bf16.msra.mxu0 %v6037
          %6081 = vmatprep.subr.bf16.mxu0 0
          %6082 = vmatpush2.bf16.msra.mxu0 %v6036
          %6083 = vmatprep.subr.bf16.mxu0 0
          %6084 = vmatpush2.bf16.msra.mxu0 %v6035
          %6085 = vmatprep.subr.bf16.mxu0 0
          %6086 = vmatpush2.bf16.msra.mxu0 %v6034
          %6087 = vmatprep.subr.bf16.mxu0 0
          %6088 = vmatpush2.bf16.msra.mxu0 %v6033
          %6089 = vmatprep.mubr.bf16.mxu0 %v5907
          %6090 = vmatmul.mubr.bf16.gmra.mxu0 %v5906
          %v6091 = vpop.f32.mrf.mxu0
          %v6092 = vadd.f32 %v5959, %v6091
          %v6093 = vpop.f32.mrf.mxu0
          %v6094 = vpop.f32.mrf.mxu0
          %v6095 = vadd.f32 %v5959, %v6094
          %v6096 = vpop.f32.mrf.mxu0
          %6097 = vmatprep.mubr.bf16.mxu0 %v5909
          %6098 = vmatmul.mubr.bf16.gmra.mxu0 %v5908
          %v6099 = vpop.f32.mrf.mxu0
          %v6100 = vadd.f32 %v5959, %v6099
          %v6101 = vpop.f32.mrf.mxu0
          %v6102 = vpop.f32.mrf.mxu0
          %v6103 = vadd.f32 %v5959, %v6102
          %v6104 = vpop.f32.mrf.mxu0
          %6105 = vmatprep.mubr.bf16.mxu0 %v5911
          %6106 = vmatmul.mubr.bf16.gmra.mxu0 %v5910
          %v6107 = vpop.f32.mrf.mxu0
          %v6108 = vadd.f32 %v5959, %v6107
          %v6109 = vpop.f32.mrf.mxu0
          %v6110 = vpop.f32.mrf.mxu0
          %v6111 = vadd.f32 %v5959, %v6110
          %v6112 = vpop.f32.mrf.mxu0
          %6113 = vmatprep.mubr.bf16.mxu0 %v5913
          %6114 = vmatmul.mubr.bf16.gmra.mxu0 %v5912
          %v6115 = vpop.f32.mrf.mxu0
          %v6116 = vadd.f32 %v5959, %v6115
          %v6117 = vpop.f32.mrf.mxu0
          %v6118 = vpop.f32.mrf.mxu0
          %v6119 = vadd.f32 %v5959, %v6118
          %v6120 = vpop.f32.mrf.mxu0
          %6121 = vmatprep.mubr.bf16.mxu0 %v5915
          %6122 = vmatmul.mubr.bf16.gmra.mxu0 %v5914
          %v6123 = vpop.f32.mrf.mxu0
          %v6124 = vadd.f32 %v5959, %v6123
          %v6125 = vpop.f32.mrf.mxu0
          %v6126 = vpop.f32.mrf.mxu0
          %v6127 = vadd.f32 %v5959, %v6126
          %v6128 = vpop.f32.mrf.mxu0
          %6129 = vmatprep.mubr.bf16.mxu0 %v5917
          %6130 = vmatmul.mubr.bf16.gmra.mxu0 %v5916
          %v6131 = vpop.f32.mrf.mxu0
          %v6132 = vadd.f32 %v5959, %v6131
          %v6133 = vpop.f32.mrf.mxu0
          %v6134 = vpop.f32.mrf.mxu0
          %v6135 = vadd.f32 %v5959, %v6134
          %v6136 = vpop.f32.mrf.mxu0
          %6137 = vmatprep.mubr.bf16.mxu0 %v5919
          %6138 = vmatmul.mubr.bf16.gmra.mxu0 %v5918
          %v6139 = vpop.f32.mrf.mxu0
          %v6140 = vadd.f32 %v5959, %v6139
          %v6141 = vpop.f32.mrf.mxu0
          %v6142 = vpop.f32.mrf.mxu0
          %v6143 = vadd.f32 %v5959, %v6142
          %v6144 = vpop.f32.mrf.mxu0
          %6145 = vmatprep.mubr.bf16.mxu0 %v5921
          %6146 = vmatmul.mubr.bf16.gmra.mxu0 %v5920
          %v6147 = vpop.f32.mrf.mxu0
          %v6148 = vadd.f32 %v5959, %v6147
          %v6149 = vpop.f32.mrf.mxu0
          %v6150 = vpop.f32.mrf.mxu0
          %v6151 = vadd.f32 %v5959, %v6150
          %v6152 = vpop.f32.mrf.mxu0
          %6153 = vdwg.mxu0
          %v6154 = vpack.c.bf16 %v6095, %v6092
          %v6155 = vpack.c.bf16 %v6103, %v6100
          %v6156 = vpack.c.bf16 %v6111, %v6108
          %v6157 = vpack.c.bf16 %v6119, %v6116
          %v6158 = vpack.c.bf16 %v6127, %v6124
          %v6159 = vpack.c.bf16 %v6135, %v6132
          %v6160 = vpack.c.bf16 %v6143, %v6140
          %v6161 = vpack.c.bf16 %v6151, %v6148
          %v6162 = vld [vmem:[%s25] sm:$0x1]
          %v6163 = vld [vmem:[#allocation3] sm:$0x1]
          %6165 = vset.pattern.permute.xlu0 0
          %6166 = vperm.xlu0 %6165, %v6163
          %v6167 = vpop.permute.xlu0 %6166
          %v6169 = vlaneseq
          %v6170 = vshrl.u32 %v6169, 7
          %v6171 = vsub.s32 0, %v6170
          %v6172 = vrot.slane %v6167, %v6171
          %6173 = vmatprep.subr.bf16.mxu0 0
          %6174 = vmatpush1.bf16.xpose.msra.mxu0 %v6161
          %6175 = vmatprep.subr.bf16.mxu0 0
          %6176 = vmatpush1.bf16.xpose.msra.mxu0 %v6160
          %6177 = vmatprep.subr.bf16.mxu0 0
          %6178 = vmatpush1.bf16.xpose.msra.mxu0 %v6159
          %6179 = vmatprep.subr.bf16.mxu0 0
          %6180 = vmatpush1.bf16.xpose.msra.mxu0 %v6158
          %6181 = vmatprep.subr.bf16.mxu0 0
          %6182 = vmatpush1.bf16.xpose.msra.mxu0 %v6157
          %6183 = vmatprep.subr.bf16.mxu0 0
          %6184 = vmatpush1.bf16.xpose.msra.mxu0 %v6156
          %6185 = vmatprep.subr.bf16.mxu0 0
          %6186 = vmatpush1.bf16.xpose.msra.mxu0 %v6155
          %6187 = vmatprep.subr.bf16.mxu0 0
          %6188 = vmatpush1.bf16.xpose.msra.mxu0 %v6154
          %6189 = vmatprep.subr.bf16.mxu0 0
          %6190 = vmatpush2.bf16.xpose.msra.mxu0 0
          %6191 = vmatprep.subr.bf16.mxu0 0
          %6192 = vmatpush2.bf16.xpose.msra.mxu0 0
          %6193 = vmatprep.subr.bf16.mxu0 0
          %6194 = vmatpush2.bf16.xpose.msra.mxu0 0
          %6195 = vmatprep.subr.bf16.mxu0 0
          %6196 = vmatpush2.bf16.xpose.msra.mxu0 0
          %6197 = vmatprep.subr.bf16.mxu0 0
          %6198 = vmatpush2.bf16.xpose.msra.mxu0 0
          %6199 = vmatprep.subr.bf16.mxu0 0
          %6200 = vmatpush2.bf16.xpose.msra.mxu0 0
          %6201 = vmatprep.subr.bf16.mxu0 0
          %6202 = vmatpush2.bf16.xpose.msra.mxu0 0
          %6203 = vmatprep.subr.bf16.mxu0 0
          %6204 = vmatpush2.bf16.xpose.msra.mxu0 0
          %6205 = vmatprep.mubr.bf16.mxu0 0
          %6206 = vmatmul.mubr.bf16.gmra.mxu0 %v6162
          %v6207 = vpop.f32.mrf.mxu0
          %v6208 = vadd.f32 %v6172, %v6207
          %v6209 = vpop.f32.mrf.mxu0
          %v6210 = vpop.f32.mrf.mxu0
          %v6211 = vpop.f32.mrf.mxu0
          %6212 = vdwg.mxu0
          %v6213 = vxor.u32 %v6208, 2147483648
          %v6214 = vmul.f32 %v6213, 1.442695
          %v6215 = vpow.pop %v6214
          %v6216 = vadd.f32 %v6215, 1.0
          %v6217 = vrcp.pop %v6216
          %v6218 = vmul.f32 1.0, %v6217
          %6219 = vst [vmem:[%s1085] sm:$0x1] %v6218
        $region144: #{_lambda_.1} parent=127 // pred_fallthru
          _
        %s6220 = smul.u32 16, %s48
        %p6221 = scmp.lt.s32.totalorder %s6220, 15
        %s6222 = scalar_select %p6221, %s6220, 15
        %s6223 = smul.addr %s6222, 8
        %s6224 = scalar_lea.vmem %s27, %s6223
        %p6225 = scmp.lt.s32.totalorder %s48, 0
        %s6226 = scalar_select %p6225, %s48, 0
        %s6227 = scalar_lea.vmem %s28, %s6226
        // Predicated region
        $region145: #{_lambda_.1} parent=127 // pred_check
          %p6228 = pneg %p701
        $region146: #{_lambda_.1} parent=127 // pred_check_branch
          %6230 = sbr.rel (%p6228) target = $region148
        $region147: #{_lambda_.1} parent=127 // pred_region
          %s6231 = smul.u32 16, %s48
        $region148: #{_lambda_.1} parent=127 // pred_fallthru
          _
        // Predicated region
        $region149: #{_lambda_.1} parent=127 // pred_check
          %p6232 = pneg %p727
        $region150: #{_lambda_.1} parent=127 // pred_check_branch
          %6234 = sbr.rel (%p6232) target = $region152
        $region151: #{_lambda_.1} parent=127 // pred_region
          _
        $region152: #{_lambda_.1} parent=127 // pred_fallthru
          _
        // Predicated region
        $region153: #{_lambda_.1} parent=127 // pred_check
          %p6235 = pneg %p701
        $region154: #{_lambda_.1} parent=127 // pred_check_branch
          %6237 = sbr.rel (%p6235) target = $region156
        $region155: #{_lambda_.1} parent=127 // pred_region
          %s6238 = smul.u32 16, %s48
          %p6239 = scmp.lt.s32.totalorder %s6238, 15
          %s6240 = scalar_select %p6239, %s6238, 15
          %s6241 = smul.addr %s6240, 8
          %s6242 = scalar_lea.vmem %s27, %s6241
        $region156: #{_lambda_.1} parent=127 // pred_fallthru
          _
        // Predicated region
        $region157: #{_lambda_.1} parent=127 // pred_check
          %p6243 = pneg %p727
        $region158: #{_lambda_.1} parent=127 // pred_check_branch
          %6245 = sbr.rel (%p6243) target = $region160
        $region159: #{_lambda_.1} parent=127 // pred_region
          %p6246 = scmp.lt.s32.totalorder %s48, 0
          %s6247 = scalar_select %p6246, %s48, 0
          %s6248 = scalar_lea.vmem %s28, %s6247
        $region160: #{_lambda_.1} parent=127 // pred_fallthru
          _
      $region128: #{_lambda_.1} parent=5 // pred_fallthru
        _
      %p6249 = scmp.le.s32.totalorder 2, %s39
      // Predicated region
      $region161: #{_lambda_.1} parent=5 // pred_check
        %p6250 = pneg %p6249
      $region162: #{_lambda_.1} parent=5 // pred_check_branch
        %6252 = sbr.rel (%p6250) target = $region164
      $region163: #{_lambda_.1} parent=5 // pred_region
        %s6253 = ssub.s32 %s39, 2
      $region164: #{_lambda_.1} parent=5 // pred_fallthru
        _
    $region6: #{_lambda_.1} parent=1 // loop_footer
      %s43 = sadd.s32 1, %s39
    $region7: #{_lambda_.1} parent=1 // loop_footer_branch
      %38 = sbr.rel target = $region3
    $region8: #{_lambda_.1} parent=1 // loop_exit
      _
    %6254 = vsyncpa [#allocation5], 1
    %s6255 = scalar_lea.sflag [#allocation5], 1
    %6256 = vsyncpa %s6255, 1
    %6257 = vsyncpa [#allocation7], 1

</llo_original>
